<compile_context>
chip_gen: v5e
topology: v5e:2x2
jax: 0.10.0
libtpu: 0.0.40
codegen_flags: <defaults>
</compile_context>

<pallas_src>
import functools

import numpy as np
import jax
import jax.numpy as jnp
from jax import lax
from jax.experimental import pallas as pl
from jax.experimental.pallas import tpu as pltpu


def _up2_kernel(x1_ref, x2_ref, bexp_ref, rowexp_ref, par_ref, out_ref, *,
                nb, cin, c_half, cmid, cout, hin, win, crop_h0, crop_w0,
                off_wt, off_wc1, off_bc1, off_wc2, off_bc2):
    f32 = jnp.float32
    hs, ws = 2 * hin, 2 * win          # after ConvTranspose (== crop size)
    ho1, wo1 = hs - 2, ws - 2          # after conv1 (3x3 VALID)
    ho2, wo2 = ho1 - 2, wo1 - 2        # after conv2 (3x3 VALID)
    hi_p = lax.Precision.HIGHEST

    for bb in range(nb):               # images per grid step (static unroll)
        x1_chans = [x1_ref[bb, ci] for ci in range(cin)]          # (hin, win)

        # ---- ConvTranspose2d(cin -> c_half, k=2, s=2, bias=False) + ReLU ----
        # up[co][2i+di, 2j+dj] = sum_ci wt[ci,co,di,dj] * x1[ci][i,j]
        # Phase images are stacked over (co, di) along sublanes, then
        # interleaved by 3 exact 0/1 expansion dots (vs 12 tiny serialized
        # dots before).  precision=HIGHEST makes the dots exact pass-through.
        a_dj = []
        for dj in range(2):
            blocks = []
            for co in range(c_half):
                for di in range(2):
                    p = None
                    for ci in range(cin):
                        w = par_ref[off_wt + ((ci * c_half + co) * 2 + di) * 2 + dj]
                        t = w * x1_chans[ci]
                        p = t if p is None else p + t
                    blocks.append(p)
            a_dj.append(jnp.concatenate(blocks, axis=0))    # (2*c_half*hin, win)

        q = (jnp.dot(a_dj[0], bexp_ref[0], preferred_element_type=f32, precision=hi_p)
             + jnp.dot(a_dj[1], bexp_ref[1], preferred_element_type=f32, precision=hi_p))
        up_all = jnp.dot(rowexp_ref[...], q, preferred_element_type=f32, precision=hi_p)
        up_all = jnp.maximum(up_all, 0.0)                   # (c_half*hs, ws)

        # ---- concat([up, crop(skip)]) is never materialized: conv1 windows
        # come from up_all (channel co = rows [co*hs, (co+1)*hs)) or straight
        # out of x2_ref with the CentralCrop offsets fused into the slice. ----
        def cat_slice(c, dy, dx):
            if c < c_half:
                r0 = c * hs + dy
                return up_all[r0:r0 + ho1, dx:dx + wo1]
            cs = c - c_half
            return x2_ref[bb, cs,
                          crop_h0 + dy:crop_h0 + dy + ho1,
                          crop_w0 + dx:crop_w0 + dx + wo1]

        # ---- DoubleConv: two 3x3 VALID convs + ReLU as unrolled VPU FMAs.
        # (c, dy, dx) outer / m inner: one live window slice + n_out
        # accumulators -> no vreg-file blow-up.
        # TODO(synk): at production channel counts (Cin >= 64) switch to an
        # im2col / shifted-window MXU matmul (K = 9*Cin) instead of VPU FMAs.
        def conv3x3_relu(slicer, w_off, b_off, n_out, n_in, ho, wo):
            accs = [jnp.zeros((ho, wo), f32) for _ in range(n_out)]
            for c in range(n_in):
                for dy in range(3):
                    for dx in range(3):
                        window = slicer(c, dy, dx)
                        for m in range(n_out):
                            w = par_ref[w_off + ((m * n_in + c) * 3 + dy) * 3 + dx]
                            accs[m] = accs[m] + w * window
            return [jnp.maximum(accs[m] + par_ref[b_off + m], 0.0)
                    for m in range(n_out)]

        o1 = conv3x3_relu(cat_slice, off_wc1, off_bc1, cmid, cin, ho1, wo1)
        o2 = conv3x3_relu(lambda c, dy, dx: o1[c][dy:dy + ho2, dx:dx + wo2],
                          off_wc2, off_bc2, cout, cmid, ho2, wo2)

        for m in range(cout):
            out_ref[bb, m] = o2[m]


def up2_forward(x1, x2, wt, wc1, bc1, wc2, bc2, *,
                central_fraction=104.0 / 136.0, images_per_step=1):
    """x1: (N, Cin, H, W); x2: (N, Cin//2, Hs, Ws); wt: ConvTranspose weight
    (Cin, Cin//2, 2, 2); wc1/bc1, wc2/bc2: DoubleConv weights/biases.

    images_per_step=1 keeps a parallel batch grid (v7x megacore friendly);
    set images_per_step=N on single-TC chips (v5e/v6e) to fold the batch into
    one grid step and remove per-step overhead.
    """
    n, cin, hin, win = x1.shape
    cin_t, c_half, kh, kw = wt.shape
    assert (cin_t, kh, kw) == (cin, 2, 2) and cin % 2 == 0 and c_half == cin // 2
    n2, c_skip, h_skip, w_skip = x2.shape
    assert n2 == n and c_skip == c_half
    cmid, cout = wc1.shape[0], wc2.shape[0]
    assert wc1.shape == (cmid, cin, 3, 3) and wc2.shape == (cout, cmid, 3, 3)
    assert bc1.shape == (cmid,) and bc2.shape == (cout,)

    hs, ws = 2 * hin, 2 * win
    # CentralCrop -- same integer arithmetic as the PyTorch module
    crop_h = int(h_skip * central_fraction)
    crop_w = int(w_skip * central_fraction)
    crop_h0 = int((h_skip - h_skip * central_fraction) / 2)
    crop_w0 = int((w_skip - w_skip * central_fraction) / 2)
    assert crop_h == hs and crop_w == ws, "cropped skip must match upsampled x1"

    ho2, wo2 = hs - 4, ws - 4   # two 3x3 VALID convs

    nb = images_per_step
    assert n % nb == 0

    # ---- one merged flat SMEM parameter table (single descriptor) ----
    params = jnp.concatenate([
        wt.reshape(-1).astype(jnp.float32),
        wc1.reshape(-1).astype(jnp.float32),
        bc1.reshape(-1).astype(jnp.float32),
        wc2.reshape(-1).astype(jnp.float32),
        bc2.reshape(-1).astype(jnp.float32)])
    off_wt = 0
    off_wc1 = off_wt + wt.size
    off_bc1 = off_wc1 + wc1.size
    off_wc2 = off_bc1 + bc1.size
    off_bc2 = off_wc2 + wc2.size

    # ---- exact 0/1 expansion matrices for the stride-2 interleave, built
    # once on the host (hoisted out of the per-grid-step body) ----
    bexp = np.zeros((2, win, ws), np.float32)        # bexp[dj, j, 2j+dj] = 1
    for dj in range(2):
        for j in range(win):
            bexp[dj, j, 2 * j + dj] = 1.0
    rowexp = np.zeros((c_half * hs, 2 * c_half * hin), np.float32)
    for co in range(c_half):                          # row y of channel co <-
        for y in range(hs):                           #   phase-row (co,y%2,y//2)
            rowexp[co * hs + y, (co * 2 + (y % 2)) * hin + y // 2] = 1.0
    bexp = jnp.asarray(bexp)
    rowexp = jnp.asarray(rowexp)

    kernel = functools.partial(
        _up2_kernel, nb=nb, cin=cin, c_half=c_half, cmid=cmid, cout=cout,
        hin=hin, win=win, crop_h0=crop_h0, crop_w0=crop_w0,
        off_wt=off_wt, off_wc1=off_wc1, off_bc1=off_bc1,
        off_wc2=off_wc2, off_bc2=off_bc2)

    return pl.pallas_call(
        kernel,
        out_shape=jax.ShapeDtypeStruct((n, cout, ho2, wo2), jnp.float32),
        grid=(n // nb,),
        in_specs=[
            pl.BlockSpec((nb, cin, hin, win), lambda b: (b, 0, 0, 0)),
            pl.BlockSpec((nb, c_half, h_skip, w_skip), lambda b: (b, 0, 0, 0)),
            pl.BlockSpec((2, win, ws), lambda b: (0, 0, 0)),       # constant
            pl.BlockSpec((c_half * hs, 2 * c_half * hin), lambda b: (0, 0)),
            pl.BlockSpec(memory_space=pltpu.MemorySpace.SMEM),     # params
        ],
        # Full-width W-on-lanes output block; at production UNet widths block
        # W in multiples of 128 for lane-dense stores.
        out_specs=pl.BlockSpec((nb, cout, ho2, wo2), lambda b: (b, 0, 0, 0)),
        compiler_params=pltpu.CompilerParams(
            dimension_semantics=("parallel",)),
    )(x1.astype(jnp.float32), x2.astype(jnp.float32), bexp, rowexp, params)


if __name__ == "__main__":
    jax.config.update("jax_default_matmul_precision", "highest")
    key = jax.random.PRNGKey(0)
    k1, k2, k3, k4, k5, k6, k7 = jax.random.split(key, 7)

    N, Cin, Cout = 2, 4, 4
    H1 = W1 = 8                       # x1 spatial; ConvTranspose -> 16x16
    Hs = Ws = 21                      # skip spatial; CentralCrop(104/136) -> 16x16
    frac = 104.0 / 136.0

    x1 = jax.random.normal(k1, (N, Cin, H1, W1), jnp.float32)
    x2 = jax.random.normal(k2, (N, Cin // 2, Hs, Ws), jnp.float32)

    wt = jax.random.normal(k3, (Cin, Cin // 2, 2, 2), jnp.float32) * 0.1
    wc1 = jax.random.normal(k4, (Cout, Cin, 3, 3), jnp.float32) * 0.1
    bc1 = jax.random.normal(k5, (Cout,), jnp.float32) * 0.1
    wc2 = jax.random.normal(k6, (Cout, Cout, 3, 3), jnp.float32) * 0.1
    bc2 = jax.random.normal(k7, (Cout,), jnp.float32) * 0.1

    out = up2_forward(x1, x2, wt, wc1, bc1, wc2, bc2, central_fraction=frac)
    jax.block_until_ready(out)

    # ---- pure-JAX reference (same math as the PyTorch module) ----
    hi = lax.Precision.HIGHEST
    up = jnp.zeros((N, Cin // 2, 2 * H1, 2 * W1), jnp.float32)
    for di in range(2):
        for dj in range(2):
            ph = jnp.einsum("ncij,ck->nkij", x1, wt[:, :, di, dj], precision=hi)
            up = up.at[:, :, di::2, dj::2].set(ph)
    up = jax.nn.relu(up)
    sh = int((Hs - Hs * frac) / 2); eh_ = sh + int(Hs * frac)
    sw = int((Ws - Ws * frac) / 2); ew_ = sw + int(Ws * frac)
    xcat = jnp.concatenate([up, x2[:, :, sh:eh_, sw:ew_]], axis=1)
    dn = ("NCHW", "OIHW", "NCHW")
    y = lax.conv_general_dilated(xcat, wc1, (1, 1), "VALID",
                                 dimension_numbers=dn, precision=hi)
    y = jax.nn.relu(y + bc1[None, :, None, None])
    y = lax.conv_general_dilated(y, wc2, (1, 1), "VALID",
                                 dimension_numbers=dn, precision=hi)
    ref = jax.nn.relu(y + bc2[None, :, None, None])

    assert out.shape == ref.shape, (out.shape, ref.shape)
    err = float(jnp.max(jnp.abs(out - ref)))
    assert err < 1e-3, err

    print("KERNEL_OK")
</pallas_src>

<mosaic_0001>
module attributes {stable_mosaic.version = 11 : i64} {
  func.func @_up2_kernel(%arg0: i32, %arg1: memref<1x4x8x8xf32, #tpu.memory_space<vmem>>, %arg2: memref<1x2x21x21xf32, #tpu.memory_space<vmem>>, %arg3: memref<2x8x16xf32, #tpu.memory_space<vmem>>, %arg4: memref<32x32xf32, #tpu.memory_space<vmem>>, %arg5: memref<328xf32, #tpu.memory_space<smem>>, %arg6: memref<1x4x12x12xf32, #tpu.memory_space<vmem>>) attributes {dimension_semantics = [#tpu.dimension_semantics<parallel>], iteration_bounds = array<i64: 2>, scalar_prefetch = 0 : i64, scratch_operands = 0 : i64, tpu.core_type = #tpu.core_type<tc>, window_params = [{transform_indices = @transform_0, window_bounds = array<i64: 1, 4, 8, 8>}, {transform_indices = @transform_1, window_bounds = array<i64: 1, 2, 21, 21>}, {pipeline_mode = #tpu.pipeline_mode<synchronous>, transform_indices = @transform_2, window_bounds = array<i64: 2, 8, 16>}, {pipeline_mode = #tpu.pipeline_mode<synchronous>, transform_indices = @transform_3, window_bounds = array<i64: 32, 32>}, {transform_indices = @transform_4, window_bounds = array<i64: 328>}, {transform_indices = @transform_5, window_bounds = array<i64: 1, 4, 12, 12>}]} {
    %c0 = arith.constant 0 : index
    %c0_0 = arith.constant 0 : index
    %c0_1 = arith.constant 0 : index
    %c0_2 = arith.constant 0 : index
    %0 = vector.load %arg1[%c0, %c0_0, %c0_1, %c0_2] : memref<1x4x8x8xf32, #tpu.memory_space<vmem>>, vector<1x1x8x8xf32>
    %1 = vector.shape_cast %0 : vector<1x1x8x8xf32> to vector<8x8xf32>
    %c0_3 = arith.constant 0 : index
    %c1 = arith.constant 1 : index
    %c0_4 = arith.constant 0 : index
    %c0_5 = arith.constant 0 : index
    %2 = vector.load %arg1[%c0_3, %c1, %c0_4, %c0_5] : memref<1x4x8x8xf32, #tpu.memory_space<vmem>>, vector<1x1x8x8xf32>
    %3 = vector.shape_cast %2 : vector<1x1x8x8xf32> to vector<8x8xf32>
    %c0_6 = arith.constant 0 : index
    %c2 = arith.constant 2 : index
    %c0_7 = arith.constant 0 : index
    %c0_8 = arith.constant 0 : index
    %4 = vector.load %arg1[%c0_6, %c2, %c0_7, %c0_8] : memref<1x4x8x8xf32, #tpu.memory_space<vmem>>, vector<1x1x8x8xf32>
    %5 = vector.shape_cast %4 : vector<1x1x8x8xf32> to vector<8x8xf32>
    %c0_9 = arith.constant 0 : index
    %c3 = arith.constant 3 : index
    %c0_10 = arith.constant 0 : index
    %c0_11 = arith.constant 0 : index
    %6 = vector.load %arg1[%c0_9, %c3, %c0_10, %c0_11] : memref<1x4x8x8xf32, #tpu.memory_space<vmem>>, vector<1x1x8x8xf32>
    %7 = vector.shape_cast %6 : vector<1x1x8x8xf32> to vector<8x8xf32>
    %c0_12 = arith.constant 0 : index
    %8 = memref.load %arg5[%c0_12] : memref<328xf32, #tpu.memory_space<smem>>
    %9 = vector.broadcast %8 : f32 to vector<8x8xf32>
    %10 = arith.mulf %9, %1 : vector<8x8xf32>
    %c8 = arith.constant 8 : index
    %11 = memref.load %arg5[%c8] : memref<328xf32, #tpu.memory_space<smem>>
    %12 = vector.broadcast %11 : f32 to vector<8x8xf32>
    %13 = arith.mulf %12, %3 : vector<8x8xf32>
    %14 = arith.addf %10, %13 : vector<8x8xf32>
    %c16 = arith.constant 16 : index
    %15 = memref.load %arg5[%c16] : memref<328xf32, #tpu.memory_space<smem>>
    %16 = vector.broadcast %15 : f32 to vector<8x8xf32>
    %17 = arith.mulf %16, %5 : vector<8x8xf32>
    %18 = arith.addf %14, %17 : vector<8x8xf32>
    %c24 = arith.constant 24 : index
    %19 = memref.load %arg5[%c24] : memref<328xf32, #tpu.memory_space<smem>>
    %20 = vector.broadcast %19 : f32 to vector<8x8xf32>
    %21 = arith.mulf %20, %7 : vector<8x8xf32>
    %22 = arith.addf %18, %21 : vector<8x8xf32>
    %c2_13 = arith.constant 2 : index
    %23 = memref.load %arg5[%c2_13] : memref<328xf32, #tpu.memory_space<smem>>
    %24 = vector.broadcast %23 : f32 to vector<8x8xf32>
    %25 = arith.mulf %24, %1 : vector<8x8xf32>
    %c10 = arith.constant 10 : index
    %26 = memref.load %arg5[%c10] : memref<328xf32, #tpu.memory_space<smem>>
    %27 = vector.broadcast %26 : f32 to vector<8x8xf32>
    %28 = arith.mulf %27, %3 : vector<8x8xf32>
    %29 = arith.addf %25, %28 : vector<8x8xf32>
    %c18 = arith.constant 18 : index
    %30 = memref.load %arg5[%c18] : memref<328xf32, #tpu.memory_space<smem>>
    %31 = vector.broadcast %30 : f32 to vector<8x8xf32>
    %32 = arith.mulf %31, %5 : vector<8x8xf32>
    %33 = arith.addf %29, %32 : vector<8x8xf32>
    %c26 = arith.constant 26 : index
    %34 = memref.load %arg5[%c26] : memref<328xf32, #tpu.memory_space<smem>>
    %35 = vector.broadcast %34 : f32 to vector<8x8xf32>
    %36 = arith.mulf %35, %7 : vector<8x8xf32>
    %37 = arith.addf %33, %36 : vector<8x8xf32>
    %c4 = arith.constant 4 : index
    %38 = memref.load %arg5[%c4] : memref<328xf32, #tpu.memory_space<smem>>
    %39 = vector.broadcast %38 : f32 to vector<8x8xf32>
    %40 = arith.mulf %39, %1 : vector<8x8xf32>
    %c12 = arith.constant 12 : index
    %41 = memref.load %arg5[%c12] : memref<328xf32, #tpu.memory_space<smem>>
    %42 = vector.broadcast %41 : f32 to vector<8x8xf32>
    %43 = arith.mulf %42, %3 : vector<8x8xf32>
    %44 = arith.addf %40, %43 : vector<8x8xf32>
    %c20 = arith.constant 20 : index
    %45 = memref.load %arg5[%c20] : memref<328xf32, #tpu.memory_space<smem>>
    %46 = vector.broadcast %45 : f32 to vector<8x8xf32>
    %47 = arith.mulf %46, %5 : vector<8x8xf32>
    %48 = arith.addf %44, %47 : vector<8x8xf32>
    %c28 = arith.constant 28 : index
    %49 = memref.load %arg5[%c28] : memref<328xf32, #tpu.memory_space<smem>>
    %50 = vector.broadcast %49 : f32 to vector<8x8xf32>
    %51 = arith.mulf %50, %7 : vector<8x8xf32>
    %52 = arith.addf %48, %51 : vector<8x8xf32>
    %c6 = arith.constant 6 : index
    %53 = memref.load %arg5[%c6] : memref<328xf32, #tpu.memory_space<smem>>
    %54 = vector.broadcast %53 : f32 to vector<8x8xf32>
    %55 = arith.mulf %54, %1 : vector<8x8xf32>
    %c14 = arith.constant 14 : index
    %56 = memref.load %arg5[%c14] : memref<328xf32, #tpu.memory_space<smem>>
    %57 = vector.broadcast %56 : f32 to vector<8x8xf32>
    %58 = arith.mulf %57, %3 : vector<8x8xf32>
    %59 = arith.addf %55, %58 : vector<8x8xf32>
    %c22 = arith.constant 22 : index
    %60 = memref.load %arg5[%c22] : memref<328xf32, #tpu.memory_space<smem>>
    %61 = vector.broadcast %60 : f32 to vector<8x8xf32>
    %62 = arith.mulf %61, %5 : vector<8x8xf32>
    %63 = arith.addf %59, %62 : vector<8x8xf32>
    %c30 = arith.constant 30 : index
    %64 = memref.load %arg5[%c30] : memref<328xf32, #tpu.memory_space<smem>>
    %65 = vector.broadcast %64 : f32 to vector<8x8xf32>
    %66 = arith.mulf %65, %7 : vector<8x8xf32>
    %67 = arith.addf %63, %66 : vector<8x8xf32>
    %68 = tpu.concatenate %22, %37, %52, %67 in 0 : vector<8x8xf32>, vector<8x8xf32>, vector<8x8xf32>, vector<8x8xf32> -> vector<32x8xf32>
    %c1_14 = arith.constant 1 : index
    %69 = memref.load %arg5[%c1_14] : memref<328xf32, #tpu.memory_space<smem>>
    %70 = vector.broadcast %69 : f32 to vector<8x8xf32>
    %71 = arith.mulf %70, %1 : vector<8x8xf32>
    %c9 = arith.constant 9 : index
    %72 = memref.load %arg5[%c9] : memref<328xf32, #tpu.memory_space<smem>>
    %73 = vector.broadcast %72 : f32 to vector<8x8xf32>
    %74 = arith.mulf %73, %3 : vector<8x8xf32>
    %75 = arith.addf %71, %74 : vector<8x8xf32>
    %c17 = arith.constant 17 : index
    %76 = memref.load %arg5[%c17] : memref<328xf32, #tpu.memory_space<smem>>
    %77 = vector.broadcast %76 : f32 to vector<8x8xf32>
    %78 = arith.mulf %77, %5 : vector<8x8xf32>
    %79 = arith.addf %75, %78 : vector<8x8xf32>
    %c25 = arith.constant 25 : index
    %80 = memref.load %arg5[%c25] : memref<328xf32, #tpu.memory_space<smem>>
    %81 = vector.broadcast %80 : f32 to vector<8x8xf32>
    %82 = arith.mulf %81, %7 : vector<8x8xf32>
    %83 = arith.addf %79, %82 : vector<8x8xf32>
    %c3_15 = arith.constant 3 : index
    %84 = memref.load %arg5[%c3_15] : memref<328xf32, #tpu.memory_space<smem>>
    %85 = vector.broadcast %84 : f32 to vector<8x8xf32>
    %86 = arith.mulf %85, %1 : vector<8x8xf32>
    %c11 = arith.constant 11 : index
    %87 = memref.load %arg5[%c11] : memref<328xf32, #tpu.memory_space<smem>>
    %88 = vector.broadcast %87 : f32 to vector<8x8xf32>
    %89 = arith.mulf %88, %3 : vector<8x8xf32>
    %90 = arith.addf %86, %89 : vector<8x8xf32>
    %c19 = arith.constant 19 : index
    %91 = memref.load %arg5[%c19] : memref<328xf32, #tpu.memory_space<smem>>
    %92 = vector.broadcast %91 : f32 to vector<8x8xf32>
    %93 = arith.mulf %92, %5 : vector<8x8xf32>
    %94 = arith.addf %90, %93 : vector<8x8xf32>
    %c27 = arith.constant 27 : index
    %95 = memref.load %arg5[%c27] : memref<328xf32, #tpu.memory_space<smem>>
    %96 = vector.broadcast %95 : f32 to vector<8x8xf32>
    %97 = arith.mulf %96, %7 : vector<8x8xf32>
    %98 = arith.addf %94, %97 : vector<8x8xf32>
    %c5 = arith.constant 5 : index
    %99 = memref.load %arg5[%c5] : memref<328xf32, #tpu.memory_space<smem>>
    %100 = vector.broadcast %99 : f32 to vector<8x8xf32>
    %101 = arith.mulf %100, %1 : vector<8x8xf32>
    %c13 = arith.constant 13 : index
    %102 = memref.load %arg5[%c13] : memref<328xf32, #tpu.memory_space<smem>>
    %103 = vector.broadcast %102 : f32 to vector<8x8xf32>
    %104 = arith.mulf %103, %3 : vector<8x8xf32>
    %105 = arith.addf %101, %104 : vector<8x8xf32>
    %c21 = arith.constant 21 : index
    %106 = memref.load %arg5[%c21] : memref<328xf32, #tpu.memory_space<smem>>
    %107 = vector.broadcast %106 : f32 to vector<8x8xf32>
    %108 = arith.mulf %107, %5 : vector<8x8xf32>
    %109 = arith.addf %105, %108 : vector<8x8xf32>
    %c29 = arith.constant 29 : index
    %110 = memref.load %arg5[%c29] : memref<328xf32, #tpu.memory_space<smem>>
    %111 = vector.broadcast %110 : f32 to vector<8x8xf32>
    %112 = arith.mulf %111, %7 : vector<8x8xf32>
    %113 = arith.addf %109, %112 : vector<8x8xf32>
    %c7 = arith.constant 7 : index
    %114 = memref.load %arg5[%c7] : memref<328xf32, #tpu.memory_space<smem>>
    %115 = vector.broadcast %114 : f32 to vector<8x8xf32>
    %116 = arith.mulf %115, %1 : vector<8x8xf32>
    %c15 = arith.constant 15 : index
    %117 = memref.load %arg5[%c15] : memref<328xf32, #tpu.memory_space<smem>>
    %118 = vector.broadcast %117 : f32 to vector<8x8xf32>
    %119 = arith.mulf %118, %3 : vector<8x8xf32>
    %120 = arith.addf %116, %119 : vector<8x8xf32>
    %c23 = arith.constant 23 : index
    %121 = memref.load %arg5[%c23] : memref<328xf32, #tpu.memory_space<smem>>
    %122 = vector.broadcast %121 : f32 to vector<8x8xf32>
    %123 = arith.mulf %122, %5 : vector<8x8xf32>
    %124 = arith.addf %120, %123 : vector<8x8xf32>
    %c31 = arith.constant 31 : index
    %125 = memref.load %arg5[%c31] : memref<328xf32, #tpu.memory_space<smem>>
    %126 = vector.broadcast %125 : f32 to vector<8x8xf32>
    %127 = arith.mulf %126, %7 : vector<8x8xf32>
    %128 = arith.addf %124, %127 : vector<8x8xf32>
    %129 = tpu.concatenate %83, %98, %113, %128 in 0 : vector<8x8xf32>, vector<8x8xf32>, vector<8x8xf32>, vector<8x8xf32> -> vector<32x8xf32>
    %c0_16 = arith.constant 0 : index
    %c0_17 = arith.constant 0 : index
    %c0_18 = arith.constant 0 : index
    %130 = vector.load %arg3[%c0_16, %c0_17, %c0_18] : memref<2x8x16xf32, #tpu.memory_space<vmem>>, vector<1x8x16xf32>
    %131 = vector.shape_cast %130 : vector<1x8x16xf32> to vector<8x16xf32>
    %cst = arith.constant dense<0.000000e+00> : vector<32x16xf32>
    %132 = tpu.matmul %68, %131, %cst {dimension_numbers = #tpu.dot_dimension_numbers<[1], [0], [0], [1], [0, 0, 1, 1], [], []>, precision = #tpu.contract_precision<fp32>} : vector<32x8xf32>, vector<8x16xf32>, vector<32x16xf32> -> vector<32x16xf32>
    %c1_19 = arith.constant 1 : index
    %c0_20 = arith.constant 0 : index
    %c0_21 = arith.constant 0 : index
    %133 = vector.load %arg3[%c1_19, %c0_20, %c0_21] : memref<2x8x16xf32, #tpu.memory_space<vmem>>, vector<1x8x16xf32>
    %134 = vector.shape_cast %133 : vector<1x8x16xf32> to vector<8x16xf32>
    %cst_22 = arith.constant dense<0.000000e+00> : vector<32x16xf32>
    %135 = tpu.matmul %129, %134, %cst_22 {dimension_numbers = #tpu.dot_dimension_numbers<[1], [0], [0], [1], [0, 0, 1, 1], [], []>, precision = #tpu.contract_precision<fp32>} : vector<32x8xf32>, vector<8x16xf32>, vector<32x16xf32> -> vector<32x16xf32>
    %136 = arith.addf %132, %135 : vector<32x16xf32>
    %c0_23 = arith.constant 0 : index
    %c0_24 = arith.constant 0 : index
    %137 = vector.load %arg4[%c0_23, %c0_24] : memref<32x32xf32, #tpu.memory_space<vmem>>, vector<32x32xf32>
    %cst_25 = arith.constant dense<0.000000e+00> : vector<32x16xf32>
    %138 = tpu.matmul %137, %136, %cst_25 {dimension_numbers = #tpu.dot_dimension_numbers<[1], [0], [0], [1], [0, 0, 1, 1], [], []>, precision = #tpu.contract_precision<fp32>} : vector<32x32xf32>, vector<32x16xf32>, vector<32x16xf32> -> vector<32x16xf32>
    %cst_26 = arith.constant 0.000000e+00 : f32
    %139 = vector.broadcast %cst_26 : f32 to vector<32x16xf32>
    %140 = arith.maximumf %138, %139 : vector<32x16xf32>
    %cst_27 = arith.constant 0.000000e+00 : f32
    %141 = vector.broadcast %cst_27 : f32 to vector<14x14xf32>
    %cst_28 = arith.constant 0.000000e+00 : f32
    %142 = vector.broadcast %cst_28 : f32 to vector<14x14xf32>
    %cst_29 = arith.constant 0.000000e+00 : f32
    %143 = vector.broadcast %cst_29 : f32 to vector<14x14xf32>
    %cst_30 = arith.constant 0.000000e+00 : f32
    %144 = vector.broadcast %cst_30 : f32 to vector<14x14xf32>
    %145 = vector.extract_strided_slice %140 {offsets = [0, 0], sizes = [14, 14], strides = [1, 1]} : vector<32x16xf32> to vector<14x14xf32>
    %c32 = arith.constant 32 : index
    %146 = memref.load %arg5[%c32] : memref<328xf32, #tpu.memory_space<smem>>
    %147 = vector.broadcast %146 : f32 to vector<14x14xf32>
    %148 = arith.mulf %147, %145 : vector<14x14xf32>
    %149 = arith.addf %141, %148 : vector<14x14xf32>
    %c68 = arith.constant 68 : index
    %150 = memref.load %arg5[%c68] : memref<328xf32, #tpu.memory_space<smem>>
    %151 = vector.broadcast %150 : f32 to vector<14x14xf32>
    %152 = arith.mulf %151, %145 : vector<14x14xf32>
    %153 = arith.addf %142, %152 : vector<14x14xf32>
    %c104 = arith.constant 104 : index
    %154 = memref.load %arg5[%c104] : memref<328xf32, #tpu.memory_space<smem>>
    %155 = vector.broadcast %154 : f32 to vector<14x14xf32>
    %156 = arith.mulf %155, %145 : vector<14x14xf32>
    %157 = arith.addf %143, %156 : vector<14x14xf32>
    %c140 = arith.constant 140 : index
    %158 = memref.load %arg5[%c140] : memref<328xf32, #tpu.memory_space<smem>>
    %159 = vector.broadcast %158 : f32 to vector<14x14xf32>
    %160 = arith.mulf %159, %145 : vector<14x14xf32>
    %161 = arith.addf %144, %160 : vector<14x14xf32>
    %162 = vector.extract_strided_slice %140 {offsets = [0, 1], sizes = [14, 14], strides = [1, 1]} : vector<32x16xf32> to vector<14x14xf32>
    %c33 = arith.constant 33 : index
    %163 = memref.load %arg5[%c33] : memref<328xf32, #tpu.memory_space<smem>>
    %164 = vector.broadcast %163 : f32 to vector<14x14xf32>
    %165 = arith.mulf %164, %162 : vector<14x14xf32>
    %166 = arith.addf %149, %165 : vector<14x14xf32>
    %c69 = arith.constant 69 : index
    %167 = memref.load %arg5[%c69] : memref<328xf32, #tpu.memory_space<smem>>
    %168 = vector.broadcast %167 : f32 to vector<14x14xf32>
    %169 = arith.mulf %168, %162 : vector<14x14xf32>
    %170 = arith.addf %153, %169 : vector<14x14xf32>
    %c105 = arith.constant 105 : index
    %171 = memref.load %arg5[%c105] : memref<328xf32, #tpu.memory_space<smem>>
    %172 = vector.broadcast %171 : f32 to vector<14x14xf32>
    %173 = arith.mulf %172, %162 : vector<14x14xf32>
    %174 = arith.addf %157, %173 : vector<14x14xf32>
    %c141 = arith.constant 141 : index
    %175 = memref.load %arg5[%c141] : memref<328xf32, #tpu.memory_space<smem>>
    %176 = vector.broadcast %175 : f32 to vector<14x14xf32>
    %177 = arith.mulf %176, %162 : vector<14x14xf32>
    %178 = arith.addf %161, %177 : vector<14x14xf32>
    %179 = vector.extract_strided_slice %140 {offsets = [0, 2], sizes = [14, 14], strides = [1, 1]} : vector<32x16xf32> to vector<14x14xf32>
    %c34 = arith.constant 34 : index
    %180 = memref.load %arg5[%c34] : memref<328xf32, #tpu.memory_space<smem>>
    %181 = vector.broadcast %180 : f32 to vector<14x14xf32>
    %182 = arith.mulf %181, %179 : vector<14x14xf32>
    %183 = arith.addf %166, %182 : vector<14x14xf32>
    %c70 = arith.constant 70 : index
    %184 = memref.load %arg5[%c70] : memref<328xf32, #tpu.memory_space<smem>>
    %185 = vector.broadcast %184 : f32 to vector<14x14xf32>
    %186 = arith.mulf %185, %179 : vector<14x14xf32>
    %187 = arith.addf %170, %186 : vector<14x14xf32>
    %c106 = arith.constant 106 : index
    %188 = memref.load %arg5[%c106] : memref<328xf32, #tpu.memory_space<smem>>
    %189 = vector.broadcast %188 : f32 to vector<14x14xf32>
    %190 = arith.mulf %189, %179 : vector<14x14xf32>
    %191 = arith.addf %174, %190 : vector<14x14xf32>
    %c142 = arith.constant 142 : index
    %192 = memref.load %arg5[%c142] : memref<328xf32, #tpu.memory_space<smem>>
    %193 = vector.broadcast %192 : f32 to vector<14x14xf32>
    %194 = arith.mulf %193, %179 : vector<14x14xf32>
    %195 = arith.addf %178, %194 : vector<14x14xf32>
    %196 = vector.extract_strided_slice %140 {offsets = [1, 0], sizes = [14, 14], strides = [1, 1]} : vector<32x16xf32> to vector<14x14xf32>
    %c35 = arith.constant 35 : index
    %197 = memref.load %arg5[%c35] : memref<328xf32, #tpu.memory_space<smem>>
    %198 = vector.broadcast %197 : f32 to vector<14x14xf32>
    %199 = arith.mulf %198, %196 : vector<14x14xf32>
    %200 = arith.addf %183, %199 : vector<14x14xf32>
    %c71 = arith.constant 71 : index
    %201 = memref.load %arg5[%c71] : memref<328xf32, #tpu.memory_space<smem>>
    %202 = vector.broadcast %201 : f32 to vector<14x14xf32>
    %203 = arith.mulf %202, %196 : vector<14x14xf32>
    %204 = arith.addf %187, %203 : vector<14x14xf32>
    %c107 = arith.constant 107 : index
    %205 = memref.load %arg5[%c107] : memref<328xf32, #tpu.memory_space<smem>>
    %206 = vector.broadcast %205 : f32 to vector<14x14xf32>
    %207 = arith.mulf %206, %196 : vector<14x14xf32>
    %208 = arith.addf %191, %207 : vector<14x14xf32>
    %c143 = arith.constant 143 : index
    %209 = memref.load %arg5[%c143] : memref<328xf32, #tpu.memory_space<smem>>
    %210 = vector.broadcast %209 : f32 to vector<14x14xf32>
    %211 = arith.mulf %210, %196 : vector<14x14xf32>
    %212 = arith.addf %195, %211 : vector<14x14xf32>
    %213 = vector.extract_strided_slice %140 {offsets = [1, 1], sizes = [14, 14], strides = [1, 1]} : vector<32x16xf32> to vector<14x14xf32>
    %c36 = arith.constant 36 : index
    %214 = memref.load %arg5[%c36] : memref<328xf32, #tpu.memory_space<smem>>
    %215 = vector.broadcast %214 : f32 to vector<14x14xf32>
    %216 = arith.mulf %215, %213 : vector<14x14xf32>
    %217 = arith.addf %200, %216 : vector<14x14xf32>
    %c72 = arith.constant 72 : index
    %218 = memref.load %arg5[%c72] : memref<328xf32, #tpu.memory_space<smem>>
    %219 = vector.broadcast %218 : f32 to vector<14x14xf32>
    %220 = arith.mulf %219, %213 : vector<14x14xf32>
    %221 = arith.addf %204, %220 : vector<14x14xf32>
    %c108 = arith.constant 108 : index
    %222 = memref.load %arg5[%c108] : memref<328xf32, #tpu.memory_space<smem>>
    %223 = vector.broadcast %222 : f32 to vector<14x14xf32>
    %224 = arith.mulf %223, %213 : vector<14x14xf32>
    %225 = arith.addf %208, %224 : vector<14x14xf32>
    %c144 = arith.constant 144 : index
    %226 = memref.load %arg5[%c144] : memref<328xf32, #tpu.memory_space<smem>>
    %227 = vector.broadcast %226 : f32 to vector<14x14xf32>
    %228 = arith.mulf %227, %213 : vector<14x14xf32>
    %229 = arith.addf %212, %228 : vector<14x14xf32>
    %230 = vector.extract_strided_slice %140 {offsets = [1, 2], sizes = [14, 14], strides = [1, 1]} : vector<32x16xf32> to vector<14x14xf32>
    %c37 = arith.constant 37 : index
    %231 = memref.load %arg5[%c37] : memref<328xf32, #tpu.memory_space<smem>>
    %232 = vector.broadcast %231 : f32 to vector<14x14xf32>
    %233 = arith.mulf %232, %230 : vector<14x14xf32>
    %234 = arith.addf %217, %233 : vector<14x14xf32>
    %c73 = arith.constant 73 : index
    %235 = memref.load %arg5[%c73] : memref<328xf32, #tpu.memory_space<smem>>
    %236 = vector.broadcast %235 : f32 to vector<14x14xf32>
    %237 = arith.mulf %236, %230 : vector<14x14xf32>
    %238 = arith.addf %221, %237 : vector<14x14xf32>
    %c109 = arith.constant 109 : index
    %239 = memref.load %arg5[%c109] : memref<328xf32, #tpu.memory_space<smem>>
    %240 = vector.broadcast %239 : f32 to vector<14x14xf32>
    %241 = arith.mulf %240, %230 : vector<14x14xf32>
    %242 = arith.addf %225, %241 : vector<14x14xf32>
    %c145 = arith.constant 145 : index
    %243 = memref.load %arg5[%c145] : memref<328xf32, #tpu.memory_space<smem>>
    %244 = vector.broadcast %243 : f32 to vector<14x14xf32>
    %245 = arith.mulf %244, %230 : vector<14x14xf32>
    %246 = arith.addf %229, %245 : vector<14x14xf32>
    %247 = vector.extract_strided_slice %140 {offsets = [2, 0], sizes = [14, 14], strides = [1, 1]} : vector<32x16xf32> to vector<14x14xf32>
    %c38 = arith.constant 38 : index
    %248 = memref.load %arg5[%c38] : memref<328xf32, #tpu.memory_space<smem>>
    %249 = vector.broadcast %248 : f32 to vector<14x14xf32>
    %250 = arith.mulf %249, %247 : vector<14x14xf32>
    %251 = arith.addf %234, %250 : vector<14x14xf32>
    %c74 = arith.constant 74 : index
    %252 = memref.load %arg5[%c74] : memref<328xf32, #tpu.memory_space<smem>>
    %253 = vector.broadcast %252 : f32 to vector<14x14xf32>
    %254 = arith.mulf %253, %247 : vector<14x14xf32>
    %255 = arith.addf %238, %254 : vector<14x14xf32>
    %c110 = arith.constant 110 : index
    %256 = memref.load %arg5[%c110] : memref<328xf32, #tpu.memory_space<smem>>
    %257 = vector.broadcast %256 : f32 to vector<14x14xf32>
    %258 = arith.mulf %257, %247 : vector<14x14xf32>
    %259 = arith.addf %242, %258 : vector<14x14xf32>
    %c146 = arith.constant 146 : index
    %260 = memref.load %arg5[%c146] : memref<328xf32, #tpu.memory_space<smem>>
    %261 = vector.broadcast %260 : f32 to vector<14x14xf32>
    %262 = arith.mulf %261, %247 : vector<14x14xf32>
    %263 = arith.addf %246, %262 : vector<14x14xf32>
    %264 = vector.extract_strided_slice %140 {offsets = [2, 1], sizes = [14, 14], strides = [1, 1]} : vector<32x16xf32> to vector<14x14xf32>
    %c39 = arith.constant 39 : index
    %265 = memref.load %arg5[%c39] : memref<328xf32, #tpu.memory_space<smem>>
    %266 = vector.broadcast %265 : f32 to vector<14x14xf32>
    %267 = arith.mulf %266, %264 : vector<14x14xf32>
    %268 = arith.addf %251, %267 : vector<14x14xf32>
    %c75 = arith.constant 75 : index
    %269 = memref.load %arg5[%c75] : memref<328xf32, #tpu.memory_space<smem>>
    %270 = vector.broadcast %269 : f32 to vector<14x14xf32>
    %271 = arith.mulf %270, %264 : vector<14x14xf32>
    %272 = arith.addf %255, %271 : vector<14x14xf32>
    %c111 = arith.constant 111 : index
    %273 = memref.load %arg5[%c111] : memref<328xf32, #tpu.memory_space<smem>>
    %274 = vector.broadcast %273 : f32 to vector<14x14xf32>
    %275 = arith.mulf %274, %264 : vector<14x14xf32>
    %276 = arith.addf %259, %275 : vector<14x14xf32>
    %c147 = arith.constant 147 : index
    %277 = memref.load %arg5[%c147] : memref<328xf32, #tpu.memory_space<smem>>
    %278 = vector.broadcast %277 : f32 to vector<14x14xf32>
    %279 = arith.mulf %278, %264 : vector<14x14xf32>
    %280 = arith.addf %263, %279 : vector<14x14xf32>
    %281 = vector.extract_strided_slice %140 {offsets = [2, 2], sizes = [14, 14], strides = [1, 1]} : vector<32x16xf32> to vector<14x14xf32>
    %c40 = arith.constant 40 : index
    %282 = memref.load %arg5[%c40] : memref<328xf32, #tpu.memory_space<smem>>
    %283 = vector.broadcast %282 : f32 to vector<14x14xf32>
    %284 = arith.mulf %283, %281 : vector<14x14xf32>
    %285 = arith.addf %268, %284 : vector<14x14xf32>
    %c76 = arith.constant 76 : index
    %286 = memref.load %arg5[%c76] : memref<328xf32, #tpu.memory_space<smem>>
    %287 = vector.broadcast %286 : f32 to vector<14x14xf32>
    %288 = arith.mulf %287, %281 : vector<14x14xf32>
    %289 = arith.addf %272, %288 : vector<14x14xf32>
    %c112 = arith.constant 112 : index
    %290 = memref.load %arg5[%c112] : memref<328xf32, #tpu.memory_space<smem>>
    %291 = vector.broadcast %290 : f32 to vector<14x14xf32>
    %292 = arith.mulf %291, %281 : vector<14x14xf32>
    %293 = arith.addf %276, %292 : vector<14x14xf32>
    %c148 = arith.constant 148 : index
    %294 = memref.load %arg5[%c148] : memref<328xf32, #tpu.memory_space<smem>>
    %295 = vector.broadcast %294 : f32 to vector<14x14xf32>
    %296 = arith.mulf %295, %281 : vector<14x14xf32>
    %297 = arith.addf %280, %296 : vector<14x14xf32>
    %298 = vector.extract_strided_slice %140 {offsets = [16, 0], sizes = [14, 14], strides = [1, 1]} : vector<32x16xf32> to vector<14x14xf32>
    %c41 = arith.constant 41 : index
    %299 = memref.load %arg5[%c41] : memref<328xf32, #tpu.memory_space<smem>>
    %300 = vector.broadcast %299 : f32 to vector<14x14xf32>
    %301 = arith.mulf %300, %298 : vector<14x14xf32>
    %302 = arith.addf %285, %301 : vector<14x14xf32>
    %c77 = arith.constant 77 : index
    %303 = memref.load %arg5[%c77] : memref<328xf32, #tpu.memory_space<smem>>
    %304 = vector.broadcast %303 : f32 to vector<14x14xf32>
    %305 = arith.mulf %304, %298 : vector<14x14xf32>
    %306 = arith.addf %289, %305 : vector<14x14xf32>
    %c113 = arith.constant 113 : index
    %307 = memref.load %arg5[%c113] : memref<328xf32, #tpu.memory_space<smem>>
    %308 = vector.broadcast %307 : f32 to vector<14x14xf32>
    %309 = arith.mulf %308, %298 : vector<14x14xf32>
    %310 = arith.addf %293, %309 : vector<14x14xf32>
    %c149 = arith.constant 149 : index
    %311 = memref.load %arg5[%c149] : memref<328xf32, #tpu.memory_space<smem>>
    %312 = vector.broadcast %311 : f32 to vector<14x14xf32>
    %313 = arith.mulf %312, %298 : vector<14x14xf32>
    %314 = arith.addf %297, %313 : vector<14x14xf32>
    %315 = vector.extract_strided_slice %140 {offsets = [16, 1], sizes = [14, 14], strides = [1, 1]} : vector<32x16xf32> to vector<14x14xf32>
    %c42 = arith.constant 42 : index
    %316 = memref.load %arg5[%c42] : memref<328xf32, #tpu.memory_space<smem>>
    %317 = vector.broadcast %316 : f32 to vector<14x14xf32>
    %318 = arith.mulf %317, %315 : vector<14x14xf32>
    %319 = arith.addf %302, %318 : vector<14x14xf32>
    %c78 = arith.constant 78 : index
    %320 = memref.load %arg5[%c78] : memref<328xf32, #tpu.memory_space<smem>>
    %321 = vector.broadcast %320 : f32 to vector<14x14xf32>
    %322 = arith.mulf %321, %315 : vector<14x14xf32>
    %323 = arith.addf %306, %322 : vector<14x14xf32>
    %c114 = arith.constant 114 : index
    %324 = memref.load %arg5[%c114] : memref<328xf32, #tpu.memory_space<smem>>
    %325 = vector.broadcast %324 : f32 to vector<14x14xf32>
    %326 = arith.mulf %325, %315 : vector<14x14xf32>
    %327 = arith.addf %310, %326 : vector<14x14xf32>
    %c150 = arith.constant 150 : index
    %328 = memref.load %arg5[%c150] : memref<328xf32, #tpu.memory_space<smem>>
    %329 = vector.broadcast %328 : f32 to vector<14x14xf32>
    %330 = arith.mulf %329, %315 : vector<14x14xf32>
    %331 = arith.addf %314, %330 : vector<14x14xf32>
    %332 = vector.extract_strided_slice %140 {offsets = [16, 2], sizes = [14, 14], strides = [1, 1]} : vector<32x16xf32> to vector<14x14xf32>
    %c43 = arith.constant 43 : index
    %333 = memref.load %arg5[%c43] : memref<328xf32, #tpu.memory_space<smem>>
    %334 = vector.broadcast %333 : f32 to vector<14x14xf32>
    %335 = arith.mulf %334, %332 : vector<14x14xf32>
    %336 = arith.addf %319, %335 : vector<14x14xf32>
    %c79 = arith.constant 79 : index
    %337 = memref.load %arg5[%c79] : memref<328xf32, #tpu.memory_space<smem>>
    %338 = vector.broadcast %337 : f32 to vector<14x14xf32>
    %339 = arith.mulf %338, %332 : vector<14x14xf32>
    %340 = arith.addf %323, %339 : vector<14x14xf32>
    %c115 = arith.constant 115 : index
    %341 = memref.load %arg5[%c115] : memref<328xf32, #tpu.memory_space<smem>>
    %342 = vector.broadcast %341 : f32 to vector<14x14xf32>
    %343 = arith.mulf %342, %332 : vector<14x14xf32>
    %344 = arith.addf %327, %343 : vector<14x14xf32>
    %c151 = arith.constant 151 : index
    %345 = memref.load %arg5[%c151] : memref<328xf32, #tpu.memory_space<smem>>
    %346 = vector.broadcast %345 : f32 to vector<14x14xf32>
    %347 = arith.mulf %346, %332 : vector<14x14xf32>
    %348 = arith.addf %331, %347 : vector<14x14xf32>
    %349 = vector.extract_strided_slice %140 {offsets = [17, 0], sizes = [14, 14], strides = [1, 1]} : vector<32x16xf32> to vector<14x14xf32>
    %c44 = arith.constant 44 : index
    %350 = memref.load %arg5[%c44] : memref<328xf32, #tpu.memory_space<smem>>
    %351 = vector.broadcast %350 : f32 to vector<14x14xf32>
    %352 = arith.mulf %351, %349 : vector<14x14xf32>
    %353 = arith.addf %336, %352 : vector<14x14xf32>
    %c80 = arith.constant 80 : index
    %354 = memref.load %arg5[%c80] : memref<328xf32, #tpu.memory_space<smem>>
    %355 = vector.broadcast %354 : f32 to vector<14x14xf32>
    %356 = arith.mulf %355, %349 : vector<14x14xf32>
    %357 = arith.addf %340, %356 : vector<14x14xf32>
    %c116 = arith.constant 116 : index
    %358 = memref.load %arg5[%c116] : memref<328xf32, #tpu.memory_space<smem>>
    %359 = vector.broadcast %358 : f32 to vector<14x14xf32>
    %360 = arith.mulf %359, %349 : vector<14x14xf32>
    %361 = arith.addf %344, %360 : vector<14x14xf32>
    %c152 = arith.constant 152 : index
    %362 = memref.load %arg5[%c152] : memref<328xf32, #tpu.memory_space<smem>>
    %363 = vector.broadcast %362 : f32 to vector<14x14xf32>
    %364 = arith.mulf %363, %349 : vector<14x14xf32>
    %365 = arith.addf %348, %364 : vector<14x14xf32>
    %366 = vector.extract_strided_slice %140 {offsets = [17, 1], sizes = [14, 14], strides = [1, 1]} : vector<32x16xf32> to vector<14x14xf32>
    %c45 = arith.constant 45 : index
    %367 = memref.load %arg5[%c45] : memref<328xf32, #tpu.memory_space<smem>>
    %368 = vector.broadcast %367 : f32 to vector<14x14xf32>
    %369 = arith.mulf %368, %366 : vector<14x14xf32>
    %370 = arith.addf %353, %369 : vector<14x14xf32>
    %c81 = arith.constant 81 : index
    %371 = memref.load %arg5[%c81] : memref<328xf32, #tpu.memory_space<smem>>
    %372 = vector.broadcast %371 : f32 to vector<14x14xf32>
    %373 = arith.mulf %372, %366 : vector<14x14xf32>
    %374 = arith.addf %357, %373 : vector<14x14xf32>
    %c117 = arith.constant 117 : index
    %375 = memref.load %arg5[%c117] : memref<328xf32, #tpu.memory_space<smem>>
    %376 = vector.broadcast %375 : f32 to vector<14x14xf32>
    %377 = arith.mulf %376, %366 : vector<14x14xf32>
    %378 = arith.addf %361, %377 : vector<14x14xf32>
    %c153 = arith.constant 153 : index
    %379 = memref.load %arg5[%c153] : memref<328xf32, #tpu.memory_space<smem>>
    %380 = vector.broadcast %379 : f32 to vector<14x14xf32>
    %381 = arith.mulf %380, %366 : vector<14x14xf32>
    %382 = arith.addf %365, %381 : vector<14x14xf32>
    %383 = vector.extract_strided_slice %140 {offsets = [17, 2], sizes = [14, 14], strides = [1, 1]} : vector<32x16xf32> to vector<14x14xf32>
    %c46 = arith.constant 46 : index
    %384 = memref.load %arg5[%c46] : memref<328xf32, #tpu.memory_space<smem>>
    %385 = vector.broadcast %384 : f32 to vector<14x14xf32>
    %386 = arith.mulf %385, %383 : vector<14x14xf32>
    %387 = arith.addf %370, %386 : vector<14x14xf32>
    %c82 = arith.constant 82 : index
    %388 = memref.load %arg5[%c82] : memref<328xf32, #tpu.memory_space<smem>>
    %389 = vector.broadcast %388 : f32 to vector<14x14xf32>
    %390 = arith.mulf %389, %383 : vector<14x14xf32>
    %391 = arith.addf %374, %390 : vector<14x14xf32>
    %c118 = arith.constant 118 : index
    %392 = memref.load %arg5[%c118] : memref<328xf32, #tpu.memory_space<smem>>
    %393 = vector.broadcast %392 : f32 to vector<14x14xf32>
    %394 = arith.mulf %393, %383 : vector<14x14xf32>
    %395 = arith.addf %378, %394 : vector<14x14xf32>
    %c154 = arith.constant 154 : index
    %396 = memref.load %arg5[%c154] : memref<328xf32, #tpu.memory_space<smem>>
    %397 = vector.broadcast %396 : f32 to vector<14x14xf32>
    %398 = arith.mulf %397, %383 : vector<14x14xf32>
    %399 = arith.addf %382, %398 : vector<14x14xf32>
    %400 = vector.extract_strided_slice %140 {offsets = [18, 0], sizes = [14, 14], strides = [1, 1]} : vector<32x16xf32> to vector<14x14xf32>
    %c47 = arith.constant 47 : index
    %401 = memref.load %arg5[%c47] : memref<328xf32, #tpu.memory_space<smem>>
    %402 = vector.broadcast %401 : f32 to vector<14x14xf32>
    %403 = arith.mulf %402, %400 : vector<14x14xf32>
    %404 = arith.addf %387, %403 : vector<14x14xf32>
    %c83 = arith.constant 83 : index
    %405 = memref.load %arg5[%c83] : memref<328xf32, #tpu.memory_space<smem>>
    %406 = vector.broadcast %405 : f32 to vector<14x14xf32>
    %407 = arith.mulf %406, %400 : vector<14x14xf32>
    %408 = arith.addf %391, %407 : vector<14x14xf32>
    %c119 = arith.constant 119 : index
    %409 = memref.load %arg5[%c119] : memref<328xf32, #tpu.memory_space<smem>>
    %410 = vector.broadcast %409 : f32 to vector<14x14xf32>
    %411 = arith.mulf %410, %400 : vector<14x14xf32>
    %412 = arith.addf %395, %411 : vector<14x14xf32>
    %c155 = arith.constant 155 : index
    %413 = memref.load %arg5[%c155] : memref<328xf32, #tpu.memory_space<smem>>
    %414 = vector.broadcast %413 : f32 to vector<14x14xf32>
    %415 = arith.mulf %414, %400 : vector<14x14xf32>
    %416 = arith.addf %399, %415 : vector<14x14xf32>
    %417 = vector.extract_strided_slice %140 {offsets = [18, 1], sizes = [14, 14], strides = [1, 1]} : vector<32x16xf32> to vector<14x14xf32>
    %c48 = arith.constant 48 : index
    %418 = memref.load %arg5[%c48] : memref<328xf32, #tpu.memory_space<smem>>
    %419 = vector.broadcast %418 : f32 to vector<14x14xf32>
    %420 = arith.mulf %419, %417 : vector<14x14xf32>
    %421 = arith.addf %404, %420 : vector<14x14xf32>
    %c84 = arith.constant 84 : index
    %422 = memref.load %arg5[%c84] : memref<328xf32, #tpu.memory_space<smem>>
    %423 = vector.broadcast %422 : f32 to vector<14x14xf32>
    %424 = arith.mulf %423, %417 : vector<14x14xf32>
    %425 = arith.addf %408, %424 : vector<14x14xf32>
    %c120 = arith.constant 120 : index
    %426 = memref.load %arg5[%c120] : memref<328xf32, #tpu.memory_space<smem>>
    %427 = vector.broadcast %426 : f32 to vector<14x14xf32>
    %428 = arith.mulf %427, %417 : vector<14x14xf32>
    %429 = arith.addf %412, %428 : vector<14x14xf32>
    %c156 = arith.constant 156 : index
    %430 = memref.load %arg5[%c156] : memref<328xf32, #tpu.memory_space<smem>>
    %431 = vector.broadcast %430 : f32 to vector<14x14xf32>
    %432 = arith.mulf %431, %417 : vector<14x14xf32>
    %433 = arith.addf %416, %432 : vector<14x14xf32>
    %434 = vector.extract_strided_slice %140 {offsets = [18, 2], sizes = [14, 14], strides = [1, 1]} : vector<32x16xf32> to vector<14x14xf32>
    %c49 = arith.constant 49 : index
    %435 = memref.load %arg5[%c49] : memref<328xf32, #tpu.memory_space<smem>>
    %436 = vector.broadcast %435 : f32 to vector<14x14xf32>
    %437 = arith.mulf %436, %434 : vector<14x14xf32>
    %438 = arith.addf %421, %437 : vector<14x14xf32>
    %c85 = arith.constant 85 : index
    %439 = memref.load %arg5[%c85] : memref<328xf32, #tpu.memory_space<smem>>
    %440 = vector.broadcast %439 : f32 to vector<14x14xf32>
    %441 = arith.mulf %440, %434 : vector<14x14xf32>
    %442 = arith.addf %425, %441 : vector<14x14xf32>
    %c121 = arith.constant 121 : index
    %443 = memref.load %arg5[%c121] : memref<328xf32, #tpu.memory_space<smem>>
    %444 = vector.broadcast %443 : f32 to vector<14x14xf32>
    %445 = arith.mulf %444, %434 : vector<14x14xf32>
    %446 = arith.addf %429, %445 : vector<14x14xf32>
    %c157 = arith.constant 157 : index
    %447 = memref.load %arg5[%c157] : memref<328xf32, #tpu.memory_space<smem>>
    %448 = vector.broadcast %447 : f32 to vector<14x14xf32>
    %449 = arith.mulf %448, %434 : vector<14x14xf32>
    %450 = arith.addf %433, %449 : vector<14x14xf32>
    %c0_31 = arith.constant 0 : index
    %c0_32 = arith.constant 0 : index
    %c2_33 = arith.constant 2 : index
    %c2_34 = arith.constant 2 : index
    %451 = vector.load %arg2[%c0_31, %c0_32, %c2_33, %c2_34] : memref<1x2x21x21xf32, #tpu.memory_space<vmem>>, vector<1x1x14x14xf32>
    %452 = vector.shape_cast %451 : vector<1x1x14x14xf32> to vector<14x14xf32>
    %c50 = arith.constant 50 : index
    %453 = memref.load %arg5[%c50] : memref<328xf32, #tpu.memory_space<smem>>
    %454 = vector.broadcast %453 : f32 to vector<14x14xf32>
    %455 = arith.mulf %454, %452 : vector<14x14xf32>
    %456 = arith.addf %438, %455 : vector<14x14xf32>
    %c86 = arith.constant 86 : index
    %457 = memref.load %arg5[%c86] : memref<328xf32, #tpu.memory_space<smem>>
    %458 = vector.broadcast %457 : f32 to vector<14x14xf32>
    %459 = arith.mulf %458, %452 : vector<14x14xf32>
    %460 = arith.addf %442, %459 : vector<14x14xf32>
    %c122 = arith.constant 122 : index
    %461 = memref.load %arg5[%c122] : memref<328xf32, #tpu.memory_space<smem>>
    %462 = vector.broadcast %461 : f32 to vector<14x14xf32>
    %463 = arith.mulf %462, %452 : vector<14x14xf32>
    %464 = arith.addf %446, %463 : vector<14x14xf32>
    %c158 = arith.constant 158 : index
    %465 = memref.load %arg5[%c158] : memref<328xf32, #tpu.memory_space<smem>>
    %466 = vector.broadcast %465 : f32 to vector<14x14xf32>
    %467 = arith.mulf %466, %452 : vector<14x14xf32>
    %468 = arith.addf %450, %467 : vector<14x14xf32>
    %c0_35 = arith.constant 0 : index
    %c0_36 = arith.constant 0 : index
    %c2_37 = arith.constant 2 : index
    %c3_38 = arith.constant 3 : index
    %469 = vector.load %arg2[%c0_35, %c0_36, %c2_37, %c3_38] : memref<1x2x21x21xf32, #tpu.memory_space<vmem>>, vector<1x1x14x14xf32>
    %470 = vector.shape_cast %469 : vector<1x1x14x14xf32> to vector<14x14xf32>
    %c51 = arith.constant 51 : index
    %471 = memref.load %arg5[%c51] : memref<328xf32, #tpu.memory_space<smem>>
    %472 = vector.broadcast %471 : f32 to vector<14x14xf32>
    %473 = arith.mulf %472, %470 : vector<14x14xf32>
    %474 = arith.addf %456, %473 : vector<14x14xf32>
    %c87 = arith.constant 87 : index
    %475 = memref.load %arg5[%c87] : memref<328xf32, #tpu.memory_space<smem>>
    %476 = vector.broadcast %475 : f32 to vector<14x14xf32>
    %477 = arith.mulf %476, %470 : vector<14x14xf32>
    %478 = arith.addf %460, %477 : vector<14x14xf32>
    %c123 = arith.constant 123 : index
    %479 = memref.load %arg5[%c123] : memref<328xf32, #tpu.memory_space<smem>>
    %480 = vector.broadcast %479 : f32 to vector<14x14xf32>
    %481 = arith.mulf %480, %470 : vector<14x14xf32>
    %482 = arith.addf %464, %481 : vector<14x14xf32>
    %c159 = arith.constant 159 : index
    %483 = memref.load %arg5[%c159] : memref<328xf32, #tpu.memory_space<smem>>
    %484 = vector.broadcast %483 : f32 to vector<14x14xf32>
    %485 = arith.mulf %484, %470 : vector<14x14xf32>
    %486 = arith.addf %468, %485 : vector<14x14xf32>
    %c0_39 = arith.constant 0 : index
    %c0_40 = arith.constant 0 : index
    %c2_41 = arith.constant 2 : index
    %c4_42 = arith.constant 4 : index
    %487 = vector.load %arg2[%c0_39, %c0_40, %c2_41, %c4_42] : memref<1x2x21x21xf32, #tpu.memory_space<vmem>>, vector<1x1x14x14xf32>
    %488 = vector.shape_cast %487 : vector<1x1x14x14xf32> to vector<14x14xf32>
    %c52 = arith.constant 52 : index
    %489 = memref.load %arg5[%c52] : memref<328xf32, #tpu.memory_space<smem>>
    %490 = vector.broadcast %489 : f32 to vector<14x14xf32>
    %491 = arith.mulf %490, %488 : vector<14x14xf32>
    %492 = arith.addf %474, %491 : vector<14x14xf32>
    %c88 = arith.constant 88 : index
    %493 = memref.load %arg5[%c88] : memref<328xf32, #tpu.memory_space<smem>>
    %494 = vector.broadcast %493 : f32 to vector<14x14xf32>
    %495 = arith.mulf %494, %488 : vector<14x14xf32>
    %496 = arith.addf %478, %495 : vector<14x14xf32>
    %c124 = arith.constant 124 : index
    %497 = memref.load %arg5[%c124] : memref<328xf32, #tpu.memory_space<smem>>
    %498 = vector.broadcast %497 : f32 to vector<14x14xf32>
    %499 = arith.mulf %498, %488 : vector<14x14xf32>
    %500 = arith.addf %482, %499 : vector<14x14xf32>
    %c160 = arith.constant 160 : index
    %501 = memref.load %arg5[%c160] : memref<328xf32, #tpu.memory_space<smem>>
    %502 = vector.broadcast %501 : f32 to vector<14x14xf32>
    %503 = arith.mulf %502, %488 : vector<14x14xf32>
    %504 = arith.addf %486, %503 : vector<14x14xf32>
    %c0_43 = arith.constant 0 : index
    %c0_44 = arith.constant 0 : index
    %c3_45 = arith.constant 3 : index
    %c2_46 = arith.constant 2 : index
    %505 = vector.load %arg2[%c0_43, %c0_44, %c3_45, %c2_46] : memref<1x2x21x21xf32, #tpu.memory_space<vmem>>, vector<1x1x14x14xf32>
    %506 = vector.shape_cast %505 : vector<1x1x14x14xf32> to vector<14x14xf32>
    %c53 = arith.constant 53 : index
    %507 = memref.load %arg5[%c53] : memref<328xf32, #tpu.memory_space<smem>>
    %508 = vector.broadcast %507 : f32 to vector<14x14xf32>
    %509 = arith.mulf %508, %506 : vector<14x14xf32>
    %510 = arith.addf %492, %509 : vector<14x14xf32>
    %c89 = arith.constant 89 : index
    %511 = memref.load %arg5[%c89] : memref<328xf32, #tpu.memory_space<smem>>
    %512 = vector.broadcast %511 : f32 to vector<14x14xf32>
    %513 = arith.mulf %512, %506 : vector<14x14xf32>
    %514 = arith.addf %496, %513 : vector<14x14xf32>
    %c125 = arith.constant 125 : index
    %515 = memref.load %arg5[%c125] : memref<328xf32, #tpu.memory_space<smem>>
    %516 = vector.broadcast %515 : f32 to vector<14x14xf32>
    %517 = arith.mulf %516, %506 : vector<14x14xf32>
    %518 = arith.addf %500, %517 : vector<14x14xf32>
    %c161 = arith.constant 161 : index
    %519 = memref.load %arg5[%c161] : memref<328xf32, #tpu.memory_space<smem>>
    %520 = vector.broadcast %519 : f32 to vector<14x14xf32>
    %521 = arith.mulf %520, %506 : vector<14x14xf32>
    %522 = arith.addf %504, %521 : vector<14x14xf32>
    %c0_47 = arith.constant 0 : index
    %c0_48 = arith.constant 0 : index
    %c3_49 = arith.constant 3 : index
    %c3_50 = arith.constant 3 : index
    %523 = vector.load %arg2[%c0_47, %c0_48, %c3_49, %c3_50] : memref<1x2x21x21xf32, #tpu.memory_space<vmem>>, vector<1x1x14x14xf32>
    %524 = vector.shape_cast %523 : vector<1x1x14x14xf32> to vector<14x14xf32>
    %c54 = arith.constant 54 : index
    %525 = memref.load %arg5[%c54] : memref<328xf32, #tpu.memory_space<smem>>
    %526 = vector.broadcast %525 : f32 to vector<14x14xf32>
    %527 = arith.mulf %526, %524 : vector<14x14xf32>
    %528 = arith.addf %510, %527 : vector<14x14xf32>
    %c90 = arith.constant 90 : index
    %529 = memref.load %arg5[%c90] : memref<328xf32, #tpu.memory_space<smem>>
    %530 = vector.broadcast %529 : f32 to vector<14x14xf32>
    %531 = arith.mulf %530, %524 : vector<14x14xf32>
    %532 = arith.addf %514, %531 : vector<14x14xf32>
    %c126 = arith.constant 126 : index
    %533 = memref.load %arg5[%c126] : memref<328xf32, #tpu.memory_space<smem>>
    %534 = vector.broadcast %533 : f32 to vector<14x14xf32>
    %535 = arith.mulf %534, %524 : vector<14x14xf32>
    %536 = arith.addf %518, %535 : vector<14x14xf32>
    %c162 = arith.constant 162 : index
    %537 = memref.load %arg5[%c162] : memref<328xf32, #tpu.memory_space<smem>>
    %538 = vector.broadcast %537 : f32 to vector<14x14xf32>
    %539 = arith.mulf %538, %524 : vector<14x14xf32>
    %540 = arith.addf %522, %539 : vector<14x14xf32>
    %c0_51 = arith.constant 0 : index
    %c0_52 = arith.constant 0 : index
    %c3_53 = arith.constant 3 : index
    %c4_54 = arith.constant 4 : index
    %541 = vector.load %arg2[%c0_51, %c0_52, %c3_53, %c4_54] : memref<1x2x21x21xf32, #tpu.memory_space<vmem>>, vector<1x1x14x14xf32>
    %542 = vector.shape_cast %541 : vector<1x1x14x14xf32> to vector<14x14xf32>
    %c55 = arith.constant 55 : index
    %543 = memref.load %arg5[%c55] : memref<328xf32, #tpu.memory_space<smem>>
    %544 = vector.broadcast %543 : f32 to vector<14x14xf32>
    %545 = arith.mulf %544, %542 : vector<14x14xf32>
    %546 = arith.addf %528, %545 : vector<14x14xf32>
    %c91 = arith.constant 91 : index
    %547 = memref.load %arg5[%c91] : memref<328xf32, #tpu.memory_space<smem>>
    %548 = vector.broadcast %547 : f32 to vector<14x14xf32>
    %549 = arith.mulf %548, %542 : vector<14x14xf32>
    %550 = arith.addf %532, %549 : vector<14x14xf32>
    %c127 = arith.constant 127 : index
    %551 = memref.load %arg5[%c127] : memref<328xf32, #tpu.memory_space<smem>>
    %552 = vector.broadcast %551 : f32 to vector<14x14xf32>
    %553 = arith.mulf %552, %542 : vector<14x14xf32>
    %554 = arith.addf %536, %553 : vector<14x14xf32>
    %c163 = arith.constant 163 : index
    %555 = memref.load %arg5[%c163] : memref<328xf32, #tpu.memory_space<smem>>
    %556 = vector.broadcast %555 : f32 to vector<14x14xf32>
    %557 = arith.mulf %556, %542 : vector<14x14xf32>
    %558 = arith.addf %540, %557 : vector<14x14xf32>
    %c0_55 = arith.constant 0 : index
    %c0_56 = arith.constant 0 : index
    %c4_57 = arith.constant 4 : index
    %c2_58 = arith.constant 2 : index
    %559 = vector.load %arg2[%c0_55, %c0_56, %c4_57, %c2_58] : memref<1x2x21x21xf32, #tpu.memory_space<vmem>>, vector<1x1x14x14xf32>
    %560 = vector.shape_cast %559 : vector<1x1x14x14xf32> to vector<14x14xf32>
    %c56 = arith.constant 56 : index
    %561 = memref.load %arg5[%c56] : memref<328xf32, #tpu.memory_space<smem>>
    %562 = vector.broadcast %561 : f32 to vector<14x14xf32>
    %563 = arith.mulf %562, %560 : vector<14x14xf32>
    %564 = arith.addf %546, %563 : vector<14x14xf32>
    %c92 = arith.constant 92 : index
    %565 = memref.load %arg5[%c92] : memref<328xf32, #tpu.memory_space<smem>>
    %566 = vector.broadcast %565 : f32 to vector<14x14xf32>
    %567 = arith.mulf %566, %560 : vector<14x14xf32>
    %568 = arith.addf %550, %567 : vector<14x14xf32>
    %c128 = arith.constant 128 : index
    %569 = memref.load %arg5[%c128] : memref<328xf32, #tpu.memory_space<smem>>
    %570 = vector.broadcast %569 : f32 to vector<14x14xf32>
    %571 = arith.mulf %570, %560 : vector<14x14xf32>
    %572 = arith.addf %554, %571 : vector<14x14xf32>
    %c164 = arith.constant 164 : index
    %573 = memref.load %arg5[%c164] : memref<328xf32, #tpu.memory_space<smem>>
    %574 = vector.broadcast %573 : f32 to vector<14x14xf32>
    %575 = arith.mulf %574, %560 : vector<14x14xf32>
    %576 = arith.addf %558, %575 : vector<14x14xf32>
    %c0_59 = arith.constant 0 : index
    %c0_60 = arith.constant 0 : index
    %c4_61 = arith.constant 4 : index
    %c3_62 = arith.constant 3 : index
    %577 = vector.load %arg2[%c0_59, %c0_60, %c4_61, %c3_62] : memref<1x2x21x21xf32, #tpu.memory_space<vmem>>, vector<1x1x14x14xf32>
    %578 = vector.shape_cast %577 : vector<1x1x14x14xf32> to vector<14x14xf32>
    %c57 = arith.constant 57 : index
    %579 = memref.load %arg5[%c57] : memref<328xf32, #tpu.memory_space<smem>>
    %580 = vector.broadcast %579 : f32 to vector<14x14xf32>
    %581 = arith.mulf %580, %578 : vector<14x14xf32>
    %582 = arith.addf %564, %581 : vector<14x14xf32>
    %c93 = arith.constant 93 : index
    %583 = memref.load %arg5[%c93] : memref<328xf32, #tpu.memory_space<smem>>
    %584 = vector.broadcast %583 : f32 to vector<14x14xf32>
    %585 = arith.mulf %584, %578 : vector<14x14xf32>
    %586 = arith.addf %568, %585 : vector<14x14xf32>
    %c129 = arith.constant 129 : index
    %587 = memref.load %arg5[%c129] : memref<328xf32, #tpu.memory_space<smem>>
    %588 = vector.broadcast %587 : f32 to vector<14x14xf32>
    %589 = arith.mulf %588, %578 : vector<14x14xf32>
    %590 = arith.addf %572, %589 : vector<14x14xf32>
    %c165 = arith.constant 165 : index
    %591 = memref.load %arg5[%c165] : memref<328xf32, #tpu.memory_space<smem>>
    %592 = vector.broadcast %591 : f32 to vector<14x14xf32>
    %593 = arith.mulf %592, %578 : vector<14x14xf32>
    %594 = arith.addf %576, %593 : vector<14x14xf32>
    %c0_63 = arith.constant 0 : index
    %c0_64 = arith.constant 0 : index
    %c4_65 = arith.constant 4 : index
    %c4_66 = arith.constant 4 : index
    %595 = vector.load %arg2[%c0_63, %c0_64, %c4_65, %c4_66] : memref<1x2x21x21xf32, #tpu.memory_space<vmem>>, vector<1x1x14x14xf32>
    %596 = vector.shape_cast %595 : vector<1x1x14x14xf32> to vector<14x14xf32>
    %c58 = arith.constant 58 : index
    %597 = memref.load %arg5[%c58] : memref<328xf32, #tpu.memory_space<smem>>
    %598 = vector.broadcast %597 : f32 to vector<14x14xf32>
    %599 = arith.mulf %598, %596 : vector<14x14xf32>
    %600 = arith.addf %582, %599 : vector<14x14xf32>
    %c94 = arith.constant 94 : index
    %601 = memref.load %arg5[%c94] : memref<328xf32, #tpu.memory_space<smem>>
    %602 = vector.broadcast %601 : f32 to vector<14x14xf32>
    %603 = arith.mulf %602, %596 : vector<14x14xf32>
    %604 = arith.addf %586, %603 : vector<14x14xf32>
    %c130 = arith.constant 130 : index
    %605 = memref.load %arg5[%c130] : memref<328xf32, #tpu.memory_space<smem>>
    %606 = vector.broadcast %605 : f32 to vector<14x14xf32>
    %607 = arith.mulf %606, %596 : vector<14x14xf32>
    %608 = arith.addf %590, %607 : vector<14x14xf32>
    %c166 = arith.constant 166 : index
    %609 = memref.load %arg5[%c166] : memref<328xf32, #tpu.memory_space<smem>>
    %610 = vector.broadcast %609 : f32 to vector<14x14xf32>
    %611 = arith.mulf %610, %596 : vector<14x14xf32>
    %612 = arith.addf %594, %611 : vector<14x14xf32>
    %c0_67 = arith.constant 0 : index
    %c1_68 = arith.constant 1 : index
    %c2_69 = arith.constant 2 : index
    %c2_70 = arith.constant 2 : index
    %613 = vector.load %arg2[%c0_67, %c1_68, %c2_69, %c2_70] : memref<1x2x21x21xf32, #tpu.memory_space<vmem>>, vector<1x1x14x14xf32>
    %614 = vector.shape_cast %613 : vector<1x1x14x14xf32> to vector<14x14xf32>
    %c59 = arith.constant 59 : index
    %615 = memref.load %arg5[%c59] : memref<328xf32, #tpu.memory_space<smem>>
    %616 = vector.broadcast %615 : f32 to vector<14x14xf32>
    %617 = arith.mulf %616, %614 : vector<14x14xf32>
    %618 = arith.addf %600, %617 : vector<14x14xf32>
    %c95 = arith.constant 95 : index
    %619 = memref.load %arg5[%c95] : memref<328xf32, #tpu.memory_space<smem>>
    %620 = vector.broadcast %619 : f32 to vector<14x14xf32>
    %621 = arith.mulf %620, %614 : vector<14x14xf32>
    %622 = arith.addf %604, %621 : vector<14x14xf32>
    %c131 = arith.constant 131 : index
    %623 = memref.load %arg5[%c131] : memref<328xf32, #tpu.memory_space<smem>>
    %624 = vector.broadcast %623 : f32 to vector<14x14xf32>
    %625 = arith.mulf %624, %614 : vector<14x14xf32>
    %626 = arith.addf %608, %625 : vector<14x14xf32>
    %c167 = arith.constant 167 : index
    %627 = memref.load %arg5[%c167] : memref<328xf32, #tpu.memory_space<smem>>
    %628 = vector.broadcast %627 : f32 to vector<14x14xf32>
    %629 = arith.mulf %628, %614 : vector<14x14xf32>
    %630 = arith.addf %612, %629 : vector<14x14xf32>
    %c0_71 = arith.constant 0 : index
    %c1_72 = arith.constant 1 : index
    %c2_73 = arith.constant 2 : index
    %c3_74 = arith.constant 3 : index
    %631 = vector.load %arg2[%c0_71, %c1_72, %c2_73, %c3_74] : memref<1x2x21x21xf32, #tpu.memory_space<vmem>>, vector<1x1x14x14xf32>
    %632 = vector.shape_cast %631 : vector<1x1x14x14xf32> to vector<14x14xf32>
    %c60 = arith.constant 60 : index
    %633 = memref.load %arg5[%c60] : memref<328xf32, #tpu.memory_space<smem>>
    %634 = vector.broadcast %633 : f32 to vector<14x14xf32>
    %635 = arith.mulf %634, %632 : vector<14x14xf32>
    %636 = arith.addf %618, %635 : vector<14x14xf32>
    %c96 = arith.constant 96 : index
    %637 = memref.load %arg5[%c96] : memref<328xf32, #tpu.memory_space<smem>>
    %638 = vector.broadcast %637 : f32 to vector<14x14xf32>
    %639 = arith.mulf %638, %632 : vector<14x14xf32>
    %640 = arith.addf %622, %639 : vector<14x14xf32>
    %c132 = arith.constant 132 : index
    %641 = memref.load %arg5[%c132] : memref<328xf32, #tpu.memory_space<smem>>
    %642 = vector.broadcast %641 : f32 to vector<14x14xf32>
    %643 = arith.mulf %642, %632 : vector<14x14xf32>
    %644 = arith.addf %626, %643 : vector<14x14xf32>
    %c168 = arith.constant 168 : index
    %645 = memref.load %arg5[%c168] : memref<328xf32, #tpu.memory_space<smem>>
    %646 = vector.broadcast %645 : f32 to vector<14x14xf32>
    %647 = arith.mulf %646, %632 : vector<14x14xf32>
    %648 = arith.addf %630, %647 : vector<14x14xf32>
    %c0_75 = arith.constant 0 : index
    %c1_76 = arith.constant 1 : index
    %c2_77 = arith.constant 2 : index
    %c4_78 = arith.constant 4 : index
    %649 = vector.load %arg2[%c0_75, %c1_76, %c2_77, %c4_78] : memref<1x2x21x21xf32, #tpu.memory_space<vmem>>, vector<1x1x14x14xf32>
    %650 = vector.shape_cast %649 : vector<1x1x14x14xf32> to vector<14x14xf32>
    %c61 = arith.constant 61 : index
    %651 = memref.load %arg5[%c61] : memref<328xf32, #tpu.memory_space<smem>>
    %652 = vector.broadcast %651 : f32 to vector<14x14xf32>
    %653 = arith.mulf %652, %650 : vector<14x14xf32>
    %654 = arith.addf %636, %653 : vector<14x14xf32>
    %c97 = arith.constant 97 : index
    %655 = memref.load %arg5[%c97] : memref<328xf32, #tpu.memory_space<smem>>
    %656 = vector.broadcast %655 : f32 to vector<14x14xf32>
    %657 = arith.mulf %656, %650 : vector<14x14xf32>
    %658 = arith.addf %640, %657 : vector<14x14xf32>
    %c133 = arith.constant 133 : index
    %659 = memref.load %arg5[%c133] : memref<328xf32, #tpu.memory_space<smem>>
    %660 = vector.broadcast %659 : f32 to vector<14x14xf32>
    %661 = arith.mulf %660, %650 : vector<14x14xf32>
    %662 = arith.addf %644, %661 : vector<14x14xf32>
    %c169 = arith.constant 169 : index
    %663 = memref.load %arg5[%c169] : memref<328xf32, #tpu.memory_space<smem>>
    %664 = vector.broadcast %663 : f32 to vector<14x14xf32>
    %665 = arith.mulf %664, %650 : vector<14x14xf32>
    %666 = arith.addf %648, %665 : vector<14x14xf32>
    %c0_79 = arith.constant 0 : index
    %c1_80 = arith.constant 1 : index
    %c3_81 = arith.constant 3 : index
    %c2_82 = arith.constant 2 : index
    %667 = vector.load %arg2[%c0_79, %c1_80, %c3_81, %c2_82] : memref<1x2x21x21xf32, #tpu.memory_space<vmem>>, vector<1x1x14x14xf32>
    %668 = vector.shape_cast %667 : vector<1x1x14x14xf32> to vector<14x14xf32>
    %c62 = arith.constant 62 : index
    %669 = memref.load %arg5[%c62] : memref<328xf32, #tpu.memory_space<smem>>
    %670 = vector.broadcast %669 : f32 to vector<14x14xf32>
    %671 = arith.mulf %670, %668 : vector<14x14xf32>
    %672 = arith.addf %654, %671 : vector<14x14xf32>
    %c98 = arith.constant 98 : index
    %673 = memref.load %arg5[%c98] : memref<328xf32, #tpu.memory_space<smem>>
    %674 = vector.broadcast %673 : f32 to vector<14x14xf32>
    %675 = arith.mulf %674, %668 : vector<14x14xf32>
    %676 = arith.addf %658, %675 : vector<14x14xf32>
    %c134 = arith.constant 134 : index
    %677 = memref.load %arg5[%c134] : memref<328xf32, #tpu.memory_space<smem>>
    %678 = vector.broadcast %677 : f32 to vector<14x14xf32>
    %679 = arith.mulf %678, %668 : vector<14x14xf32>
    %680 = arith.addf %662, %679 : vector<14x14xf32>
    %c170 = arith.constant 170 : index
    %681 = memref.load %arg5[%c170] : memref<328xf32, #tpu.memory_space<smem>>
    %682 = vector.broadcast %681 : f32 to vector<14x14xf32>
    %683 = arith.mulf %682, %668 : vector<14x14xf32>
    %684 = arith.addf %666, %683 : vector<14x14xf32>
    %c0_83 = arith.constant 0 : index
    %c1_84 = arith.constant 1 : index
    %c3_85 = arith.constant 3 : index
    %c3_86 = arith.constant 3 : index
    %685 = vector.load %arg2[%c0_83, %c1_84, %c3_85, %c3_86] : memref<1x2x21x21xf32, #tpu.memory_space<vmem>>, vector<1x1x14x14xf32>
    %686 = vector.shape_cast %685 : vector<1x1x14x14xf32> to vector<14x14xf32>
    %c63 = arith.constant 63 : index
    %687 = memref.load %arg5[%c63] : memref<328xf32, #tpu.memory_space<smem>>
    %688 = vector.broadcast %687 : f32 to vector<14x14xf32>
    %689 = arith.mulf %688, %686 : vector<14x14xf32>
    %690 = arith.addf %672, %689 : vector<14x14xf32>
    %c99 = arith.constant 99 : index
    %691 = memref.load %arg5[%c99] : memref<328xf32, #tpu.memory_space<smem>>
    %692 = vector.broadcast %691 : f32 to vector<14x14xf32>
    %693 = arith.mulf %692, %686 : vector<14x14xf32>
    %694 = arith.addf %676, %693 : vector<14x14xf32>
    %c135 = arith.constant 135 : index
    %695 = memref.load %arg5[%c135] : memref<328xf32, #tpu.memory_space<smem>>
    %696 = vector.broadcast %695 : f32 to vector<14x14xf32>
    %697 = arith.mulf %696, %686 : vector<14x14xf32>
    %698 = arith.addf %680, %697 : vector<14x14xf32>
    %c171 = arith.constant 171 : index
    %699 = memref.load %arg5[%c171] : memref<328xf32, #tpu.memory_space<smem>>
    %700 = vector.broadcast %699 : f32 to vector<14x14xf32>
    %701 = arith.mulf %700, %686 : vector<14x14xf32>
    %702 = arith.addf %684, %701 : vector<14x14xf32>
    %c0_87 = arith.constant 0 : index
    %c1_88 = arith.constant 1 : index
    %c3_89 = arith.constant 3 : index
    %c4_90 = arith.constant 4 : index
    %703 = vector.load %arg2[%c0_87, %c1_88, %c3_89, %c4_90] : memref<1x2x21x21xf32, #tpu.memory_space<vmem>>, vector<1x1x14x14xf32>
    %704 = vector.shape_cast %703 : vector<1x1x14x14xf32> to vector<14x14xf32>
    %c64 = arith.constant 64 : index
    %705 = memref.load %arg5[%c64] : memref<328xf32, #tpu.memory_space<smem>>
    %706 = vector.broadcast %705 : f32 to vector<14x14xf32>
    %707 = arith.mulf %706, %704 : vector<14x14xf32>
    %708 = arith.addf %690, %707 : vector<14x14xf32>
    %c100 = arith.constant 100 : index
    %709 = memref.load %arg5[%c100] : memref<328xf32, #tpu.memory_space<smem>>
    %710 = vector.broadcast %709 : f32 to vector<14x14xf32>
    %711 = arith.mulf %710, %704 : vector<14x14xf32>
    %712 = arith.addf %694, %711 : vector<14x14xf32>
    %c136 = arith.constant 136 : index
    %713 = memref.load %arg5[%c136] : memref<328xf32, #tpu.memory_space<smem>>
    %714 = vector.broadcast %713 : f32 to vector<14x14xf32>
    %715 = arith.mulf %714, %704 : vector<14x14xf32>
    %716 = arith.addf %698, %715 : vector<14x14xf32>
    %c172 = arith.constant 172 : index
    %717 = memref.load %arg5[%c172] : memref<328xf32, #tpu.memory_space<smem>>
    %718 = vector.broadcast %717 : f32 to vector<14x14xf32>
    %719 = arith.mulf %718, %704 : vector<14x14xf32>
    %720 = arith.addf %702, %719 : vector<14x14xf32>
    %c0_91 = arith.constant 0 : index
    %c1_92 = arith.constant 1 : index
    %c4_93 = arith.constant 4 : index
    %c2_94 = arith.constant 2 : index
    %721 = vector.load %arg2[%c0_91, %c1_92, %c4_93, %c2_94] : memref<1x2x21x21xf32, #tpu.memory_space<vmem>>, vector<1x1x14x14xf32>
    %722 = vector.shape_cast %721 : vector<1x1x14x14xf32> to vector<14x14xf32>
    %c65 = arith.constant 65 : index
    %723 = memref.load %arg5[%c65] : memref<328xf32, #tpu.memory_space<smem>>
    %724 = vector.broadcast %723 : f32 to vector<14x14xf32>
    %725 = arith.mulf %724, %722 : vector<14x14xf32>
    %726 = arith.addf %708, %725 : vector<14x14xf32>
    %c101 = arith.constant 101 : index
    %727 = memref.load %arg5[%c101] : memref<328xf32, #tpu.memory_space<smem>>
    %728 = vector.broadcast %727 : f32 to vector<14x14xf32>
    %729 = arith.mulf %728, %722 : vector<14x14xf32>
    %730 = arith.addf %712, %729 : vector<14x14xf32>
    %c137 = arith.constant 137 : index
    %731 = memref.load %arg5[%c137] : memref<328xf32, #tpu.memory_space<smem>>
    %732 = vector.broadcast %731 : f32 to vector<14x14xf32>
    %733 = arith.mulf %732, %722 : vector<14x14xf32>
    %734 = arith.addf %716, %733 : vector<14x14xf32>
    %c173 = arith.constant 173 : index
    %735 = memref.load %arg5[%c173] : memref<328xf32, #tpu.memory_space<smem>>
    %736 = vector.broadcast %735 : f32 to vector<14x14xf32>
    %737 = arith.mulf %736, %722 : vector<14x14xf32>
    %738 = arith.addf %720, %737 : vector<14x14xf32>
    %c0_95 = arith.constant 0 : index
    %c1_96 = arith.constant 1 : index
    %c4_97 = arith.constant 4 : index
    %c3_98 = arith.constant 3 : index
    %739 = vector.load %arg2[%c0_95, %c1_96, %c4_97, %c3_98] : memref<1x2x21x21xf32, #tpu.memory_space<vmem>>, vector<1x1x14x14xf32>
    %740 = vector.shape_cast %739 : vector<1x1x14x14xf32> to vector<14x14xf32>
    %c66 = arith.constant 66 : index
    %741 = memref.load %arg5[%c66] : memref<328xf32, #tpu.memory_space<smem>>
    %742 = vector.broadcast %741 : f32 to vector<14x14xf32>
    %743 = arith.mulf %742, %740 : vector<14x14xf32>
    %744 = arith.addf %726, %743 : vector<14x14xf32>
    %c102 = arith.constant 102 : index
    %745 = memref.load %arg5[%c102] : memref<328xf32, #tpu.memory_space<smem>>
    %746 = vector.broadcast %745 : f32 to vector<14x14xf32>
    %747 = arith.mulf %746, %740 : vector<14x14xf32>
    %748 = arith.addf %730, %747 : vector<14x14xf32>
    %c138 = arith.constant 138 : index
    %749 = memref.load %arg5[%c138] : memref<328xf32, #tpu.memory_space<smem>>
    %750 = vector.broadcast %749 : f32 to vector<14x14xf32>
    %751 = arith.mulf %750, %740 : vector<14x14xf32>
    %752 = arith.addf %734, %751 : vector<14x14xf32>
    %c174 = arith.constant 174 : index
    %753 = memref.load %arg5[%c174] : memref<328xf32, #tpu.memory_space<smem>>
    %754 = vector.broadcast %753 : f32 to vector<14x14xf32>
    %755 = arith.mulf %754, %740 : vector<14x14xf32>
    %756 = arith.addf %738, %755 : vector<14x14xf32>
    %c0_99 = arith.constant 0 : index
    %c1_100 = arith.constant 1 : index
    %c4_101 = arith.constant 4 : index
    %c4_102 = arith.constant 4 : index
    %757 = vector.load %arg2[%c0_99, %c1_100, %c4_101, %c4_102] : memref<1x2x21x21xf32, #tpu.memory_space<vmem>>, vector<1x1x14x14xf32>
    %758 = vector.shape_cast %757 : vector<1x1x14x14xf32> to vector<14x14xf32>
    %c67 = arith.constant 67 : index
    %759 = memref.load %arg5[%c67] : memref<328xf32, #tpu.memory_space<smem>>
    %760 = vector.broadcast %759 : f32 to vector<14x14xf32>
    %761 = arith.mulf %760, %758 : vector<14x14xf32>
    %762 = arith.addf %744, %761 : vector<14x14xf32>
    %c103 = arith.constant 103 : index
    %763 = memref.load %arg5[%c103] : memref<328xf32, #tpu.memory_space<smem>>
    %764 = vector.broadcast %763 : f32 to vector<14x14xf32>
    %765 = arith.mulf %764, %758 : vector<14x14xf32>
    %766 = arith.addf %748, %765 : vector<14x14xf32>
    %c139 = arith.constant 139 : index
    %767 = memref.load %arg5[%c139] : memref<328xf32, #tpu.memory_space<smem>>
    %768 = vector.broadcast %767 : f32 to vector<14x14xf32>
    %769 = arith.mulf %768, %758 : vector<14x14xf32>
    %770 = arith.addf %752, %769 : vector<14x14xf32>
    %c175 = arith.constant 175 : index
    %771 = memref.load %arg5[%c175] : memref<328xf32, #tpu.memory_space<smem>>
    %772 = vector.broadcast %771 : f32 to vector<14x14xf32>
    %773 = arith.mulf %772, %758 : vector<14x14xf32>
    %774 = arith.addf %756, %773 : vector<14x14xf32>
    %c176 = arith.constant 176 : index
    %775 = memref.load %arg5[%c176] : memref<328xf32, #tpu.memory_space<smem>>
    %776 = vector.broadcast %775 : f32 to vector<14x14xf32>
    %777 = arith.addf %762, %776 : vector<14x14xf32>
    %cst_103 = arith.constant 0.000000e+00 : f32
    %778 = vector.broadcast %cst_103 : f32 to vector<14x14xf32>
    %779 = arith.maximumf %777, %778 : vector<14x14xf32>
    %c177 = arith.constant 177 : index
    %780 = memref.load %arg5[%c177] : memref<328xf32, #tpu.memory_space<smem>>
    %781 = vector.broadcast %780 : f32 to vector<14x14xf32>
    %782 = arith.addf %766, %781 : vector<14x14xf32>
    %cst_104 = arith.constant 0.000000e+00 : f32
    %783 = vector.broadcast %cst_104 : f32 to vector<14x14xf32>
    %784 = arith.maximumf %782, %783 : vector<14x14xf32>
    %c178 = arith.constant 178 : index
    %785 = memref.load %arg5[%c178] : memref<328xf32, #tpu.memory_space<smem>>
    %786 = vector.broadcast %785 : f32 to vector<14x14xf32>
    %787 = arith.addf %770, %786 : vector<14x14xf32>
    %cst_105 = arith.constant 0.000000e+00 : f32
    %788 = vector.broadcast %cst_105 : f32 to vector<14x14xf32>
    %789 = arith.maximumf %787, %788 : vector<14x14xf32>
    %c179 = arith.constant 179 : index
    %790 = memref.load %arg5[%c179] : memref<328xf32, #tpu.memory_space<smem>>
    %791 = vector.broadcast %790 : f32 to vector<14x14xf32>
    %792 = arith.addf %774, %791 : vector<14x14xf32>
    %cst_106 = arith.constant 0.000000e+00 : f32
    %793 = vector.broadcast %cst_106 : f32 to vector<14x14xf32>
    %794 = arith.maximumf %792, %793 : vector<14x14xf32>
    %cst_107 = arith.constant 0.000000e+00 : f32
    %795 = vector.broadcast %cst_107 : f32 to vector<12x12xf32>
    %cst_108 = arith.constant 0.000000e+00 : f32
    %796 = vector.broadcast %cst_108 : f32 to vector<12x12xf32>
    %cst_109 = arith.constant 0.000000e+00 : f32
    %797 = vector.broadcast %cst_109 : f32 to vector<12x12xf32>
    %cst_110 = arith.constant 0.000000e+00 : f32
    %798 = vector.broadcast %cst_110 : f32 to vector<12x12xf32>
    %799 = vector.extract_strided_slice %779 {offsets = [0, 0], sizes = [12, 12], strides = [1, 1]} : vector<14x14xf32> to vector<12x12xf32>
    %c180 = arith.constant 180 : index
    %800 = memref.load %arg5[%c180] : memref<328xf32, #tpu.memory_space<smem>>
    %801 = vector.broadcast %800 : f32 to vector<12x12xf32>
    %802 = arith.mulf %801, %799 : vector<12x12xf32>
    %803 = arith.addf %795, %802 : vector<12x12xf32>
    %c216 = arith.constant 216 : index
    %804 = memref.load %arg5[%c216] : memref<328xf32, #tpu.memory_space<smem>>
    %805 = vector.broadcast %804 : f32 to vector<12x12xf32>
    %806 = arith.mulf %805, %799 : vector<12x12xf32>
    %807 = arith.addf %796, %806 : vector<12x12xf32>
    %c252 = arith.constant 252 : index
    %808 = memref.load %arg5[%c252] : memref<328xf32, #tpu.memory_space<smem>>
    %809 = vector.broadcast %808 : f32 to vector<12x12xf32>
    %810 = arith.mulf %809, %799 : vector<12x12xf32>
    %811 = arith.addf %797, %810 : vector<12x12xf32>
    %c288 = arith.constant 288 : index
    %812 = memref.load %arg5[%c288] : memref<328xf32, #tpu.memory_space<smem>>
    %813 = vector.broadcast %812 : f32 to vector<12x12xf32>
    %814 = arith.mulf %813, %799 : vector<12x12xf32>
    %815 = arith.addf %798, %814 : vector<12x12xf32>
    %816 = vector.extract_strided_slice %779 {offsets = [0, 1], sizes = [12, 12], strides = [1, 1]} : vector<14x14xf32> to vector<12x12xf32>
    %c181 = arith.constant 181 : index
    %817 = memref.load %arg5[%c181] : memref<328xf32, #tpu.memory_space<smem>>
    %818 = vector.broadcast %817 : f32 to vector<12x12xf32>
    %819 = arith.mulf %818, %816 : vector<12x12xf32>
    %820 = arith.addf %803, %819 : vector<12x12xf32>
    %c217 = arith.constant 217 : index
    %821 = memref.load %arg5[%c217] : memref<328xf32, #tpu.memory_space<smem>>
    %822 = vector.broadcast %821 : f32 to vector<12x12xf32>
    %823 = arith.mulf %822, %816 : vector<12x12xf32>
    %824 = arith.addf %807, %823 : vector<12x12xf32>
    %c253 = arith.constant 253 : index
    %825 = memref.load %arg5[%c253] : memref<328xf32, #tpu.memory_space<smem>>
    %826 = vector.broadcast %825 : f32 to vector<12x12xf32>
    %827 = arith.mulf %826, %816 : vector<12x12xf32>
    %828 = arith.addf %811, %827 : vector<12x12xf32>
    %c289 = arith.constant 289 : index
    %829 = memref.load %arg5[%c289] : memref<328xf32, #tpu.memory_space<smem>>
    %830 = vector.broadcast %829 : f32 to vector<12x12xf32>
    %831 = arith.mulf %830, %816 : vector<12x12xf32>
    %832 = arith.addf %815, %831 : vector<12x12xf32>
    %833 = vector.extract_strided_slice %779 {offsets = [0, 2], sizes = [12, 12], strides = [1, 1]} : vector<14x14xf32> to vector<12x12xf32>
    %c182 = arith.constant 182 : index
    %834 = memref.load %arg5[%c182] : memref<328xf32, #tpu.memory_space<smem>>
    %835 = vector.broadcast %834 : f32 to vector<12x12xf32>
    %836 = arith.mulf %835, %833 : vector<12x12xf32>
    %837 = arith.addf %820, %836 : vector<12x12xf32>
    %c218 = arith.constant 218 : index
    %838 = memref.load %arg5[%c218] : memref<328xf32, #tpu.memory_space<smem>>
    %839 = vector.broadcast %838 : f32 to vector<12x12xf32>
    %840 = arith.mulf %839, %833 : vector<12x12xf32>
    %841 = arith.addf %824, %840 : vector<12x12xf32>
    %c254 = arith.constant 254 : index
    %842 = memref.load %arg5[%c254] : memref<328xf32, #tpu.memory_space<smem>>
    %843 = vector.broadcast %842 : f32 to vector<12x12xf32>
    %844 = arith.mulf %843, %833 : vector<12x12xf32>
    %845 = arith.addf %828, %844 : vector<12x12xf32>
    %c290 = arith.constant 290 : index
    %846 = memref.load %arg5[%c290] : memref<328xf32, #tpu.memory_space<smem>>
    %847 = vector.broadcast %846 : f32 to vector<12x12xf32>
    %848 = arith.mulf %847, %833 : vector<12x12xf32>
    %849 = arith.addf %832, %848 : vector<12x12xf32>
    %850 = vector.extract_strided_slice %779 {offsets = [1, 0], sizes = [12, 12], strides = [1, 1]} : vector<14x14xf32> to vector<12x12xf32>
    %c183 = arith.constant 183 : index
    %851 = memref.load %arg5[%c183] : memref<328xf32, #tpu.memory_space<smem>>
    %852 = vector.broadcast %851 : f32 to vector<12x12xf32>
    %853 = arith.mulf %852, %850 : vector<12x12xf32>
    %854 = arith.addf %837, %853 : vector<12x12xf32>
    %c219 = arith.constant 219 : index
    %855 = memref.load %arg5[%c219] : memref<328xf32, #tpu.memory_space<smem>>
    %856 = vector.broadcast %855 : f32 to vector<12x12xf32>
    %857 = arith.mulf %856, %850 : vector<12x12xf32>
    %858 = arith.addf %841, %857 : vector<12x12xf32>
    %c255 = arith.constant 255 : index
    %859 = memref.load %arg5[%c255] : memref<328xf32, #tpu.memory_space<smem>>
    %860 = vector.broadcast %859 : f32 to vector<12x12xf32>
    %861 = arith.mulf %860, %850 : vector<12x12xf32>
    %862 = arith.addf %845, %861 : vector<12x12xf32>
    %c291 = arith.constant 291 : index
    %863 = memref.load %arg5[%c291] : memref<328xf32, #tpu.memory_space<smem>>
    %864 = vector.broadcast %863 : f32 to vector<12x12xf32>
    %865 = arith.mulf %864, %850 : vector<12x12xf32>
    %866 = arith.addf %849, %865 : vector<12x12xf32>
    %867 = vector.extract_strided_slice %779 {offsets = [1, 1], sizes = [12, 12], strides = [1, 1]} : vector<14x14xf32> to vector<12x12xf32>
    %c184 = arith.constant 184 : index
    %868 = memref.load %arg5[%c184] : memref<328xf32, #tpu.memory_space<smem>>
    %869 = vector.broadcast %868 : f32 to vector<12x12xf32>
    %870 = arith.mulf %869, %867 : vector<12x12xf32>
    %871 = arith.addf %854, %870 : vector<12x12xf32>
    %c220 = arith.constant 220 : index
    %872 = memref.load %arg5[%c220] : memref<328xf32, #tpu.memory_space<smem>>
    %873 = vector.broadcast %872 : f32 to vector<12x12xf32>
    %874 = arith.mulf %873, %867 : vector<12x12xf32>
    %875 = arith.addf %858, %874 : vector<12x12xf32>
    %c256 = arith.constant 256 : index
    %876 = memref.load %arg5[%c256] : memref<328xf32, #tpu.memory_space<smem>>
    %877 = vector.broadcast %876 : f32 to vector<12x12xf32>
    %878 = arith.mulf %877, %867 : vector<12x12xf32>
    %879 = arith.addf %862, %878 : vector<12x12xf32>
    %c292 = arith.constant 292 : index
    %880 = memref.load %arg5[%c292] : memref<328xf32, #tpu.memory_space<smem>>
    %881 = vector.broadcast %880 : f32 to vector<12x12xf32>
    %882 = arith.mulf %881, %867 : vector<12x12xf32>
    %883 = arith.addf %866, %882 : vector<12x12xf32>
    %884 = vector.extract_strided_slice %779 {offsets = [1, 2], sizes = [12, 12], strides = [1, 1]} : vector<14x14xf32> to vector<12x12xf32>
    %c185 = arith.constant 185 : index
    %885 = memref.load %arg5[%c185] : memref<328xf32, #tpu.memory_space<smem>>
    %886 = vector.broadcast %885 : f32 to vector<12x12xf32>
    %887 = arith.mulf %886, %884 : vector<12x12xf32>
    %888 = arith.addf %871, %887 : vector<12x12xf32>
    %c221 = arith.constant 221 : index
    %889 = memref.load %arg5[%c221] : memref<328xf32, #tpu.memory_space<smem>>
    %890 = vector.broadcast %889 : f32 to vector<12x12xf32>
    %891 = arith.mulf %890, %884 : vector<12x12xf32>
    %892 = arith.addf %875, %891 : vector<12x12xf32>
    %c257 = arith.constant 257 : index
    %893 = memref.load %arg5[%c257] : memref<328xf32, #tpu.memory_space<smem>>
    %894 = vector.broadcast %893 : f32 to vector<12x12xf32>
    %895 = arith.mulf %894, %884 : vector<12x12xf32>
    %896 = arith.addf %879, %895 : vector<12x12xf32>
    %c293 = arith.constant 293 : index
    %897 = memref.load %arg5[%c293] : memref<328xf32, #tpu.memory_space<smem>>
    %898 = vector.broadcast %897 : f32 to vector<12x12xf32>
    %899 = arith.mulf %898, %884 : vector<12x12xf32>
    %900 = arith.addf %883, %899 : vector<12x12xf32>
    %901 = vector.extract_strided_slice %779 {offsets = [2, 0], sizes = [12, 12], strides = [1, 1]} : vector<14x14xf32> to vector<12x12xf32>
    %c186 = arith.constant 186 : index
    %902 = memref.load %arg5[%c186] : memref<328xf32, #tpu.memory_space<smem>>
    %903 = vector.broadcast %902 : f32 to vector<12x12xf32>
    %904 = arith.mulf %903, %901 : vector<12x12xf32>
    %905 = arith.addf %888, %904 : vector<12x12xf32>
    %c222 = arith.constant 222 : index
    %906 = memref.load %arg5[%c222] : memref<328xf32, #tpu.memory_space<smem>>
    %907 = vector.broadcast %906 : f32 to vector<12x12xf32>
    %908 = arith.mulf %907, %901 : vector<12x12xf32>
    %909 = arith.addf %892, %908 : vector<12x12xf32>
    %c258 = arith.constant 258 : index
    %910 = memref.load %arg5[%c258] : memref<328xf32, #tpu.memory_space<smem>>
    %911 = vector.broadcast %910 : f32 to vector<12x12xf32>
    %912 = arith.mulf %911, %901 : vector<12x12xf32>
    %913 = arith.addf %896, %912 : vector<12x12xf32>
    %c294 = arith.constant 294 : index
    %914 = memref.load %arg5[%c294] : memref<328xf32, #tpu.memory_space<smem>>
    %915 = vector.broadcast %914 : f32 to vector<12x12xf32>
    %916 = arith.mulf %915, %901 : vector<12x12xf32>
    %917 = arith.addf %900, %916 : vector<12x12xf32>
    %918 = vector.extract_strided_slice %779 {offsets = [2, 1], sizes = [12, 12], strides = [1, 1]} : vector<14x14xf32> to vector<12x12xf32>
    %c187 = arith.constant 187 : index
    %919 = memref.load %arg5[%c187] : memref<328xf32, #tpu.memory_space<smem>>
    %920 = vector.broadcast %919 : f32 to vector<12x12xf32>
    %921 = arith.mulf %920, %918 : vector<12x12xf32>
    %922 = arith.addf %905, %921 : vector<12x12xf32>
    %c223 = arith.constant 223 : index
    %923 = memref.load %arg5[%c223] : memref<328xf32, #tpu.memory_space<smem>>
    %924 = vector.broadcast %923 : f32 to vector<12x12xf32>
    %925 = arith.mulf %924, %918 : vector<12x12xf32>
    %926 = arith.addf %909, %925 : vector<12x12xf32>
    %c259 = arith.constant 259 : index
    %927 = memref.load %arg5[%c259] : memref<328xf32, #tpu.memory_space<smem>>
    %928 = vector.broadcast %927 : f32 to vector<12x12xf32>
    %929 = arith.mulf %928, %918 : vector<12x12xf32>
    %930 = arith.addf %913, %929 : vector<12x12xf32>
    %c295 = arith.constant 295 : index
    %931 = memref.load %arg5[%c295] : memref<328xf32, #tpu.memory_space<smem>>
    %932 = vector.broadcast %931 : f32 to vector<12x12xf32>
    %933 = arith.mulf %932, %918 : vector<12x12xf32>
    %934 = arith.addf %917, %933 : vector<12x12xf32>
    %935 = vector.extract_strided_slice %779 {offsets = [2, 2], sizes = [12, 12], strides = [1, 1]} : vector<14x14xf32> to vector<12x12xf32>
    %c188 = arith.constant 188 : index
    %936 = memref.load %arg5[%c188] : memref<328xf32, #tpu.memory_space<smem>>
    %937 = vector.broadcast %936 : f32 to vector<12x12xf32>
    %938 = arith.mulf %937, %935 : vector<12x12xf32>
    %939 = arith.addf %922, %938 : vector<12x12xf32>
    %c224 = arith.constant 224 : index
    %940 = memref.load %arg5[%c224] : memref<328xf32, #tpu.memory_space<smem>>
    %941 = vector.broadcast %940 : f32 to vector<12x12xf32>
    %942 = arith.mulf %941, %935 : vector<12x12xf32>
    %943 = arith.addf %926, %942 : vector<12x12xf32>
    %c260 = arith.constant 260 : index
    %944 = memref.load %arg5[%c260] : memref<328xf32, #tpu.memory_space<smem>>
    %945 = vector.broadcast %944 : f32 to vector<12x12xf32>
    %946 = arith.mulf %945, %935 : vector<12x12xf32>
    %947 = arith.addf %930, %946 : vector<12x12xf32>
    %c296 = arith.constant 296 : index
    %948 = memref.load %arg5[%c296] : memref<328xf32, #tpu.memory_space<smem>>
    %949 = vector.broadcast %948 : f32 to vector<12x12xf32>
    %950 = arith.mulf %949, %935 : vector<12x12xf32>
    %951 = arith.addf %934, %950 : vector<12x12xf32>
    %952 = vector.extract_strided_slice %784 {offsets = [0, 0], sizes = [12, 12], strides = [1, 1]} : vector<14x14xf32> to vector<12x12xf32>
    %c189 = arith.constant 189 : index
    %953 = memref.load %arg5[%c189] : memref<328xf32, #tpu.memory_space<smem>>
    %954 = vector.broadcast %953 : f32 to vector<12x12xf32>
    %955 = arith.mulf %954, %952 : vector<12x12xf32>
    %956 = arith.addf %939, %955 : vector<12x12xf32>
    %c225 = arith.constant 225 : index
    %957 = memref.load %arg5[%c225] : memref<328xf32, #tpu.memory_space<smem>>
    %958 = vector.broadcast %957 : f32 to vector<12x12xf32>
    %959 = arith.mulf %958, %952 : vector<12x12xf32>
    %960 = arith.addf %943, %959 : vector<12x12xf32>
    %c261 = arith.constant 261 : index
    %961 = memref.load %arg5[%c261] : memref<328xf32, #tpu.memory_space<smem>>
    %962 = vector.broadcast %961 : f32 to vector<12x12xf32>
    %963 = arith.mulf %962, %952 : vector<12x12xf32>
    %964 = arith.addf %947, %963 : vector<12x12xf32>
    %c297 = arith.constant 297 : index
    %965 = memref.load %arg5[%c297] : memref<328xf32, #tpu.memory_space<smem>>
    %966 = vector.broadcast %965 : f32 to vector<12x12xf32>
    %967 = arith.mulf %966, %952 : vector<12x12xf32>
    %968 = arith.addf %951, %967 : vector<12x12xf32>
    %969 = vector.extract_strided_slice %784 {offsets = [0, 1], sizes = [12, 12], strides = [1, 1]} : vector<14x14xf32> to vector<12x12xf32>
    %c190 = arith.constant 190 : index
    %970 = memref.load %arg5[%c190] : memref<328xf32, #tpu.memory_space<smem>>
    %971 = vector.broadcast %970 : f32 to vector<12x12xf32>
    %972 = arith.mulf %971, %969 : vector<12x12xf32>
    %973 = arith.addf %956, %972 : vector<12x12xf32>
    %c226 = arith.constant 226 : index
    %974 = memref.load %arg5[%c226] : memref<328xf32, #tpu.memory_space<smem>>
    %975 = vector.broadcast %974 : f32 to vector<12x12xf32>
    %976 = arith.mulf %975, %969 : vector<12x12xf32>
    %977 = arith.addf %960, %976 : vector<12x12xf32>
    %c262 = arith.constant 262 : index
    %978 = memref.load %arg5[%c262] : memref<328xf32, #tpu.memory_space<smem>>
    %979 = vector.broadcast %978 : f32 to vector<12x12xf32>
    %980 = arith.mulf %979, %969 : vector<12x12xf32>
    %981 = arith.addf %964, %980 : vector<12x12xf32>
    %c298 = arith.constant 298 : index
    %982 = memref.load %arg5[%c298] : memref<328xf32, #tpu.memory_space<smem>>
    %983 = vector.broadcast %982 : f32 to vector<12x12xf32>
    %984 = arith.mulf %983, %969 : vector<12x12xf32>
    %985 = arith.addf %968, %984 : vector<12x12xf32>
    %986 = vector.extract_strided_slice %784 {offsets = [0, 2], sizes = [12, 12], strides = [1, 1]} : vector<14x14xf32> to vector<12x12xf32>
    %c191 = arith.constant 191 : index
    %987 = memref.load %arg5[%c191] : memref<328xf32, #tpu.memory_space<smem>>
    %988 = vector.broadcast %987 : f32 to vector<12x12xf32>
    %989 = arith.mulf %988, %986 : vector<12x12xf32>
    %990 = arith.addf %973, %989 : vector<12x12xf32>
    %c227 = arith.constant 227 : index
    %991 = memref.load %arg5[%c227] : memref<328xf32, #tpu.memory_space<smem>>
    %992 = vector.broadcast %991 : f32 to vector<12x12xf32>
    %993 = arith.mulf %992, %986 : vector<12x12xf32>
    %994 = arith.addf %977, %993 : vector<12x12xf32>
    %c263 = arith.constant 263 : index
    %995 = memref.load %arg5[%c263] : memref<328xf32, #tpu.memory_space<smem>>
    %996 = vector.broadcast %995 : f32 to vector<12x12xf32>
    %997 = arith.mulf %996, %986 : vector<12x12xf32>
    %998 = arith.addf %981, %997 : vector<12x12xf32>
    %c299 = arith.constant 299 : index
    %999 = memref.load %arg5[%c299] : memref<328xf32, #tpu.memory_space<smem>>
    %1000 = vector.broadcast %999 : f32 to vector<12x12xf32>
    %1001 = arith.mulf %1000, %986 : vector<12x12xf32>
    %1002 = arith.addf %985, %1001 : vector<12x12xf32>
    %1003 = vector.extract_strided_slice %784 {offsets = [1, 0], sizes = [12, 12], strides = [1, 1]} : vector<14x14xf32> to vector<12x12xf32>
    %c192 = arith.constant 192 : index
    %1004 = memref.load %arg5[%c192] : memref<328xf32, #tpu.memory_space<smem>>
    %1005 = vector.broadcast %1004 : f32 to vector<12x12xf32>
    %1006 = arith.mulf %1005, %1003 : vector<12x12xf32>
    %1007 = arith.addf %990, %1006 : vector<12x12xf32>
    %c228 = arith.constant 228 : index
    %1008 = memref.load %arg5[%c228] : memref<328xf32, #tpu.memory_space<smem>>
    %1009 = vector.broadcast %1008 : f32 to vector<12x12xf32>
    %1010 = arith.mulf %1009, %1003 : vector<12x12xf32>
    %1011 = arith.addf %994, %1010 : vector<12x12xf32>
    %c264 = arith.constant 264 : index
    %1012 = memref.load %arg5[%c264] : memref<328xf32, #tpu.memory_space<smem>>
    %1013 = vector.broadcast %1012 : f32 to vector<12x12xf32>
    %1014 = arith.mulf %1013, %1003 : vector<12x12xf32>
    %1015 = arith.addf %998, %1014 : vector<12x12xf32>
    %c300 = arith.constant 300 : index
    %1016 = memref.load %arg5[%c300] : memref<328xf32, #tpu.memory_space<smem>>
    %1017 = vector.broadcast %1016 : f32 to vector<12x12xf32>
    %1018 = arith.mulf %1017, %1003 : vector<12x12xf32>
    %1019 = arith.addf %1002, %1018 : vector<12x12xf32>
    %1020 = vector.extract_strided_slice %784 {offsets = [1, 1], sizes = [12, 12], strides = [1, 1]} : vector<14x14xf32> to vector<12x12xf32>
    %c193 = arith.constant 193 : index
    %1021 = memref.load %arg5[%c193] : memref<328xf32, #tpu.memory_space<smem>>
    %1022 = vector.broadcast %1021 : f32 to vector<12x12xf32>
    %1023 = arith.mulf %1022, %1020 : vector<12x12xf32>
    %1024 = arith.addf %1007, %1023 : vector<12x12xf32>
    %c229 = arith.constant 229 : index
    %1025 = memref.load %arg5[%c229] : memref<328xf32, #tpu.memory_space<smem>>
    %1026 = vector.broadcast %1025 : f32 to vector<12x12xf32>
    %1027 = arith.mulf %1026, %1020 : vector<12x12xf32>
    %1028 = arith.addf %1011, %1027 : vector<12x12xf32>
    %c265 = arith.constant 265 : index
    %1029 = memref.load %arg5[%c265] : memref<328xf32, #tpu.memory_space<smem>>
    %1030 = vector.broadcast %1029 : f32 to vector<12x12xf32>
    %1031 = arith.mulf %1030, %1020 : vector<12x12xf32>
    %1032 = arith.addf %1015, %1031 : vector<12x12xf32>
    %c301 = arith.constant 301 : index
    %1033 = memref.load %arg5[%c301] : memref<328xf32, #tpu.memory_space<smem>>
    %1034 = vector.broadcast %1033 : f32 to vector<12x12xf32>
    %1035 = arith.mulf %1034, %1020 : vector<12x12xf32>
    %1036 = arith.addf %1019, %1035 : vector<12x12xf32>
    %1037 = vector.extract_strided_slice %784 {offsets = [1, 2], sizes = [12, 12], strides = [1, 1]} : vector<14x14xf32> to vector<12x12xf32>
    %c194 = arith.constant 194 : index
    %1038 = memref.load %arg5[%c194] : memref<328xf32, #tpu.memory_space<smem>>
    %1039 = vector.broadcast %1038 : f32 to vector<12x12xf32>
    %1040 = arith.mulf %1039, %1037 : vector<12x12xf32>
    %1041 = arith.addf %1024, %1040 : vector<12x12xf32>
    %c230 = arith.constant 230 : index
    %1042 = memref.load %arg5[%c230] : memref<328xf32, #tpu.memory_space<smem>>
    %1043 = vector.broadcast %1042 : f32 to vector<12x12xf32>
    %1044 = arith.mulf %1043, %1037 : vector<12x12xf32>
    %1045 = arith.addf %1028, %1044 : vector<12x12xf32>
    %c266 = arith.constant 266 : index
    %1046 = memref.load %arg5[%c266] : memref<328xf32, #tpu.memory_space<smem>>
    %1047 = vector.broadcast %1046 : f32 to vector<12x12xf32>
    %1048 = arith.mulf %1047, %1037 : vector<12x12xf32>
    %1049 = arith.addf %1032, %1048 : vector<12x12xf32>
    %c302 = arith.constant 302 : index
    %1050 = memref.load %arg5[%c302] : memref<328xf32, #tpu.memory_space<smem>>
    %1051 = vector.broadcast %1050 : f32 to vector<12x12xf32>
    %1052 = arith.mulf %1051, %1037 : vector<12x12xf32>
    %1053 = arith.addf %1036, %1052 : vector<12x12xf32>
    %1054 = vector.extract_strided_slice %784 {offsets = [2, 0], sizes = [12, 12], strides = [1, 1]} : vector<14x14xf32> to vector<12x12xf32>
    %c195 = arith.constant 195 : index
    %1055 = memref.load %arg5[%c195] : memref<328xf32, #tpu.memory_space<smem>>
    %1056 = vector.broadcast %1055 : f32 to vector<12x12xf32>
    %1057 = arith.mulf %1056, %1054 : vector<12x12xf32>
    %1058 = arith.addf %1041, %1057 : vector<12x12xf32>
    %c231 = arith.constant 231 : index
    %1059 = memref.load %arg5[%c231] : memref<328xf32, #tpu.memory_space<smem>>
    %1060 = vector.broadcast %1059 : f32 to vector<12x12xf32>
    %1061 = arith.mulf %1060, %1054 : vector<12x12xf32>
    %1062 = arith.addf %1045, %1061 : vector<12x12xf32>
    %c267 = arith.constant 267 : index
    %1063 = memref.load %arg5[%c267] : memref<328xf32, #tpu.memory_space<smem>>
    %1064 = vector.broadcast %1063 : f32 to vector<12x12xf32>
    %1065 = arith.mulf %1064, %1054 : vector<12x12xf32>
    %1066 = arith.addf %1049, %1065 : vector<12x12xf32>
    %c303 = arith.constant 303 : index
    %1067 = memref.load %arg5[%c303] : memref<328xf32, #tpu.memory_space<smem>>
    %1068 = vector.broadcast %1067 : f32 to vector<12x12xf32>
    %1069 = arith.mulf %1068, %1054 : vector<12x12xf32>
    %1070 = arith.addf %1053, %1069 : vector<12x12xf32>
    %1071 = vector.extract_strided_slice %784 {offsets = [2, 1], sizes = [12, 12], strides = [1, 1]} : vector<14x14xf32> to vector<12x12xf32>
    %c196 = arith.constant 196 : index
    %1072 = memref.load %arg5[%c196] : memref<328xf32, #tpu.memory_space<smem>>
    %1073 = vector.broadcast %1072 : f32 to vector<12x12xf32>
    %1074 = arith.mulf %1073, %1071 : vector<12x12xf32>
    %1075 = arith.addf %1058, %1074 : vector<12x12xf32>
    %c232 = arith.constant 232 : index
    %1076 = memref.load %arg5[%c232] : memref<328xf32, #tpu.memory_space<smem>>
    %1077 = vector.broadcast %1076 : f32 to vector<12x12xf32>
    %1078 = arith.mulf %1077, %1071 : vector<12x12xf32>
    %1079 = arith.addf %1062, %1078 : vector<12x12xf32>
    %c268 = arith.constant 268 : index
    %1080 = memref.load %arg5[%c268] : memref<328xf32, #tpu.memory_space<smem>>
    %1081 = vector.broadcast %1080 : f32 to vector<12x12xf32>
    %1082 = arith.mulf %1081, %1071 : vector<12x12xf32>
    %1083 = arith.addf %1066, %1082 : vector<12x12xf32>
    %c304 = arith.constant 304 : index
    %1084 = memref.load %arg5[%c304] : memref<328xf32, #tpu.memory_space<smem>>
    %1085 = vector.broadcast %1084 : f32 to vector<12x12xf32>
    %1086 = arith.mulf %1085, %1071 : vector<12x12xf32>
    %1087 = arith.addf %1070, %1086 : vector<12x12xf32>
    %1088 = vector.extract_strided_slice %784 {offsets = [2, 2], sizes = [12, 12], strides = [1, 1]} : vector<14x14xf32> to vector<12x12xf32>
    %c197 = arith.constant 197 : index
    %1089 = memref.load %arg5[%c197] : memref<328xf32, #tpu.memory_space<smem>>
    %1090 = vector.broadcast %1089 : f32 to vector<12x12xf32>
    %1091 = arith.mulf %1090, %1088 : vector<12x12xf32>
    %1092 = arith.addf %1075, %1091 : vector<12x12xf32>
    %c233 = arith.constant 233 : index
    %1093 = memref.load %arg5[%c233] : memref<328xf32, #tpu.memory_space<smem>>
    %1094 = vector.broadcast %1093 : f32 to vector<12x12xf32>
    %1095 = arith.mulf %1094, %1088 : vector<12x12xf32>
    %1096 = arith.addf %1079, %1095 : vector<12x12xf32>
    %c269 = arith.constant 269 : index
    %1097 = memref.load %arg5[%c269] : memref<328xf32, #tpu.memory_space<smem>>
    %1098 = vector.broadcast %1097 : f32 to vector<12x12xf32>
    %1099 = arith.mulf %1098, %1088 : vector<12x12xf32>
    %1100 = arith.addf %1083, %1099 : vector<12x12xf32>
    %c305 = arith.constant 305 : index
    %1101 = memref.load %arg5[%c305] : memref<328xf32, #tpu.memory_space<smem>>
    %1102 = vector.broadcast %1101 : f32 to vector<12x12xf32>
    %1103 = arith.mulf %1102, %1088 : vector<12x12xf32>
    %1104 = arith.addf %1087, %1103 : vector<12x12xf32>
    %1105 = vector.extract_strided_slice %789 {offsets = [0, 0], sizes = [12, 12], strides = [1, 1]} : vector<14x14xf32> to vector<12x12xf32>
    %c198 = arith.constant 198 : index
    %1106 = memref.load %arg5[%c198] : memref<328xf32, #tpu.memory_space<smem>>
    %1107 = vector.broadcast %1106 : f32 to vector<12x12xf32>
    %1108 = arith.mulf %1107, %1105 : vector<12x12xf32>
    %1109 = arith.addf %1092, %1108 : vector<12x12xf32>
    %c234 = arith.constant 234 : index
    %1110 = memref.load %arg5[%c234] : memref<328xf32, #tpu.memory_space<smem>>
    %1111 = vector.broadcast %1110 : f32 to vector<12x12xf32>
    %1112 = arith.mulf %1111, %1105 : vector<12x12xf32>
    %1113 = arith.addf %1096, %1112 : vector<12x12xf32>
    %c270 = arith.constant 270 : index
    %1114 = memref.load %arg5[%c270] : memref<328xf32, #tpu.memory_space<smem>>
    %1115 = vector.broadcast %1114 : f32 to vector<12x12xf32>
    %1116 = arith.mulf %1115, %1105 : vector<12x12xf32>
    %1117 = arith.addf %1100, %1116 : vector<12x12xf32>
    %c306 = arith.constant 306 : index
    %1118 = memref.load %arg5[%c306] : memref<328xf32, #tpu.memory_space<smem>>
    %1119 = vector.broadcast %1118 : f32 to vector<12x12xf32>
    %1120 = arith.mulf %1119, %1105 : vector<12x12xf32>
    %1121 = arith.addf %1104, %1120 : vector<12x12xf32>
    %1122 = vector.extract_strided_slice %789 {offsets = [0, 1], sizes = [12, 12], strides = [1, 1]} : vector<14x14xf32> to vector<12x12xf32>
    %c199 = arith.constant 199 : index
    %1123 = memref.load %arg5[%c199] : memref<328xf32, #tpu.memory_space<smem>>
    %1124 = vector.broadcast %1123 : f32 to vector<12x12xf32>
    %1125 = arith.mulf %1124, %1122 : vector<12x12xf32>
    %1126 = arith.addf %1109, %1125 : vector<12x12xf32>
    %c235 = arith.constant 235 : index
    %1127 = memref.load %arg5[%c235] : memref<328xf32, #tpu.memory_space<smem>>
    %1128 = vector.broadcast %1127 : f32 to vector<12x12xf32>
    %1129 = arith.mulf %1128, %1122 : vector<12x12xf32>
    %1130 = arith.addf %1113, %1129 : vector<12x12xf32>
    %c271 = arith.constant 271 : index
    %1131 = memref.load %arg5[%c271] : memref<328xf32, #tpu.memory_space<smem>>
    %1132 = vector.broadcast %1131 : f32 to vector<12x12xf32>
    %1133 = arith.mulf %1132, %1122 : vector<12x12xf32>
    %1134 = arith.addf %1117, %1133 : vector<12x12xf32>
    %c307 = arith.constant 307 : index
    %1135 = memref.load %arg5[%c307] : memref<328xf32, #tpu.memory_space<smem>>
    %1136 = vector.broadcast %1135 : f32 to vector<12x12xf32>
    %1137 = arith.mulf %1136, %1122 : vector<12x12xf32>
    %1138 = arith.addf %1121, %1137 : vector<12x12xf32>
    %1139 = vector.extract_strided_slice %789 {offsets = [0, 2], sizes = [12, 12], strides = [1, 1]} : vector<14x14xf32> to vector<12x12xf32>
    %c200 = arith.constant 200 : index
    %1140 = memref.load %arg5[%c200] : memref<328xf32, #tpu.memory_space<smem>>
    %1141 = vector.broadcast %1140 : f32 to vector<12x12xf32>
    %1142 = arith.mulf %1141, %1139 : vector<12x12xf32>
    %1143 = arith.addf %1126, %1142 : vector<12x12xf32>
    %c236 = arith.constant 236 : index
    %1144 = memref.load %arg5[%c236] : memref<328xf32, #tpu.memory_space<smem>>
    %1145 = vector.broadcast %1144 : f32 to vector<12x12xf32>
    %1146 = arith.mulf %1145, %1139 : vector<12x12xf32>
    %1147 = arith.addf %1130, %1146 : vector<12x12xf32>
    %c272 = arith.constant 272 : index
    %1148 = memref.load %arg5[%c272] : memref<328xf32, #tpu.memory_space<smem>>
    %1149 = vector.broadcast %1148 : f32 to vector<12x12xf32>
    %1150 = arith.mulf %1149, %1139 : vector<12x12xf32>
    %1151 = arith.addf %1134, %1150 : vector<12x12xf32>
    %c308 = arith.constant 308 : index
    %1152 = memref.load %arg5[%c308] : memref<328xf32, #tpu.memory_space<smem>>
    %1153 = vector.broadcast %1152 : f32 to vector<12x12xf32>
    %1154 = arith.mulf %1153, %1139 : vector<12x12xf32>
    %1155 = arith.addf %1138, %1154 : vector<12x12xf32>
    %1156 = vector.extract_strided_slice %789 {offsets = [1, 0], sizes = [12, 12], strides = [1, 1]} : vector<14x14xf32> to vector<12x12xf32>
    %c201 = arith.constant 201 : index
    %1157 = memref.load %arg5[%c201] : memref<328xf32, #tpu.memory_space<smem>>
    %1158 = vector.broadcast %1157 : f32 to vector<12x12xf32>
    %1159 = arith.mulf %1158, %1156 : vector<12x12xf32>
    %1160 = arith.addf %1143, %1159 : vector<12x12xf32>
    %c237 = arith.constant 237 : index
    %1161 = memref.load %arg5[%c237] : memref<328xf32, #tpu.memory_space<smem>>
    %1162 = vector.broadcast %1161 : f32 to vector<12x12xf32>
    %1163 = arith.mulf %1162, %1156 : vector<12x12xf32>
    %1164 = arith.addf %1147, %1163 : vector<12x12xf32>
    %c273 = arith.constant 273 : index
    %1165 = memref.load %arg5[%c273] : memref<328xf32, #tpu.memory_space<smem>>
    %1166 = vector.broadcast %1165 : f32 to vector<12x12xf32>
    %1167 = arith.mulf %1166, %1156 : vector<12x12xf32>
    %1168 = arith.addf %1151, %1167 : vector<12x12xf32>
    %c309 = arith.constant 309 : index
    %1169 = memref.load %arg5[%c309] : memref<328xf32, #tpu.memory_space<smem>>
    %1170 = vector.broadcast %1169 : f32 to vector<12x12xf32>
    %1171 = arith.mulf %1170, %1156 : vector<12x12xf32>
    %1172 = arith.addf %1155, %1171 : vector<12x12xf32>
    %1173 = vector.extract_strided_slice %789 {offsets = [1, 1], sizes = [12, 12], strides = [1, 1]} : vector<14x14xf32> to vector<12x12xf32>
    %c202 = arith.constant 202 : index
    %1174 = memref.load %arg5[%c202] : memref<328xf32, #tpu.memory_space<smem>>
    %1175 = vector.broadcast %1174 : f32 to vector<12x12xf32>
    %1176 = arith.mulf %1175, %1173 : vector<12x12xf32>
    %1177 = arith.addf %1160, %1176 : vector<12x12xf32>
    %c238 = arith.constant 238 : index
    %1178 = memref.load %arg5[%c238] : memref<328xf32, #tpu.memory_space<smem>>
    %1179 = vector.broadcast %1178 : f32 to vector<12x12xf32>
    %1180 = arith.mulf %1179, %1173 : vector<12x12xf32>
    %1181 = arith.addf %1164, %1180 : vector<12x12xf32>
    %c274 = arith.constant 274 : index
    %1182 = memref.load %arg5[%c274] : memref<328xf32, #tpu.memory_space<smem>>
    %1183 = vector.broadcast %1182 : f32 to vector<12x12xf32>
    %1184 = arith.mulf %1183, %1173 : vector<12x12xf32>
    %1185 = arith.addf %1168, %1184 : vector<12x12xf32>
    %c310 = arith.constant 310 : index
    %1186 = memref.load %arg5[%c310] : memref<328xf32, #tpu.memory_space<smem>>
    %1187 = vector.broadcast %1186 : f32 to vector<12x12xf32>
    %1188 = arith.mulf %1187, %1173 : vector<12x12xf32>
    %1189 = arith.addf %1172, %1188 : vector<12x12xf32>
    %1190 = vector.extract_strided_slice %789 {offsets = [1, 2], sizes = [12, 12], strides = [1, 1]} : vector<14x14xf32> to vector<12x12xf32>
    %c203 = arith.constant 203 : index
    %1191 = memref.load %arg5[%c203] : memref<328xf32, #tpu.memory_space<smem>>
    %1192 = vector.broadcast %1191 : f32 to vector<12x12xf32>
    %1193 = arith.mulf %1192, %1190 : vector<12x12xf32>
    %1194 = arith.addf %1177, %1193 : vector<12x12xf32>
    %c239 = arith.constant 239 : index
    %1195 = memref.load %arg5[%c239] : memref<328xf32, #tpu.memory_space<smem>>
    %1196 = vector.broadcast %1195 : f32 to vector<12x12xf32>
    %1197 = arith.mulf %1196, %1190 : vector<12x12xf32>
    %1198 = arith.addf %1181, %1197 : vector<12x12xf32>
    %c275 = arith.constant 275 : index
    %1199 = memref.load %arg5[%c275] : memref<328xf32, #tpu.memory_space<smem>>
    %1200 = vector.broadcast %1199 : f32 to vector<12x12xf32>
    %1201 = arith.mulf %1200, %1190 : vector<12x12xf32>
    %1202 = arith.addf %1185, %1201 : vector<12x12xf32>
    %c311 = arith.constant 311 : index
    %1203 = memref.load %arg5[%c311] : memref<328xf32, #tpu.memory_space<smem>>
    %1204 = vector.broadcast %1203 : f32 to vector<12x12xf32>
    %1205 = arith.mulf %1204, %1190 : vector<12x12xf32>
    %1206 = arith.addf %1189, %1205 : vector<12x12xf32>
    %1207 = vector.extract_strided_slice %789 {offsets = [2, 0], sizes = [12, 12], strides = [1, 1]} : vector<14x14xf32> to vector<12x12xf32>
    %c204 = arith.constant 204 : index
    %1208 = memref.load %arg5[%c204] : memref<328xf32, #tpu.memory_space<smem>>
    %1209 = vector.broadcast %1208 : f32 to vector<12x12xf32>
    %1210 = arith.mulf %1209, %1207 : vector<12x12xf32>
    %1211 = arith.addf %1194, %1210 : vector<12x12xf32>
    %c240 = arith.constant 240 : index
    %1212 = memref.load %arg5[%c240] : memref<328xf32, #tpu.memory_space<smem>>
    %1213 = vector.broadcast %1212 : f32 to vector<12x12xf32>
    %1214 = arith.mulf %1213, %1207 : vector<12x12xf32>
    %1215 = arith.addf %1198, %1214 : vector<12x12xf32>
    %c276 = arith.constant 276 : index
    %1216 = memref.load %arg5[%c276] : memref<328xf32, #tpu.memory_space<smem>>
    %1217 = vector.broadcast %1216 : f32 to vector<12x12xf32>
    %1218 = arith.mulf %1217, %1207 : vector<12x12xf32>
    %1219 = arith.addf %1202, %1218 : vector<12x12xf32>
    %c312 = arith.constant 312 : index
    %1220 = memref.load %arg5[%c312] : memref<328xf32, #tpu.memory_space<smem>>
    %1221 = vector.broadcast %1220 : f32 to vector<12x12xf32>
    %1222 = arith.mulf %1221, %1207 : vector<12x12xf32>
    %1223 = arith.addf %1206, %1222 : vector<12x12xf32>
    %1224 = vector.extract_strided_slice %789 {offsets = [2, 1], sizes = [12, 12], strides = [1, 1]} : vector<14x14xf32> to vector<12x12xf32>
    %c205 = arith.constant 205 : index
    %1225 = memref.load %arg5[%c205] : memref<328xf32, #tpu.memory_space<smem>>
    %1226 = vector.broadcast %1225 : f32 to vector<12x12xf32>
    %1227 = arith.mulf %1226, %1224 : vector<12x12xf32>
    %1228 = arith.addf %1211, %1227 : vector<12x12xf32>
    %c241 = arith.constant 241 : index
    %1229 = memref.load %arg5[%c241] : memref<328xf32, #tpu.memory_space<smem>>
    %1230 = vector.broadcast %1229 : f32 to vector<12x12xf32>
    %1231 = arith.mulf %1230, %1224 : vector<12x12xf32>
    %1232 = arith.addf %1215, %1231 : vector<12x12xf32>
    %c277 = arith.constant 277 : index
    %1233 = memref.load %arg5[%c277] : memref<328xf32, #tpu.memory_space<smem>>
    %1234 = vector.broadcast %1233 : f32 to vector<12x12xf32>
    %1235 = arith.mulf %1234, %1224 : vector<12x12xf32>
    %1236 = arith.addf %1219, %1235 : vector<12x12xf32>
    %c313 = arith.constant 313 : index
    %1237 = memref.load %arg5[%c313] : memref<328xf32, #tpu.memory_space<smem>>
    %1238 = vector.broadcast %1237 : f32 to vector<12x12xf32>
    %1239 = arith.mulf %1238, %1224 : vector<12x12xf32>
    %1240 = arith.addf %1223, %1239 : vector<12x12xf32>
    %1241 = vector.extract_strided_slice %789 {offsets = [2, 2], sizes = [12, 12], strides = [1, 1]} : vector<14x14xf32> to vector<12x12xf32>
    %c206 = arith.constant 206 : index
    %1242 = memref.load %arg5[%c206] : memref<328xf32, #tpu.memory_space<smem>>
    %1243 = vector.broadcast %1242 : f32 to vector<12x12xf32>
    %1244 = arith.mulf %1243, %1241 : vector<12x12xf32>
    %1245 = arith.addf %1228, %1244 : vector<12x12xf32>
    %c242 = arith.constant 242 : index
    %1246 = memref.load %arg5[%c242] : memref<328xf32, #tpu.memory_space<smem>>
    %1247 = vector.broadcast %1246 : f32 to vector<12x12xf32>
    %1248 = arith.mulf %1247, %1241 : vector<12x12xf32>
    %1249 = arith.addf %1232, %1248 : vector<12x12xf32>
    %c278 = arith.constant 278 : index
    %1250 = memref.load %arg5[%c278] : memref<328xf32, #tpu.memory_space<smem>>
    %1251 = vector.broadcast %1250 : f32 to vector<12x12xf32>
    %1252 = arith.mulf %1251, %1241 : vector<12x12xf32>
    %1253 = arith.addf %1236, %1252 : vector<12x12xf32>
    %c314 = arith.constant 314 : index
    %1254 = memref.load %arg5[%c314] : memref<328xf32, #tpu.memory_space<smem>>
    %1255 = vector.broadcast %1254 : f32 to vector<12x12xf32>
    %1256 = arith.mulf %1255, %1241 : vector<12x12xf32>
    %1257 = arith.addf %1240, %1256 : vector<12x12xf32>
    %1258 = vector.extract_strided_slice %794 {offsets = [0, 0], sizes = [12, 12], strides = [1, 1]} : vector<14x14xf32> to vector<12x12xf32>
    %c207 = arith.constant 207 : index
    %1259 = memref.load %arg5[%c207] : memref<328xf32, #tpu.memory_space<smem>>
    %1260 = vector.broadcast %1259 : f32 to vector<12x12xf32>
    %1261 = arith.mulf %1260, %1258 : vector<12x12xf32>
    %1262 = arith.addf %1245, %1261 : vector<12x12xf32>
    %c243 = arith.constant 243 : index
    %1263 = memref.load %arg5[%c243] : memref<328xf32, #tpu.memory_space<smem>>
    %1264 = vector.broadcast %1263 : f32 to vector<12x12xf32>
    %1265 = arith.mulf %1264, %1258 : vector<12x12xf32>
    %1266 = arith.addf %1249, %1265 : vector<12x12xf32>
    %c279 = arith.constant 279 : index
    %1267 = memref.load %arg5[%c279] : memref<328xf32, #tpu.memory_space<smem>>
    %1268 = vector.broadcast %1267 : f32 to vector<12x12xf32>
    %1269 = arith.mulf %1268, %1258 : vector<12x12xf32>
    %1270 = arith.addf %1253, %1269 : vector<12x12xf32>
    %c315 = arith.constant 315 : index
    %1271 = memref.load %arg5[%c315] : memref<328xf32, #tpu.memory_space<smem>>
    %1272 = vector.broadcast %1271 : f32 to vector<12x12xf32>
    %1273 = arith.mulf %1272, %1258 : vector<12x12xf32>
    %1274 = arith.addf %1257, %1273 : vector<12x12xf32>
    %1275 = vector.extract_strided_slice %794 {offsets = [0, 1], sizes = [12, 12], strides = [1, 1]} : vector<14x14xf32> to vector<12x12xf32>
    %c208 = arith.constant 208 : index
    %1276 = memref.load %arg5[%c208] : memref<328xf32, #tpu.memory_space<smem>>
    %1277 = vector.broadcast %1276 : f32 to vector<12x12xf32>
    %1278 = arith.mulf %1277, %1275 : vector<12x12xf32>
    %1279 = arith.addf %1262, %1278 : vector<12x12xf32>
    %c244 = arith.constant 244 : index
    %1280 = memref.load %arg5[%c244] : memref<328xf32, #tpu.memory_space<smem>>
    %1281 = vector.broadcast %1280 : f32 to vector<12x12xf32>
    %1282 = arith.mulf %1281, %1275 : vector<12x12xf32>
    %1283 = arith.addf %1266, %1282 : vector<12x12xf32>
    %c280 = arith.constant 280 : index
    %1284 = memref.load %arg5[%c280] : memref<328xf32, #tpu.memory_space<smem>>
    %1285 = vector.broadcast %1284 : f32 to vector<12x12xf32>
    %1286 = arith.mulf %1285, %1275 : vector<12x12xf32>
    %1287 = arith.addf %1270, %1286 : vector<12x12xf32>
    %c316 = arith.constant 316 : index
    %1288 = memref.load %arg5[%c316] : memref<328xf32, #tpu.memory_space<smem>>
    %1289 = vector.broadcast %1288 : f32 to vector<12x12xf32>
    %1290 = arith.mulf %1289, %1275 : vector<12x12xf32>
    %1291 = arith.addf %1274, %1290 : vector<12x12xf32>
    %1292 = vector.extract_strided_slice %794 {offsets = [0, 2], sizes = [12, 12], strides = [1, 1]} : vector<14x14xf32> to vector<12x12xf32>
    %c209 = arith.constant 209 : index
    %1293 = memref.load %arg5[%c209] : memref<328xf32, #tpu.memory_space<smem>>
    %1294 = vector.broadcast %1293 : f32 to vector<12x12xf32>
    %1295 = arith.mulf %1294, %1292 : vector<12x12xf32>
    %1296 = arith.addf %1279, %1295 : vector<12x12xf32>
    %c245 = arith.constant 245 : index
    %1297 = memref.load %arg5[%c245] : memref<328xf32, #tpu.memory_space<smem>>
    %1298 = vector.broadcast %1297 : f32 to vector<12x12xf32>
    %1299 = arith.mulf %1298, %1292 : vector<12x12xf32>
    %1300 = arith.addf %1283, %1299 : vector<12x12xf32>
    %c281 = arith.constant 281 : index
    %1301 = memref.load %arg5[%c281] : memref<328xf32, #tpu.memory_space<smem>>
    %1302 = vector.broadcast %1301 : f32 to vector<12x12xf32>
    %1303 = arith.mulf %1302, %1292 : vector<12x12xf32>
    %1304 = arith.addf %1287, %1303 : vector<12x12xf32>
    %c317 = arith.constant 317 : index
    %1305 = memref.load %arg5[%c317] : memref<328xf32, #tpu.memory_space<smem>>
    %1306 = vector.broadcast %1305 : f32 to vector<12x12xf32>
    %1307 = arith.mulf %1306, %1292 : vector<12x12xf32>
    %1308 = arith.addf %1291, %1307 : vector<12x12xf32>
    %1309 = vector.extract_strided_slice %794 {offsets = [1, 0], sizes = [12, 12], strides = [1, 1]} : vector<14x14xf32> to vector<12x12xf32>
    %c210 = arith.constant 210 : index
    %1310 = memref.load %arg5[%c210] : memref<328xf32, #tpu.memory_space<smem>>
    %1311 = vector.broadcast %1310 : f32 to vector<12x12xf32>
    %1312 = arith.mulf %1311, %1309 : vector<12x12xf32>
    %1313 = arith.addf %1296, %1312 : vector<12x12xf32>
    %c246 = arith.constant 246 : index
    %1314 = memref.load %arg5[%c246] : memref<328xf32, #tpu.memory_space<smem>>
    %1315 = vector.broadcast %1314 : f32 to vector<12x12xf32>
    %1316 = arith.mulf %1315, %1309 : vector<12x12xf32>
    %1317 = arith.addf %1300, %1316 : vector<12x12xf32>
    %c282 = arith.constant 282 : index
    %1318 = memref.load %arg5[%c282] : memref<328xf32, #tpu.memory_space<smem>>
    %1319 = vector.broadcast %1318 : f32 to vector<12x12xf32>
    %1320 = arith.mulf %1319, %1309 : vector<12x12xf32>
    %1321 = arith.addf %1304, %1320 : vector<12x12xf32>
    %c318 = arith.constant 318 : index
    %1322 = memref.load %arg5[%c318] : memref<328xf32, #tpu.memory_space<smem>>
    %1323 = vector.broadcast %1322 : f32 to vector<12x12xf32>
    %1324 = arith.mulf %1323, %1309 : vector<12x12xf32>
    %1325 = arith.addf %1308, %1324 : vector<12x12xf32>
    %1326 = vector.extract_strided_slice %794 {offsets = [1, 1], sizes = [12, 12], strides = [1, 1]} : vector<14x14xf32> to vector<12x12xf32>
    %c211 = arith.constant 211 : index
    %1327 = memref.load %arg5[%c211] : memref<328xf32, #tpu.memory_space<smem>>
    %1328 = vector.broadcast %1327 : f32 to vector<12x12xf32>
    %1329 = arith.mulf %1328, %1326 : vector<12x12xf32>
    %1330 = arith.addf %1313, %1329 : vector<12x12xf32>
    %c247 = arith.constant 247 : index
    %1331 = memref.load %arg5[%c247] : memref<328xf32, #tpu.memory_space<smem>>
    %1332 = vector.broadcast %1331 : f32 to vector<12x12xf32>
    %1333 = arith.mulf %1332, %1326 : vector<12x12xf32>
    %1334 = arith.addf %1317, %1333 : vector<12x12xf32>
    %c283 = arith.constant 283 : index
    %1335 = memref.load %arg5[%c283] : memref<328xf32, #tpu.memory_space<smem>>
    %1336 = vector.broadcast %1335 : f32 to vector<12x12xf32>
    %1337 = arith.mulf %1336, %1326 : vector<12x12xf32>
    %1338 = arith.addf %1321, %1337 : vector<12x12xf32>
    %c319 = arith.constant 319 : index
    %1339 = memref.load %arg5[%c319] : memref<328xf32, #tpu.memory_space<smem>>
    %1340 = vector.broadcast %1339 : f32 to vector<12x12xf32>
    %1341 = arith.mulf %1340, %1326 : vector<12x12xf32>
    %1342 = arith.addf %1325, %1341 : vector<12x12xf32>
    %1343 = vector.extract_strided_slice %794 {offsets = [1, 2], sizes = [12, 12], strides = [1, 1]} : vector<14x14xf32> to vector<12x12xf32>
    %c212 = arith.constant 212 : index
    %1344 = memref.load %arg5[%c212] : memref<328xf32, #tpu.memory_space<smem>>
    %1345 = vector.broadcast %1344 : f32 to vector<12x12xf32>
    %1346 = arith.mulf %1345, %1343 : vector<12x12xf32>
    %1347 = arith.addf %1330, %1346 : vector<12x12xf32>
    %c248 = arith.constant 248 : index
    %1348 = memref.load %arg5[%c248] : memref<328xf32, #tpu.memory_space<smem>>
    %1349 = vector.broadcast %1348 : f32 to vector<12x12xf32>
    %1350 = arith.mulf %1349, %1343 : vector<12x12xf32>
    %1351 = arith.addf %1334, %1350 : vector<12x12xf32>
    %c284 = arith.constant 284 : index
    %1352 = memref.load %arg5[%c284] : memref<328xf32, #tpu.memory_space<smem>>
    %1353 = vector.broadcast %1352 : f32 to vector<12x12xf32>
    %1354 = arith.mulf %1353, %1343 : vector<12x12xf32>
    %1355 = arith.addf %1338, %1354 : vector<12x12xf32>
    %c320 = arith.constant 320 : index
    %1356 = memref.load %arg5[%c320] : memref<328xf32, #tpu.memory_space<smem>>
    %1357 = vector.broadcast %1356 : f32 to vector<12x12xf32>
    %1358 = arith.mulf %1357, %1343 : vector<12x12xf32>
    %1359 = arith.addf %1342, %1358 : vector<12x12xf32>
    %1360 = vector.extract_strided_slice %794 {offsets = [2, 0], sizes = [12, 12], strides = [1, 1]} : vector<14x14xf32> to vector<12x12xf32>
    %c213 = arith.constant 213 : index
    %1361 = memref.load %arg5[%c213] : memref<328xf32, #tpu.memory_space<smem>>
    %1362 = vector.broadcast %1361 : f32 to vector<12x12xf32>
    %1363 = arith.mulf %1362, %1360 : vector<12x12xf32>
    %1364 = arith.addf %1347, %1363 : vector<12x12xf32>
    %c249 = arith.constant 249 : index
    %1365 = memref.load %arg5[%c249] : memref<328xf32, #tpu.memory_space<smem>>
    %1366 = vector.broadcast %1365 : f32 to vector<12x12xf32>
    %1367 = arith.mulf %1366, %1360 : vector<12x12xf32>
    %1368 = arith.addf %1351, %1367 : vector<12x12xf32>
    %c285 = arith.constant 285 : index
    %1369 = memref.load %arg5[%c285] : memref<328xf32, #tpu.memory_space<smem>>
    %1370 = vector.broadcast %1369 : f32 to vector<12x12xf32>
    %1371 = arith.mulf %1370, %1360 : vector<12x12xf32>
    %1372 = arith.addf %1355, %1371 : vector<12x12xf32>
    %c321 = arith.constant 321 : index
    %1373 = memref.load %arg5[%c321] : memref<328xf32, #tpu.memory_space<smem>>
    %1374 = vector.broadcast %1373 : f32 to vector<12x12xf32>
    %1375 = arith.mulf %1374, %1360 : vector<12x12xf32>
    %1376 = arith.addf %1359, %1375 : vector<12x12xf32>
    %1377 = vector.extract_strided_slice %794 {offsets = [2, 1], sizes = [12, 12], strides = [1, 1]} : vector<14x14xf32> to vector<12x12xf32>
    %c214 = arith.constant 214 : index
    %1378 = memref.load %arg5[%c214] : memref<328xf32, #tpu.memory_space<smem>>
    %1379 = vector.broadcast %1378 : f32 to vector<12x12xf32>
    %1380 = arith.mulf %1379, %1377 : vector<12x12xf32>
    %1381 = arith.addf %1364, %1380 : vector<12x12xf32>
    %c250 = arith.constant 250 : index
    %1382 = memref.load %arg5[%c250] : memref<328xf32, #tpu.memory_space<smem>>
    %1383 = vector.broadcast %1382 : f32 to vector<12x12xf32>
    %1384 = arith.mulf %1383, %1377 : vector<12x12xf32>
    %1385 = arith.addf %1368, %1384 : vector<12x12xf32>
    %c286 = arith.constant 286 : index
    %1386 = memref.load %arg5[%c286] : memref<328xf32, #tpu.memory_space<smem>>
    %1387 = vector.broadcast %1386 : f32 to vector<12x12xf32>
    %1388 = arith.mulf %1387, %1377 : vector<12x12xf32>
    %1389 = arith.addf %1372, %1388 : vector<12x12xf32>
    %c322 = arith.constant 322 : index
    %1390 = memref.load %arg5[%c322] : memref<328xf32, #tpu.memory_space<smem>>
    %1391 = vector.broadcast %1390 : f32 to vector<12x12xf32>
    %1392 = arith.mulf %1391, %1377 : vector<12x12xf32>
    %1393 = arith.addf %1376, %1392 : vector<12x12xf32>
    %1394 = vector.extract_strided_slice %794 {offsets = [2, 2], sizes = [12, 12], strides = [1, 1]} : vector<14x14xf32> to vector<12x12xf32>
    %c215 = arith.constant 215 : index
    %1395 = memref.load %arg5[%c215] : memref<328xf32, #tpu.memory_space<smem>>
    %1396 = vector.broadcast %1395 : f32 to vector<12x12xf32>
    %1397 = arith.mulf %1396, %1394 : vector<12x12xf32>
    %1398 = arith.addf %1381, %1397 : vector<12x12xf32>
    %c251 = arith.constant 251 : index
    %1399 = memref.load %arg5[%c251] : memref<328xf32, #tpu.memory_space<smem>>
    %1400 = vector.broadcast %1399 : f32 to vector<12x12xf32>
    %1401 = arith.mulf %1400, %1394 : vector<12x12xf32>
    %1402 = arith.addf %1385, %1401 : vector<12x12xf32>
    %c287 = arith.constant 287 : index
    %1403 = memref.load %arg5[%c287] : memref<328xf32, #tpu.memory_space<smem>>
    %1404 = vector.broadcast %1403 : f32 to vector<12x12xf32>
    %1405 = arith.mulf %1404, %1394 : vector<12x12xf32>
    %1406 = arith.addf %1389, %1405 : vector<12x12xf32>
    %c323 = arith.constant 323 : index
    %1407 = memref.load %arg5[%c323] : memref<328xf32, #tpu.memory_space<smem>>
    %1408 = vector.broadcast %1407 : f32 to vector<12x12xf32>
    %1409 = arith.mulf %1408, %1394 : vector<12x12xf32>
    %1410 = arith.addf %1393, %1409 : vector<12x12xf32>
    %c324 = arith.constant 324 : index
    %1411 = memref.load %arg5[%c324] : memref<328xf32, #tpu.memory_space<smem>>
    %1412 = vector.broadcast %1411 : f32 to vector<12x12xf32>
    %1413 = arith.addf %1398, %1412 : vector<12x12xf32>
    %cst_111 = arith.constant 0.000000e+00 : f32
    %1414 = vector.broadcast %cst_111 : f32 to vector<12x12xf32>
    %1415 = arith.maximumf %1413, %1414 : vector<12x12xf32>
    %c325 = arith.constant 325 : index
    %1416 = memref.load %arg5[%c325] : memref<328xf32, #tpu.memory_space<smem>>
    %1417 = vector.broadcast %1416 : f32 to vector<12x12xf32>
    %1418 = arith.addf %1402, %1417 : vector<12x12xf32>
    %cst_112 = arith.constant 0.000000e+00 : f32
    %1419 = vector.broadcast %cst_112 : f32 to vector<12x12xf32>
    %1420 = arith.maximumf %1418, %1419 : vector<12x12xf32>
    %c326 = arith.constant 326 : index
    %1421 = memref.load %arg5[%c326] : memref<328xf32, #tpu.memory_space<smem>>
    %1422 = vector.broadcast %1421 : f32 to vector<12x12xf32>
    %1423 = arith.addf %1406, %1422 : vector<12x12xf32>
    %cst_113 = arith.constant 0.000000e+00 : f32
    %1424 = vector.broadcast %cst_113 : f32 to vector<12x12xf32>
    %1425 = arith.maximumf %1423, %1424 : vector<12x12xf32>
    %c327 = arith.constant 327 : index
    %1426 = memref.load %arg5[%c327] : memref<328xf32, #tpu.memory_space<smem>>
    %1427 = vector.broadcast %1426 : f32 to vector<12x12xf32>
    %1428 = arith.addf %1410, %1427 : vector<12x12xf32>
    %cst_114 = arith.constant 0.000000e+00 : f32
    %1429 = vector.broadcast %cst_114 : f32 to vector<12x12xf32>
    %1430 = arith.maximumf %1428, %1429 : vector<12x12xf32>
    %c0_115 = arith.constant 0 : index
    %c0_116 = arith.constant 0 : index
    %c0_117 = arith.constant 0 : index
    %c0_118 = arith.constant 0 : index
    %1431 = vector.load %arg6[%c0_115, %c0_116, %c0_117, %c0_118] : memref<1x4x12x12xf32, #tpu.memory_space<vmem>>, vector<1x1x12x12xf32>
    %1432 = vector.shape_cast %1431 : vector<1x1x12x12xf32> to vector<12x12xf32>
    %1433 = vector.shape_cast %1415 : vector<12x12xf32> to vector<1x1x12x12xf32>
    tpu.vector_store %arg6[%c0_115, %c0_116, %c0_117, %c0_118], %1433 {strides = array<i32>} : memref<1x4x12x12xf32, #tpu.memory_space<vmem>>, vector<1x1x12x12xf32>,
    %c0_119 = arith.constant 0 : index
    %c1_120 = arith.constant 1 : index
    %c0_121 = arith.constant 0 : index
    %c0_122 = arith.constant 0 : index
    %1434 = vector.load %arg6[%c0_119, %c1_120, %c0_121, %c0_122] : memref<1x4x12x12xf32, #tpu.memory_space<vmem>>, vector<1x1x12x12xf32>
    %1435 = vector.shape_cast %1434 : vector<1x1x12x12xf32> to vector<12x12xf32>
    %1436 = vector.shape_cast %1420 : vector<12x12xf32> to vector<1x1x12x12xf32>
    tpu.vector_store %arg6[%c0_119, %c1_120, %c0_121, %c0_122], %1436 {strides = array<i32>} : memref<1x4x12x12xf32, #tpu.memory_space<vmem>>, vector<1x1x12x12xf32>,
    %c0_123 = arith.constant 0 : index
    %c2_124 = arith.constant 2 : index
    %c0_125 = arith.constant 0 : index
    %c0_126 = arith.constant 0 : index
    %1437 = vector.load %arg6[%c0_123, %c2_124, %c0_125, %c0_126] : memref<1x4x12x12xf32, #tpu.memory_space<vmem>>, vector<1x1x12x12xf32>
    %1438 = vector.shape_cast %1437 : vector<1x1x12x12xf32> to vector<12x12xf32>
    %1439 = vector.shape_cast %1425 : vector<12x12xf32> to vector<1x1x12x12xf32>
    tpu.vector_store %arg6[%c0_123, %c2_124, %c0_125, %c0_126], %1439 {strides = array<i32>} : memref<1x4x12x12xf32, #tpu.memory_space<vmem>>, vector<1x1x12x12xf32>,
    %c0_127 = arith.constant 0 : index
    %c3_128 = arith.constant 3 : index
    %c0_129 = arith.constant 0 : index
    %c0_130 = arith.constant 0 : index
    %1440 = vector.load %arg6[%c0_127, %c3_128, %c0_129, %c0_130] : memref<1x4x12x12xf32, #tpu.memory_space<vmem>>, vector<1x1x12x12xf32>
    %1441 = vector.shape_cast %1440 : vector<1x1x12x12xf32> to vector<12x12xf32>
    %1442 = vector.shape_cast %1430 : vector<12x12xf32> to vector<1x1x12x12xf32>
    tpu.vector_store %arg6[%c0_127, %c3_128, %c0_129, %c0_130], %1442 {strides = array<i32>} : memref<1x4x12x12xf32, #tpu.memory_space<vmem>>, vector<1x1x12x12xf32>,
    return
  }
  func.func @transform_0(%arg0: i32) -> (i32, i32, i32, i32) {
    %c0_i32 = arith.constant 0 : i32
    %c0_i32_0 = arith.constant 0 : i32
    %c0_i32_1 = arith.constant 0 : i32
    %c0_i32_2 = arith.constant 0 : i32
    return %arg0, %c0_i32, %c0_i32_0, %c0_i32_1 : i32, i32, i32, i32
  }
  func.func @transform_1(%arg0: i32) -> (i32, i32, i32, i32) {
    %c0_i32 = arith.constant 0 : i32
    %c0_i32_0 = arith.constant 0 : i32
    %c0_i32_1 = arith.constant 0 : i32
    %c0_i32_2 = arith.constant 0 : i32
    return %arg0, %c0_i32, %c0_i32_0, %c0_i32_1 : i32, i32, i32, i32
  }
  func.func @transform_2(%arg0: i32) -> (i32, i32, i32) {
    %c0_i32 = arith.constant 0 : i32
    %c0_i32_0 = arith.constant 0 : i32
    %c0_i32_1 = arith.constant 0 : i32
    %c0_i32_2 = arith.constant 0 : i32
    return %c0_i32, %c0_i32_0, %c0_i32_1 : i32, i32, i32
  }
  func.func @transform_3(%arg0: i32) -> (i32, i32) {
    %c0_i32 = arith.constant 0 : i32
    %c0_i32_0 = arith.constant 0 : i32
    %c0_i32_1 = arith.constant 0 : i32
    return %c0_i32, %c0_i32_0 : i32, i32
  }
  func.func @transform_4(%arg0: i32) -> i32 {
    %c0_i32 = arith.constant 0 : i32
    %c0_i32_0 = arith.constant 0 : i32
    return %c0_i32 : i32
  }
  func.func @transform_5(%arg0: i32) -> (i32, i32, i32, i32) {
    %c0_i32 = arith.constant 0 : i32
    %c0_i32_0 = arith.constant 0 : i32
    %c0_i32_1 = arith.constant 0 : i32
    %c0_i32_2 = arith.constant 0 : i32
    return %arg0, %c0_i32, %c0_i32_0, %c0_i32_1 : i32, i32, i32, i32
  }
}

</mosaic_0001>

<llo_original>
// kernel: tpu_custom_call.1
$region0: #{tpu_custom_call.1}
  #allocation0 [shape = 'u32[]', space=smem, size = 0x4, offset = 0x4, fixed_abs, tag = 'smem constant byte address 0x4 - core index']
  #allocation1 [shape = 'u32[72,128]{1,0:T(1,128)}', space=vmem, size = 0x9000, scoped, tag = 'internal scratch']
  %s0 = inlined_call_operand.vmem [shape: f32[2,4,8,8], index: 0, kind: input, shape index: {}]
  %s1 = inlined_call_operand.vmem [shape: f32[2,2,21,21], index: 1, kind: input, shape index: {}]
  %s2 = inlined_call_operand.vmem [shape: f32[2,8,16], index: 2, kind: input, shape index: {}]
  %s3 = inlined_call_operand.vmem [shape: f32[32,32], index: 3, kind: input, shape index: {}]
  %s4 = inlined_call_operand.vmem [shape: f32[328], index: 4, kind: input, shape index: {}]
  %s5 = inlined_call_operand.vmem [shape: f32[2,4,12,12], index: 5, kind: output, shape index: {}]
  %s6 = sld [smem:[#allocation0]]
  $region57: #{tpu_custom_call.1} parent=0
    _
  %s8 = ssub.s32 1, %s6
  %s9 = scalar_select 0, %s8, %s6
  $region1: #{tpu_custom_call.1} parent=0
    #allocation2 [shape = 'u8[1536]{0}', space=smem, size = 0x600, scoped, tag = 'input window, operand 4, single buffered']
    #allocation3 [shape = 's32[2]{0}', space=sflag, size = 0x8, scoped, tag = 'scoped memory for tpu_custom_call.1']
    %10 = vsyncpa [#allocation3], 0
    loop: start=0, step=1, limit=4
    $region2: #{tpu_custom_call.1} parent=1 // loop_pre_header
      _
    $region3: #{tpu_custom_call.1} parent=1 // loop_header
      %s12 = sphi 0, %s16
      %p13 = scmp.ge.s32.totalorder %s12, 4
      %s22 = sphi 0, %s24
      %s25 = sphi 0, %s22
      %s26 = sphi 0, %s25
      %s42 = sphi 0, %s26
      %s48 = sphi 0, %s50
      %s51 = sphi 0, %s48
      %s52 = sphi 0, %s51
      %s68 = sphi 0, %s52
      %s72 = sphi 0, %s72
      %s74 = sphi 0, %s72
      %s75 = sphi 0, %s74
      %s89 = sphi 0, %s75
      %s93 = sphi 0, %s93
      %s95 = sphi 0, %s93
      %s96 = sphi 0, %s95
      %s110 = sphi 0, %s96
      %s114 = sphi 0, %s114
      %s116 = sphi 0, %s114
      %s117 = sphi 0, %s116
      %s131 = sphi 0, %s117
      %s137 = sphi 0, %s139
      %s140 = sphi 0, %s137
      %s141 = sphi 0, %s140
      %s157 = sphi 0, %s141
    $region4: #{tpu_custom_call.1} parent=1 // loop_header_branch
      %15 = sbr.rel (%p13) target = $region8
    $region5: #{tpu_custom_call.1} parent=1 // loop_body
      %s17 = ssub.s32 %s12, 1
      %s18 = ssub.s32 %s12, 2
      %s19 = sadd.s32 %s12, 1
      %s20 = ssub.s32 %s12, %s19
      %p21 = scmp.eq.s32.totalorder %s20, 0
      %s23 = sadd.s32 %s22, 1
      %s24 = scalar_select %p21, %s22, %s23
      %p27 = pneg %p21
      %p28 = scmp.eq.s32.totalorder %s12, 1
      %p29 = por %p27, %p28
      %p30 = scmp.ne.s32.totalorder %s22, %s25
      %p31 = scmp.eq.s32.totalorder %s12, 0
      %p32 = por %p30, %p31
      %p33 = scmp.ne.s32.totalorder %s22, %s25
      %p34 = scmp.eq.s32.totalorder %s17, 1
      %p35 = por %p33, %p34
      %p36 = scmp.ne.s32.totalorder %s25, %s26
      %p37 = scmp.eq.s32.totalorder %s17, 0
      %p38 = por %p36, %p37
      %p39 = scmp.ne.s32.totalorder %s25, %s26
      %p40 = scmp.eq.s32.totalorder %s18, 1
      %p41 = por %p39, %p40
      %p43 = scmp.ne.s32.totalorder %s26, %s42
      %p44 = scmp.eq.s32.totalorder %s18, 0
      %p45 = por %p43, %p44
      %s46 = ssub.s32 %s12, %s19
      %p47 = scmp.eq.s32.totalorder %s46, 0
      %s49 = sadd.s32 %s48, 1
      %s50 = scalar_select %p47, %s48, %s49
      %p53 = pneg %p47
      %p54 = scmp.eq.s32.totalorder %s12, 1
      %p55 = por %p53, %p54
      %p56 = scmp.ne.s32.totalorder %s48, %s51
      %p57 = scmp.eq.s32.totalorder %s12, 0
      %p58 = por %p56, %p57
      %p59 = scmp.ne.s32.totalorder %s48, %s51
      %p60 = scmp.eq.s32.totalorder %s17, 1
      %p61 = por %p59, %p60
      %p62 = scmp.ne.s32.totalorder %s51, %s52
      %p63 = scmp.eq.s32.totalorder %s17, 0
      %p64 = por %p62, %p63
      %p65 = scmp.ne.s32.totalorder %s51, %s52
      %p66 = scmp.eq.s32.totalorder %s18, 1
      %p67 = por %p65, %p66
      %p69 = scmp.ne.s32.totalorder %s52, %s68
      %p70 = scmp.eq.s32.totalorder %s18, 0
      %p71 = por %p69, %p70
      %s73 = sadd.s32 %s72, 1
      %p76 = scmp.eq.s32.totalorder %s12, 1
      %p77 = scmp.ne.s32.totalorder %s72, %s74
      %p78 = scmp.eq.s32.totalorder %s12, 0
      %p79 = por %p77, %p78
      %p80 = scmp.ne.s32.totalorder %s72, %s74
      %p81 = scmp.eq.s32.totalorder %s17, 1
      %p82 = por %p80, %p81
      %p83 = scmp.ne.s32.totalorder %s74, %s75
      %p84 = scmp.eq.s32.totalorder %s17, 0
      %p85 = por %p83, %p84
      %p86 = scmp.ne.s32.totalorder %s74, %s75
      %p87 = scmp.eq.s32.totalorder %s18, 1
      %p88 = por %p86, %p87
      %p90 = scmp.ne.s32.totalorder %s75, %s89
      %p91 = scmp.eq.s32.totalorder %s18, 0
      %p92 = por %p90, %p91
      %s94 = sadd.s32 %s93, 1
      %p97 = scmp.eq.s32.totalorder %s12, 1
      %p98 = scmp.ne.s32.totalorder %s93, %s95
      %p99 = scmp.eq.s32.totalorder %s12, 0
      %p100 = por %p98, %p99
      %p101 = scmp.ne.s32.totalorder %s93, %s95
      %p102 = scmp.eq.s32.totalorder %s17, 1
      %p103 = por %p101, %p102
      %p104 = scmp.ne.s32.totalorder %s95, %s96
      %p105 = scmp.eq.s32.totalorder %s17, 0
      %p106 = por %p104, %p105
      %p107 = scmp.ne.s32.totalorder %s95, %s96
      %p108 = scmp.eq.s32.totalorder %s18, 1
      %p109 = por %p107, %p108
      %p111 = scmp.ne.s32.totalorder %s96, %s110
      %p112 = scmp.eq.s32.totalorder %s18, 0
      %p113 = por %p111, %p112
      %s115 = sadd.s32 %s114, 1
      %p118 = scmp.eq.s32.totalorder %s12, 1
      %p119 = scmp.ne.s32.totalorder %s114, %s116
      %p120 = scmp.eq.s32.totalorder %s12, 0
      %p121 = por %p119, %p120
      %p122 = scmp.ne.s32.totalorder %s114, %s116
      %p123 = scmp.eq.s32.totalorder %s17, 1
      %p124 = por %p122, %p123
      %p125 = scmp.ne.s32.totalorder %s116, %s117
      %p126 = scmp.eq.s32.totalorder %s17, 0
      %p127 = por %p125, %p126
      %p128 = scmp.ne.s32.totalorder %s116, %s117
      %p129 = scmp.eq.s32.totalorder %s18, 1
      %p130 = por %p128, %p129
      %p132 = scmp.ne.s32.totalorder %s117, %s131
      %p133 = scmp.eq.s32.totalorder %s18, 0
      %p134 = por %p132, %p133
      %s135 = ssub.s32 %s12, %s19
      %p136 = scmp.eq.s32.totalorder %s135, 0
      %s138 = sadd.s32 %s137, 1
      %s139 = scalar_select %p136, %s137, %s138
      %p142 = pneg %p136
      %p143 = scmp.eq.s32.totalorder %s12, 1
      %p144 = por %p142, %p143
      %p145 = scmp.ne.s32.totalorder %s137, %s140
      %p146 = scmp.eq.s32.totalorder %s12, 0
      %p147 = por %p145, %p146
      %p148 = scmp.ne.s32.totalorder %s137, %s140
      %p149 = scmp.eq.s32.totalorder %s17, 1
      %p150 = por %p148, %p149
      %p151 = scmp.ne.s32.totalorder %s140, %s141
      %p152 = scmp.eq.s32.totalorder %s17, 0
      %p153 = por %p151, %p152
      %p154 = scmp.ne.s32.totalorder %s140, %s141
      %p155 = scmp.eq.s32.totalorder %s18, 1
      %p156 = por %p154, %p155
      %p158 = scmp.ne.s32.totalorder %s141, %s157
      %p159 = scmp.eq.s32.totalorder %s18, 0
      %p160 = por %p158, %p159
      %p161 = scmp.le.s32.totalorder 1, %s12
      %p162 = scmp.lt.s32.totalorder %s12, 3
      %p163 = pnand %p161, %p162
      %p164 = pneg %p163
      // Predicated region
      $region9: #{tpu_custom_call.1} parent=5 // pred_check
        _
      $region10: #{tpu_custom_call.1} parent=5 // pred_check_branch
        %166 = sbr.rel (%p163) target = $region12
      $region11: #{tpu_custom_call.1} parent=5 // pred_region
        %s167 = ssub.s32 %s12, 1
        // Predicated region
        $region13: #{tpu_custom_call.1} parent=11 // pred_check
          %p168 = pneg %p85
        $region14: #{tpu_custom_call.1} parent=11 // pred_check_branch
          %170 = sbr.rel (%p168) target = $region16
        $region15: #{tpu_custom_call.1} parent=11 // pred_region
          _
        $region16: #{tpu_custom_call.1} parent=11 // pred_fallthru
          _
        // Predicated region
        $region17: #{tpu_custom_call.1} parent=11 // pred_check
          %p171 = pneg %p106
        $region18: #{tpu_custom_call.1} parent=11 // pred_check_branch
          %173 = sbr.rel (%p171) target = $region20
        $region19: #{tpu_custom_call.1} parent=11 // pred_region
          _
        $region20: #{tpu_custom_call.1} parent=11 // pred_fallthru
          _
        // Predicated region
        $region21: #{tpu_custom_call.1} parent=11 // pred_check
          %p174 = pneg %p127
        $region22: #{tpu_custom_call.1} parent=11 // pred_check_branch
          %176 = sbr.rel (%p174) target = $region24
        $region23: #{tpu_custom_call.1} parent=11 // pred_region
          %178 = vsyncadd [#allocation3], 0
          %s180 = sshll.u32 %s4, 4
          %s181 = int_to_ptr.vmem [resolvable:$true] %s180
          %183 = dma.vmem_to_smem %s181, 48, [#allocation2], [#allocation3]
        $region24: #{tpu_custom_call.1} parent=11 // pred_fallthru
          _
      $region12: #{tpu_custom_call.1} parent=5 // pred_fallthru
        _
      %p184 = scmp.lt.s32.totalorder %s12, 2
      // Predicated region
      $region25: #{tpu_custom_call.1} parent=5 // pred_check
        %p185 = pneg %p184
      $region26: #{tpu_custom_call.1} parent=5 // pred_check_branch
        %187 = sbr.rel (%p185) target = $region28
      $region27: #{tpu_custom_call.1} parent=5 // pred_region
        // Predicated region
        $region29: #{tpu_custom_call.1} parent=27 // pred_check
          %p188 = pneg %p32
        $region30: #{tpu_custom_call.1} parent=27 // pred_check_branch
          %190 = sbr.rel (%p188) target = $region32
        $region31: #{tpu_custom_call.1} parent=27 // pred_region
          %p191 = scmp.lt.s32.totalorder %s12, 1
          %s192 = scalar_select %p191, %s12, 1
          %s193 = smul.addr %s192, 4
          %s194 = smul.addr %s193, 8
          %s195 = scalar_lea.vmem %s0, %s194
        $region32: #{tpu_custom_call.1} parent=27 // pred_fallthru
          _
        // Predicated region
        $region33: #{tpu_custom_call.1} parent=27 // pred_check
          %p196 = pneg %p58
        $region34: #{tpu_custom_call.1} parent=27 // pred_check_branch
          %198 = sbr.rel (%p196) target = $region36
        $region35: #{tpu_custom_call.1} parent=27 // pred_region
          %p199 = scmp.lt.s32.totalorder %s12, 1
          %s200 = scalar_select %p199, %s12, 1
          %s201 = smul.addr %s200, 6
          %s202 = smul.addr %s201, 8
          %s203 = scalar_lea.vmem %s1, %s202
        $region36: #{tpu_custom_call.1} parent=27 // pred_fallthru
          _
      $region28: #{tpu_custom_call.1} parent=5 // pred_fallthru
        _
      %p204 = scmp.le.s32.totalorder 1, %s12
      %p205 = scmp.lt.s32.totalorder %s12, 3
      %p206 = pnand %p204, %p205
      %p207 = pneg %p206
      // Predicated region
      $region37: #{tpu_custom_call.1} parent=5 // pred_check
        _
      $region38: #{tpu_custom_call.1} parent=5 // pred_check_branch
        %209 = sbr.rel (%p206) target = $region40
      $region39: #{tpu_custom_call.1} parent=5 // pred_region
        %s210 = ssub.s32 %s12, 1
        // Predicated region
        $region41: #{tpu_custom_call.1} parent=39 // pred_check
          %p211 = pneg %p127
        $region42: #{tpu_custom_call.1} parent=39 // pred_check_branch
          %213 = sbr.rel (%p211) target = $region44
        $region43: #{tpu_custom_call.1} parent=39 // pred_region
          %215 = dma.done [#allocation3], 48
        $region44: #{tpu_custom_call.1} parent=39 // pred_fallthru
          _
        %216 = sfence
        %p217 = scmp.lt.s32.totalorder %s17, 1
        %s218 = scalar_select %p217, %s17, 1
        %s219 = smul.addr %s218, 4
        %s220 = smul.addr %s219, 8
        %s221 = scalar_lea.vmem %s0, %s220
        %p222 = pneg %p38
        %p223 = pneg %p35
        %p224 = scmp.lt.s32.totalorder %s17, 1
        %s225 = scalar_select %p224, %s17, 1
        %s226 = smul.addr %s225, 6
        %s227 = smul.addr %s226, 8
        %s228 = scalar_lea.vmem %s1, %s227
        %p229 = pneg %p64
        %p230 = pneg %p61
        %p231 = pneg %p85
        %p232 = pneg %p82
        %p233 = pneg %p106
        %p234 = pneg %p103
        %p235 = pneg %p127
        %p236 = pneg %p124
        %p237 = pneg %p153
        %p238 = pneg %p150
        %p239 = scmp.lt.s32.totalorder %s17, 1
        %s240 = scalar_select %p239, %s17, 1
        %s241 = smul.addr %s240, 8
        %s242 = smul.addr %s241, 8
        %s243 = scalar_lea.vmem %s5, %s242
        %p244 = scmp.lt.s32.totalorder %s17, 1
        %s245 = scalar_select %p244, %s17, 1
        %s246 = smul.addr %s245, 4
        %s247 = smul.addr %s246, 8
        %s248 = scalar_lea.vmem %s0, %s247
        %p249 = scmp.lt.s32.totalorder %s17, 1
        %s250 = scalar_select %p249, %s17, 1
        %s251 = smul.addr %s250, 6
        %s252 = smul.addr %s251, 8
        %s253 = scalar_lea.vmem %s1, %s252
        %p254 = scmp.lt.s32.totalorder %s17, 1
        %s255 = scalar_select %p254, %s17, 1
        %s256 = smul.addr %s255, 8
        %s257 = smul.addr %s256, 8
        %s258 = scalar_lea.vmem %s5, %s257
        %v259 = vld [vmem:[%s248] sm:$0xff]
        %s260 = scalar_lea.vmem %s248, 8
        %v261 = vld [vmem:[%s260] sm:$0xff]
        %s262 = scalar_lea.vmem %s248, 16
        %v263 = vld [vmem:[%s262] sm:$0xff]
        %s264 = scalar_lea.vmem %s248, 24
        %v265 = vld [vmem:[%s264] sm:$0xff]
        %s266 = sld [smem:[#allocation2]]
        %v267 = vstv %s266
        %v268 = vmul.f32 %v267, %v259
        %s269 = sld [smem:[#allocation2 + $0x8]]
        %v270 = vstv %s269
        %v271 = vmul.f32 %v270, %v261
        %v272 = vadd.f32 %v268, %v271
        %s273 = sld [smem:[#allocation2 + $0x10]]
        %v274 = vstv %s273
        %v275 = vmul.f32 %v274, %v263
        %v276 = vadd.f32 %v272, %v275
        %s277 = sld [smem:[#allocation2 + $0x18]]
        %v278 = vstv %s277
        %v279 = vmul.f32 %v278, %v265
        %v280 = vadd.f32 %v276, %v279
        %s281 = sld [smem:[#allocation2 + $0x2]]
        %v282 = vstv %s281
        %v283 = vmul.f32 %v282, %v259
        %s284 = sld [smem:[#allocation2 + $0xa]]
        %v285 = vstv %s284
        %v286 = vmul.f32 %v285, %v261
        %v287 = vadd.f32 %v283, %v286
        %s288 = sld [smem:[#allocation2 + $0x12]]
        %v289 = vstv %s288
        %v290 = vmul.f32 %v289, %v263
        %v291 = vadd.f32 %v287, %v290
        %s292 = sld [smem:[#allocation2 + $0x1a]]
        %v293 = vstv %s292
        %v294 = vmul.f32 %v293, %v265
        %v295 = vadd.f32 %v291, %v294
        %s296 = sld [smem:[#allocation2 + $0x4]]
        %v297 = vstv %s296
        %v298 = vmul.f32 %v297, %v259
        %s299 = sld [smem:[#allocation2 + $0xc]]
        %v300 = vstv %s299
        %v301 = vmul.f32 %v300, %v261
        %v302 = vadd.f32 %v298, %v301
        %s303 = sld [smem:[#allocation2 + $0x14]]
        %v304 = vstv %s303
        %v305 = vmul.f32 %v304, %v263
        %v306 = vadd.f32 %v302, %v305
        %s307 = sld [smem:[#allocation2 + $0x1c]]
        %v308 = vstv %s307
        %v309 = vmul.f32 %v308, %v265
        %v310 = vadd.f32 %v306, %v309
        %s311 = sld [smem:[#allocation2 + $0x6]]
        %v312 = vstv %s311
        %v313 = vmul.f32 %v312, %v259
        %s314 = sld [smem:[#allocation2 + $0xe]]
        %v315 = vstv %s314
        %v316 = vmul.f32 %v315, %v261
        %v317 = vadd.f32 %v313, %v316
        %s318 = sld [smem:[#allocation2 + $0x16]]
        %v319 = vstv %s318
        %v320 = vmul.f32 %v319, %v263
        %v321 = vadd.f32 %v317, %v320
        %s322 = sld [smem:[#allocation2 + $0x1e]]
        %v323 = vstv %s322
        %v324 = vmul.f32 %v323, %v265
        %v325 = vadd.f32 %v321, %v324
        %s326 = sld [smem:[#allocation2 + $0x1]]
        %v327 = vstv %s326
        %v328 = vmul.f32 %v327, %v259
        %s329 = sld [smem:[#allocation2 + $0x9]]
        %v330 = vstv %s329
        %v331 = vmul.f32 %v330, %v261
        %v332 = vadd.f32 %v328, %v331
        %s333 = sld [smem:[#allocation2 + $0x11]]
        %v334 = vstv %s333
        %v335 = vmul.f32 %v334, %v263
        %v336 = vadd.f32 %v332, %v335
        %s337 = sld [smem:[#allocation2 + $0x19]]
        %v338 = vstv %s337
        %v339 = vmul.f32 %v338, %v265
        %v340 = vadd.f32 %v336, %v339
        %s341 = sld [smem:[#allocation2 + $0x3]]
        %v342 = vstv %s341
        %v343 = vmul.f32 %v342, %v259
        %s344 = sld [smem:[#allocation2 + $0xb]]
        %v345 = vstv %s344
        %v346 = vmul.f32 %v345, %v261
        %v347 = vadd.f32 %v343, %v346
        %s348 = sld [smem:[#allocation2 + $0x13]]
        %v349 = vstv %s348
        %v350 = vmul.f32 %v349, %v263
        %v351 = vadd.f32 %v347, %v350
        %s352 = sld [smem:[#allocation2 + $0x1b]]
        %v353 = vstv %s352
        %v354 = vmul.f32 %v353, %v265
        %v355 = vadd.f32 %v351, %v354
        %s356 = sld [smem:[#allocation2 + $0x5]]
        %v357 = vstv %s356
        %v358 = vmul.f32 %v357, %v259
        %s359 = sld [smem:[#allocation2 + $0xd]]
        %v360 = vstv %s359
        %v361 = vmul.f32 %v360, %v261
        %v362 = vadd.f32 %v358, %v361
        %s363 = sld [smem:[#allocation2 + $0x15]]
        %v364 = vstv %s363
        %v365 = vmul.f32 %v364, %v263
        %v366 = vadd.f32 %v362, %v365
        %s367 = sld [smem:[#allocation2 + $0x1d]]
        %v368 = vstv %s367
        %v369 = vmul.f32 %v368, %v265
        %v370 = vadd.f32 %v366, %v369
        %s371 = sld [smem:[#allocation2 + $0x7]]
        %v372 = vstv %s371
        %v373 = vmul.f32 %v372, %v259
        %s374 = sld [smem:[#allocation2 + $0xf]]
        %v375 = vstv %s374
        %v376 = vmul.f32 %v375, %v261
        %v377 = vadd.f32 %v373, %v376
        %s378 = sld [smem:[#allocation2 + $0x17]]
        %v379 = vstv %s378
        %v380 = vmul.f32 %v379, %v263
        %v381 = vadd.f32 %v377, %v380
        %s382 = sld [smem:[#allocation2 + $0x1f]]
        %v383 = vstv %s382
        %v384 = vmul.f32 %v383, %v265
        %v385 = vadd.f32 %v381, %v384
        %v386 = vld [vmem:[%s2] sm:$0xff]
        %s387 = scalar_lea.vmem %s2, 8
        %v388 = vld [vmem:[%s387] sm:$0xff]
        %vm389 = vcmask 64512
        %v391 = vsel %vm389, %v340, 0
        %v394 = vsel %vm389, %v355, 0
        %v397 = vsel %vm389, %v370, 0
        %v400 = vsel %vm389, %v385, 0
        %402 = vmatpush.msra.mxu0 0.0
        %403 = vmatpush.msra.mxu0 0.0
        %404 = vmatpush.msra.mxu0 0.0
        %405 = vmatpush.msra.mxu0 0.0
        %406 = vmatpush.msra.mxu0 0.0
        %407 = vmatpush.msra.mxu0 0.0
        %408 = vmatpush.msra.mxu0 0.0
        %409 = vmatpush.msra.mxu0 0.0
        %410 = vmatpush.msra.mxu0 0.0
        %411 = vmatpush.msra.mxu0 0.0
        %412 = vmatpush.msra.mxu0 0.0
        %413 = vmatpush.msra.mxu0 0.0
        %414 = vmatpush.msra.mxu0 0.0
        %415 = vmatpush.msra.mxu0 0.0
        %416 = vmatpush.msra.mxu0 0.0
        %v417 = vand.u32 %v388, 4294901760
        %418 = vmatpush.msra.mxu0 %v417
        %v419 = vand.u32 %v391, 4294901760
        %v420 = vsub.f32 %v391, %v419
        %v421 = vand.u32 %v420, 4294901760
        %v422 = vsub.f32 %v420, %v421
        %v423 = vand.u32 %v422, 4294901760
        %424 = vmatmul.f32.gmra.mxu0 %v423
        %v425 = vpop.f32.mrf.mxu0
        %v426 = vadd.f32 0.0, %v425
        %v427 = vand.u32 %v394, 4294901760
        %v428 = vsub.f32 %v394, %v427
        %v429 = vand.u32 %v428, 4294901760
        %v430 = vsub.f32 %v428, %v429
        %v431 = vand.u32 %v430, 4294901760
        %432 = vmatmul.f32.gmra.mxu0 %v431
        %v433 = vpop.f32.mrf.mxu0
        %v434 = vadd.f32 0.0, %v433
        %v435 = vand.u32 %v397, 4294901760
        %v436 = vsub.f32 %v397, %v435
        %v437 = vand.u32 %v436, 4294901760
        %v438 = vsub.f32 %v436, %v437
        %v439 = vand.u32 %v438, 4294901760
        %440 = vmatmul.f32.gmra.mxu0 %v439
        %v441 = vpop.f32.mrf.mxu0
        %v442 = vadd.f32 0.0, %v441
        %v443 = vand.u32 %v400, 4294901760
        %v444 = vsub.f32 %v400, %v443
        %v445 = vand.u32 %v444, 4294901760
        %v446 = vsub.f32 %v444, %v445
        %v447 = vand.u32 %v446, 4294901760
        %448 = vmatmul.f32.gmra.mxu0 %v447
        %v449 = vpop.f32.mrf.mxu0
        %v450 = vadd.f32 0.0, %v449
        %451 = vdwg.mxu0
        %452 = vmatpush.msra.mxu0 0.0
        %453 = vmatpush.msra.mxu0 0.0
        %454 = vmatpush.msra.mxu0 0.0
        %455 = vmatpush.msra.mxu0 0.0
        %456 = vmatpush.msra.mxu0 0.0
        %457 = vmatpush.msra.mxu0 0.0
        %458 = vmatpush.msra.mxu0 0.0
        %459 = vmatpush.msra.mxu0 0.0
        %460 = vmatpush.msra.mxu0 0.0
        %461 = vmatpush.msra.mxu0 0.0
        %462 = vmatpush.msra.mxu0 0.0
        %463 = vmatpush.msra.mxu0 0.0
        %464 = vmatpush.msra.mxu0 0.0
        %465 = vmatpush.msra.mxu0 0.0
        %466 = vmatpush.msra.mxu0 0.0
        %v467 = vand.u32 %v388, 4294901760
        %v468 = vsub.f32 %v388, %v467
        %v469 = vand.u32 %v468, 4294901760
        %v470 = vsub.f32 %v468, %v469
        %v471 = vand.u32 %v470, 4294901760
        %472 = vmatpush.msra.mxu0 %v471
        %v473 = vand.u32 %v391, 4294901760
        %474 = vmatmul.f32.gmra.mxu0 %v473
        %v475 = vpop.f32.mrf.mxu0
        %v476 = vadd.f32 %v426, %v475
        %v477 = vand.u32 %v394, 4294901760
        %478 = vmatmul.f32.gmra.mxu0 %v477
        %v479 = vpop.f32.mrf.mxu0
        %v480 = vadd.f32 %v434, %v479
        %v481 = vand.u32 %v397, 4294901760
        %482 = vmatmul.f32.gmra.mxu0 %v481
        %v483 = vpop.f32.mrf.mxu0
        %v484 = vadd.f32 %v442, %v483
        %v485 = vand.u32 %v400, 4294901760
        %486 = vmatmul.f32.gmra.mxu0 %v485
        %v487 = vpop.f32.mrf.mxu0
        %v488 = vadd.f32 %v450, %v487
        %489 = vdwg.mxu0
        %490 = vmatpush.msra.mxu0 0.0
        %491 = vmatpush.msra.mxu0 0.0
        %492 = vmatpush.msra.mxu0 0.0
        %493 = vmatpush.msra.mxu0 0.0
        %494 = vmatpush.msra.mxu0 0.0
        %495 = vmatpush.msra.mxu0 0.0
        %496 = vmatpush.msra.mxu0 0.0
        %497 = vmatpush.msra.mxu0 0.0
        %498 = vmatpush.msra.mxu0 0.0
        %499 = vmatpush.msra.mxu0 0.0
        %500 = vmatpush.msra.mxu0 0.0
        %501 = vmatpush.msra.mxu0 0.0
        %502 = vmatpush.msra.mxu0 0.0
        %503 = vmatpush.msra.mxu0 0.0
        %504 = vmatpush.msra.mxu0 0.0
        %v505 = vand.u32 %v388, 4294901760
        %v506 = vsub.f32 %v388, %v505
        %507 = vmatpush.msra.mxu0 %v506
        %v508 = vand.u32 %v391, 4294901760
        %v509 = vsub.f32 %v391, %v508
        %510 = vmatmul.f32.gmra.mxu0 %v509
        %v511 = vpop.f32.mrf.mxu0
        %v512 = vadd.f32 %v476, %v511
        %v513 = vand.u32 %v394, 4294901760
        %v514 = vsub.f32 %v394, %v513
        %515 = vmatmul.f32.gmra.mxu0 %v514
        %v516 = vpop.f32.mrf.mxu0
        %v517 = vadd.f32 %v480, %v516
        %v518 = vand.u32 %v397, 4294901760
        %v519 = vsub.f32 %v397, %v518
        %520 = vmatmul.f32.gmra.mxu0 %v519
        %v521 = vpop.f32.mrf.mxu0
        %v522 = vadd.f32 %v484, %v521
        %v523 = vand.u32 %v400, 4294901760
        %v524 = vsub.f32 %v400, %v523
        %525 = vmatmul.f32.gmra.mxu0 %v524
        %v526 = vpop.f32.mrf.mxu0
        %v527 = vadd.f32 %v488, %v526
        %528 = vdwg.mxu0
        %529 = vmatpush.msra.mxu0 0.0
        %530 = vmatpush.msra.mxu0 0.0
        %531 = vmatpush.msra.mxu0 0.0
        %532 = vmatpush.msra.mxu0 0.0
        %533 = vmatpush.msra.mxu0 0.0
        %534 = vmatpush.msra.mxu0 0.0
        %535 = vmatpush.msra.mxu0 0.0
        %536 = vmatpush.msra.mxu0 0.0
        %537 = vmatpush.msra.mxu0 0.0
        %538 = vmatpush.msra.mxu0 0.0
        %539 = vmatpush.msra.mxu0 0.0
        %540 = vmatpush.msra.mxu0 0.0
        %541 = vmatpush.msra.mxu0 0.0
        %542 = vmatpush.msra.mxu0 0.0
        %543 = vmatpush.msra.mxu0 0.0
        %v544 = vand.u32 %v388, 4294901760
        %545 = vmatpush.msra.mxu0 %v544
        %v546 = vand.u32 %v391, 4294901760
        %v547 = vsub.f32 %v391, %v546
        %v548 = vand.u32 %v547, 4294901760
        %549 = vmatmul.f32.gmra.mxu0 %v548
        %v550 = vpop.f32.mrf.mxu0
        %v551 = vadd.f32 %v512, %v550
        %v552 = vand.u32 %v394, 4294901760
        %v553 = vsub.f32 %v394, %v552
        %v554 = vand.u32 %v553, 4294901760
        %555 = vmatmul.f32.gmra.mxu0 %v554
        %v556 = vpop.f32.mrf.mxu0
        %v557 = vadd.f32 %v517, %v556
        %v558 = vand.u32 %v397, 4294901760
        %v559 = vsub.f32 %v397, %v558
        %v560 = vand.u32 %v559, 4294901760
        %561 = vmatmul.f32.gmra.mxu0 %v560
        %v562 = vpop.f32.mrf.mxu0
        %v563 = vadd.f32 %v522, %v562
        %v564 = vand.u32 %v400, 4294901760
        %v565 = vsub.f32 %v400, %v564
        %v566 = vand.u32 %v565, 4294901760
        %567 = vmatmul.f32.gmra.mxu0 %v566
        %v568 = vpop.f32.mrf.mxu0
        %v569 = vadd.f32 %v527, %v568
        %570 = vdwg.mxu0
        %571 = vmatpush.msra.mxu0 0.0
        %572 = vmatpush.msra.mxu0 0.0
        %573 = vmatpush.msra.mxu0 0.0
        %574 = vmatpush.msra.mxu0 0.0
        %575 = vmatpush.msra.mxu0 0.0
        %576 = vmatpush.msra.mxu0 0.0
        %577 = vmatpush.msra.mxu0 0.0
        %578 = vmatpush.msra.mxu0 0.0
        %579 = vmatpush.msra.mxu0 0.0
        %580 = vmatpush.msra.mxu0 0.0
        %581 = vmatpush.msra.mxu0 0.0
        %582 = vmatpush.msra.mxu0 0.0
        %583 = vmatpush.msra.mxu0 0.0
        %584 = vmatpush.msra.mxu0 0.0
        %585 = vmatpush.msra.mxu0 0.0
        %v586 = vand.u32 %v388, 4294901760
        %v587 = vsub.f32 %v388, %v586
        %v588 = vand.u32 %v587, 4294901760
        %589 = vmatpush.msra.mxu0 %v588
        %v590 = vand.u32 %v391, 4294901760
        %591 = vmatmul.f32.gmra.mxu0 %v590
        %v592 = vpop.f32.mrf.mxu0
        %v593 = vadd.f32 %v551, %v592
        %v594 = vand.u32 %v394, 4294901760
        %595 = vmatmul.f32.gmra.mxu0 %v594
        %v596 = vpop.f32.mrf.mxu0
        %v597 = vadd.f32 %v557, %v596
        %v598 = vand.u32 %v397, 4294901760
        %599 = vmatmul.f32.gmra.mxu0 %v598
        %v600 = vpop.f32.mrf.mxu0
        %v601 = vadd.f32 %v563, %v600
        %v602 = vand.u32 %v400, 4294901760
        %603 = vmatmul.f32.gmra.mxu0 %v602
        %v604 = vpop.f32.mrf.mxu0
        %v605 = vadd.f32 %v569, %v604
        %606 = vdwg.mxu0
        %607 = vmatpush.msra.mxu0 0.0
        %608 = vmatpush.msra.mxu0 0.0
        %609 = vmatpush.msra.mxu0 0.0
        %610 = vmatpush.msra.mxu0 0.0
        %611 = vmatpush.msra.mxu0 0.0
        %612 = vmatpush.msra.mxu0 0.0
        %613 = vmatpush.msra.mxu0 0.0
        %614 = vmatpush.msra.mxu0 0.0
        %615 = vmatpush.msra.mxu0 0.0
        %616 = vmatpush.msra.mxu0 0.0
        %617 = vmatpush.msra.mxu0 0.0
        %618 = vmatpush.msra.mxu0 0.0
        %619 = vmatpush.msra.mxu0 0.0
        %620 = vmatpush.msra.mxu0 0.0
        %621 = vmatpush.msra.mxu0 0.0
        %v622 = vand.u32 %v388, 4294901760
        %623 = vmatpush.msra.mxu0 %v622
        %v624 = vand.u32 %v391, 4294901760
        %625 = vmatmul.f32.gmra.mxu0 %v624
        %v626 = vpop.f32.mrf.mxu0
        %v627 = vadd.f32 %v593, %v626
        %v628 = vand.u32 %v394, 4294901760
        %629 = vmatmul.f32.gmra.mxu0 %v628
        %v630 = vpop.f32.mrf.mxu0
        %v631 = vadd.f32 %v597, %v630
        %v632 = vand.u32 %v397, 4294901760
        %633 = vmatmul.f32.gmra.mxu0 %v632
        %v634 = vpop.f32.mrf.mxu0
        %v635 = vadd.f32 %v601, %v634
        %v636 = vand.u32 %v400, 4294901760
        %637 = vmatmul.f32.gmra.mxu0 %v636
        %v638 = vpop.f32.mrf.mxu0
        %v639 = vadd.f32 %v605, %v638
        %640 = vdwg.mxu0
        %v642 = vsel %vm389, %v280, 0
        %v645 = vsel %vm389, %v295, 0
        %v648 = vsel %vm389, %v310, 0
        %v651 = vsel %vm389, %v325, 0
        %653 = vmatpush.msra.mxu0 0.0
        %654 = vmatpush.msra.mxu0 0.0
        %655 = vmatpush.msra.mxu0 0.0
        %656 = vmatpush.msra.mxu0 0.0
        %657 = vmatpush.msra.mxu0 0.0
        %658 = vmatpush.msra.mxu0 0.0
        %659 = vmatpush.msra.mxu0 0.0
        %660 = vmatpush.msra.mxu0 0.0
        %661 = vmatpush.msra.mxu0 0.0
        %662 = vmatpush.msra.mxu0 0.0
        %663 = vmatpush.msra.mxu0 0.0
        %664 = vmatpush.msra.mxu0 0.0
        %665 = vmatpush.msra.mxu0 0.0
        %666 = vmatpush.msra.mxu0 0.0
        %667 = vmatpush.msra.mxu0 0.0
        %v668 = vand.u32 %v386, 4294901760
        %669 = vmatpush.msra.mxu0 %v668
        %v670 = vand.u32 %v642, 4294901760
        %v671 = vsub.f32 %v642, %v670
        %v672 = vand.u32 %v671, 4294901760
        %v673 = vsub.f32 %v671, %v672
        %v674 = vand.u32 %v673, 4294901760
        %675 = vmatmul.f32.gmra.mxu0 %v674
        %v676 = vpop.f32.mrf.mxu0
        %v677 = vadd.f32 %v627, %v676
        %v678 = vand.u32 %v645, 4294901760
        %v679 = vsub.f32 %v645, %v678
        %v680 = vand.u32 %v679, 4294901760
        %v681 = vsub.f32 %v679, %v680
        %v682 = vand.u32 %v681, 4294901760
        %683 = vmatmul.f32.gmra.mxu0 %v682
        %v684 = vpop.f32.mrf.mxu0
        %v685 = vadd.f32 %v631, %v684
        %v686 = vand.u32 %v648, 4294901760
        %v687 = vsub.f32 %v648, %v686
        %v688 = vand.u32 %v687, 4294901760
        %v689 = vsub.f32 %v687, %v688
        %v690 = vand.u32 %v689, 4294901760
        %691 = vmatmul.f32.gmra.mxu0 %v690
        %v692 = vpop.f32.mrf.mxu0
        %v693 = vadd.f32 %v635, %v692
        %v694 = vand.u32 %v651, 4294901760
        %v695 = vsub.f32 %v651, %v694
        %v696 = vand.u32 %v695, 4294901760
        %v697 = vsub.f32 %v695, %v696
        %v698 = vand.u32 %v697, 4294901760
        %699 = vmatmul.f32.gmra.mxu0 %v698
        %v700 = vpop.f32.mrf.mxu0
        %v701 = vadd.f32 %v639, %v700
        %702 = vdwg.mxu0
        %703 = vmatpush.msra.mxu0 0.0
        %704 = vmatpush.msra.mxu0 0.0
        %705 = vmatpush.msra.mxu0 0.0
        %706 = vmatpush.msra.mxu0 0.0
        %707 = vmatpush.msra.mxu0 0.0
        %708 = vmatpush.msra.mxu0 0.0
        %709 = vmatpush.msra.mxu0 0.0
        %710 = vmatpush.msra.mxu0 0.0
        %711 = vmatpush.msra.mxu0 0.0
        %712 = vmatpush.msra.mxu0 0.0
        %713 = vmatpush.msra.mxu0 0.0
        %714 = vmatpush.msra.mxu0 0.0
        %715 = vmatpush.msra.mxu0 0.0
        %716 = vmatpush.msra.mxu0 0.0
        %717 = vmatpush.msra.mxu0 0.0
        %v718 = vand.u32 %v386, 4294901760
        %v719 = vsub.f32 %v386, %v718
        %v720 = vand.u32 %v719, 4294901760
        %v721 = vsub.f32 %v719, %v720
        %v722 = vand.u32 %v721, 4294901760
        %723 = vmatpush.msra.mxu0 %v722
        %v724 = vand.u32 %v642, 4294901760
        %725 = vmatmul.f32.gmra.mxu0 %v724
        %v726 = vpop.f32.mrf.mxu0
        %v727 = vadd.f32 %v677, %v726
        %v728 = vand.u32 %v645, 4294901760
        %729 = vmatmul.f32.gmra.mxu0 %v728
        %v730 = vpop.f32.mrf.mxu0
        %v731 = vadd.f32 %v685, %v730
        %v732 = vand.u32 %v648, 4294901760
        %733 = vmatmul.f32.gmra.mxu0 %v732
        %v734 = vpop.f32.mrf.mxu0
        %v735 = vadd.f32 %v693, %v734
        %v736 = vand.u32 %v651, 4294901760
        %737 = vmatmul.f32.gmra.mxu0 %v736
        %v738 = vpop.f32.mrf.mxu0
        %v739 = vadd.f32 %v701, %v738
        %740 = vdwg.mxu0
        %741 = vmatpush.msra.mxu0 0.0
        %742 = vmatpush.msra.mxu0 0.0
        %743 = vmatpush.msra.mxu0 0.0
        %744 = vmatpush.msra.mxu0 0.0
        %745 = vmatpush.msra.mxu0 0.0
        %746 = vmatpush.msra.mxu0 0.0
        %747 = vmatpush.msra.mxu0 0.0
        %748 = vmatpush.msra.mxu0 0.0
        %749 = vmatpush.msra.mxu0 0.0
        %750 = vmatpush.msra.mxu0 0.0
        %751 = vmatpush.msra.mxu0 0.0
        %752 = vmatpush.msra.mxu0 0.0
        %753 = vmatpush.msra.mxu0 0.0
        %754 = vmatpush.msra.mxu0 0.0
        %755 = vmatpush.msra.mxu0 0.0
        %v756 = vand.u32 %v386, 4294901760
        %v757 = vsub.f32 %v386, %v756
        %758 = vmatpush.msra.mxu0 %v757
        %v759 = vand.u32 %v642, 4294901760
        %v760 = vsub.f32 %v642, %v759
        %761 = vmatmul.f32.gmra.mxu0 %v760
        %v762 = vpop.f32.mrf.mxu0
        %v763 = vadd.f32 %v727, %v762
        %v764 = vand.u32 %v645, 4294901760
        %v765 = vsub.f32 %v645, %v764
        %766 = vmatmul.f32.gmra.mxu0 %v765
        %v767 = vpop.f32.mrf.mxu0
        %v768 = vadd.f32 %v731, %v767
        %v769 = vand.u32 %v648, 4294901760
        %v770 = vsub.f32 %v648, %v769
        %771 = vmatmul.f32.gmra.mxu0 %v770
        %v772 = vpop.f32.mrf.mxu0
        %v773 = vadd.f32 %v735, %v772
        %v774 = vand.u32 %v651, 4294901760
        %v775 = vsub.f32 %v651, %v774
        %776 = vmatmul.f32.gmra.mxu0 %v775
        %v777 = vpop.f32.mrf.mxu0
        %v778 = vadd.f32 %v739, %v777
        %779 = vdwg.mxu0
        %780 = vmatpush.msra.mxu0 0.0
        %781 = vmatpush.msra.mxu0 0.0
        %782 = vmatpush.msra.mxu0 0.0
        %783 = vmatpush.msra.mxu0 0.0
        %784 = vmatpush.msra.mxu0 0.0
        %785 = vmatpush.msra.mxu0 0.0
        %786 = vmatpush.msra.mxu0 0.0
        %787 = vmatpush.msra.mxu0 0.0
        %788 = vmatpush.msra.mxu0 0.0
        %789 = vmatpush.msra.mxu0 0.0
        %790 = vmatpush.msra.mxu0 0.0
        %791 = vmatpush.msra.mxu0 0.0
        %792 = vmatpush.msra.mxu0 0.0
        %793 = vmatpush.msra.mxu0 0.0
        %794 = vmatpush.msra.mxu0 0.0
        %v795 = vand.u32 %v386, 4294901760
        %796 = vmatpush.msra.mxu0 %v795
        %v797 = vand.u32 %v642, 4294901760
        %v798 = vsub.f32 %v642, %v797
        %v799 = vand.u32 %v798, 4294901760
        %800 = vmatmul.f32.gmra.mxu0 %v799
        %v801 = vpop.f32.mrf.mxu0
        %v802 = vadd.f32 %v763, %v801
        %v803 = vand.u32 %v645, 4294901760
        %v804 = vsub.f32 %v645, %v803
        %v805 = vand.u32 %v804, 4294901760
        %806 = vmatmul.f32.gmra.mxu0 %v805
        %v807 = vpop.f32.mrf.mxu0
        %v808 = vadd.f32 %v768, %v807
        %v809 = vand.u32 %v648, 4294901760
        %v810 = vsub.f32 %v648, %v809
        %v811 = vand.u32 %v810, 4294901760
        %812 = vmatmul.f32.gmra.mxu0 %v811
        %v813 = vpop.f32.mrf.mxu0
        %v814 = vadd.f32 %v773, %v813
        %v815 = vand.u32 %v651, 4294901760
        %v816 = vsub.f32 %v651, %v815
        %v817 = vand.u32 %v816, 4294901760
        %818 = vmatmul.f32.gmra.mxu0 %v817
        %v819 = vpop.f32.mrf.mxu0
        %v820 = vadd.f32 %v778, %v819
        %821 = vdwg.mxu0
        %822 = vmatpush.msra.mxu0 0.0
        %823 = vmatpush.msra.mxu0 0.0
        %824 = vmatpush.msra.mxu0 0.0
        %825 = vmatpush.msra.mxu0 0.0
        %826 = vmatpush.msra.mxu0 0.0
        %827 = vmatpush.msra.mxu0 0.0
        %828 = vmatpush.msra.mxu0 0.0
        %829 = vmatpush.msra.mxu0 0.0
        %830 = vmatpush.msra.mxu0 0.0
        %831 = vmatpush.msra.mxu0 0.0
        %832 = vmatpush.msra.mxu0 0.0
        %833 = vmatpush.msra.mxu0 0.0
        %834 = vmatpush.msra.mxu0 0.0
        %835 = vmatpush.msra.mxu0 0.0
        %836 = vmatpush.msra.mxu0 0.0
        %v837 = vand.u32 %v386, 4294901760
        %v838 = vsub.f32 %v386, %v837
        %v839 = vand.u32 %v838, 4294901760
        %840 = vmatpush.msra.mxu0 %v839
        %v841 = vand.u32 %v642, 4294901760
        %842 = vmatmul.f32.gmra.mxu0 %v841
        %v843 = vpop.f32.mrf.mxu0
        %v844 = vadd.f32 %v802, %v843
        %v845 = vand.u32 %v645, 4294901760
        %846 = vmatmul.f32.gmra.mxu0 %v845
        %v847 = vpop.f32.mrf.mxu0
        %v848 = vadd.f32 %v808, %v847
        %v849 = vand.u32 %v648, 4294901760
        %850 = vmatmul.f32.gmra.mxu0 %v849
        %v851 = vpop.f32.mrf.mxu0
        %v852 = vadd.f32 %v814, %v851
        %v853 = vand.u32 %v651, 4294901760
        %854 = vmatmul.f32.gmra.mxu0 %v853
        %v855 = vpop.f32.mrf.mxu0
        %v856 = vadd.f32 %v820, %v855
        %857 = vdwg.mxu0
        %858 = vmatpush.msra.mxu0 0.0
        %859 = vmatpush.msra.mxu0 0.0
        %860 = vmatpush.msra.mxu0 0.0
        %861 = vmatpush.msra.mxu0 0.0
        %862 = vmatpush.msra.mxu0 0.0
        %863 = vmatpush.msra.mxu0 0.0
        %864 = vmatpush.msra.mxu0 0.0
        %865 = vmatpush.msra.mxu0 0.0
        %866 = vmatpush.msra.mxu0 0.0
        %867 = vmatpush.msra.mxu0 0.0
        %868 = vmatpush.msra.mxu0 0.0
        %869 = vmatpush.msra.mxu0 0.0
        %870 = vmatpush.msra.mxu0 0.0
        %871 = vmatpush.msra.mxu0 0.0
        %872 = vmatpush.msra.mxu0 0.0
        %v873 = vand.u32 %v386, 4294901760
        %874 = vmatpush.msra.mxu0 %v873
        %v875 = vand.u32 %v642, 4294901760
        %876 = vmatmul.f32.gmra.mxu0 %v875
        %v877 = vpop.f32.mrf.mxu0
        %v878 = vadd.f32 %v844, %v877
        %v879 = vand.u32 %v645, 4294901760
        %880 = vmatmul.f32.gmra.mxu0 %v879
        %v881 = vpop.f32.mrf.mxu0
        %v882 = vadd.f32 %v848, %v881
        %v883 = vand.u32 %v648, 4294901760
        %884 = vmatmul.f32.gmra.mxu0 %v883
        %v885 = vpop.f32.mrf.mxu0
        %v886 = vadd.f32 %v852, %v885
        %v887 = vand.u32 %v651, 4294901760
        %888 = vmatmul.f32.gmra.mxu0 %v887
        %v889 = vpop.f32.mrf.mxu0
        %v890 = vadd.f32 %v856, %v889
        %891 = vdwg.mxu0
        %v892 = vld [vmem:[%s3] sm:$0xff]
        %v893 = vld [vmem:[%s3 + $0x8] sm:$0xff]
        %v894 = vld [vmem:[%s3 + $0x10] sm:$0xff]
        %v895 = vld [vmem:[%s3 + $0x18] sm:$0xff]
        %vm896 = vcmask 261120
        %v898 = vsel %vm896, %v892, 0
        %v901 = vsel %vm896, %v893, 0
        %v904 = vsel %vm896, %v894, 0
        %v907 = vsel %vm896, %v895, 0
        %909 = vmatpush.msra.mxu0 0.0
        %910 = vmatpush.msra.mxu0 0.0
        %911 = vmatpush.msra.mxu0 0.0
        %912 = vmatpush.msra.mxu0 0.0
        %913 = vmatpush.msra.mxu0 0.0
        %914 = vmatpush.msra.mxu0 0.0
        %915 = vmatpush.msra.mxu0 0.0
        %916 = vmatpush.msra.mxu0 0.0
        %917 = vmatpush.msra.mxu0 0.0
        %918 = vmatpush.msra.mxu0 0.0
        %919 = vmatpush.msra.mxu0 0.0
        %920 = vmatpush.msra.mxu0 0.0
        %v921 = vand.u32 %v890, 4294901760
        %922 = vmatpush.msra.mxu0 %v921
        %v923 = vand.u32 %v886, 4294901760
        %924 = vmatpush.msra.mxu0 %v923
        %v925 = vand.u32 %v882, 4294901760
        %926 = vmatpush.msra.mxu0 %v925
        %v927 = vand.u32 %v878, 4294901760
        %928 = vmatpush.msra.mxu0 %v927
        %v929 = vand.u32 %v898, 4294901760
        %v930 = vsub.f32 %v898, %v929
        %v931 = vand.u32 %v930, 4294901760
        %v932 = vsub.f32 %v930, %v931
        %v933 = vand.u32 %v932, 4294901760
        %934 = vmatmul.f32.gmra.mxu0 %v933
        %v935 = vpop.f32.mrf.mxu0
        %v936 = vadd.f32 0.0, %v935
        %v937 = vand.u32 %v901, 4294901760
        %v938 = vsub.f32 %v901, %v937
        %v939 = vand.u32 %v938, 4294901760
        %v940 = vsub.f32 %v938, %v939
        %v941 = vand.u32 %v940, 4294901760
        %942 = vmatmul.f32.gmra.mxu0 %v941
        %v943 = vpop.f32.mrf.mxu0
        %v944 = vadd.f32 0.0, %v943
        %v945 = vand.u32 %v904, 4294901760
        %v946 = vsub.f32 %v904, %v945
        %v947 = vand.u32 %v946, 4294901760
        %v948 = vsub.f32 %v946, %v947
        %v949 = vand.u32 %v948, 4294901760
        %950 = vmatmul.f32.gmra.mxu0 %v949
        %v951 = vpop.f32.mrf.mxu0
        %v952 = vadd.f32 0.0, %v951
        %v953 = vand.u32 %v907, 4294901760
        %v954 = vsub.f32 %v907, %v953
        %v955 = vand.u32 %v954, 4294901760
        %v956 = vsub.f32 %v954, %v955
        %v957 = vand.u32 %v956, 4294901760
        %958 = vmatmul.f32.gmra.mxu0 %v957
        %v959 = vpop.f32.mrf.mxu0
        %v960 = vadd.f32 0.0, %v959
        %961 = vdwg.mxu0
        %962 = vmatpush.msra.mxu0 0.0
        %963 = vmatpush.msra.mxu0 0.0
        %964 = vmatpush.msra.mxu0 0.0
        %965 = vmatpush.msra.mxu0 0.0
        %966 = vmatpush.msra.mxu0 0.0
        %967 = vmatpush.msra.mxu0 0.0
        %968 = vmatpush.msra.mxu0 0.0
        %969 = vmatpush.msra.mxu0 0.0
        %970 = vmatpush.msra.mxu0 0.0
        %971 = vmatpush.msra.mxu0 0.0
        %972 = vmatpush.msra.mxu0 0.0
        %973 = vmatpush.msra.mxu0 0.0
        %v974 = vand.u32 %v890, 4294901760
        %v975 = vsub.f32 %v890, %v974
        %v976 = vand.u32 %v975, 4294901760
        %v977 = vsub.f32 %v975, %v976
        %v978 = vand.u32 %v977, 4294901760
        %979 = vmatpush.msra.mxu0 %v978
        %v980 = vand.u32 %v886, 4294901760
        %v981 = vsub.f32 %v886, %v980
        %v982 = vand.u32 %v981, 4294901760
        %v983 = vsub.f32 %v981, %v982
        %v984 = vand.u32 %v983, 4294901760
        %985 = vmatpush.msra.mxu0 %v984
        %v986 = vand.u32 %v882, 4294901760
        %v987 = vsub.f32 %v882, %v986
        %v988 = vand.u32 %v987, 4294901760
        %v989 = vsub.f32 %v987, %v988
        %v990 = vand.u32 %v989, 4294901760
        %991 = vmatpush.msra.mxu0 %v990
        %v992 = vand.u32 %v878, 4294901760
        %v993 = vsub.f32 %v878, %v992
        %v994 = vand.u32 %v993, 4294901760
        %v995 = vsub.f32 %v993, %v994
        %v996 = vand.u32 %v995, 4294901760
        %997 = vmatpush.msra.mxu0 %v996
        %v998 = vand.u32 %v898, 4294901760
        %999 = vmatmul.f32.gmra.mxu0 %v998
        %v1000 = vpop.f32.mrf.mxu0
        %v1001 = vadd.f32 %v936, %v1000
        %v1002 = vand.u32 %v901, 4294901760
        %1003 = vmatmul.f32.gmra.mxu0 %v1002
        %v1004 = vpop.f32.mrf.mxu0
        %v1005 = vadd.f32 %v944, %v1004
        %v1006 = vand.u32 %v904, 4294901760
        %1007 = vmatmul.f32.gmra.mxu0 %v1006
        %v1008 = vpop.f32.mrf.mxu0
        %v1009 = vadd.f32 %v952, %v1008
        %v1010 = vand.u32 %v907, 4294901760
        %1011 = vmatmul.f32.gmra.mxu0 %v1010
        %v1012 = vpop.f32.mrf.mxu0
        %v1013 = vadd.f32 %v960, %v1012
        %1014 = vdwg.mxu0
        %1015 = vmatpush.msra.mxu0 0.0
        %1016 = vmatpush.msra.mxu0 0.0
        %1017 = vmatpush.msra.mxu0 0.0
        %1018 = vmatpush.msra.mxu0 0.0
        %1019 = vmatpush.msra.mxu0 0.0
        %1020 = vmatpush.msra.mxu0 0.0
        %1021 = vmatpush.msra.mxu0 0.0
        %1022 = vmatpush.msra.mxu0 0.0
        %1023 = vmatpush.msra.mxu0 0.0
        %1024 = vmatpush.msra.mxu0 0.0
        %1025 = vmatpush.msra.mxu0 0.0
        %1026 = vmatpush.msra.mxu0 0.0
        %v1027 = vand.u32 %v890, 4294901760
        %v1028 = vsub.f32 %v890, %v1027
        %1029 = vmatpush.msra.mxu0 %v1028
        %v1030 = vand.u32 %v886, 4294901760
        %v1031 = vsub.f32 %v886, %v1030
        %1032 = vmatpush.msra.mxu0 %v1031
        %v1033 = vand.u32 %v882, 4294901760
        %v1034 = vsub.f32 %v882, %v1033
        %1035 = vmatpush.msra.mxu0 %v1034
        %v1036 = vand.u32 %v878, 4294901760
        %v1037 = vsub.f32 %v878, %v1036
        %1038 = vmatpush.msra.mxu0 %v1037
        %v1039 = vand.u32 %v898, 4294901760
        %v1040 = vsub.f32 %v898, %v1039
        %1041 = vmatmul.f32.gmra.mxu0 %v1040
        %v1042 = vpop.f32.mrf.mxu0
        %v1043 = vadd.f32 %v1001, %v1042
        %v1044 = vand.u32 %v901, 4294901760
        %v1045 = vsub.f32 %v901, %v1044
        %1046 = vmatmul.f32.gmra.mxu0 %v1045
        %v1047 = vpop.f32.mrf.mxu0
        %v1048 = vadd.f32 %v1005, %v1047
        %v1049 = vand.u32 %v904, 4294901760
        %v1050 = vsub.f32 %v904, %v1049
        %1051 = vmatmul.f32.gmra.mxu0 %v1050
        %v1052 = vpop.f32.mrf.mxu0
        %v1053 = vadd.f32 %v1009, %v1052
        %v1054 = vand.u32 %v907, 4294901760
        %v1055 = vsub.f32 %v907, %v1054
        %1056 = vmatmul.f32.gmra.mxu0 %v1055
        %v1057 = vpop.f32.mrf.mxu0
        %v1058 = vadd.f32 %v1013, %v1057
        %1059 = vdwg.mxu0
        %1060 = vmatpush.msra.mxu0 0.0
        %1061 = vmatpush.msra.mxu0 0.0
        %1062 = vmatpush.msra.mxu0 0.0
        %1063 = vmatpush.msra.mxu0 0.0
        %1064 = vmatpush.msra.mxu0 0.0
        %1065 = vmatpush.msra.mxu0 0.0
        %1066 = vmatpush.msra.mxu0 0.0
        %1067 = vmatpush.msra.mxu0 0.0
        %1068 = vmatpush.msra.mxu0 0.0
        %1069 = vmatpush.msra.mxu0 0.0
        %1070 = vmatpush.msra.mxu0 0.0
        %1071 = vmatpush.msra.mxu0 0.0
        %v1072 = vand.u32 %v890, 4294901760
        %1073 = vmatpush.msra.mxu0 %v1072
        %v1074 = vand.u32 %v886, 4294901760
        %1075 = vmatpush.msra.mxu0 %v1074
        %v1076 = vand.u32 %v882, 4294901760
        %1077 = vmatpush.msra.mxu0 %v1076
        %v1078 = vand.u32 %v878, 4294901760
        %1079 = vmatpush.msra.mxu0 %v1078
        %v1080 = vand.u32 %v898, 4294901760
        %v1081 = vsub.f32 %v898, %v1080
        %v1082 = vand.u32 %v1081, 4294901760
        %1083 = vmatmul.f32.gmra.mxu0 %v1082
        %v1084 = vpop.f32.mrf.mxu0
        %v1085 = vadd.f32 %v1043, %v1084
        %v1086 = vand.u32 %v901, 4294901760
        %v1087 = vsub.f32 %v901, %v1086
        %v1088 = vand.u32 %v1087, 4294901760
        %1089 = vmatmul.f32.gmra.mxu0 %v1088
        %v1090 = vpop.f32.mrf.mxu0
        %v1091 = vadd.f32 %v1048, %v1090
        %v1092 = vand.u32 %v904, 4294901760
        %v1093 = vsub.f32 %v904, %v1092
        %v1094 = vand.u32 %v1093, 4294901760
        %1095 = vmatmul.f32.gmra.mxu0 %v1094
        %v1096 = vpop.f32.mrf.mxu0
        %v1097 = vadd.f32 %v1053, %v1096
        %v1098 = vand.u32 %v907, 4294901760
        %v1099 = vsub.f32 %v907, %v1098
        %v1100 = vand.u32 %v1099, 4294901760
        %1101 = vmatmul.f32.gmra.mxu0 %v1100
        %v1102 = vpop.f32.mrf.mxu0
        %v1103 = vadd.f32 %v1058, %v1102
        %1104 = vdwg.mxu0
        %1105 = vmatpush.msra.mxu0 0.0
        %1106 = vmatpush.msra.mxu0 0.0
        %1107 = vmatpush.msra.mxu0 0.0
        %1108 = vmatpush.msra.mxu0 0.0
        %1109 = vmatpush.msra.mxu0 0.0
        %1110 = vmatpush.msra.mxu0 0.0
        %1111 = vmatpush.msra.mxu0 0.0
        %1112 = vmatpush.msra.mxu0 0.0
        %1113 = vmatpush.msra.mxu0 0.0
        %1114 = vmatpush.msra.mxu0 0.0
        %1115 = vmatpush.msra.mxu0 0.0
        %1116 = vmatpush.msra.mxu0 0.0
        %v1117 = vand.u32 %v890, 4294901760
        %v1118 = vsub.f32 %v890, %v1117
        %v1119 = vand.u32 %v1118, 4294901760
        %1120 = vmatpush.msra.mxu0 %v1119
        %v1121 = vand.u32 %v886, 4294901760
        %v1122 = vsub.f32 %v886, %v1121
        %v1123 = vand.u32 %v1122, 4294901760
        %1124 = vmatpush.msra.mxu0 %v1123
        %v1125 = vand.u32 %v882, 4294901760
        %v1126 = vsub.f32 %v882, %v1125
        %v1127 = vand.u32 %v1126, 4294901760
        %1128 = vmatpush.msra.mxu0 %v1127
        %v1129 = vand.u32 %v878, 4294901760
        %v1130 = vsub.f32 %v878, %v1129
        %v1131 = vand.u32 %v1130, 4294901760
        %1132 = vmatpush.msra.mxu0 %v1131
        %v1133 = vand.u32 %v898, 4294901760
        %1134 = vmatmul.f32.gmra.mxu0 %v1133
        %v1135 = vpop.f32.mrf.mxu0
        %v1136 = vadd.f32 %v1085, %v1135
        %v1137 = vand.u32 %v901, 4294901760
        %1138 = vmatmul.f32.gmra.mxu0 %v1137
        %v1139 = vpop.f32.mrf.mxu0
        %v1140 = vadd.f32 %v1091, %v1139
        %v1141 = vand.u32 %v904, 4294901760
        %1142 = vmatmul.f32.gmra.mxu0 %v1141
        %v1143 = vpop.f32.mrf.mxu0
        %v1144 = vadd.f32 %v1097, %v1143
        %v1145 = vand.u32 %v907, 4294901760
        %1146 = vmatmul.f32.gmra.mxu0 %v1145
        %v1147 = vpop.f32.mrf.mxu0
        %v1148 = vadd.f32 %v1103, %v1147
        %1149 = vdwg.mxu0
        %1150 = vmatpush.msra.mxu0 0.0
        %1151 = vmatpush.msra.mxu0 0.0
        %1152 = vmatpush.msra.mxu0 0.0
        %1153 = vmatpush.msra.mxu0 0.0
        %1154 = vmatpush.msra.mxu0 0.0
        %1155 = vmatpush.msra.mxu0 0.0
        %1156 = vmatpush.msra.mxu0 0.0
        %1157 = vmatpush.msra.mxu0 0.0
        %1158 = vmatpush.msra.mxu0 0.0
        %1159 = vmatpush.msra.mxu0 0.0
        %1160 = vmatpush.msra.mxu0 0.0
        %1161 = vmatpush.msra.mxu0 0.0
        %v1162 = vand.u32 %v890, 4294901760
        %1163 = vmatpush.msra.mxu0 %v1162
        %v1164 = vand.u32 %v886, 4294901760
        %1165 = vmatpush.msra.mxu0 %v1164
        %v1166 = vand.u32 %v882, 4294901760
        %1167 = vmatpush.msra.mxu0 %v1166
        %v1168 = vand.u32 %v878, 4294901760
        %1169 = vmatpush.msra.mxu0 %v1168
        %v1170 = vand.u32 %v898, 4294901760
        %1171 = vmatmul.f32.gmra.mxu0 %v1170
        %v1172 = vpop.f32.mrf.mxu0
        %v1173 = vadd.f32 %v1136, %v1172
        %v1174 = vand.u32 %v901, 4294901760
        %1175 = vmatmul.f32.gmra.mxu0 %v1174
        %v1176 = vpop.f32.mrf.mxu0
        %v1177 = vadd.f32 %v1140, %v1176
        %v1178 = vand.u32 %v904, 4294901760
        %1179 = vmatmul.f32.gmra.mxu0 %v1178
        %v1180 = vpop.f32.mrf.mxu0
        %v1181 = vadd.f32 %v1144, %v1180
        %v1182 = vand.u32 %v907, 4294901760
        %1183 = vmatmul.f32.gmra.mxu0 %v1182
        %v1184 = vpop.f32.mrf.mxu0
        %v1185 = vadd.f32 %v1148, %v1184
        %1186 = vdwg.mxu0
        %v1187 = vmax.f32 %v1173, 0.0
        %v1188 = vmax.f32 %v1177, 0.0
        %v1189 = vmax.f32 %v1181, 0.0
        %v1190 = vmax.f32 %v1185, 0.0
        %s1191 = sld [smem:[#allocation2 + $0x20]]
        %v1192 = vstv %s1191
        %v1193 = vmul.f32 %v1192, %v1187
        %v1194 = vmul.f32 %v1192, %v1188
        %v1195 = vadd.f32 %v1193, 0.0
        %v1196 = vadd.f32 %v1194, 0.0
        %s1197 = sld [smem:[#allocation2 + $0x44]]
        %v1198 = vstv %s1197
        %v1199 = vmul.f32 %v1198, %v1187
        %v1200 = vmul.f32 %v1198, %v1188
        %v1201 = vadd.f32 %v1199, 0.0
        %v1202 = vadd.f32 %v1200, 0.0
        %s1203 = sld [smem:[#allocation2 + $0x68]]
        %v1204 = vstv %s1203
        %v1205 = vmul.f32 %v1204, %v1187
        %v1206 = vmul.f32 %v1204, %v1188
        %v1207 = vadd.f32 %v1205, 0.0
        %v1208 = vadd.f32 %v1206, 0.0
        %s1209 = sld [smem:[#allocation2 + $0x8c]]
        %v1210 = vstv %s1209
        %v1211 = vmul.f32 %v1210, %v1187
        %v1212 = vmul.f32 %v1210, %v1188
        %v1213 = vadd.f32 %v1211, 0.0
        %v1214 = vadd.f32 %v1212, 0.0
        %s1215 = sld [smem:[#allocation2 + $0x21]]
        %v1216 = vstv %s1215
        %v1217 = vmul.f32 %v1216, %v1187
        %v1218 = vmul.f32 %v1216, %v1188
        %1221 = vrot.lane.b32.xlu0 %v1217, 127
        %v1222 = vpop.permute.xlu0 %1221
        %1223 = vrot.lane.b32.xlu0 %v1218, 127
        %v1224 = vpop.permute.xlu0 %1223
        %v1227 = vadd.f32 %v1195, %v1222
        %v1228 = vadd.f32 %v1196, %v1224
        %s1229 = sld [smem:[#allocation2 + $0x45]]
        %v1230 = vstv %s1229
        %v1231 = vmul.f32 %v1230, %v1187
        %v1232 = vmul.f32 %v1230, %v1188
        %1235 = vrot.lane.b32.xlu0 %v1231, 127
        %v1236 = vpop.permute.xlu0 %1235
        %1237 = vrot.lane.b32.xlu0 %v1232, 127
        %v1238 = vpop.permute.xlu0 %1237
        %v1241 = vadd.f32 %v1201, %v1236
        %v1242 = vadd.f32 %v1202, %v1238
        %s1243 = sld [smem:[#allocation2 + $0x69]]
        %v1244 = vstv %s1243
        %v1245 = vmul.f32 %v1244, %v1187
        %v1246 = vmul.f32 %v1244, %v1188
        %1249 = vrot.lane.b32.xlu0 %v1245, 127
        %v1250 = vpop.permute.xlu0 %1249
        %1251 = vrot.lane.b32.xlu0 %v1246, 127
        %v1252 = vpop.permute.xlu0 %1251
        %v1255 = vadd.f32 %v1207, %v1250
        %v1256 = vadd.f32 %v1208, %v1252
        %s1257 = sld [smem:[#allocation2 + $0x8d]]
        %v1258 = vstv %s1257
        %v1259 = vmul.f32 %v1258, %v1187
        %v1260 = vmul.f32 %v1258, %v1188
        %1263 = vrot.lane.b32.xlu0 %v1259, 127
        %v1264 = vpop.permute.xlu0 %1263
        %1265 = vrot.lane.b32.xlu0 %v1260, 127
        %v1266 = vpop.permute.xlu0 %1265
        %v1269 = vadd.f32 %v1213, %v1264
        %v1270 = vadd.f32 %v1214, %v1266
        %s1271 = sld [smem:[#allocation2 + $0x22]]
        %v1272 = vstv %s1271
        %v1273 = vmul.f32 %v1272, %v1187
        %v1274 = vmul.f32 %v1272, %v1188
        %1277 = vrot.lane.b32.xlu0 %v1273, 126
        %v1278 = vpop.permute.xlu0 %1277
        %1279 = vrot.lane.b32.xlu0 %v1274, 126
        %v1280 = vpop.permute.xlu0 %1279
        %v1283 = vadd.f32 %v1227, %v1278
        %v1284 = vadd.f32 %v1228, %v1280
        %s1285 = sld [smem:[#allocation2 + $0x46]]
        %v1286 = vstv %s1285
        %v1287 = vmul.f32 %v1286, %v1187
        %v1288 = vmul.f32 %v1286, %v1188
        %1291 = vrot.lane.b32.xlu0 %v1287, 126
        %v1292 = vpop.permute.xlu0 %1291
        %1293 = vrot.lane.b32.xlu0 %v1288, 126
        %v1294 = vpop.permute.xlu0 %1293
        %v1297 = vadd.f32 %v1241, %v1292
        %v1298 = vadd.f32 %v1242, %v1294
        %s1299 = sld [smem:[#allocation2 + $0x6a]]
        %v1300 = vstv %s1299
        %v1301 = vmul.f32 %v1300, %v1187
        %v1302 = vmul.f32 %v1300, %v1188
        %1305 = vrot.lane.b32.xlu0 %v1301, 126
        %v1306 = vpop.permute.xlu0 %1305
        %1307 = vrot.lane.b32.xlu0 %v1302, 126
        %v1308 = vpop.permute.xlu0 %1307
        %v1311 = vadd.f32 %v1255, %v1306
        %v1312 = vadd.f32 %v1256, %v1308
        %s1313 = sld [smem:[#allocation2 + $0x8e]]
        %v1314 = vstv %s1313
        %v1315 = vmul.f32 %v1314, %v1187
        %v1316 = vmul.f32 %v1314, %v1188
        %1319 = vrot.lane.b32.xlu0 %v1315, 126
        %v1320 = vpop.permute.xlu0 %1319
        %1321 = vrot.lane.b32.xlu0 %v1316, 126
        %v1322 = vpop.permute.xlu0 %1321
        %v1325 = vadd.f32 %v1269, %v1320
        %v1326 = vadd.f32 %v1270, %v1322
        %s1327 = sld [smem:[#allocation2 + $0x23]]
        %v1328 = vstv %s1327
        %v1329 = vmul.f32 %v1328, %v1187
        %v1330 = vmul.f32 %v1328, %v1188
        %vm1333 = vcmask 1046528
        %v1334 = vrot.slane %v1329, 1
        %v1335 = vrot.slane %v1330, 1
        %v1336 = vsel %vm1333, %v1334, %v1335
        %v1339 = vadd.f32 %v1283, %v1336
        %v1340 = vadd.f32 %v1284, %v1335
        %s1341 = sld [smem:[#allocation2 + $0x47]]
        %v1342 = vstv %s1341
        %v1343 = vmul.f32 %v1342, %v1187
        %v1344 = vmul.f32 %v1342, %v1188
        %v1347 = vrot.slane %v1343, 1
        %v1348 = vrot.slane %v1344, 1
        %v1349 = vsel %vm1333, %v1347, %v1348
        %v1352 = vadd.f32 %v1297, %v1349
        %v1353 = vadd.f32 %v1298, %v1348
        %s1354 = sld [smem:[#allocation2 + $0x6b]]
        %v1355 = vstv %s1354
        %v1356 = vmul.f32 %v1355, %v1187
        %v1357 = vmul.f32 %v1355, %v1188
        %v1360 = vrot.slane %v1356, 1
        %v1361 = vrot.slane %v1357, 1
        %v1362 = vsel %vm1333, %v1360, %v1361
        %v1365 = vadd.f32 %v1311, %v1362
        %v1366 = vadd.f32 %v1312, %v1361
        %s1367 = sld [smem:[#allocation2 + $0x8f]]
        %v1368 = vstv %s1367
        %v1369 = vmul.f32 %v1368, %v1187
        %v1370 = vmul.f32 %v1368, %v1188
        %v1373 = vrot.slane %v1369, 1
        %v1374 = vrot.slane %v1370, 1
        %v1375 = vsel %vm1333, %v1373, %v1374
        %v1378 = vadd.f32 %v1325, %v1375
        %v1379 = vadd.f32 %v1326, %v1374
        %s1380 = sld [smem:[#allocation2 + $0x24]]
        %v1381 = vstv %s1380
        %v1382 = vmul.f32 %v1381, %v1187
        %v1383 = vmul.f32 %v1381, %v1188
        %v1386 = vrot.slane %v1382, 1
        %v1387 = vrot.slane %v1383, 1
        %v1388 = vsel %vm1333, %v1386, %v1387
        %1389 = vrot.lane.b32.xlu0 %v1388, 127
        %v1390 = vpop.permute.xlu0 %1389
        %1391 = vrot.lane.b32.xlu0 %v1387, 127
        %v1392 = vpop.permute.xlu0 %1391
        %v1395 = vadd.f32 %v1339, %v1390
        %v1396 = vadd.f32 %v1340, %v1392
        %s1397 = sld [smem:[#allocation2 + $0x48]]
        %v1398 = vstv %s1397
        %v1399 = vmul.f32 %v1398, %v1187
        %v1400 = vmul.f32 %v1398, %v1188
        %v1403 = vrot.slane %v1399, 1
        %v1404 = vrot.slane %v1400, 1
        %v1405 = vsel %vm1333, %v1403, %v1404
        %1406 = vrot.lane.b32.xlu0 %v1405, 127
        %v1407 = vpop.permute.xlu0 %1406
        %1408 = vrot.lane.b32.xlu0 %v1404, 127
        %v1409 = vpop.permute.xlu0 %1408
        %v1412 = vadd.f32 %v1352, %v1407
        %v1413 = vadd.f32 %v1353, %v1409
        %s1414 = sld [smem:[#allocation2 + $0x6c]]
        %v1415 = vstv %s1414
        %v1416 = vmul.f32 %v1415, %v1187
        %v1417 = vmul.f32 %v1415, %v1188
        %v1420 = vrot.slane %v1416, 1
        %v1421 = vrot.slane %v1417, 1
        %v1422 = vsel %vm1333, %v1420, %v1421
        %1423 = vrot.lane.b32.xlu0 %v1422, 127
        %v1424 = vpop.permute.xlu0 %1423
        %1425 = vrot.lane.b32.xlu0 %v1421, 127
        %v1426 = vpop.permute.xlu0 %1425
        %v1429 = vadd.f32 %v1365, %v1424
        %v1430 = vadd.f32 %v1366, %v1426
        %s1431 = sld [smem:[#allocation2 + $0x90]]
        %v1432 = vstv %s1431
        %v1433 = vmul.f32 %v1432, %v1187
        %v1434 = vmul.f32 %v1432, %v1188
        %v1437 = vrot.slane %v1433, 1
        %v1438 = vrot.slane %v1434, 1
        %v1439 = vsel %vm1333, %v1437, %v1438
        %1440 = vrot.lane.b32.xlu0 %v1439, 127
        %v1441 = vpop.permute.xlu0 %1440
        %1442 = vrot.lane.b32.xlu0 %v1438, 127
        %v1443 = vpop.permute.xlu0 %1442
        %v1446 = vadd.f32 %v1378, %v1441
        %v1447 = vadd.f32 %v1379, %v1443
        %s1448 = sld [smem:[#allocation2 + $0x25]]
        %v1449 = vstv %s1448
        %v1450 = vmul.f32 %v1449, %v1187
        %v1451 = vmul.f32 %v1449, %v1188
        %v1454 = vrot.slane %v1450, 1
        %v1455 = vrot.slane %v1451, 1
        %v1456 = vsel %vm1333, %v1454, %v1455
        %1457 = vrot.lane.b32.xlu0 %v1456, 126
        %v1458 = vpop.permute.xlu0 %1457
        %1459 = vrot.lane.b32.xlu0 %v1455, 126
        %v1460 = vpop.permute.xlu0 %1459
        %v1463 = vadd.f32 %v1395, %v1458
        %v1464 = vadd.f32 %v1396, %v1460
        %s1465 = sld [smem:[#allocation2 + $0x49]]
        %v1466 = vstv %s1465
        %v1467 = vmul.f32 %v1466, %v1187
        %v1468 = vmul.f32 %v1466, %v1188
        %v1471 = vrot.slane %v1467, 1
        %v1472 = vrot.slane %v1468, 1
        %v1473 = vsel %vm1333, %v1471, %v1472
        %1474 = vrot.lane.b32.xlu0 %v1473, 126
        %v1475 = vpop.permute.xlu0 %1474
        %1476 = vrot.lane.b32.xlu0 %v1472, 126
        %v1477 = vpop.permute.xlu0 %1476
        %v1480 = vadd.f32 %v1412, %v1475
        %v1481 = vadd.f32 %v1413, %v1477
        %s1482 = sld [smem:[#allocation2 + $0x6d]]
        %v1483 = vstv %s1482
        %v1484 = vmul.f32 %v1483, %v1187
        %v1485 = vmul.f32 %v1483, %v1188
        %v1488 = vrot.slane %v1484, 1
        %v1489 = vrot.slane %v1485, 1
        %v1490 = vsel %vm1333, %v1488, %v1489
        %1491 = vrot.lane.b32.xlu0 %v1490, 126
        %v1492 = vpop.permute.xlu0 %1491
        %1493 = vrot.lane.b32.xlu0 %v1489, 126
        %v1494 = vpop.permute.xlu0 %1493
        %v1497 = vadd.f32 %v1429, %v1492
        %v1498 = vadd.f32 %v1430, %v1494
        %s1499 = sld [smem:[#allocation2 + $0x91]]
        %v1500 = vstv %s1499
        %v1501 = vmul.f32 %v1500, %v1187
        %v1502 = vmul.f32 %v1500, %v1188
        %v1505 = vrot.slane %v1501, 1
        %v1506 = vrot.slane %v1502, 1
        %v1507 = vsel %vm1333, %v1505, %v1506
        %1508 = vrot.lane.b32.xlu0 %v1507, 126
        %v1509 = vpop.permute.xlu0 %1508
        %1510 = vrot.lane.b32.xlu0 %v1506, 126
        %v1511 = vpop.permute.xlu0 %1510
        %v1514 = vadd.f32 %v1446, %v1509
        %v1515 = vadd.f32 %v1447, %v1511
        %s1516 = sld [smem:[#allocation2 + $0x26]]
        %v1517 = vstv %s1516
        %v1518 = vmul.f32 %v1517, %v1187
        %v1519 = vmul.f32 %v1517, %v1188
        %vm1522 = vcmask 1045504
        %v1523 = vrot.slane %v1518, 2
        %v1524 = vrot.slane %v1519, 2
        %v1525 = vsel %vm1522, %v1523, %v1524
        %v1528 = vadd.f32 %v1463, %v1525
        %v1529 = vadd.f32 %v1464, %v1524
        %s1530 = sld [smem:[#allocation2 + $0x4a]]
        %v1531 = vstv %s1530
        %v1532 = vmul.f32 %v1531, %v1187
        %v1533 = vmul.f32 %v1531, %v1188
        %v1536 = vrot.slane %v1532, 2
        %v1537 = vrot.slane %v1533, 2
        %v1538 = vsel %vm1522, %v1536, %v1537
        %v1541 = vadd.f32 %v1480, %v1538
        %v1542 = vadd.f32 %v1481, %v1537
        %s1543 = sld [smem:[#allocation2 + $0x6e]]
        %v1544 = vstv %s1543
        %v1545 = vmul.f32 %v1544, %v1187
        %v1546 = vmul.f32 %v1544, %v1188
        %v1549 = vrot.slane %v1545, 2
        %v1550 = vrot.slane %v1546, 2
        %v1551 = vsel %vm1522, %v1549, %v1550
        %v1554 = vadd.f32 %v1497, %v1551
        %v1555 = vadd.f32 %v1498, %v1550
        %s1556 = sld [smem:[#allocation2 + $0x92]]
        %v1557 = vstv %s1556
        %v1558 = vmul.f32 %v1557, %v1187
        %v1559 = vmul.f32 %v1557, %v1188
        %v1562 = vrot.slane %v1558, 2
        %v1563 = vrot.slane %v1559, 2
        %v1564 = vsel %vm1522, %v1562, %v1563
        %v1567 = vadd.f32 %v1514, %v1564
        %v1568 = vadd.f32 %v1515, %v1563
        %s1569 = sld [smem:[#allocation2 + $0x27]]
        %v1570 = vstv %s1569
        %v1571 = vmul.f32 %v1570, %v1187
        %v1572 = vmul.f32 %v1570, %v1188
        %v1575 = vrot.slane %v1571, 2
        %v1576 = vrot.slane %v1572, 2
        %v1577 = vsel %vm1522, %v1575, %v1576
        %1578 = vrot.lane.b32.xlu0 %v1577, 127
        %v1579 = vpop.permute.xlu0 %1578
        %1580 = vrot.lane.b32.xlu0 %v1576, 127
        %v1581 = vpop.permute.xlu0 %1580
        %v1584 = vadd.f32 %v1528, %v1579
        %v1585 = vadd.f32 %v1529, %v1581
        %s1586 = sld [smem:[#allocation2 + $0x4b]]
        %v1587 = vstv %s1586
        %v1588 = vmul.f32 %v1587, %v1187
        %v1589 = vmul.f32 %v1587, %v1188
        %v1592 = vrot.slane %v1588, 2
        %v1593 = vrot.slane %v1589, 2
        %v1594 = vsel %vm1522, %v1592, %v1593
        %1595 = vrot.lane.b32.xlu0 %v1594, 127
        %v1596 = vpop.permute.xlu0 %1595
        %1597 = vrot.lane.b32.xlu0 %v1593, 127
        %v1598 = vpop.permute.xlu0 %1597
        %v1601 = vadd.f32 %v1541, %v1596
        %v1602 = vadd.f32 %v1542, %v1598
        %s1603 = sld [smem:[#allocation2 + $0x6f]]
        %v1604 = vstv %s1603
        %v1605 = vmul.f32 %v1604, %v1187
        %v1606 = vmul.f32 %v1604, %v1188
        %v1609 = vrot.slane %v1605, 2
        %v1610 = vrot.slane %v1606, 2
        %v1611 = vsel %vm1522, %v1609, %v1610
        %1612 = vrot.lane.b32.xlu0 %v1611, 127
        %v1613 = vpop.permute.xlu0 %1612
        %1614 = vrot.lane.b32.xlu0 %v1610, 127
        %v1615 = vpop.permute.xlu0 %1614
        %v1618 = vadd.f32 %v1554, %v1613
        %v1619 = vadd.f32 %v1555, %v1615
        %s1620 = sld [smem:[#allocation2 + $0x93]]
        %v1621 = vstv %s1620
        %v1622 = vmul.f32 %v1621, %v1187
        %v1623 = vmul.f32 %v1621, %v1188
        %v1626 = vrot.slane %v1622, 2
        %v1627 = vrot.slane %v1623, 2
        %v1628 = vsel %vm1522, %v1626, %v1627
        %1629 = vrot.lane.b32.xlu0 %v1628, 127
        %v1630 = vpop.permute.xlu0 %1629
        %1631 = vrot.lane.b32.xlu0 %v1627, 127
        %v1632 = vpop.permute.xlu0 %1631
        %v1635 = vadd.f32 %v1567, %v1630
        %v1636 = vadd.f32 %v1568, %v1632
        %s1637 = sld [smem:[#allocation2 + $0x28]]
        %v1638 = vstv %s1637
        %v1639 = vmul.f32 %v1638, %v1187
        %v1640 = vmul.f32 %v1638, %v1188
        %v1643 = vrot.slane %v1639, 2
        %v1644 = vrot.slane %v1640, 2
        %v1645 = vsel %vm1522, %v1643, %v1644
        %1646 = vrot.lane.b32.xlu0 %v1645, 126
        %v1647 = vpop.permute.xlu0 %1646
        %1648 = vrot.lane.b32.xlu0 %v1644, 126
        %v1649 = vpop.permute.xlu0 %1648
        %v1652 = vadd.f32 %v1584, %v1647
        %v1653 = vadd.f32 %v1585, %v1649
        %s1654 = sld [smem:[#allocation2 + $0x4c]]
        %v1655 = vstv %s1654
        %v1656 = vmul.f32 %v1655, %v1187
        %v1657 = vmul.f32 %v1655, %v1188
        %v1660 = vrot.slane %v1656, 2
        %v1661 = vrot.slane %v1657, 2
        %v1662 = vsel %vm1522, %v1660, %v1661
        %1663 = vrot.lane.b32.xlu0 %v1662, 126
        %v1664 = vpop.permute.xlu0 %1663
        %1665 = vrot.lane.b32.xlu0 %v1661, 126
        %v1666 = vpop.permute.xlu0 %1665
        %v1669 = vadd.f32 %v1601, %v1664
        %v1670 = vadd.f32 %v1602, %v1666
        %s1671 = sld [smem:[#allocation2 + $0x70]]
        %v1672 = vstv %s1671
        %v1673 = vmul.f32 %v1672, %v1187
        %v1674 = vmul.f32 %v1672, %v1188
        %v1677 = vrot.slane %v1673, 2
        %v1678 = vrot.slane %v1674, 2
        %v1679 = vsel %vm1522, %v1677, %v1678
        %1680 = vrot.lane.b32.xlu0 %v1679, 126
        %v1681 = vpop.permute.xlu0 %1680
        %1682 = vrot.lane.b32.xlu0 %v1678, 126
        %v1683 = vpop.permute.xlu0 %1682
        %v1686 = vadd.f32 %v1618, %v1681
        %v1687 = vadd.f32 %v1619, %v1683
        %s1688 = sld [smem:[#allocation2 + $0x94]]
        %v1689 = vstv %s1688
        %v1690 = vmul.f32 %v1689, %v1187
        %v1691 = vmul.f32 %v1689, %v1188
        %v1694 = vrot.slane %v1690, 2
        %v1695 = vrot.slane %v1691, 2
        %v1696 = vsel %vm1522, %v1694, %v1695
        %1697 = vrot.lane.b32.xlu0 %v1696, 126
        %v1698 = vpop.permute.xlu0 %1697
        %1699 = vrot.lane.b32.xlu0 %v1695, 126
        %v1700 = vpop.permute.xlu0 %1699
        %v1703 = vadd.f32 %v1635, %v1698
        %v1704 = vadd.f32 %v1636, %v1700
        %s1705 = sld [smem:[#allocation2 + $0x29]]
        %v1706 = vstv %s1705
        %v1707 = vmul.f32 %v1706, %v1189
        %v1708 = vmul.f32 %v1706, %v1190
        %v1709 = vadd.f32 %v1652, %v1707
        %v1710 = vadd.f32 %v1653, %v1708
        %s1711 = sld [smem:[#allocation2 + $0x4d]]
        %v1712 = vstv %s1711
        %v1713 = vmul.f32 %v1712, %v1189
        %v1714 = vmul.f32 %v1712, %v1190
        %v1715 = vadd.f32 %v1669, %v1713
        %v1716 = vadd.f32 %v1670, %v1714
        %s1717 = sld [smem:[#allocation2 + $0x71]]
        %v1718 = vstv %s1717
        %v1719 = vmul.f32 %v1718, %v1189
        %v1720 = vmul.f32 %v1718, %v1190
        %v1721 = vadd.f32 %v1686, %v1719
        %v1722 = vadd.f32 %v1687, %v1720
        %s1723 = sld [smem:[#allocation2 + $0x95]]
        %v1724 = vstv %s1723
        %v1725 = vmul.f32 %v1724, %v1189
        %v1726 = vmul.f32 %v1724, %v1190
        %v1727 = vadd.f32 %v1703, %v1725
        %v1728 = vadd.f32 %v1704, %v1726
        %s1729 = sld [smem:[#allocation2 + $0x2a]]
        %v1730 = vstv %s1729
        %v1731 = vmul.f32 %v1730, %v1189
        %v1732 = vmul.f32 %v1730, %v1190
        %1735 = vrot.lane.b32.xlu0 %v1731, 127
        %v1736 = vpop.permute.xlu0 %1735
        %1737 = vrot.lane.b32.xlu0 %v1732, 127
        %v1738 = vpop.permute.xlu0 %1737
        %v1741 = vadd.f32 %v1709, %v1736
        %v1742 = vadd.f32 %v1710, %v1738
        %s1743 = sld [smem:[#allocation2 + $0x4e]]
        %v1744 = vstv %s1743
        %v1745 = vmul.f32 %v1744, %v1189
        %v1746 = vmul.f32 %v1744, %v1190
        %1749 = vrot.lane.b32.xlu0 %v1745, 127
        %v1750 = vpop.permute.xlu0 %1749
        %1751 = vrot.lane.b32.xlu0 %v1746, 127
        %v1752 = vpop.permute.xlu0 %1751
        %v1755 = vadd.f32 %v1715, %v1750
        %v1756 = vadd.f32 %v1716, %v1752
        %s1757 = sld [smem:[#allocation2 + $0x72]]
        %v1758 = vstv %s1757
        %v1759 = vmul.f32 %v1758, %v1189
        %v1760 = vmul.f32 %v1758, %v1190
        %1763 = vrot.lane.b32.xlu0 %v1759, 127
        %v1764 = vpop.permute.xlu0 %1763
        %1765 = vrot.lane.b32.xlu0 %v1760, 127
        %v1766 = vpop.permute.xlu0 %1765
        %v1769 = vadd.f32 %v1721, %v1764
        %v1770 = vadd.f32 %v1722, %v1766
        %s1771 = sld [smem:[#allocation2 + $0x96]]
        %v1772 = vstv %s1771
        %v1773 = vmul.f32 %v1772, %v1189
        %v1774 = vmul.f32 %v1772, %v1190
        %1777 = vrot.lane.b32.xlu0 %v1773, 127
        %v1778 = vpop.permute.xlu0 %1777
        %1779 = vrot.lane.b32.xlu0 %v1774, 127
        %v1780 = vpop.permute.xlu0 %1779
        %v1783 = vadd.f32 %v1727, %v1778
        %v1784 = vadd.f32 %v1728, %v1780
        %s1785 = sld [smem:[#allocation2 + $0x2b]]
        %v1786 = vstv %s1785
        %v1787 = vmul.f32 %v1786, %v1189
        %v1788 = vmul.f32 %v1786, %v1190
        %1791 = vrot.lane.b32.xlu0 %v1787, 126
        %v1792 = vpop.permute.xlu0 %1791
        %1793 = vrot.lane.b32.xlu0 %v1788, 126
        %v1794 = vpop.permute.xlu0 %1793
        %v1797 = vadd.f32 %v1741, %v1792
        %v1798 = vadd.f32 %v1742, %v1794
        %s1799 = sld [smem:[#allocation2 + $0x4f]]
        %v1800 = vstv %s1799
        %v1801 = vmul.f32 %v1800, %v1189
        %v1802 = vmul.f32 %v1800, %v1190
        %1805 = vrot.lane.b32.xlu0 %v1801, 126
        %v1806 = vpop.permute.xlu0 %1805
        %1807 = vrot.lane.b32.xlu0 %v1802, 126
        %v1808 = vpop.permute.xlu0 %1807
        %v1811 = vadd.f32 %v1755, %v1806
        %v1812 = vadd.f32 %v1756, %v1808
        %s1813 = sld [smem:[#allocation2 + $0x73]]
        %v1814 = vstv %s1813
        %v1815 = vmul.f32 %v1814, %v1189
        %v1816 = vmul.f32 %v1814, %v1190
        %1819 = vrot.lane.b32.xlu0 %v1815, 126
        %v1820 = vpop.permute.xlu0 %1819
        %1821 = vrot.lane.b32.xlu0 %v1816, 126
        %v1822 = vpop.permute.xlu0 %1821
        %v1825 = vadd.f32 %v1769, %v1820
        %v1826 = vadd.f32 %v1770, %v1822
        %s1827 = sld [smem:[#allocation2 + $0x97]]
        %v1828 = vstv %s1827
        %v1829 = vmul.f32 %v1828, %v1189
        %v1830 = vmul.f32 %v1828, %v1190
        %1833 = vrot.lane.b32.xlu0 %v1829, 126
        %v1834 = vpop.permute.xlu0 %1833
        %1835 = vrot.lane.b32.xlu0 %v1830, 126
        %v1836 = vpop.permute.xlu0 %1835
        %v1839 = vadd.f32 %v1783, %v1834
        %v1840 = vadd.f32 %v1784, %v1836
        %s1841 = sld [smem:[#allocation2 + $0x2c]]
        %v1842 = vstv %s1841
        %v1843 = vmul.f32 %v1842, %v1189
        %v1844 = vmul.f32 %v1842, %v1190
        %v1847 = vrot.slane %v1843, 1
        %v1848 = vrot.slane %v1844, 1
        %v1849 = vsel %vm1333, %v1847, %v1848
        %v1852 = vadd.f32 %v1797, %v1849
        %v1853 = vadd.f32 %v1798, %v1848
        %s1854 = sld [smem:[#allocation2 + $0x50]]
        %v1855 = vstv %s1854
        %v1856 = vmul.f32 %v1855, %v1189
        %v1857 = vmul.f32 %v1855, %v1190
        %v1860 = vrot.slane %v1856, 1
        %v1861 = vrot.slane %v1857, 1
        %v1862 = vsel %vm1333, %v1860, %v1861
        %v1865 = vadd.f32 %v1811, %v1862
        %v1866 = vadd.f32 %v1812, %v1861
        %s1867 = sld [smem:[#allocation2 + $0x74]]
        %v1868 = vstv %s1867
        %v1869 = vmul.f32 %v1868, %v1189
        %v1870 = vmul.f32 %v1868, %v1190
        %v1873 = vrot.slane %v1869, 1
        %v1874 = vrot.slane %v1870, 1
        %v1875 = vsel %vm1333, %v1873, %v1874
        %v1878 = vadd.f32 %v1825, %v1875
        %v1879 = vadd.f32 %v1826, %v1874
        %s1880 = sld [smem:[#allocation2 + $0x98]]
        %v1881 = vstv %s1880
        %v1882 = vmul.f32 %v1881, %v1189
        %v1883 = vmul.f32 %v1881, %v1190
        %v1886 = vrot.slane %v1882, 1
        %v1887 = vrot.slane %v1883, 1
        %v1888 = vsel %vm1333, %v1886, %v1887
        %v1891 = vadd.f32 %v1839, %v1888
        %v1892 = vadd.f32 %v1840, %v1887
        %s1893 = sld [smem:[#allocation2 + $0x2d]]
        %v1894 = vstv %s1893
        %v1895 = vmul.f32 %v1894, %v1189
        %v1896 = vmul.f32 %v1894, %v1190
        %v1899 = vrot.slane %v1895, 1
        %v1900 = vrot.slane %v1896, 1
        %v1901 = vsel %vm1333, %v1899, %v1900
        %1902 = vrot.lane.b32.xlu0 %v1901, 127
        %v1903 = vpop.permute.xlu0 %1902
        %1904 = vrot.lane.b32.xlu0 %v1900, 127
        %v1905 = vpop.permute.xlu0 %1904
        %v1908 = vadd.f32 %v1852, %v1903
        %v1909 = vadd.f32 %v1853, %v1905
        %s1910 = sld [smem:[#allocation2 + $0x51]]
        %v1911 = vstv %s1910
        %v1912 = vmul.f32 %v1911, %v1189
        %v1913 = vmul.f32 %v1911, %v1190
        %v1916 = vrot.slane %v1912, 1
        %v1917 = vrot.slane %v1913, 1
        %v1918 = vsel %vm1333, %v1916, %v1917
        %1919 = vrot.lane.b32.xlu0 %v1918, 127
        %v1920 = vpop.permute.xlu0 %1919
        %1921 = vrot.lane.b32.xlu0 %v1917, 127
        %v1922 = vpop.permute.xlu0 %1921
        %v1925 = vadd.f32 %v1865, %v1920
        %v1926 = vadd.f32 %v1866, %v1922
        %s1927 = sld [smem:[#allocation2 + $0x75]]
        %v1928 = vstv %s1927
        %v1929 = vmul.f32 %v1928, %v1189
        %v1930 = vmul.f32 %v1928, %v1190
        %v1933 = vrot.slane %v1929, 1
        %v1934 = vrot.slane %v1930, 1
        %v1935 = vsel %vm1333, %v1933, %v1934
        %1936 = vrot.lane.b32.xlu0 %v1935, 127
        %v1937 = vpop.permute.xlu0 %1936
        %1938 = vrot.lane.b32.xlu0 %v1934, 127
        %v1939 = vpop.permute.xlu0 %1938
        %v1942 = vadd.f32 %v1878, %v1937
        %v1943 = vadd.f32 %v1879, %v1939
        %s1944 = sld [smem:[#allocation2 + $0x99]]
        %v1945 = vstv %s1944
        %v1946 = vmul.f32 %v1945, %v1189
        %v1947 = vmul.f32 %v1945, %v1190
        %v1950 = vrot.slane %v1946, 1
        %v1951 = vrot.slane %v1947, 1
        %v1952 = vsel %vm1333, %v1950, %v1951
        %1953 = vrot.lane.b32.xlu0 %v1952, 127
        %v1954 = vpop.permute.xlu0 %1953
        %1955 = vrot.lane.b32.xlu0 %v1951, 127
        %v1956 = vpop.permute.xlu0 %1955
        %v1959 = vadd.f32 %v1891, %v1954
        %v1960 = vadd.f32 %v1892, %v1956
        %s1961 = sld [smem:[#allocation2 + $0x2e]]
        %v1962 = vstv %s1961
        %v1963 = vmul.f32 %v1962, %v1189
        %v1964 = vmul.f32 %v1962, %v1190
        %v1967 = vrot.slane %v1963, 1
        %v1968 = vrot.slane %v1964, 1
        %v1969 = vsel %vm1333, %v1967, %v1968
        %1970 = vrot.lane.b32.xlu0 %v1969, 126
        %v1971 = vpop.permute.xlu0 %1970
        %1972 = vrot.lane.b32.xlu0 %v1968, 126
        %v1973 = vpop.permute.xlu0 %1972
        %v1976 = vadd.f32 %v1908, %v1971
        %v1977 = vadd.f32 %v1909, %v1973
        %s1978 = sld [smem:[#allocation2 + $0x52]]
        %v1979 = vstv %s1978
        %v1980 = vmul.f32 %v1979, %v1189
        %v1981 = vmul.f32 %v1979, %v1190
        %v1984 = vrot.slane %v1980, 1
        %v1985 = vrot.slane %v1981, 1
        %v1986 = vsel %vm1333, %v1984, %v1985
        %1987 = vrot.lane.b32.xlu0 %v1986, 126
        %v1988 = vpop.permute.xlu0 %1987
        %1989 = vrot.lane.b32.xlu0 %v1985, 126
        %v1990 = vpop.permute.xlu0 %1989
        %v1993 = vadd.f32 %v1925, %v1988
        %v1994 = vadd.f32 %v1926, %v1990
        %s1995 = sld [smem:[#allocation2 + $0x76]]
        %v1996 = vstv %s1995
        %v1997 = vmul.f32 %v1996, %v1189
        %v1998 = vmul.f32 %v1996, %v1190
        %v2001 = vrot.slane %v1997, 1
        %v2002 = vrot.slane %v1998, 1
        %v2003 = vsel %vm1333, %v2001, %v2002
        %2004 = vrot.lane.b32.xlu0 %v2003, 126
        %v2005 = vpop.permute.xlu0 %2004
        %2006 = vrot.lane.b32.xlu0 %v2002, 126
        %v2007 = vpop.permute.xlu0 %2006
        %v2010 = vadd.f32 %v1942, %v2005
        %v2011 = vadd.f32 %v1943, %v2007
        %s2012 = sld [smem:[#allocation2 + $0x9a]]
        %v2013 = vstv %s2012
        %v2014 = vmul.f32 %v2013, %v1189
        %v2015 = vmul.f32 %v2013, %v1190
        %v2018 = vrot.slane %v2014, 1
        %v2019 = vrot.slane %v2015, 1
        %v2020 = vsel %vm1333, %v2018, %v2019
        %2021 = vrot.lane.b32.xlu0 %v2020, 126
        %v2022 = vpop.permute.xlu0 %2021
        %2023 = vrot.lane.b32.xlu0 %v2019, 126
        %v2024 = vpop.permute.xlu0 %2023
        %v2027 = vadd.f32 %v1959, %v2022
        %v2028 = vadd.f32 %v1960, %v2024
        %s2029 = sld [smem:[#allocation2 + $0x2f]]
        %v2030 = vstv %s2029
        %v2031 = vmul.f32 %v2030, %v1189
        %v2032 = vmul.f32 %v2030, %v1190
        %v2035 = vrot.slane %v2031, 2
        %v2036 = vrot.slane %v2032, 2
        %v2037 = vsel %vm1522, %v2035, %v2036
        %v2040 = vadd.f32 %v1976, %v2037
        %v2041 = vadd.f32 %v1977, %v2036
        %s2042 = sld [smem:[#allocation2 + $0x53]]
        %v2043 = vstv %s2042
        %v2044 = vmul.f32 %v2043, %v1189
        %v2045 = vmul.f32 %v2043, %v1190
        %v2048 = vrot.slane %v2044, 2
        %v2049 = vrot.slane %v2045, 2
        %v2050 = vsel %vm1522, %v2048, %v2049
        %v2053 = vadd.f32 %v1993, %v2050
        %v2054 = vadd.f32 %v1994, %v2049
        %s2055 = sld [smem:[#allocation2 + $0x77]]
        %v2056 = vstv %s2055
        %v2057 = vmul.f32 %v2056, %v1189
        %v2058 = vmul.f32 %v2056, %v1190
        %v2061 = vrot.slane %v2057, 2
        %v2062 = vrot.slane %v2058, 2
        %v2063 = vsel %vm1522, %v2061, %v2062
        %v2066 = vadd.f32 %v2010, %v2063
        %v2067 = vadd.f32 %v2011, %v2062
        %s2068 = sld [smem:[#allocation2 + $0x9b]]
        %v2069 = vstv %s2068
        %v2070 = vmul.f32 %v2069, %v1189
        %v2071 = vmul.f32 %v2069, %v1190
        %v2074 = vrot.slane %v2070, 2
        %v2075 = vrot.slane %v2071, 2
        %v2076 = vsel %vm1522, %v2074, %v2075
        %v2079 = vadd.f32 %v2027, %v2076
        %v2080 = vadd.f32 %v2028, %v2075
        %s2081 = sld [smem:[#allocation2 + $0x30]]
        %v2082 = vstv %s2081
        %v2083 = vmul.f32 %v2082, %v1189
        %v2084 = vmul.f32 %v2082, %v1190
        %v2087 = vrot.slane %v2083, 2
        %v2088 = vrot.slane %v2084, 2
        %v2089 = vsel %vm1522, %v2087, %v2088
        %2090 = vrot.lane.b32.xlu0 %v2089, 127
        %v2091 = vpop.permute.xlu0 %2090
        %2092 = vrot.lane.b32.xlu0 %v2088, 127
        %v2093 = vpop.permute.xlu0 %2092
        %v2096 = vadd.f32 %v2040, %v2091
        %v2097 = vadd.f32 %v2041, %v2093
        %s2098 = sld [smem:[#allocation2 + $0x54]]
        %v2099 = vstv %s2098
        %v2100 = vmul.f32 %v2099, %v1189
        %v2101 = vmul.f32 %v2099, %v1190
        %v2104 = vrot.slane %v2100, 2
        %v2105 = vrot.slane %v2101, 2
        %v2106 = vsel %vm1522, %v2104, %v2105
        %2107 = vrot.lane.b32.xlu0 %v2106, 127
        %v2108 = vpop.permute.xlu0 %2107
        %2109 = vrot.lane.b32.xlu0 %v2105, 127
        %v2110 = vpop.permute.xlu0 %2109
        %v2113 = vadd.f32 %v2053, %v2108
        %v2114 = vadd.f32 %v2054, %v2110
        %s2115 = sld [smem:[#allocation2 + $0x78]]
        %v2116 = vstv %s2115
        %v2117 = vmul.f32 %v2116, %v1189
        %v2118 = vmul.f32 %v2116, %v1190
        %v2121 = vrot.slane %v2117, 2
        %v2122 = vrot.slane %v2118, 2
        %v2123 = vsel %vm1522, %v2121, %v2122
        %2124 = vrot.lane.b32.xlu0 %v2123, 127
        %v2125 = vpop.permute.xlu0 %2124
        %2126 = vrot.lane.b32.xlu0 %v2122, 127
        %v2127 = vpop.permute.xlu0 %2126
        %v2130 = vadd.f32 %v2066, %v2125
        %v2131 = vadd.f32 %v2067, %v2127
        %s2132 = sld [smem:[#allocation2 + $0x9c]]
        %v2133 = vstv %s2132
        %v2134 = vmul.f32 %v2133, %v1189
        %v2135 = vmul.f32 %v2133, %v1190
        %v2138 = vrot.slane %v2134, 2
        %v2139 = vrot.slane %v2135, 2
        %v2140 = vsel %vm1522, %v2138, %v2139
        %2141 = vrot.lane.b32.xlu0 %v2140, 127
        %v2142 = vpop.permute.xlu0 %2141
        %2143 = vrot.lane.b32.xlu0 %v2139, 127
        %v2144 = vpop.permute.xlu0 %2143
        %v2147 = vadd.f32 %v2079, %v2142
        %v2148 = vadd.f32 %v2080, %v2144
        %s2149 = sld [smem:[#allocation2 + $0x31]]
        %v2150 = vstv %s2149
        %v2151 = vmul.f32 %v2150, %v1189
        %v2152 = vmul.f32 %v2150, %v1190
        %v2155 = vrot.slane %v2151, 2
        %v2156 = vrot.slane %v2152, 2
        %v2157 = vsel %vm1522, %v2155, %v2156
        %2158 = vrot.lane.b32.xlu0 %v2157, 126
        %v2159 = vpop.permute.xlu0 %2158
        %2160 = vrot.lane.b32.xlu0 %v2156, 126
        %v2161 = vpop.permute.xlu0 %2160
        %v2164 = vadd.f32 %v2096, %v2159
        %v2165 = vadd.f32 %v2097, %v2161
        %s2166 = sld [smem:[#allocation2 + $0x55]]
        %v2167 = vstv %s2166
        %v2168 = vmul.f32 %v2167, %v1189
        %v2169 = vmul.f32 %v2167, %v1190
        %v2172 = vrot.slane %v2168, 2
        %v2173 = vrot.slane %v2169, 2
        %v2174 = vsel %vm1522, %v2172, %v2173
        %2175 = vrot.lane.b32.xlu0 %v2174, 126
        %v2176 = vpop.permute.xlu0 %2175
        %2177 = vrot.lane.b32.xlu0 %v2173, 126
        %v2178 = vpop.permute.xlu0 %2177
        %v2181 = vadd.f32 %v2113, %v2176
        %v2182 = vadd.f32 %v2114, %v2178
        %s2183 = sld [smem:[#allocation2 + $0x79]]
        %v2184 = vstv %s2183
        %v2185 = vmul.f32 %v2184, %v1189
        %v2186 = vmul.f32 %v2184, %v1190
        %v2189 = vrot.slane %v2185, 2
        %v2190 = vrot.slane %v2186, 2
        %v2191 = vsel %vm1522, %v2189, %v2190
        %2192 = vrot.lane.b32.xlu0 %v2191, 126
        %v2193 = vpop.permute.xlu0 %2192
        %2194 = vrot.lane.b32.xlu0 %v2190, 126
        %v2195 = vpop.permute.xlu0 %2194
        %v2198 = vadd.f32 %v2130, %v2193
        %v2199 = vadd.f32 %v2131, %v2195
        %s2200 = sld [smem:[#allocation2 + $0x9d]]
        %v2201 = vstv %s2200
        %v2202 = vmul.f32 %v2201, %v1189
        %v2203 = vmul.f32 %v2201, %v1190
        %v2206 = vrot.slane %v2202, 2
        %v2207 = vrot.slane %v2203, 2
        %v2208 = vsel %vm1522, %v2206, %v2207
        %2209 = vrot.lane.b32.xlu0 %v2208, 126
        %v2210 = vpop.permute.xlu0 %2209
        %2211 = vrot.lane.b32.xlu0 %v2207, 126
        %v2212 = vpop.permute.xlu0 %2211
        %v2215 = vadd.f32 %v2147, %v2210
        %v2216 = vadd.f32 %v2148, %v2212
        %v2217 = vld [vmem:[%s253 + $0x2] sm:$0xff]
        %v2218 = vld [vmem:[%s253 + $0xa] sm:$0x3f]
        %s2219 = sld [smem:[#allocation2 + $0x32]]
        %v2220 = vstv %s2219
        %v2221 = vmul.f32 %v2220, %v2217
        %v2222 = vmul.f32 %v2220, %v2218
        %2225 = vrot.lane.b32.xlu0 %v2221, 126
        %v2226 = vpop.permute.xlu0 %2225
        %2227 = vrot.lane.b32.xlu0 %v2222, 126
        %v2228 = vpop.permute.xlu0 %2227
        %v2231 = vadd.f32 %v2164, %v2226
        %v2232 = vadd.f32 %v2165, %v2228
        %s2233 = sld [smem:[#allocation2 + $0x56]]
        %v2234 = vstv %s2233
        %v2235 = vmul.f32 %v2234, %v2217
        %v2236 = vmul.f32 %v2234, %v2218
        %2239 = vrot.lane.b32.xlu0 %v2235, 126
        %v2240 = vpop.permute.xlu0 %2239
        %2241 = vrot.lane.b32.xlu0 %v2236, 126
        %v2242 = vpop.permute.xlu0 %2241
        %v2245 = vadd.f32 %v2181, %v2240
        %v2246 = vadd.f32 %v2182, %v2242
        %s2247 = sld [smem:[#allocation2 + $0x7a]]
        %v2248 = vstv %s2247
        %v2249 = vmul.f32 %v2248, %v2217
        %v2250 = vmul.f32 %v2248, %v2218
        %2253 = vrot.lane.b32.xlu0 %v2249, 126
        %v2254 = vpop.permute.xlu0 %2253
        %2255 = vrot.lane.b32.xlu0 %v2250, 126
        %v2256 = vpop.permute.xlu0 %2255
        %v2259 = vadd.f32 %v2198, %v2254
        %v2260 = vadd.f32 %v2199, %v2256
        %s2261 = sld [smem:[#allocation2 + $0x9e]]
        %v2262 = vstv %s2261
        %v2263 = vmul.f32 %v2262, %v2217
        %v2264 = vmul.f32 %v2262, %v2218
        %2267 = vrot.lane.b32.xlu0 %v2263, 126
        %v2268 = vpop.permute.xlu0 %2267
        %2269 = vrot.lane.b32.xlu0 %v2264, 126
        %v2270 = vpop.permute.xlu0 %2269
        %v2273 = vadd.f32 %v2215, %v2268
        %v2274 = vadd.f32 %v2216, %v2270
        %s2275 = sld [smem:[#allocation2 + $0x33]]
        %v2276 = vstv %s2275
        %v2277 = vmul.f32 %v2276, %v2217
        %v2278 = vmul.f32 %v2276, %v2218
        %2281 = vrot.lane.b32.xlu0 %v2277, 125
        %v2282 = vpop.permute.xlu0 %2281
        %2283 = vrot.lane.b32.xlu0 %v2278, 125
        %v2284 = vpop.permute.xlu0 %2283
        %v2287 = vadd.f32 %v2231, %v2282
        %v2288 = vadd.f32 %v2232, %v2284
        %s2289 = sld [smem:[#allocation2 + $0x57]]
        %v2290 = vstv %s2289
        %v2291 = vmul.f32 %v2290, %v2217
        %v2292 = vmul.f32 %v2290, %v2218
        %2295 = vrot.lane.b32.xlu0 %v2291, 125
        %v2296 = vpop.permute.xlu0 %2295
        %2297 = vrot.lane.b32.xlu0 %v2292, 125
        %v2298 = vpop.permute.xlu0 %2297
        %v2301 = vadd.f32 %v2245, %v2296
        %v2302 = vadd.f32 %v2246, %v2298
        %s2303 = sld [smem:[#allocation2 + $0x7b]]
        %v2304 = vstv %s2303
        %v2305 = vmul.f32 %v2304, %v2217
        %v2306 = vmul.f32 %v2304, %v2218
        %2309 = vrot.lane.b32.xlu0 %v2305, 125
        %v2310 = vpop.permute.xlu0 %2309
        %2311 = vrot.lane.b32.xlu0 %v2306, 125
        %v2312 = vpop.permute.xlu0 %2311
        %v2315 = vadd.f32 %v2259, %v2310
        %v2316 = vadd.f32 %v2260, %v2312
        %s2317 = sld [smem:[#allocation2 + $0x9f]]
        %v2318 = vstv %s2317
        %v2319 = vmul.f32 %v2318, %v2217
        %v2320 = vmul.f32 %v2318, %v2218
        %2323 = vrot.lane.b32.xlu0 %v2319, 125
        %v2324 = vpop.permute.xlu0 %2323
        %2325 = vrot.lane.b32.xlu0 %v2320, 125
        %v2326 = vpop.permute.xlu0 %2325
        %v2329 = vadd.f32 %v2273, %v2324
        %v2330 = vadd.f32 %v2274, %v2326
        %s2331 = sld [smem:[#allocation2 + $0x34]]
        %v2332 = vstv %s2331
        %v2333 = vmul.f32 %v2332, %v2217
        %v2334 = vmul.f32 %v2332, %v2218
        %2337 = vrot.lane.b32.xlu0 %v2333, 124
        %v2338 = vpop.permute.xlu0 %2337
        %2339 = vrot.lane.b32.xlu0 %v2334, 124
        %v2340 = vpop.permute.xlu0 %2339
        %v2343 = vadd.f32 %v2287, %v2338
        %v2344 = vadd.f32 %v2288, %v2340
        %s2345 = sld [smem:[#allocation2 + $0x58]]
        %v2346 = vstv %s2345
        %v2347 = vmul.f32 %v2346, %v2217
        %v2348 = vmul.f32 %v2346, %v2218
        %2351 = vrot.lane.b32.xlu0 %v2347, 124
        %v2352 = vpop.permute.xlu0 %2351
        %2353 = vrot.lane.b32.xlu0 %v2348, 124
        %v2354 = vpop.permute.xlu0 %2353
        %v2357 = vadd.f32 %v2301, %v2352
        %v2358 = vadd.f32 %v2302, %v2354
        %s2359 = sld [smem:[#allocation2 + $0x7c]]
        %v2360 = vstv %s2359
        %v2361 = vmul.f32 %v2360, %v2217
        %v2362 = vmul.f32 %v2360, %v2218
        %2365 = vrot.lane.b32.xlu0 %v2361, 124
        %v2366 = vpop.permute.xlu0 %2365
        %2367 = vrot.lane.b32.xlu0 %v2362, 124
        %v2368 = vpop.permute.xlu0 %2367
        %v2371 = vadd.f32 %v2315, %v2366
        %v2372 = vadd.f32 %v2316, %v2368
        %s2373 = sld [smem:[#allocation2 + $0xa0]]
        %v2374 = vstv %s2373
        %v2375 = vmul.f32 %v2374, %v2217
        %v2376 = vmul.f32 %v2374, %v2218
        %2379 = vrot.lane.b32.xlu0 %v2375, 124
        %v2380 = vpop.permute.xlu0 %2379
        %2381 = vrot.lane.b32.xlu0 %v2376, 124
        %v2382 = vpop.permute.xlu0 %2381
        %v2385 = vadd.f32 %v2329, %v2380
        %v2386 = vadd.f32 %v2330, %v2382
        %v2387 = vld [vmem:[%s253 + $0x3] sm:$0xff]
        %v2388 = vld [vmem:[%s253 + $0xb] sm:$0x3f]
        %s2389 = sld [smem:[#allocation2 + $0x35]]
        %v2390 = vstv %s2389
        %v2391 = vmul.f32 %v2390, %v2387
        %v2392 = vmul.f32 %v2390, %v2388
        %2395 = vrot.lane.b32.xlu0 %v2391, 126
        %v2396 = vpop.permute.xlu0 %2395
        %2397 = vrot.lane.b32.xlu0 %v2392, 126
        %v2398 = vpop.permute.xlu0 %2397
        %v2401 = vadd.f32 %v2343, %v2396
        %v2402 = vadd.f32 %v2344, %v2398
        %s2403 = sld [smem:[#allocation2 + $0x59]]
        %v2404 = vstv %s2403
        %v2405 = vmul.f32 %v2404, %v2387
        %v2406 = vmul.f32 %v2404, %v2388
        %2409 = vrot.lane.b32.xlu0 %v2405, 126
        %v2410 = vpop.permute.xlu0 %2409
        %2411 = vrot.lane.b32.xlu0 %v2406, 126
        %v2412 = vpop.permute.xlu0 %2411
        %v2415 = vadd.f32 %v2357, %v2410
        %v2416 = vadd.f32 %v2358, %v2412
        %s2417 = sld [smem:[#allocation2 + $0x7d]]
        %v2418 = vstv %s2417
        %v2419 = vmul.f32 %v2418, %v2387
        %v2420 = vmul.f32 %v2418, %v2388
        %2423 = vrot.lane.b32.xlu0 %v2419, 126
        %v2424 = vpop.permute.xlu0 %2423
        %2425 = vrot.lane.b32.xlu0 %v2420, 126
        %v2426 = vpop.permute.xlu0 %2425
        %v2429 = vadd.f32 %v2371, %v2424
        %v2430 = vadd.f32 %v2372, %v2426
        %s2431 = sld [smem:[#allocation2 + $0xa1]]
        %v2432 = vstv %s2431
        %v2433 = vmul.f32 %v2432, %v2387
        %v2434 = vmul.f32 %v2432, %v2388
        %2437 = vrot.lane.b32.xlu0 %v2433, 126
        %v2438 = vpop.permute.xlu0 %2437
        %2439 = vrot.lane.b32.xlu0 %v2434, 126
        %v2440 = vpop.permute.xlu0 %2439
        %v2443 = vadd.f32 %v2385, %v2438
        %v2444 = vadd.f32 %v2386, %v2440
        %s2445 = sld [smem:[#allocation2 + $0x36]]
        %v2446 = vstv %s2445
        %v2447 = vmul.f32 %v2446, %v2387
        %v2448 = vmul.f32 %v2446, %v2388
        %2451 = vrot.lane.b32.xlu0 %v2447, 125
        %v2452 = vpop.permute.xlu0 %2451
        %2453 = vrot.lane.b32.xlu0 %v2448, 125
        %v2454 = vpop.permute.xlu0 %2453
        %v2457 = vadd.f32 %v2401, %v2452
        %v2458 = vadd.f32 %v2402, %v2454
        %s2459 = sld [smem:[#allocation2 + $0x5a]]
        %v2460 = vstv %s2459
        %v2461 = vmul.f32 %v2460, %v2387
        %v2462 = vmul.f32 %v2460, %v2388
        %2465 = vrot.lane.b32.xlu0 %v2461, 125
        %v2466 = vpop.permute.xlu0 %2465
        %2467 = vrot.lane.b32.xlu0 %v2462, 125
        %v2468 = vpop.permute.xlu0 %2467
        %v2471 = vadd.f32 %v2415, %v2466
        %v2472 = vadd.f32 %v2416, %v2468
        %s2473 = sld [smem:[#allocation2 + $0x7e]]
        %v2474 = vstv %s2473
        %v2475 = vmul.f32 %v2474, %v2387
        %v2476 = vmul.f32 %v2474, %v2388
        %2479 = vrot.lane.b32.xlu0 %v2475, 125
        %v2480 = vpop.permute.xlu0 %2479
        %2481 = vrot.lane.b32.xlu0 %v2476, 125
        %v2482 = vpop.permute.xlu0 %2481
        %v2485 = vadd.f32 %v2429, %v2480
        %v2486 = vadd.f32 %v2430, %v2482
        %s2487 = sld [smem:[#allocation2 + $0xa2]]
        %v2488 = vstv %s2487
        %v2489 = vmul.f32 %v2488, %v2387
        %v2490 = vmul.f32 %v2488, %v2388
        %2493 = vrot.lane.b32.xlu0 %v2489, 125
        %v2494 = vpop.permute.xlu0 %2493
        %2495 = vrot.lane.b32.xlu0 %v2490, 125
        %v2496 = vpop.permute.xlu0 %2495
        %v2499 = vadd.f32 %v2443, %v2494
        %v2500 = vadd.f32 %v2444, %v2496
        %s2501 = sld [smem:[#allocation2 + $0x37]]
        %v2502 = vstv %s2501
        %v2503 = vmul.f32 %v2502, %v2387
        %v2504 = vmul.f32 %v2502, %v2388
        %2507 = vrot.lane.b32.xlu0 %v2503, 124
        %v2508 = vpop.permute.xlu0 %2507
        %2509 = vrot.lane.b32.xlu0 %v2504, 124
        %v2510 = vpop.permute.xlu0 %2509
        %v2513 = vadd.f32 %v2457, %v2508
        %v2514 = vadd.f32 %v2458, %v2510
        %s2515 = sld [smem:[#allocation2 + $0x5b]]
        %v2516 = vstv %s2515
        %v2517 = vmul.f32 %v2516, %v2387
        %v2518 = vmul.f32 %v2516, %v2388
        %2521 = vrot.lane.b32.xlu0 %v2517, 124
        %v2522 = vpop.permute.xlu0 %2521
        %2523 = vrot.lane.b32.xlu0 %v2518, 124
        %v2524 = vpop.permute.xlu0 %2523
        %v2527 = vadd.f32 %v2471, %v2522
        %v2528 = vadd.f32 %v2472, %v2524
        %s2529 = sld [smem:[#allocation2 + $0x7f]]
        %v2530 = vstv %s2529
        %v2531 = vmul.f32 %v2530, %v2387
        %v2532 = vmul.f32 %v2530, %v2388
        %2535 = vrot.lane.b32.xlu0 %v2531, 124
        %v2536 = vpop.permute.xlu0 %2535
        %2537 = vrot.lane.b32.xlu0 %v2532, 124
        %v2538 = vpop.permute.xlu0 %2537
        %v2541 = vadd.f32 %v2485, %v2536
        %v2542 = vadd.f32 %v2486, %v2538
        %s2543 = sld [smem:[#allocation2 + $0xa3]]
        %v2544 = vstv %s2543
        %v2545 = vmul.f32 %v2544, %v2387
        %v2546 = vmul.f32 %v2544, %v2388
        %2549 = vrot.lane.b32.xlu0 %v2545, 124
        %v2550 = vpop.permute.xlu0 %2549
        %2551 = vrot.lane.b32.xlu0 %v2546, 124
        %v2552 = vpop.permute.xlu0 %2551
        %v2555 = vadd.f32 %v2499, %v2550
        %v2556 = vadd.f32 %v2500, %v2552
        %v2557 = vld [vmem:[%s253 + $0x4] sm:$0xff]
        %v2558 = vld [vmem:[%s253 + $0xc] sm:$0x3f]
        %s2559 = sld [smem:[#allocation2 + $0x38]]
        %v2560 = vstv %s2559
        %v2561 = vmul.f32 %v2560, %v2557
        %v2562 = vmul.f32 %v2560, %v2558
        %2565 = vrot.lane.b32.xlu0 %v2561, 126
        %v2566 = vpop.permute.xlu0 %2565
        %2567 = vrot.lane.b32.xlu0 %v2562, 126
        %v2568 = vpop.permute.xlu0 %2567
        %v2571 = vadd.f32 %v2513, %v2566
        %v2572 = vadd.f32 %v2514, %v2568
        %s2573 = sld [smem:[#allocation2 + $0x5c]]
        %v2574 = vstv %s2573
        %v2575 = vmul.f32 %v2574, %v2557
        %v2576 = vmul.f32 %v2574, %v2558
        %2579 = vrot.lane.b32.xlu0 %v2575, 126
        %v2580 = vpop.permute.xlu0 %2579
        %2581 = vrot.lane.b32.xlu0 %v2576, 126
        %v2582 = vpop.permute.xlu0 %2581
        %v2585 = vadd.f32 %v2527, %v2580
        %v2586 = vadd.f32 %v2528, %v2582
        %s2587 = sld [smem:[#allocation2 + $0x80]]
        %v2588 = vstv %s2587
        %v2589 = vmul.f32 %v2588, %v2557
        %v2590 = vmul.f32 %v2588, %v2558
        %2593 = vrot.lane.b32.xlu0 %v2589, 126
        %v2594 = vpop.permute.xlu0 %2593
        %2595 = vrot.lane.b32.xlu0 %v2590, 126
        %v2596 = vpop.permute.xlu0 %2595
        %v2599 = vadd.f32 %v2541, %v2594
        %v2600 = vadd.f32 %v2542, %v2596
        %s2601 = sld [smem:[#allocation2 + $0xa4]]
        %v2602 = vstv %s2601
        %v2603 = vmul.f32 %v2602, %v2557
        %v2604 = vmul.f32 %v2602, %v2558
        %2607 = vrot.lane.b32.xlu0 %v2603, 126
        %v2608 = vpop.permute.xlu0 %2607
        %2609 = vrot.lane.b32.xlu0 %v2604, 126
        %v2610 = vpop.permute.xlu0 %2609
        %v2613 = vadd.f32 %v2555, %v2608
        %v2614 = vadd.f32 %v2556, %v2610
        %s2615 = sld [smem:[#allocation2 + $0x39]]
        %v2616 = vstv %s2615
        %v2617 = vmul.f32 %v2616, %v2557
        %v2618 = vmul.f32 %v2616, %v2558
        %2621 = vrot.lane.b32.xlu0 %v2617, 125
        %v2622 = vpop.permute.xlu0 %2621
        %2623 = vrot.lane.b32.xlu0 %v2618, 125
        %v2624 = vpop.permute.xlu0 %2623
        %v2627 = vadd.f32 %v2571, %v2622
        %v2628 = vadd.f32 %v2572, %v2624
        %s2629 = sld [smem:[#allocation2 + $0x5d]]
        %v2630 = vstv %s2629
        %v2631 = vmul.f32 %v2630, %v2557
        %v2632 = vmul.f32 %v2630, %v2558
        %2635 = vrot.lane.b32.xlu0 %v2631, 125
        %v2636 = vpop.permute.xlu0 %2635
        %2637 = vrot.lane.b32.xlu0 %v2632, 125
        %v2638 = vpop.permute.xlu0 %2637
        %v2641 = vadd.f32 %v2585, %v2636
        %v2642 = vadd.f32 %v2586, %v2638
        %s2643 = sld [smem:[#allocation2 + $0x81]]
        %v2644 = vstv %s2643
        %v2645 = vmul.f32 %v2644, %v2557
        %v2646 = vmul.f32 %v2644, %v2558
        %2649 = vrot.lane.b32.xlu0 %v2645, 125
        %v2650 = vpop.permute.xlu0 %2649
        %2651 = vrot.lane.b32.xlu0 %v2646, 125
        %v2652 = vpop.permute.xlu0 %2651
        %v2655 = vadd.f32 %v2599, %v2650
        %v2656 = vadd.f32 %v2600, %v2652
        %s2657 = sld [smem:[#allocation2 + $0xa5]]
        %v2658 = vstv %s2657
        %v2659 = vmul.f32 %v2658, %v2557
        %v2660 = vmul.f32 %v2658, %v2558
        %2663 = vrot.lane.b32.xlu0 %v2659, 125
        %v2664 = vpop.permute.xlu0 %2663
        %2665 = vrot.lane.b32.xlu0 %v2660, 125
        %v2666 = vpop.permute.xlu0 %2665
        %v2669 = vadd.f32 %v2613, %v2664
        %v2670 = vadd.f32 %v2614, %v2666
        %s2671 = sld [smem:[#allocation2 + $0x3a]]
        %v2672 = vstv %s2671
        %v2673 = vmul.f32 %v2672, %v2557
        %v2674 = vmul.f32 %v2672, %v2558
        %2677 = vrot.lane.b32.xlu0 %v2673, 124
        %v2678 = vpop.permute.xlu0 %2677
        %2679 = vrot.lane.b32.xlu0 %v2674, 124
        %v2680 = vpop.permute.xlu0 %2679
        %v2683 = vadd.f32 %v2627, %v2678
        %v2684 = vadd.f32 %v2628, %v2680
        %s2685 = sld [smem:[#allocation2 + $0x5e]]
        %v2686 = vstv %s2685
        %v2687 = vmul.f32 %v2686, %v2557
        %v2688 = vmul.f32 %v2686, %v2558
        %2691 = vrot.lane.b32.xlu0 %v2687, 124
        %v2692 = vpop.permute.xlu0 %2691
        %2693 = vrot.lane.b32.xlu0 %v2688, 124
        %v2694 = vpop.permute.xlu0 %2693
        %v2697 = vadd.f32 %v2641, %v2692
        %v2698 = vadd.f32 %v2642, %v2694
        %s2699 = sld [smem:[#allocation2 + $0x82]]
        %v2700 = vstv %s2699
        %v2701 = vmul.f32 %v2700, %v2557
        %v2702 = vmul.f32 %v2700, %v2558
        %2705 = vrot.lane.b32.xlu0 %v2701, 124
        %v2706 = vpop.permute.xlu0 %2705
        %2707 = vrot.lane.b32.xlu0 %v2702, 124
        %v2708 = vpop.permute.xlu0 %2707
        %v2711 = vadd.f32 %v2655, %v2706
        %v2712 = vadd.f32 %v2656, %v2708
        %s2713 = sld [smem:[#allocation2 + $0xa6]]
        %v2714 = vstv %s2713
        %v2715 = vmul.f32 %v2714, %v2557
        %v2716 = vmul.f32 %v2714, %v2558
        %2719 = vrot.lane.b32.xlu0 %v2715, 124
        %v2720 = vpop.permute.xlu0 %2719
        %2721 = vrot.lane.b32.xlu0 %v2716, 124
        %v2722 = vpop.permute.xlu0 %2721
        %v2725 = vadd.f32 %v2669, %v2720
        %v2726 = vadd.f32 %v2670, %v2722
        %s2727 = scalar_lea.vmem %s253, 24
        %v2728 = vld [vmem:[%s2727 + $0x2] sm:$0xff]
        %v2729 = vld [vmem:[%s2727 + $0xa] sm:$0x3f]
        %s2730 = sld [smem:[#allocation2 + $0x3b]]
        %v2731 = vstv %s2730
        %v2732 = vmul.f32 %v2731, %v2728
        %v2733 = vmul.f32 %v2731, %v2729
        %2736 = vrot.lane.b32.xlu0 %v2732, 126
        %v2737 = vpop.permute.xlu0 %2736
        %2738 = vrot.lane.b32.xlu0 %v2733, 126
        %v2739 = vpop.permute.xlu0 %2738
        %v2742 = vadd.f32 %v2683, %v2737
        %v2743 = vadd.f32 %v2684, %v2739
        %s2744 = sld [smem:[#allocation2 + $0x5f]]
        %v2745 = vstv %s2744
        %v2746 = vmul.f32 %v2745, %v2728
        %v2747 = vmul.f32 %v2745, %v2729
        %2750 = vrot.lane.b32.xlu0 %v2746, 126
        %v2751 = vpop.permute.xlu0 %2750
        %2752 = vrot.lane.b32.xlu0 %v2747, 126
        %v2753 = vpop.permute.xlu0 %2752
        %v2756 = vadd.f32 %v2697, %v2751
        %v2757 = vadd.f32 %v2698, %v2753
        %s2758 = sld [smem:[#allocation2 + $0x83]]
        %v2759 = vstv %s2758
        %v2760 = vmul.f32 %v2759, %v2728
        %v2761 = vmul.f32 %v2759, %v2729
        %2764 = vrot.lane.b32.xlu0 %v2760, 126
        %v2765 = vpop.permute.xlu0 %2764
        %2766 = vrot.lane.b32.xlu0 %v2761, 126
        %v2767 = vpop.permute.xlu0 %2766
        %v2770 = vadd.f32 %v2711, %v2765
        %v2771 = vadd.f32 %v2712, %v2767
        %s2772 = sld [smem:[#allocation2 + $0xa7]]
        %v2773 = vstv %s2772
        %v2774 = vmul.f32 %v2773, %v2728
        %v2775 = vmul.f32 %v2773, %v2729
        %2778 = vrot.lane.b32.xlu0 %v2774, 126
        %v2779 = vpop.permute.xlu0 %2778
        %2780 = vrot.lane.b32.xlu0 %v2775, 126
        %v2781 = vpop.permute.xlu0 %2780
        %v2784 = vadd.f32 %v2725, %v2779
        %v2785 = vadd.f32 %v2726, %v2781
        %s2786 = sld [smem:[#allocation2 + $0x3c]]
        %v2787 = vstv %s2786
        %v2788 = vmul.f32 %v2787, %v2728
        %v2789 = vmul.f32 %v2787, %v2729
        %2792 = vrot.lane.b32.xlu0 %v2788, 125
        %v2793 = vpop.permute.xlu0 %2792
        %2794 = vrot.lane.b32.xlu0 %v2789, 125
        %v2795 = vpop.permute.xlu0 %2794
        %v2798 = vadd.f32 %v2742, %v2793
        %v2799 = vadd.f32 %v2743, %v2795
        %s2800 = sld [smem:[#allocation2 + $0x60]]
        %v2801 = vstv %s2800
        %v2802 = vmul.f32 %v2801, %v2728
        %v2803 = vmul.f32 %v2801, %v2729
        %2806 = vrot.lane.b32.xlu0 %v2802, 125
        %v2807 = vpop.permute.xlu0 %2806
        %2808 = vrot.lane.b32.xlu0 %v2803, 125
        %v2809 = vpop.permute.xlu0 %2808
        %v2812 = vadd.f32 %v2756, %v2807
        %v2813 = vadd.f32 %v2757, %v2809
        %s2814 = sld [smem:[#allocation2 + $0x84]]
        %v2815 = vstv %s2814
        %v2816 = vmul.f32 %v2815, %v2728
        %v2817 = vmul.f32 %v2815, %v2729
        %2820 = vrot.lane.b32.xlu0 %v2816, 125
        %v2821 = vpop.permute.xlu0 %2820
        %2822 = vrot.lane.b32.xlu0 %v2817, 125
        %v2823 = vpop.permute.xlu0 %2822
        %v2826 = vadd.f32 %v2770, %v2821
        %v2827 = vadd.f32 %v2771, %v2823
        %s2828 = sld [smem:[#allocation2 + $0xa8]]
        %v2829 = vstv %s2828
        %v2830 = vmul.f32 %v2829, %v2728
        %v2831 = vmul.f32 %v2829, %v2729
        %2834 = vrot.lane.b32.xlu0 %v2830, 125
        %v2835 = vpop.permute.xlu0 %2834
        %2836 = vrot.lane.b32.xlu0 %v2831, 125
        %v2837 = vpop.permute.xlu0 %2836
        %v2840 = vadd.f32 %v2784, %v2835
        %v2841 = vadd.f32 %v2785, %v2837
        %s2842 = sld [smem:[#allocation2 + $0x3d]]
        %v2843 = vstv %s2842
        %v2844 = vmul.f32 %v2843, %v2728
        %v2845 = vmul.f32 %v2843, %v2729
        %2848 = vrot.lane.b32.xlu0 %v2844, 124
        %v2849 = vpop.permute.xlu0 %2848
        %2850 = vrot.lane.b32.xlu0 %v2845, 124
        %v2851 = vpop.permute.xlu0 %2850
        %v2854 = vadd.f32 %v2798, %v2849
        %v2855 = vadd.f32 %v2799, %v2851
        %s2856 = sld [smem:[#allocation2 + $0x61]]
        %v2857 = vstv %s2856
        %v2858 = vmul.f32 %v2857, %v2728
        %v2859 = vmul.f32 %v2857, %v2729
        %2862 = vrot.lane.b32.xlu0 %v2858, 124
        %v2863 = vpop.permute.xlu0 %2862
        %2864 = vrot.lane.b32.xlu0 %v2859, 124
        %v2865 = vpop.permute.xlu0 %2864
        %v2868 = vadd.f32 %v2812, %v2863
        %v2869 = vadd.f32 %v2813, %v2865
        %s2870 = sld [smem:[#allocation2 + $0x85]]
        %v2871 = vstv %s2870
        %v2872 = vmul.f32 %v2871, %v2728
        %v2873 = vmul.f32 %v2871, %v2729
        %2876 = vrot.lane.b32.xlu0 %v2872, 124
        %v2877 = vpop.permute.xlu0 %2876
        %2878 = vrot.lane.b32.xlu0 %v2873, 124
        %v2879 = vpop.permute.xlu0 %2878
        %v2882 = vadd.f32 %v2826, %v2877
        %v2883 = vadd.f32 %v2827, %v2879
        %s2884 = sld [smem:[#allocation2 + $0xa9]]
        %v2885 = vstv %s2884
        %v2886 = vmul.f32 %v2885, %v2728
        %v2887 = vmul.f32 %v2885, %v2729
        %2890 = vrot.lane.b32.xlu0 %v2886, 124
        %v2891 = vpop.permute.xlu0 %2890
        %2892 = vrot.lane.b32.xlu0 %v2887, 124
        %v2893 = vpop.permute.xlu0 %2892
        %v2896 = vadd.f32 %v2840, %v2891
        %v2897 = vadd.f32 %v2841, %v2893
        %v2898 = vld [vmem:[%s2727 + $0x3] sm:$0xff]
        %v2899 = vld [vmem:[%s2727 + $0xb] sm:$0x3f]
        %s2900 = sld [smem:[#allocation2 + $0x3e]]
        %v2901 = vstv %s2900
        %v2902 = vmul.f32 %v2901, %v2898
        %v2903 = vmul.f32 %v2901, %v2899
        %2906 = vrot.lane.b32.xlu0 %v2902, 126
        %v2907 = vpop.permute.xlu0 %2906
        %2908 = vrot.lane.b32.xlu0 %v2903, 126
        %v2909 = vpop.permute.xlu0 %2908
        %v2912 = vadd.f32 %v2854, %v2907
        %v2913 = vadd.f32 %v2855, %v2909
        %s2914 = sld [smem:[#allocation2 + $0x62]]
        %v2915 = vstv %s2914
        %v2916 = vmul.f32 %v2915, %v2898
        %v2917 = vmul.f32 %v2915, %v2899
        %2920 = vrot.lane.b32.xlu0 %v2916, 126
        %v2921 = vpop.permute.xlu0 %2920
        %2922 = vrot.lane.b32.xlu0 %v2917, 126
        %v2923 = vpop.permute.xlu0 %2922
        %v2926 = vadd.f32 %v2868, %v2921
        %v2927 = vadd.f32 %v2869, %v2923
        %s2928 = sld [smem:[#allocation2 + $0x86]]
        %v2929 = vstv %s2928
        %v2930 = vmul.f32 %v2929, %v2898
        %v2931 = vmul.f32 %v2929, %v2899
        %2934 = vrot.lane.b32.xlu0 %v2930, 126
        %v2935 = vpop.permute.xlu0 %2934
        %2936 = vrot.lane.b32.xlu0 %v2931, 126
        %v2937 = vpop.permute.xlu0 %2936
        %v2940 = vadd.f32 %v2882, %v2935
        %v2941 = vadd.f32 %v2883, %v2937
        %s2942 = sld [smem:[#allocation2 + $0xaa]]
        %v2943 = vstv %s2942
        %v2944 = vmul.f32 %v2943, %v2898
        %v2945 = vmul.f32 %v2943, %v2899
        %2948 = vrot.lane.b32.xlu0 %v2944, 126
        %v2949 = vpop.permute.xlu0 %2948
        %2950 = vrot.lane.b32.xlu0 %v2945, 126
        %v2951 = vpop.permute.xlu0 %2950
        %v2954 = vadd.f32 %v2896, %v2949
        %v2955 = vadd.f32 %v2897, %v2951
        %s2956 = sld [smem:[#allocation2 + $0x3f]]
        %v2957 = vstv %s2956
        %v2958 = vmul.f32 %v2957, %v2898
        %v2959 = vmul.f32 %v2957, %v2899
        %2962 = vrot.lane.b32.xlu0 %v2958, 125
        %v2963 = vpop.permute.xlu0 %2962
        %2964 = vrot.lane.b32.xlu0 %v2959, 125
        %v2965 = vpop.permute.xlu0 %2964
        %v2968 = vadd.f32 %v2912, %v2963
        %v2969 = vadd.f32 %v2913, %v2965
        %s2970 = sld [smem:[#allocation2 + $0x63]]
        %v2971 = vstv %s2970
        %v2972 = vmul.f32 %v2971, %v2898
        %v2973 = vmul.f32 %v2971, %v2899
        %2976 = vrot.lane.b32.xlu0 %v2972, 125
        %v2977 = vpop.permute.xlu0 %2976
        %2978 = vrot.lane.b32.xlu0 %v2973, 125
        %v2979 = vpop.permute.xlu0 %2978
        %v2982 = vadd.f32 %v2926, %v2977
        %v2983 = vadd.f32 %v2927, %v2979
        %s2984 = sld [smem:[#allocation2 + $0x87]]
        %v2985 = vstv %s2984
        %v2986 = vmul.f32 %v2985, %v2898
        %v2987 = vmul.f32 %v2985, %v2899
        %2990 = vrot.lane.b32.xlu0 %v2986, 125
        %v2991 = vpop.permute.xlu0 %2990
        %2992 = vrot.lane.b32.xlu0 %v2987, 125
        %v2993 = vpop.permute.xlu0 %2992
        %v2996 = vadd.f32 %v2940, %v2991
        %v2997 = vadd.f32 %v2941, %v2993
        %s2998 = sld [smem:[#allocation2 + $0xab]]
        %v2999 = vstv %s2998
        %v3000 = vmul.f32 %v2999, %v2898
        %v3001 = vmul.f32 %v2999, %v2899
        %3004 = vrot.lane.b32.xlu0 %v3000, 125
        %v3005 = vpop.permute.xlu0 %3004
        %3006 = vrot.lane.b32.xlu0 %v3001, 125
        %v3007 = vpop.permute.xlu0 %3006
        %v3010 = vadd.f32 %v2954, %v3005
        %v3011 = vadd.f32 %v2955, %v3007
        %s3012 = sld [smem:[#allocation2 + $0x40]]
        %v3013 = vstv %s3012
        %v3014 = vmul.f32 %v3013, %v2898
        %v3015 = vmul.f32 %v3013, %v2899
        %3018 = vrot.lane.b32.xlu0 %v3014, 124
        %v3019 = vpop.permute.xlu0 %3018
        %3020 = vrot.lane.b32.xlu0 %v3015, 124
        %v3021 = vpop.permute.xlu0 %3020
        %v3024 = vadd.f32 %v2968, %v3019
        %v3025 = vadd.f32 %v2969, %v3021
        %s3026 = sld [smem:[#allocation2 + $0x64]]
        %v3027 = vstv %s3026
        %v3028 = vmul.f32 %v3027, %v2898
        %v3029 = vmul.f32 %v3027, %v2899
        %3032 = vrot.lane.b32.xlu0 %v3028, 124
        %v3033 = vpop.permute.xlu0 %3032
        %3034 = vrot.lane.b32.xlu0 %v3029, 124
        %v3035 = vpop.permute.xlu0 %3034
        %v3038 = vadd.f32 %v2982, %v3033
        %v3039 = vadd.f32 %v2983, %v3035
        %s3040 = sld [smem:[#allocation2 + $0x88]]
        %v3041 = vstv %s3040
        %v3042 = vmul.f32 %v3041, %v2898
        %v3043 = vmul.f32 %v3041, %v2899
        %3046 = vrot.lane.b32.xlu0 %v3042, 124
        %v3047 = vpop.permute.xlu0 %3046
        %3048 = vrot.lane.b32.xlu0 %v3043, 124
        %v3049 = vpop.permute.xlu0 %3048
        %v3052 = vadd.f32 %v2996, %v3047
        %v3053 = vadd.f32 %v2997, %v3049
        %s3054 = sld [smem:[#allocation2 + $0xac]]
        %v3055 = vstv %s3054
        %v3056 = vmul.f32 %v3055, %v2898
        %v3057 = vmul.f32 %v3055, %v2899
        %3060 = vrot.lane.b32.xlu0 %v3056, 124
        %v3061 = vpop.permute.xlu0 %3060
        %3062 = vrot.lane.b32.xlu0 %v3057, 124
        %v3063 = vpop.permute.xlu0 %3062
        %v3066 = vadd.f32 %v3010, %v3061
        %v3067 = vadd.f32 %v3011, %v3063
        %v3068 = vld [vmem:[%s2727 + $0x4] sm:$0xff]
        %v3069 = vld [vmem:[%s2727 + $0xc] sm:$0x3f]
        %s3070 = sld [smem:[#allocation2 + $0x41]]
        %v3071 = vstv %s3070
        %v3072 = vmul.f32 %v3071, %v3068
        %v3073 = vmul.f32 %v3071, %v3069
        %3076 = vrot.lane.b32.xlu0 %v3072, 126
        %v3077 = vpop.permute.xlu0 %3076
        %3078 = vrot.lane.b32.xlu0 %v3073, 126
        %v3079 = vpop.permute.xlu0 %3078
        %v3082 = vadd.f32 %v3024, %v3077
        %v3083 = vadd.f32 %v3025, %v3079
        %s3084 = sld [smem:[#allocation2 + $0x65]]
        %v3085 = vstv %s3084
        %v3086 = vmul.f32 %v3085, %v3068
        %v3087 = vmul.f32 %v3085, %v3069
        %3090 = vrot.lane.b32.xlu0 %v3086, 126
        %v3091 = vpop.permute.xlu0 %3090
        %3092 = vrot.lane.b32.xlu0 %v3087, 126
        %v3093 = vpop.permute.xlu0 %3092
        %v3096 = vadd.f32 %v3038, %v3091
        %v3097 = vadd.f32 %v3039, %v3093
        %s3098 = sld [smem:[#allocation2 + $0x89]]
        %v3099 = vstv %s3098
        %v3100 = vmul.f32 %v3099, %v3068
        %v3101 = vmul.f32 %v3099, %v3069
        %3104 = vrot.lane.b32.xlu0 %v3100, 126
        %v3105 = vpop.permute.xlu0 %3104
        %3106 = vrot.lane.b32.xlu0 %v3101, 126
        %v3107 = vpop.permute.xlu0 %3106
        %v3110 = vadd.f32 %v3052, %v3105
        %v3111 = vadd.f32 %v3053, %v3107
        %s3112 = sld [smem:[#allocation2 + $0xad]]
        %v3113 = vstv %s3112
        %v3114 = vmul.f32 %v3113, %v3068
        %v3115 = vmul.f32 %v3113, %v3069
        %3118 = vrot.lane.b32.xlu0 %v3114, 126
        %v3119 = vpop.permute.xlu0 %3118
        %3120 = vrot.lane.b32.xlu0 %v3115, 126
        %v3121 = vpop.permute.xlu0 %3120
        %v3124 = vadd.f32 %v3066, %v3119
        %v3125 = vadd.f32 %v3067, %v3121
        %s3126 = sld [smem:[#allocation2 + $0x42]]
        %v3127 = vstv %s3126
        %v3128 = vmul.f32 %v3127, %v3068
        %v3129 = vmul.f32 %v3127, %v3069
        %3132 = vrot.lane.b32.xlu0 %v3128, 125
        %v3133 = vpop.permute.xlu0 %3132
        %3134 = vrot.lane.b32.xlu0 %v3129, 125
        %v3135 = vpop.permute.xlu0 %3134
        %v3138 = vadd.f32 %v3082, %v3133
        %v3139 = vadd.f32 %v3083, %v3135
        %s3140 = sld [smem:[#allocation2 + $0x66]]
        %v3141 = vstv %s3140
        %v3142 = vmul.f32 %v3141, %v3068
        %v3143 = vmul.f32 %v3141, %v3069
        %3146 = vrot.lane.b32.xlu0 %v3142, 125
        %v3147 = vpop.permute.xlu0 %3146
        %3148 = vrot.lane.b32.xlu0 %v3143, 125
        %v3149 = vpop.permute.xlu0 %3148
        %v3152 = vadd.f32 %v3096, %v3147
        %v3153 = vadd.f32 %v3097, %v3149
        %s3154 = sld [smem:[#allocation2 + $0x8a]]
        %v3155 = vstv %s3154
        %v3156 = vmul.f32 %v3155, %v3068
        %v3157 = vmul.f32 %v3155, %v3069
        %3160 = vrot.lane.b32.xlu0 %v3156, 125
        %v3161 = vpop.permute.xlu0 %3160
        %3162 = vrot.lane.b32.xlu0 %v3157, 125
        %v3163 = vpop.permute.xlu0 %3162
        %v3166 = vadd.f32 %v3110, %v3161
        %v3167 = vadd.f32 %v3111, %v3163
        %s3168 = sld [smem:[#allocation2 + $0xae]]
        %v3169 = vstv %s3168
        %v3170 = vmul.f32 %v3169, %v3068
        %v3171 = vmul.f32 %v3169, %v3069
        %3174 = vrot.lane.b32.xlu0 %v3170, 125
        %v3175 = vpop.permute.xlu0 %3174
        %3176 = vrot.lane.b32.xlu0 %v3171, 125
        %v3177 = vpop.permute.xlu0 %3176
        %v3180 = vadd.f32 %v3124, %v3175
        %v3181 = vadd.f32 %v3125, %v3177
        %s3182 = sld [smem:[#allocation2 + $0x43]]
        %v3183 = vstv %s3182
        %v3184 = vmul.f32 %v3183, %v3068
        %v3185 = vmul.f32 %v3183, %v3069
        %3188 = vrot.lane.b32.xlu0 %v3184, 124
        %v3189 = vpop.permute.xlu0 %3188
        %3190 = vrot.lane.b32.xlu0 %v3185, 124
        %v3191 = vpop.permute.xlu0 %3190
        %v3194 = vadd.f32 %v3138, %v3189
        %v3195 = vadd.f32 %v3139, %v3191
        %s3196 = sld [smem:[#allocation2 + $0x67]]
        %v3197 = vstv %s3196
        %v3198 = vmul.f32 %v3197, %v3068
        %v3199 = vmul.f32 %v3197, %v3069
        %3202 = vrot.lane.b32.xlu0 %v3198, 124
        %v3203 = vpop.permute.xlu0 %3202
        %3204 = vrot.lane.b32.xlu0 %v3199, 124
        %v3205 = vpop.permute.xlu0 %3204
        %v3208 = vadd.f32 %v3152, %v3203
        %v3209 = vadd.f32 %v3153, %v3205
        %s3210 = sld [smem:[#allocation2 + $0x8b]]
        %v3211 = vstv %s3210
        %v3212 = vmul.f32 %v3211, %v3068
        %v3213 = vmul.f32 %v3211, %v3069
        %3216 = vrot.lane.b32.xlu0 %v3212, 124
        %v3217 = vpop.permute.xlu0 %3216
        %3218 = vrot.lane.b32.xlu0 %v3213, 124
        %v3219 = vpop.permute.xlu0 %3218
        %v3222 = vadd.f32 %v3166, %v3217
        %v3223 = vadd.f32 %v3167, %v3219
        %s3224 = sld [smem:[#allocation2 + $0xaf]]
        %v3225 = vstv %s3224
        %v3226 = vmul.f32 %v3225, %v3068
        %v3227 = vmul.f32 %v3225, %v3069
        %3230 = vrot.lane.b32.xlu0 %v3226, 124
        %v3231 = vpop.permute.xlu0 %3230
        %3232 = vrot.lane.b32.xlu0 %v3227, 124
        %v3233 = vpop.permute.xlu0 %3232
        %v3236 = vadd.f32 %v3180, %v3231
        %v3237 = vadd.f32 %v3181, %v3233
        %s3238 = sld [smem:[#allocation2 + $0xb0]]
        %v3239 = vstv %s3238
        %v3240 = vadd.f32 %v3194, %v3239
        %v3241 = vadd.f32 %v3195, %v3239
        %v3242 = vmax.f32 %v3240, 0.0
        %v3243 = vmax.f32 %v3241, 0.0
        %s3244 = sld [smem:[#allocation2 + $0xb1]]
        %v3245 = vstv %s3244
        %v3246 = vadd.f32 %v3208, %v3245
        %v3247 = vadd.f32 %v3209, %v3245
        %v3248 = vmax.f32 %v3246, 0.0
        %v3249 = vmax.f32 %v3247, 0.0
        %s3250 = sld [smem:[#allocation2 + $0xb2]]
        %v3251 = vstv %s3250
        %v3252 = vadd.f32 %v3222, %v3251
        %v3253 = vadd.f32 %v3223, %v3251
        %v3254 = vmax.f32 %v3252, 0.0
        %v3255 = vmax.f32 %v3253, 0.0
        %s3256 = sld [smem:[#allocation2 + $0xb3]]
        %v3257 = vstv %s3256
        %v3258 = vadd.f32 %v3236, %v3257
        %v3259 = vadd.f32 %v3237, %v3257
        %v3260 = vmax.f32 %v3258, 0.0
        %v3261 = vmax.f32 %v3259, 0.0
        %s3262 = sld [smem:[#allocation2 + $0xb4]]
        %v3263 = vstv %s3262
        %v3264 = vmul.f32 %v3263, %v3242
        %v3265 = vmul.f32 %v3263, %v3243
        %v3266 = vadd.f32 %v3264, 0.0
        %v3267 = vadd.f32 %v3265, 0.0
        %s3268 = sld [smem:[#allocation2 + $0xd8]]
        %v3269 = vstv %s3268
        %v3270 = vmul.f32 %v3269, %v3242
        %v3271 = vmul.f32 %v3269, %v3243
        %v3272 = vadd.f32 %v3270, 0.0
        %v3273 = vadd.f32 %v3271, 0.0
        %s3274 = sld [smem:[#allocation2 + $0xfc]]
        %v3275 = vstv %s3274
        %v3276 = vmul.f32 %v3275, %v3242
        %v3277 = vmul.f32 %v3275, %v3243
        %v3278 = vadd.f32 %v3276, 0.0
        %v3279 = vadd.f32 %v3277, 0.0
        %s3280 = sld [smem:[#allocation2 + $0x120]]
        %v3281 = vstv %s3280
        %v3282 = vmul.f32 %v3281, %v3242
        %v3283 = vmul.f32 %v3281, %v3243
        %v3284 = vadd.f32 %v3282, 0.0
        %v3285 = vadd.f32 %v3283, 0.0
        %s3286 = sld [smem:[#allocation2 + $0xb5]]
        %v3287 = vstv %s3286
        %v3288 = vmul.f32 %v3287, %v3242
        %v3289 = vmul.f32 %v3287, %v3243
        %3292 = vrot.lane.b32.xlu0 %v3288, 127
        %v3293 = vpop.permute.xlu0 %3292
        %3294 = vrot.lane.b32.xlu0 %v3289, 127
        %v3295 = vpop.permute.xlu0 %3294
        %v3298 = vadd.f32 %v3266, %v3293
        %v3299 = vadd.f32 %v3267, %v3295
        %s3300 = sld [smem:[#allocation2 + $0xd9]]
        %v3301 = vstv %s3300
        %v3302 = vmul.f32 %v3301, %v3242
        %v3303 = vmul.f32 %v3301, %v3243
        %3306 = vrot.lane.b32.xlu0 %v3302, 127
        %v3307 = vpop.permute.xlu0 %3306
        %3308 = vrot.lane.b32.xlu0 %v3303, 127
        %v3309 = vpop.permute.xlu0 %3308
        %v3312 = vadd.f32 %v3272, %v3307
        %v3313 = vadd.f32 %v3273, %v3309
        %s3314 = sld [smem:[#allocation2 + $0xfd]]
        %v3315 = vstv %s3314
        %v3316 = vmul.f32 %v3315, %v3242
        %v3317 = vmul.f32 %v3315, %v3243
        %3320 = vrot.lane.b32.xlu0 %v3316, 127
        %v3321 = vpop.permute.xlu0 %3320
        %3322 = vrot.lane.b32.xlu0 %v3317, 127
        %v3323 = vpop.permute.xlu0 %3322
        %v3326 = vadd.f32 %v3278, %v3321
        %v3327 = vadd.f32 %v3279, %v3323
        %s3328 = sld [smem:[#allocation2 + $0x121]]
        %v3329 = vstv %s3328
        %v3330 = vmul.f32 %v3329, %v3242
        %v3331 = vmul.f32 %v3329, %v3243
        %3334 = vrot.lane.b32.xlu0 %v3330, 127
        %v3335 = vpop.permute.xlu0 %3334
        %3336 = vrot.lane.b32.xlu0 %v3331, 127
        %v3337 = vpop.permute.xlu0 %3336
        %v3340 = vadd.f32 %v3284, %v3335
        %v3341 = vadd.f32 %v3285, %v3337
        %s3342 = sld [smem:[#allocation2 + $0xb6]]
        %v3343 = vstv %s3342
        %v3344 = vmul.f32 %v3343, %v3242
        %v3345 = vmul.f32 %v3343, %v3243
        %3348 = vrot.lane.b32.xlu0 %v3344, 126
        %v3349 = vpop.permute.xlu0 %3348
        %3350 = vrot.lane.b32.xlu0 %v3345, 126
        %v3351 = vpop.permute.xlu0 %3350
        %v3354 = vadd.f32 %v3298, %v3349
        %v3355 = vadd.f32 %v3299, %v3351
        %s3356 = sld [smem:[#allocation2 + $0xda]]
        %v3357 = vstv %s3356
        %v3358 = vmul.f32 %v3357, %v3242
        %v3359 = vmul.f32 %v3357, %v3243
        %3362 = vrot.lane.b32.xlu0 %v3358, 126
        %v3363 = vpop.permute.xlu0 %3362
        %3364 = vrot.lane.b32.xlu0 %v3359, 126
        %v3365 = vpop.permute.xlu0 %3364
        %v3368 = vadd.f32 %v3312, %v3363
        %v3369 = vadd.f32 %v3313, %v3365
        %s3370 = sld [smem:[#allocation2 + $0xfe]]
        %v3371 = vstv %s3370
        %v3372 = vmul.f32 %v3371, %v3242
        %v3373 = vmul.f32 %v3371, %v3243
        %3376 = vrot.lane.b32.xlu0 %v3372, 126
        %v3377 = vpop.permute.xlu0 %3376
        %3378 = vrot.lane.b32.xlu0 %v3373, 126
        %v3379 = vpop.permute.xlu0 %3378
        %v3382 = vadd.f32 %v3326, %v3377
        %v3383 = vadd.f32 %v3327, %v3379
        %s3384 = sld [smem:[#allocation2 + $0x122]]
        %v3385 = vstv %s3384
        %v3386 = vmul.f32 %v3385, %v3242
        %v3387 = vmul.f32 %v3385, %v3243
        %3390 = vrot.lane.b32.xlu0 %v3386, 126
        %v3391 = vpop.permute.xlu0 %3390
        %3392 = vrot.lane.b32.xlu0 %v3387, 126
        %v3393 = vpop.permute.xlu0 %3392
        %v3396 = vadd.f32 %v3340, %v3391
        %v3397 = vadd.f32 %v3341, %v3393
        %s3398 = sld [smem:[#allocation2 + $0xb7]]
        %v3399 = vstv %s3398
        %v3400 = vmul.f32 %v3399, %v3242
        %v3401 = vmul.f32 %v3399, %v3243
        %v3404 = vrot.slane %v3400, 1
        %v3405 = vrot.slane %v3401, 1
        %v3406 = vsel %vm1333, %v3404, %v3405
        %v3409 = vadd.f32 %v3354, %v3406
        %v3410 = vadd.f32 %v3355, %v3405
        %s3411 = sld [smem:[#allocation2 + $0xdb]]
        %v3412 = vstv %s3411
        %v3413 = vmul.f32 %v3412, %v3242
        %v3414 = vmul.f32 %v3412, %v3243
        %v3417 = vrot.slane %v3413, 1
        %v3418 = vrot.slane %v3414, 1
        %v3419 = vsel %vm1333, %v3417, %v3418
        %v3422 = vadd.f32 %v3368, %v3419
        %v3423 = vadd.f32 %v3369, %v3418
        %s3424 = sld [smem:[#allocation2 + $0xff]]
        %v3425 = vstv %s3424
        %v3426 = vmul.f32 %v3425, %v3242
        %v3427 = vmul.f32 %v3425, %v3243
        %v3430 = vrot.slane %v3426, 1
        %v3431 = vrot.slane %v3427, 1
        %v3432 = vsel %vm1333, %v3430, %v3431
        %v3435 = vadd.f32 %v3382, %v3432
        %v3436 = vadd.f32 %v3383, %v3431
        %s3437 = sld [smem:[#allocation2 + $0x123]]
        %v3438 = vstv %s3437
        %v3439 = vmul.f32 %v3438, %v3242
        %v3440 = vmul.f32 %v3438, %v3243
        %v3443 = vrot.slane %v3439, 1
        %v3444 = vrot.slane %v3440, 1
        %v3445 = vsel %vm1333, %v3443, %v3444
        %v3448 = vadd.f32 %v3396, %v3445
        %v3449 = vadd.f32 %v3397, %v3444
        %s3450 = sld [smem:[#allocation2 + $0xb8]]
        %v3451 = vstv %s3450
        %v3452 = vmul.f32 %v3451, %v3242
        %v3453 = vmul.f32 %v3451, %v3243
        %v3456 = vrot.slane %v3452, 1
        %v3457 = vrot.slane %v3453, 1
        %v3458 = vsel %vm1333, %v3456, %v3457
        %3459 = vrot.lane.b32.xlu0 %v3458, 127
        %v3460 = vpop.permute.xlu0 %3459
        %3461 = vrot.lane.b32.xlu0 %v3457, 127
        %v3462 = vpop.permute.xlu0 %3461
        %v3465 = vadd.f32 %v3409, %v3460
        %v3466 = vadd.f32 %v3410, %v3462
        %s3467 = sld [smem:[#allocation2 + $0xdc]]
        %v3468 = vstv %s3467
        %v3469 = vmul.f32 %v3468, %v3242
        %v3470 = vmul.f32 %v3468, %v3243
        %v3473 = vrot.slane %v3469, 1
        %v3474 = vrot.slane %v3470, 1
        %v3475 = vsel %vm1333, %v3473, %v3474
        %3476 = vrot.lane.b32.xlu0 %v3475, 127
        %v3477 = vpop.permute.xlu0 %3476
        %3478 = vrot.lane.b32.xlu0 %v3474, 127
        %v3479 = vpop.permute.xlu0 %3478
        %v3482 = vadd.f32 %v3422, %v3477
        %v3483 = vadd.f32 %v3423, %v3479
        %s3484 = sld [smem:[#allocation2 + $0x100]]
        %v3485 = vstv %s3484
        %v3486 = vmul.f32 %v3485, %v3242
        %v3487 = vmul.f32 %v3485, %v3243
        %v3490 = vrot.slane %v3486, 1
        %v3491 = vrot.slane %v3487, 1
        %v3492 = vsel %vm1333, %v3490, %v3491
        %3493 = vrot.lane.b32.xlu0 %v3492, 127
        %v3494 = vpop.permute.xlu0 %3493
        %3495 = vrot.lane.b32.xlu0 %v3491, 127
        %v3496 = vpop.permute.xlu0 %3495
        %v3499 = vadd.f32 %v3435, %v3494
        %v3500 = vadd.f32 %v3436, %v3496
        %s3501 = sld [smem:[#allocation2 + $0x124]]
        %v3502 = vstv %s3501
        %v3503 = vmul.f32 %v3502, %v3242
        %v3504 = vmul.f32 %v3502, %v3243
        %v3507 = vrot.slane %v3503, 1
        %v3508 = vrot.slane %v3504, 1
        %v3509 = vsel %vm1333, %v3507, %v3508
        %3510 = vrot.lane.b32.xlu0 %v3509, 127
        %v3511 = vpop.permute.xlu0 %3510
        %3512 = vrot.lane.b32.xlu0 %v3508, 127
        %v3513 = vpop.permute.xlu0 %3512
        %v3516 = vadd.f32 %v3448, %v3511
        %v3517 = vadd.f32 %v3449, %v3513
        %s3518 = sld [smem:[#allocation2 + $0xb9]]
        %v3519 = vstv %s3518
        %v3520 = vmul.f32 %v3519, %v3242
        %v3521 = vmul.f32 %v3519, %v3243
        %v3524 = vrot.slane %v3520, 1
        %v3525 = vrot.slane %v3521, 1
        %v3526 = vsel %vm1333, %v3524, %v3525
        %3527 = vrot.lane.b32.xlu0 %v3526, 126
        %v3528 = vpop.permute.xlu0 %3527
        %3529 = vrot.lane.b32.xlu0 %v3525, 126
        %v3530 = vpop.permute.xlu0 %3529
        %v3533 = vadd.f32 %v3465, %v3528
        %v3534 = vadd.f32 %v3466, %v3530
        %s3535 = sld [smem:[#allocation2 + $0xdd]]
        %v3536 = vstv %s3535
        %v3537 = vmul.f32 %v3536, %v3242
        %v3538 = vmul.f32 %v3536, %v3243
        %v3541 = vrot.slane %v3537, 1
        %v3542 = vrot.slane %v3538, 1
        %v3543 = vsel %vm1333, %v3541, %v3542
        %3544 = vrot.lane.b32.xlu0 %v3543, 126
        %v3545 = vpop.permute.xlu0 %3544
        %3546 = vrot.lane.b32.xlu0 %v3542, 126
        %v3547 = vpop.permute.xlu0 %3546
        %v3550 = vadd.f32 %v3482, %v3545
        %v3551 = vadd.f32 %v3483, %v3547
        %s3552 = sld [smem:[#allocation2 + $0x101]]
        %v3553 = vstv %s3552
        %v3554 = vmul.f32 %v3553, %v3242
        %v3555 = vmul.f32 %v3553, %v3243
        %v3558 = vrot.slane %v3554, 1
        %v3559 = vrot.slane %v3555, 1
        %v3560 = vsel %vm1333, %v3558, %v3559
        %3561 = vrot.lane.b32.xlu0 %v3560, 126
        %v3562 = vpop.permute.xlu0 %3561
        %3563 = vrot.lane.b32.xlu0 %v3559, 126
        %v3564 = vpop.permute.xlu0 %3563
        %v3567 = vadd.f32 %v3499, %v3562
        %v3568 = vadd.f32 %v3500, %v3564
        %s3569 = sld [smem:[#allocation2 + $0x125]]
        %v3570 = vstv %s3569
        %v3571 = vmul.f32 %v3570, %v3242
        %v3572 = vmul.f32 %v3570, %v3243
        %v3575 = vrot.slane %v3571, 1
        %v3576 = vrot.slane %v3572, 1
        %v3577 = vsel %vm1333, %v3575, %v3576
        %3578 = vrot.lane.b32.xlu0 %v3577, 126
        %v3579 = vpop.permute.xlu0 %3578
        %3580 = vrot.lane.b32.xlu0 %v3576, 126
        %v3581 = vpop.permute.xlu0 %3580
        %v3584 = vadd.f32 %v3516, %v3579
        %v3585 = vadd.f32 %v3517, %v3581
        %s3586 = sld [smem:[#allocation2 + $0xba]]
        %v3587 = vstv %s3586
        %v3588 = vmul.f32 %v3587, %v3242
        %v3589 = vmul.f32 %v3587, %v3243
        %v3592 = vrot.slane %v3588, 2
        %v3593 = vrot.slane %v3589, 2
        %v3594 = vsel %vm1522, %v3592, %v3593
        %v3597 = vadd.f32 %v3533, %v3594
        %v3598 = vadd.f32 %v3534, %v3593
        %s3599 = sld [smem:[#allocation2 + $0xde]]
        %v3600 = vstv %s3599
        %v3601 = vmul.f32 %v3600, %v3242
        %v3602 = vmul.f32 %v3600, %v3243
        %v3605 = vrot.slane %v3601, 2
        %v3606 = vrot.slane %v3602, 2
        %v3607 = vsel %vm1522, %v3605, %v3606
        %v3610 = vadd.f32 %v3550, %v3607
        %v3611 = vadd.f32 %v3551, %v3606
        %s3612 = sld [smem:[#allocation2 + $0x102]]
        %v3613 = vstv %s3612
        %v3614 = vmul.f32 %v3613, %v3242
        %v3615 = vmul.f32 %v3613, %v3243
        %v3618 = vrot.slane %v3614, 2
        %v3619 = vrot.slane %v3615, 2
        %v3620 = vsel %vm1522, %v3618, %v3619
        %v3623 = vadd.f32 %v3567, %v3620
        %v3624 = vadd.f32 %v3568, %v3619
        %s3625 = sld [smem:[#allocation2 + $0x126]]
        %v3626 = vstv %s3625
        %v3627 = vmul.f32 %v3626, %v3242
        %v3628 = vmul.f32 %v3626, %v3243
        %v3631 = vrot.slane %v3627, 2
        %v3632 = vrot.slane %v3628, 2
        %v3633 = vsel %vm1522, %v3631, %v3632
        %v3636 = vadd.f32 %v3584, %v3633
        %v3637 = vadd.f32 %v3585, %v3632
        %s3638 = sld [smem:[#allocation2 + $0xbb]]
        %v3639 = vstv %s3638
        %v3640 = vmul.f32 %v3639, %v3242
        %v3641 = vmul.f32 %v3639, %v3243
        %v3644 = vrot.slane %v3640, 2
        %v3645 = vrot.slane %v3641, 2
        %v3646 = vsel %vm1522, %v3644, %v3645
        %3647 = vrot.lane.b32.xlu0 %v3646, 127
        %v3648 = vpop.permute.xlu0 %3647
        %3649 = vrot.lane.b32.xlu0 %v3645, 127
        %v3650 = vpop.permute.xlu0 %3649
        %v3653 = vadd.f32 %v3597, %v3648
        %v3654 = vadd.f32 %v3598, %v3650
        %s3655 = sld [smem:[#allocation2 + $0xdf]]
        %v3656 = vstv %s3655
        %v3657 = vmul.f32 %v3656, %v3242
        %v3658 = vmul.f32 %v3656, %v3243
        %v3661 = vrot.slane %v3657, 2
        %v3662 = vrot.slane %v3658, 2
        %v3663 = vsel %vm1522, %v3661, %v3662
        %3664 = vrot.lane.b32.xlu0 %v3663, 127
        %v3665 = vpop.permute.xlu0 %3664
        %3666 = vrot.lane.b32.xlu0 %v3662, 127
        %v3667 = vpop.permute.xlu0 %3666
        %v3670 = vadd.f32 %v3610, %v3665
        %v3671 = vadd.f32 %v3611, %v3667
        %s3672 = sld [smem:[#allocation2 + $0x103]]
        %v3673 = vstv %s3672
        %v3674 = vmul.f32 %v3673, %v3242
        %v3675 = vmul.f32 %v3673, %v3243
        %v3678 = vrot.slane %v3674, 2
        %v3679 = vrot.slane %v3675, 2
        %v3680 = vsel %vm1522, %v3678, %v3679
        %3681 = vrot.lane.b32.xlu0 %v3680, 127
        %v3682 = vpop.permute.xlu0 %3681
        %3683 = vrot.lane.b32.xlu0 %v3679, 127
        %v3684 = vpop.permute.xlu0 %3683
        %v3687 = vadd.f32 %v3623, %v3682
        %v3688 = vadd.f32 %v3624, %v3684
        %s3689 = sld [smem:[#allocation2 + $0x127]]
        %v3690 = vstv %s3689
        %v3691 = vmul.f32 %v3690, %v3242
        %v3692 = vmul.f32 %v3690, %v3243
        %v3695 = vrot.slane %v3691, 2
        %v3696 = vrot.slane %v3692, 2
        %v3697 = vsel %vm1522, %v3695, %v3696
        %3698 = vrot.lane.b32.xlu0 %v3697, 127
        %v3699 = vpop.permute.xlu0 %3698
        %3700 = vrot.lane.b32.xlu0 %v3696, 127
        %v3701 = vpop.permute.xlu0 %3700
        %v3704 = vadd.f32 %v3636, %v3699
        %v3705 = vadd.f32 %v3637, %v3701
        %s3706 = sld [smem:[#allocation2 + $0xbc]]
        %v3707 = vstv %s3706
        %v3708 = vmul.f32 %v3707, %v3242
        %v3709 = vmul.f32 %v3707, %v3243
        %v3712 = vrot.slane %v3708, 2
        %v3713 = vrot.slane %v3709, 2
        %v3714 = vsel %vm1522, %v3712, %v3713
        %3715 = vrot.lane.b32.xlu0 %v3714, 126
        %v3716 = vpop.permute.xlu0 %3715
        %3717 = vrot.lane.b32.xlu0 %v3713, 126
        %v3718 = vpop.permute.xlu0 %3717
        %v3721 = vadd.f32 %v3653, %v3716
        %v3722 = vadd.f32 %v3654, %v3718
        %s3723 = sld [smem:[#allocation2 + $0xe0]]
        %v3724 = vstv %s3723
        %v3725 = vmul.f32 %v3724, %v3242
        %v3726 = vmul.f32 %v3724, %v3243
        %v3729 = vrot.slane %v3725, 2
        %v3730 = vrot.slane %v3726, 2
        %v3731 = vsel %vm1522, %v3729, %v3730
        %3732 = vrot.lane.b32.xlu0 %v3731, 126
        %v3733 = vpop.permute.xlu0 %3732
        %3734 = vrot.lane.b32.xlu0 %v3730, 126
        %v3735 = vpop.permute.xlu0 %3734
        %v3738 = vadd.f32 %v3670, %v3733
        %v3739 = vadd.f32 %v3671, %v3735
        %s3740 = sld [smem:[#allocation2 + $0x104]]
        %v3741 = vstv %s3740
        %v3742 = vmul.f32 %v3741, %v3242
        %v3743 = vmul.f32 %v3741, %v3243
        %v3746 = vrot.slane %v3742, 2
        %v3747 = vrot.slane %v3743, 2
        %v3748 = vsel %vm1522, %v3746, %v3747
        %3749 = vrot.lane.b32.xlu0 %v3748, 126
        %v3750 = vpop.permute.xlu0 %3749
        %3751 = vrot.lane.b32.xlu0 %v3747, 126
        %v3752 = vpop.permute.xlu0 %3751
        %v3755 = vadd.f32 %v3687, %v3750
        %v3756 = vadd.f32 %v3688, %v3752
        %s3757 = sld [smem:[#allocation2 + $0x128]]
        %v3758 = vstv %s3757
        %v3759 = vmul.f32 %v3758, %v3242
        %v3760 = vmul.f32 %v3758, %v3243
        %v3763 = vrot.slane %v3759, 2
        %v3764 = vrot.slane %v3760, 2
        %v3765 = vsel %vm1522, %v3763, %v3764
        %3766 = vrot.lane.b32.xlu0 %v3765, 126
        %v3767 = vpop.permute.xlu0 %3766
        %3768 = vrot.lane.b32.xlu0 %v3764, 126
        %v3769 = vpop.permute.xlu0 %3768
        %v3772 = vadd.f32 %v3704, %v3767
        %v3773 = vadd.f32 %v3705, %v3769
        %s3774 = sld [smem:[#allocation2 + $0xbd]]
        %v3775 = vstv %s3774
        %v3776 = vmul.f32 %v3775, %v3248
        %v3777 = vmul.f32 %v3775, %v3249
        %v3778 = vadd.f32 %v3721, %v3776
        %v3779 = vadd.f32 %v3722, %v3777
        %s3780 = sld [smem:[#allocation2 + $0xe1]]
        %v3781 = vstv %s3780
        %v3782 = vmul.f32 %v3781, %v3248
        %v3783 = vmul.f32 %v3781, %v3249
        %v3784 = vadd.f32 %v3738, %v3782
        %v3785 = vadd.f32 %v3739, %v3783
        %s3786 = sld [smem:[#allocation2 + $0x105]]
        %v3787 = vstv %s3786
        %v3788 = vmul.f32 %v3787, %v3248
        %v3789 = vmul.f32 %v3787, %v3249
        %v3790 = vadd.f32 %v3755, %v3788
        %v3791 = vadd.f32 %v3756, %v3789
        %s3792 = sld [smem:[#allocation2 + $0x129]]
        %v3793 = vstv %s3792
        %v3794 = vmul.f32 %v3793, %v3248
        %v3795 = vmul.f32 %v3793, %v3249
        %v3796 = vadd.f32 %v3772, %v3794
        %v3797 = vadd.f32 %v3773, %v3795
        %s3798 = sld [smem:[#allocation2 + $0xbe]]
        %v3799 = vstv %s3798
        %v3800 = vmul.f32 %v3799, %v3248
        %v3801 = vmul.f32 %v3799, %v3249
        %3804 = vrot.lane.b32.xlu0 %v3800, 127
        %v3805 = vpop.permute.xlu0 %3804
        %3806 = vrot.lane.b32.xlu0 %v3801, 127
        %v3807 = vpop.permute.xlu0 %3806
        %v3810 = vadd.f32 %v3778, %v3805
        %v3811 = vadd.f32 %v3779, %v3807
        %s3812 = sld [smem:[#allocation2 + $0xe2]]
        %v3813 = vstv %s3812
        %v3814 = vmul.f32 %v3813, %v3248
        %v3815 = vmul.f32 %v3813, %v3249
        %3818 = vrot.lane.b32.xlu0 %v3814, 127
        %v3819 = vpop.permute.xlu0 %3818
        %3820 = vrot.lane.b32.xlu0 %v3815, 127
        %v3821 = vpop.permute.xlu0 %3820
        %v3824 = vadd.f32 %v3784, %v3819
        %v3825 = vadd.f32 %v3785, %v3821
        %s3826 = sld [smem:[#allocation2 + $0x106]]
        %v3827 = vstv %s3826
        %v3828 = vmul.f32 %v3827, %v3248
        %v3829 = vmul.f32 %v3827, %v3249
        %3832 = vrot.lane.b32.xlu0 %v3828, 127
        %v3833 = vpop.permute.xlu0 %3832
        %3834 = vrot.lane.b32.xlu0 %v3829, 127
        %v3835 = vpop.permute.xlu0 %3834
        %v3838 = vadd.f32 %v3790, %v3833
        %v3839 = vadd.f32 %v3791, %v3835
        %s3840 = sld [smem:[#allocation2 + $0x12a]]
        %v3841 = vstv %s3840
        %v3842 = vmul.f32 %v3841, %v3248
        %v3843 = vmul.f32 %v3841, %v3249
        %3846 = vrot.lane.b32.xlu0 %v3842, 127
        %v3847 = vpop.permute.xlu0 %3846
        %3848 = vrot.lane.b32.xlu0 %v3843, 127
        %v3849 = vpop.permute.xlu0 %3848
        %v3852 = vadd.f32 %v3796, %v3847
        %v3853 = vadd.f32 %v3797, %v3849
        %s3854 = sld [smem:[#allocation2 + $0xbf]]
        %v3855 = vstv %s3854
        %v3856 = vmul.f32 %v3855, %v3248
        %v3857 = vmul.f32 %v3855, %v3249
        %3860 = vrot.lane.b32.xlu0 %v3856, 126
        %v3861 = vpop.permute.xlu0 %3860
        %3862 = vrot.lane.b32.xlu0 %v3857, 126
        %v3863 = vpop.permute.xlu0 %3862
        %v3866 = vadd.f32 %v3810, %v3861
        %v3867 = vadd.f32 %v3811, %v3863
        %s3868 = sld [smem:[#allocation2 + $0xe3]]
        %v3869 = vstv %s3868
        %v3870 = vmul.f32 %v3869, %v3248
        %v3871 = vmul.f32 %v3869, %v3249
        %3874 = vrot.lane.b32.xlu0 %v3870, 126
        %v3875 = vpop.permute.xlu0 %3874
        %3876 = vrot.lane.b32.xlu0 %v3871, 126
        %v3877 = vpop.permute.xlu0 %3876
        %v3880 = vadd.f32 %v3824, %v3875
        %v3881 = vadd.f32 %v3825, %v3877
        %s3882 = sld [smem:[#allocation2 + $0x107]]
        %v3883 = vstv %s3882
        %v3884 = vmul.f32 %v3883, %v3248
        %v3885 = vmul.f32 %v3883, %v3249
        %3888 = vrot.lane.b32.xlu0 %v3884, 126
        %v3889 = vpop.permute.xlu0 %3888
        %3890 = vrot.lane.b32.xlu0 %v3885, 126
        %v3891 = vpop.permute.xlu0 %3890
        %v3894 = vadd.f32 %v3838, %v3889
        %v3895 = vadd.f32 %v3839, %v3891
        %s3896 = sld [smem:[#allocation2 + $0x12b]]
        %v3897 = vstv %s3896
        %v3898 = vmul.f32 %v3897, %v3248
        %v3899 = vmul.f32 %v3897, %v3249
        %3902 = vrot.lane.b32.xlu0 %v3898, 126
        %v3903 = vpop.permute.xlu0 %3902
        %3904 = vrot.lane.b32.xlu0 %v3899, 126
        %v3905 = vpop.permute.xlu0 %3904
        %v3908 = vadd.f32 %v3852, %v3903
        %v3909 = vadd.f32 %v3853, %v3905
        %s3910 = sld [smem:[#allocation2 + $0xc0]]
        %v3911 = vstv %s3910
        %v3912 = vmul.f32 %v3911, %v3248
        %v3913 = vmul.f32 %v3911, %v3249
        %v3916 = vrot.slane %v3912, 1
        %v3917 = vrot.slane %v3913, 1
        %v3918 = vsel %vm1333, %v3916, %v3917
        %v3921 = vadd.f32 %v3866, %v3918
        %v3922 = vadd.f32 %v3867, %v3917
        %s3923 = sld [smem:[#allocation2 + $0xe4]]
        %v3924 = vstv %s3923
        %v3925 = vmul.f32 %v3924, %v3248
        %v3926 = vmul.f32 %v3924, %v3249
        %v3929 = vrot.slane %v3925, 1
        %v3930 = vrot.slane %v3926, 1
        %v3931 = vsel %vm1333, %v3929, %v3930
        %v3934 = vadd.f32 %v3880, %v3931
        %v3935 = vadd.f32 %v3881, %v3930
        %s3936 = sld [smem:[#allocation2 + $0x108]]
        %v3937 = vstv %s3936
        %v3938 = vmul.f32 %v3937, %v3248
        %v3939 = vmul.f32 %v3937, %v3249
        %v3942 = vrot.slane %v3938, 1
        %v3943 = vrot.slane %v3939, 1
        %v3944 = vsel %vm1333, %v3942, %v3943
        %v3947 = vadd.f32 %v3894, %v3944
        %v3948 = vadd.f32 %v3895, %v3943
        %s3949 = sld [smem:[#allocation2 + $0x12c]]
        %v3950 = vstv %s3949
        %v3951 = vmul.f32 %v3950, %v3248
        %v3952 = vmul.f32 %v3950, %v3249
        %v3955 = vrot.slane %v3951, 1
        %v3956 = vrot.slane %v3952, 1
        %v3957 = vsel %vm1333, %v3955, %v3956
        %v3960 = vadd.f32 %v3908, %v3957
        %v3961 = vadd.f32 %v3909, %v3956
        %s3962 = sld [smem:[#allocation2 + $0xc1]]
        %v3963 = vstv %s3962
        %v3964 = vmul.f32 %v3963, %v3248
        %v3965 = vmul.f32 %v3963, %v3249
        %v3968 = vrot.slane %v3964, 1
        %v3969 = vrot.slane %v3965, 1
        %v3970 = vsel %vm1333, %v3968, %v3969
        %3971 = vrot.lane.b32.xlu0 %v3970, 127
        %v3972 = vpop.permute.xlu0 %3971
        %3973 = vrot.lane.b32.xlu0 %v3969, 127
        %v3974 = vpop.permute.xlu0 %3973
        %v3977 = vadd.f32 %v3921, %v3972
        %v3978 = vadd.f32 %v3922, %v3974
        %s3979 = sld [smem:[#allocation2 + $0xe5]]
        %v3980 = vstv %s3979
        %v3981 = vmul.f32 %v3980, %v3248
        %v3982 = vmul.f32 %v3980, %v3249
        %v3985 = vrot.slane %v3981, 1
        %v3986 = vrot.slane %v3982, 1
        %v3987 = vsel %vm1333, %v3985, %v3986
        %3988 = vrot.lane.b32.xlu0 %v3987, 127
        %v3989 = vpop.permute.xlu0 %3988
        %3990 = vrot.lane.b32.xlu0 %v3986, 127
        %v3991 = vpop.permute.xlu0 %3990
        %v3994 = vadd.f32 %v3934, %v3989
        %v3995 = vadd.f32 %v3935, %v3991
        %s3996 = sld [smem:[#allocation2 + $0x109]]
        %v3997 = vstv %s3996
        %v3998 = vmul.f32 %v3997, %v3248
        %v3999 = vmul.f32 %v3997, %v3249
        %v4002 = vrot.slane %v3998, 1
        %v4003 = vrot.slane %v3999, 1
        %v4004 = vsel %vm1333, %v4002, %v4003
        %4005 = vrot.lane.b32.xlu0 %v4004, 127
        %v4006 = vpop.permute.xlu0 %4005
        %4007 = vrot.lane.b32.xlu0 %v4003, 127
        %v4008 = vpop.permute.xlu0 %4007
        %v4011 = vadd.f32 %v3947, %v4006
        %v4012 = vadd.f32 %v3948, %v4008
        %s4013 = sld [smem:[#allocation2 + $0x12d]]
        %v4014 = vstv %s4013
        %v4015 = vmul.f32 %v4014, %v3248
        %v4016 = vmul.f32 %v4014, %v3249
        %v4019 = vrot.slane %v4015, 1
        %v4020 = vrot.slane %v4016, 1
        %v4021 = vsel %vm1333, %v4019, %v4020
        %4022 = vrot.lane.b32.xlu0 %v4021, 127
        %v4023 = vpop.permute.xlu0 %4022
        %4024 = vrot.lane.b32.xlu0 %v4020, 127
        %v4025 = vpop.permute.xlu0 %4024
        %v4028 = vadd.f32 %v3960, %v4023
        %v4029 = vadd.f32 %v3961, %v4025
        %s4030 = sld [smem:[#allocation2 + $0xc2]]
        %v4031 = vstv %s4030
        %v4032 = vmul.f32 %v4031, %v3248
        %v4033 = vmul.f32 %v4031, %v3249
        %v4036 = vrot.slane %v4032, 1
        %v4037 = vrot.slane %v4033, 1
        %v4038 = vsel %vm1333, %v4036, %v4037
        %4039 = vrot.lane.b32.xlu0 %v4038, 126
        %v4040 = vpop.permute.xlu0 %4039
        %4041 = vrot.lane.b32.xlu0 %v4037, 126
        %v4042 = vpop.permute.xlu0 %4041
        %v4045 = vadd.f32 %v3977, %v4040
        %v4046 = vadd.f32 %v3978, %v4042
        %s4047 = sld [smem:[#allocation2 + $0xe6]]
        %v4048 = vstv %s4047
        %v4049 = vmul.f32 %v4048, %v3248
        %v4050 = vmul.f32 %v4048, %v3249
        %v4053 = vrot.slane %v4049, 1
        %v4054 = vrot.slane %v4050, 1
        %v4055 = vsel %vm1333, %v4053, %v4054
        %4056 = vrot.lane.b32.xlu0 %v4055, 126
        %v4057 = vpop.permute.xlu0 %4056
        %4058 = vrot.lane.b32.xlu0 %v4054, 126
        %v4059 = vpop.permute.xlu0 %4058
        %v4062 = vadd.f32 %v3994, %v4057
        %v4063 = vadd.f32 %v3995, %v4059
        %s4064 = sld [smem:[#allocation2 + $0x10a]]
        %v4065 = vstv %s4064
        %v4066 = vmul.f32 %v4065, %v3248
        %v4067 = vmul.f32 %v4065, %v3249
        %v4070 = vrot.slane %v4066, 1
        %v4071 = vrot.slane %v4067, 1
        %v4072 = vsel %vm1333, %v4070, %v4071
        %4073 = vrot.lane.b32.xlu0 %v4072, 126
        %v4074 = vpop.permute.xlu0 %4073
        %4075 = vrot.lane.b32.xlu0 %v4071, 126
        %v4076 = vpop.permute.xlu0 %4075
        %v4079 = vadd.f32 %v4011, %v4074
        %v4080 = vadd.f32 %v4012, %v4076
        %s4081 = sld [smem:[#allocation2 + $0x12e]]
        %v4082 = vstv %s4081
        %v4083 = vmul.f32 %v4082, %v3248
        %v4084 = vmul.f32 %v4082, %v3249
        %v4087 = vrot.slane %v4083, 1
        %v4088 = vrot.slane %v4084, 1
        %v4089 = vsel %vm1333, %v4087, %v4088
        %4090 = vrot.lane.b32.xlu0 %v4089, 126
        %v4091 = vpop.permute.xlu0 %4090
        %4092 = vrot.lane.b32.xlu0 %v4088, 126
        %v4093 = vpop.permute.xlu0 %4092
        %v4096 = vadd.f32 %v4028, %v4091
        %v4097 = vadd.f32 %v4029, %v4093
        %s4098 = sld [smem:[#allocation2 + $0xc3]]
        %v4099 = vstv %s4098
        %v4100 = vmul.f32 %v4099, %v3248
        %v4101 = vmul.f32 %v4099, %v3249
        %v4104 = vrot.slane %v4100, 2
        %v4105 = vrot.slane %v4101, 2
        %v4106 = vsel %vm1522, %v4104, %v4105
        %v4109 = vadd.f32 %v4045, %v4106
        %v4110 = vadd.f32 %v4046, %v4105
        %s4111 = sld [smem:[#allocation2 + $0xe7]]
        %v4112 = vstv %s4111
        %v4113 = vmul.f32 %v4112, %v3248
        %v4114 = vmul.f32 %v4112, %v3249
        %v4117 = vrot.slane %v4113, 2
        %v4118 = vrot.slane %v4114, 2
        %v4119 = vsel %vm1522, %v4117, %v4118
        %v4122 = vadd.f32 %v4062, %v4119
        %v4123 = vadd.f32 %v4063, %v4118
        %s4124 = sld [smem:[#allocation2 + $0x10b]]
        %v4125 = vstv %s4124
        %v4126 = vmul.f32 %v4125, %v3248
        %v4127 = vmul.f32 %v4125, %v3249
        %v4130 = vrot.slane %v4126, 2
        %v4131 = vrot.slane %v4127, 2
        %v4132 = vsel %vm1522, %v4130, %v4131
        %v4135 = vadd.f32 %v4079, %v4132
        %v4136 = vadd.f32 %v4080, %v4131
        %s4137 = sld [smem:[#allocation2 + $0x12f]]
        %v4138 = vstv %s4137
        %v4139 = vmul.f32 %v4138, %v3248
        %v4140 = vmul.f32 %v4138, %v3249
        %v4143 = vrot.slane %v4139, 2
        %v4144 = vrot.slane %v4140, 2
        %v4145 = vsel %vm1522, %v4143, %v4144
        %v4148 = vadd.f32 %v4096, %v4145
        %v4149 = vadd.f32 %v4097, %v4144
        %s4150 = sld [smem:[#allocation2 + $0xc4]]
        %v4151 = vstv %s4150
        %v4152 = vmul.f32 %v4151, %v3248
        %v4153 = vmul.f32 %v4151, %v3249
        %v4156 = vrot.slane %v4152, 2
        %v4157 = vrot.slane %v4153, 2
        %v4158 = vsel %vm1522, %v4156, %v4157
        %4159 = vrot.lane.b32.xlu0 %v4158, 127
        %v4160 = vpop.permute.xlu0 %4159
        %4161 = vrot.lane.b32.xlu0 %v4157, 127
        %v4162 = vpop.permute.xlu0 %4161
        %v4165 = vadd.f32 %v4109, %v4160
        %v4166 = vadd.f32 %v4110, %v4162
        %s4167 = sld [smem:[#allocation2 + $0xe8]]
        %v4168 = vstv %s4167
        %v4169 = vmul.f32 %v4168, %v3248
        %v4170 = vmul.f32 %v4168, %v3249
        %v4173 = vrot.slane %v4169, 2
        %v4174 = vrot.slane %v4170, 2
        %v4175 = vsel %vm1522, %v4173, %v4174
        %4176 = vrot.lane.b32.xlu0 %v4175, 127
        %v4177 = vpop.permute.xlu0 %4176
        %4178 = vrot.lane.b32.xlu0 %v4174, 127
        %v4179 = vpop.permute.xlu0 %4178
        %v4182 = vadd.f32 %v4122, %v4177
        %v4183 = vadd.f32 %v4123, %v4179
        %s4184 = sld [smem:[#allocation2 + $0x10c]]
        %v4185 = vstv %s4184
        %v4186 = vmul.f32 %v4185, %v3248
        %v4187 = vmul.f32 %v4185, %v3249
        %v4190 = vrot.slane %v4186, 2
        %v4191 = vrot.slane %v4187, 2
        %v4192 = vsel %vm1522, %v4190, %v4191
        %4193 = vrot.lane.b32.xlu0 %v4192, 127
        %v4194 = vpop.permute.xlu0 %4193
        %4195 = vrot.lane.b32.xlu0 %v4191, 127
        %v4196 = vpop.permute.xlu0 %4195
        %v4199 = vadd.f32 %v4135, %v4194
        %v4200 = vadd.f32 %v4136, %v4196
        %s4201 = sld [smem:[#allocation2 + $0x130]]
        %v4202 = vstv %s4201
        %v4203 = vmul.f32 %v4202, %v3248
        %v4204 = vmul.f32 %v4202, %v3249
        %v4207 = vrot.slane %v4203, 2
        %v4208 = vrot.slane %v4204, 2
        %v4209 = vsel %vm1522, %v4207, %v4208
        %4210 = vrot.lane.b32.xlu0 %v4209, 127
        %v4211 = vpop.permute.xlu0 %4210
        %4212 = vrot.lane.b32.xlu0 %v4208, 127
        %v4213 = vpop.permute.xlu0 %4212
        %v4216 = vadd.f32 %v4148, %v4211
        %v4217 = vadd.f32 %v4149, %v4213
        %s4218 = sld [smem:[#allocation2 + $0xc5]]
        %v4219 = vstv %s4218
        %v4220 = vmul.f32 %v4219, %v3248
        %v4221 = vmul.f32 %v4219, %v3249
        %v4224 = vrot.slane %v4220, 2
        %v4225 = vrot.slane %v4221, 2
        %v4226 = vsel %vm1522, %v4224, %v4225
        %4227 = vrot.lane.b32.xlu0 %v4226, 126
        %v4228 = vpop.permute.xlu0 %4227
        %4229 = vrot.lane.b32.xlu0 %v4225, 126
        %v4230 = vpop.permute.xlu0 %4229
        %v4233 = vadd.f32 %v4165, %v4228
        %v4234 = vadd.f32 %v4166, %v4230
        %s4235 = sld [smem:[#allocation2 + $0xe9]]
        %v4236 = vstv %s4235
        %v4237 = vmul.f32 %v4236, %v3248
        %v4238 = vmul.f32 %v4236, %v3249
        %v4241 = vrot.slane %v4237, 2
        %v4242 = vrot.slane %v4238, 2
        %v4243 = vsel %vm1522, %v4241, %v4242
        %4244 = vrot.lane.b32.xlu0 %v4243, 126
        %v4245 = vpop.permute.xlu0 %4244
        %4246 = vrot.lane.b32.xlu0 %v4242, 126
        %v4247 = vpop.permute.xlu0 %4246
        %v4250 = vadd.f32 %v4182, %v4245
        %v4251 = vadd.f32 %v4183, %v4247
        %s4252 = sld [smem:[#allocation2 + $0x10d]]
        %v4253 = vstv %s4252
        %v4254 = vmul.f32 %v4253, %v3248
        %v4255 = vmul.f32 %v4253, %v3249
        %v4258 = vrot.slane %v4254, 2
        %v4259 = vrot.slane %v4255, 2
        %v4260 = vsel %vm1522, %v4258, %v4259
        %4261 = vrot.lane.b32.xlu0 %v4260, 126
        %v4262 = vpop.permute.xlu0 %4261
        %4263 = vrot.lane.b32.xlu0 %v4259, 126
        %v4264 = vpop.permute.xlu0 %4263
        %v4267 = vadd.f32 %v4199, %v4262
        %v4268 = vadd.f32 %v4200, %v4264
        %s4269 = sld [smem:[#allocation2 + $0x131]]
        %v4270 = vstv %s4269
        %v4271 = vmul.f32 %v4270, %v3248
        %v4272 = vmul.f32 %v4270, %v3249
        %v4275 = vrot.slane %v4271, 2
        %v4276 = vrot.slane %v4272, 2
        %v4277 = vsel %vm1522, %v4275, %v4276
        %4278 = vrot.lane.b32.xlu0 %v4277, 126
        %v4279 = vpop.permute.xlu0 %4278
        %4280 = vrot.lane.b32.xlu0 %v4276, 126
        %v4281 = vpop.permute.xlu0 %4280
        %v4284 = vadd.f32 %v4216, %v4279
        %v4285 = vadd.f32 %v4217, %v4281
        %s4286 = sld [smem:[#allocation2 + $0xc6]]
        %v4287 = vstv %s4286
        %v4288 = vmul.f32 %v4287, %v3254
        %v4289 = vmul.f32 %v4287, %v3255
        %v4290 = vadd.f32 %v4233, %v4288
        %v4291 = vadd.f32 %v4234, %v4289
        %s4292 = sld [smem:[#allocation2 + $0xea]]
        %v4293 = vstv %s4292
        %v4294 = vmul.f32 %v4293, %v3254
        %v4295 = vmul.f32 %v4293, %v3255
        %v4296 = vadd.f32 %v4250, %v4294
        %v4297 = vadd.f32 %v4251, %v4295
        %s4298 = sld [smem:[#allocation2 + $0x10e]]
        %v4299 = vstv %s4298
        %v4300 = vmul.f32 %v4299, %v3254
        %v4301 = vmul.f32 %v4299, %v3255
        %v4302 = vadd.f32 %v4267, %v4300
        %v4303 = vadd.f32 %v4268, %v4301
        %s4304 = sld [smem:[#allocation2 + $0x132]]
        %v4305 = vstv %s4304
        %v4306 = vmul.f32 %v4305, %v3254
        %v4307 = vmul.f32 %v4305, %v3255
        %v4308 = vadd.f32 %v4284, %v4306
        %v4309 = vadd.f32 %v4285, %v4307
        %s4310 = sld [smem:[#allocation2 + $0xc7]]
        %v4311 = vstv %s4310
        %v4312 = vmul.f32 %v4311, %v3254
        %v4313 = vmul.f32 %v4311, %v3255
        %4316 = vrot.lane.b32.xlu0 %v4312, 127
        %v4317 = vpop.permute.xlu0 %4316
        %4318 = vrot.lane.b32.xlu0 %v4313, 127
        %v4319 = vpop.permute.xlu0 %4318
        %v4322 = vadd.f32 %v4290, %v4317
        %v4323 = vadd.f32 %v4291, %v4319
        %s4324 = sld [smem:[#allocation2 + $0xeb]]
        %v4325 = vstv %s4324
        %v4326 = vmul.f32 %v4325, %v3254
        %v4327 = vmul.f32 %v4325, %v3255
        %4330 = vrot.lane.b32.xlu0 %v4326, 127
        %v4331 = vpop.permute.xlu0 %4330
        %4332 = vrot.lane.b32.xlu0 %v4327, 127
        %v4333 = vpop.permute.xlu0 %4332
        %v4336 = vadd.f32 %v4296, %v4331
        %v4337 = vadd.f32 %v4297, %v4333
        %s4338 = sld [smem:[#allocation2 + $0x10f]]
        %v4339 = vstv %s4338
        %v4340 = vmul.f32 %v4339, %v3254
        %v4341 = vmul.f32 %v4339, %v3255
        %4344 = vrot.lane.b32.xlu0 %v4340, 127
        %v4345 = vpop.permute.xlu0 %4344
        %4346 = vrot.lane.b32.xlu0 %v4341, 127
        %v4347 = vpop.permute.xlu0 %4346
        %v4350 = vadd.f32 %v4302, %v4345
        %v4351 = vadd.f32 %v4303, %v4347
        %s4352 = sld [smem:[#allocation2 + $0x133]]
        %v4353 = vstv %s4352
        %v4354 = vmul.f32 %v4353, %v3254
        %v4355 = vmul.f32 %v4353, %v3255
        %4358 = vrot.lane.b32.xlu0 %v4354, 127
        %v4359 = vpop.permute.xlu0 %4358
        %4360 = vrot.lane.b32.xlu0 %v4355, 127
        %v4361 = vpop.permute.xlu0 %4360
        %v4364 = vadd.f32 %v4308, %v4359
        %v4365 = vadd.f32 %v4309, %v4361
        %s4366 = sld [smem:[#allocation2 + $0xc8]]
        %v4367 = vstv %s4366
        %v4368 = vmul.f32 %v4367, %v3254
        %v4369 = vmul.f32 %v4367, %v3255
        %4372 = vrot.lane.b32.xlu0 %v4368, 126
        %v4373 = vpop.permute.xlu0 %4372
        %4374 = vrot.lane.b32.xlu0 %v4369, 126
        %v4375 = vpop.permute.xlu0 %4374
        %v4378 = vadd.f32 %v4322, %v4373
        %v4379 = vadd.f32 %v4323, %v4375
        %s4380 = sld [smem:[#allocation2 + $0xec]]
        %v4381 = vstv %s4380
        %v4382 = vmul.f32 %v4381, %v3254
        %v4383 = vmul.f32 %v4381, %v3255
        %4386 = vrot.lane.b32.xlu0 %v4382, 126
        %v4387 = vpop.permute.xlu0 %4386
        %4388 = vrot.lane.b32.xlu0 %v4383, 126
        %v4389 = vpop.permute.xlu0 %4388
        %v4392 = vadd.f32 %v4336, %v4387
        %v4393 = vadd.f32 %v4337, %v4389
        %s4394 = sld [smem:[#allocation2 + $0x110]]
        %v4395 = vstv %s4394
        %v4396 = vmul.f32 %v4395, %v3254
        %v4397 = vmul.f32 %v4395, %v3255
        %4400 = vrot.lane.b32.xlu0 %v4396, 126
        %v4401 = vpop.permute.xlu0 %4400
        %4402 = vrot.lane.b32.xlu0 %v4397, 126
        %v4403 = vpop.permute.xlu0 %4402
        %v4406 = vadd.f32 %v4350, %v4401
        %v4407 = vadd.f32 %v4351, %v4403
        %s4408 = sld [smem:[#allocation2 + $0x134]]
        %v4409 = vstv %s4408
        %v4410 = vmul.f32 %v4409, %v3254
        %v4411 = vmul.f32 %v4409, %v3255
        %4414 = vrot.lane.b32.xlu0 %v4410, 126
        %v4415 = vpop.permute.xlu0 %4414
        %4416 = vrot.lane.b32.xlu0 %v4411, 126
        %v4417 = vpop.permute.xlu0 %4416
        %v4420 = vadd.f32 %v4364, %v4415
        %v4421 = vadd.f32 %v4365, %v4417
        %s4422 = sld [smem:[#allocation2 + $0xc9]]
        %v4423 = vstv %s4422
        %v4424 = vmul.f32 %v4423, %v3254
        %v4425 = vmul.f32 %v4423, %v3255
        %v4428 = vrot.slane %v4424, 1
        %v4429 = vrot.slane %v4425, 1
        %v4430 = vsel %vm1333, %v4428, %v4429
        %v4433 = vadd.f32 %v4378, %v4430
        %v4434 = vadd.f32 %v4379, %v4429
        %s4435 = sld [smem:[#allocation2 + $0xed]]
        %v4436 = vstv %s4435
        %v4437 = vmul.f32 %v4436, %v3254
        %v4438 = vmul.f32 %v4436, %v3255
        %v4441 = vrot.slane %v4437, 1
        %v4442 = vrot.slane %v4438, 1
        %v4443 = vsel %vm1333, %v4441, %v4442
        %v4446 = vadd.f32 %v4392, %v4443
        %v4447 = vadd.f32 %v4393, %v4442
        %s4448 = sld [smem:[#allocation2 + $0x111]]
        %v4449 = vstv %s4448
        %v4450 = vmul.f32 %v4449, %v3254
        %v4451 = vmul.f32 %v4449, %v3255
        %v4454 = vrot.slane %v4450, 1
        %v4455 = vrot.slane %v4451, 1
        %v4456 = vsel %vm1333, %v4454, %v4455
        %v4459 = vadd.f32 %v4406, %v4456
        %v4460 = vadd.f32 %v4407, %v4455
        %s4461 = sld [smem:[#allocation2 + $0x135]]
        %v4462 = vstv %s4461
        %v4463 = vmul.f32 %v4462, %v3254
        %v4464 = vmul.f32 %v4462, %v3255
        %v4467 = vrot.slane %v4463, 1
        %v4468 = vrot.slane %v4464, 1
        %v4469 = vsel %vm1333, %v4467, %v4468
        %v4472 = vadd.f32 %v4420, %v4469
        %v4473 = vadd.f32 %v4421, %v4468
        %s4474 = sld [smem:[#allocation2 + $0xca]]
        %v4475 = vstv %s4474
        %v4476 = vmul.f32 %v4475, %v3254
        %v4477 = vmul.f32 %v4475, %v3255
        %v4480 = vrot.slane %v4476, 1
        %v4481 = vrot.slane %v4477, 1
        %v4482 = vsel %vm1333, %v4480, %v4481
        %4483 = vrot.lane.b32.xlu0 %v4482, 127
        %v4484 = vpop.permute.xlu0 %4483
        %4485 = vrot.lane.b32.xlu0 %v4481, 127
        %v4486 = vpop.permute.xlu0 %4485
        %v4489 = vadd.f32 %v4433, %v4484
        %v4490 = vadd.f32 %v4434, %v4486
        %s4491 = sld [smem:[#allocation2 + $0xee]]
        %v4492 = vstv %s4491
        %v4493 = vmul.f32 %v4492, %v3254
        %v4494 = vmul.f32 %v4492, %v3255
        %v4497 = vrot.slane %v4493, 1
        %v4498 = vrot.slane %v4494, 1
        %v4499 = vsel %vm1333, %v4497, %v4498
        %4500 = vrot.lane.b32.xlu0 %v4499, 127
        %v4501 = vpop.permute.xlu0 %4500
        %4502 = vrot.lane.b32.xlu0 %v4498, 127
        %v4503 = vpop.permute.xlu0 %4502
        %v4506 = vadd.f32 %v4446, %v4501
        %v4507 = vadd.f32 %v4447, %v4503
        %s4508 = sld [smem:[#allocation2 + $0x112]]
        %v4509 = vstv %s4508
        %v4510 = vmul.f32 %v4509, %v3254
        %v4511 = vmul.f32 %v4509, %v3255
        %v4514 = vrot.slane %v4510, 1
        %v4515 = vrot.slane %v4511, 1
        %v4516 = vsel %vm1333, %v4514, %v4515
        %4517 = vrot.lane.b32.xlu0 %v4516, 127
        %v4518 = vpop.permute.xlu0 %4517
        %4519 = vrot.lane.b32.xlu0 %v4515, 127
        %v4520 = vpop.permute.xlu0 %4519
        %v4523 = vadd.f32 %v4459, %v4518
        %v4524 = vadd.f32 %v4460, %v4520
        %s4525 = sld [smem:[#allocation2 + $0x136]]
        %v4526 = vstv %s4525
        %v4527 = vmul.f32 %v4526, %v3254
        %v4528 = vmul.f32 %v4526, %v3255
        %v4531 = vrot.slane %v4527, 1
        %v4532 = vrot.slane %v4528, 1
        %v4533 = vsel %vm1333, %v4531, %v4532
        %4534 = vrot.lane.b32.xlu0 %v4533, 127
        %v4535 = vpop.permute.xlu0 %4534
        %4536 = vrot.lane.b32.xlu0 %v4532, 127
        %v4537 = vpop.permute.xlu0 %4536
        %v4540 = vadd.f32 %v4472, %v4535
        %v4541 = vadd.f32 %v4473, %v4537
        %s4542 = sld [smem:[#allocation2 + $0xcb]]
        %v4543 = vstv %s4542
        %v4544 = vmul.f32 %v4543, %v3254
        %v4545 = vmul.f32 %v4543, %v3255
        %v4548 = vrot.slane %v4544, 1
        %v4549 = vrot.slane %v4545, 1
        %v4550 = vsel %vm1333, %v4548, %v4549
        %4551 = vrot.lane.b32.xlu0 %v4550, 126
        %v4552 = vpop.permute.xlu0 %4551
        %4553 = vrot.lane.b32.xlu0 %v4549, 126
        %v4554 = vpop.permute.xlu0 %4553
        %v4557 = vadd.f32 %v4489, %v4552
        %v4558 = vadd.f32 %v4490, %v4554
        %s4559 = sld [smem:[#allocation2 + $0xef]]
        %v4560 = vstv %s4559
        %v4561 = vmul.f32 %v4560, %v3254
        %v4562 = vmul.f32 %v4560, %v3255
        %v4565 = vrot.slane %v4561, 1
        %v4566 = vrot.slane %v4562, 1
        %v4567 = vsel %vm1333, %v4565, %v4566
        %4568 = vrot.lane.b32.xlu0 %v4567, 126
        %v4569 = vpop.permute.xlu0 %4568
        %4570 = vrot.lane.b32.xlu0 %v4566, 126
        %v4571 = vpop.permute.xlu0 %4570
        %v4574 = vadd.f32 %v4506, %v4569
        %v4575 = vadd.f32 %v4507, %v4571
        %s4576 = sld [smem:[#allocation2 + $0x113]]
        %v4577 = vstv %s4576
        %v4578 = vmul.f32 %v4577, %v3254
        %v4579 = vmul.f32 %v4577, %v3255
        %v4582 = vrot.slane %v4578, 1
        %v4583 = vrot.slane %v4579, 1
        %v4584 = vsel %vm1333, %v4582, %v4583
        %4585 = vrot.lane.b32.xlu0 %v4584, 126
        %v4586 = vpop.permute.xlu0 %4585
        %4587 = vrot.lane.b32.xlu0 %v4583, 126
        %v4588 = vpop.permute.xlu0 %4587
        %v4591 = vadd.f32 %v4523, %v4586
        %v4592 = vadd.f32 %v4524, %v4588
        %s4593 = sld [smem:[#allocation2 + $0x137]]
        %v4594 = vstv %s4593
        %v4595 = vmul.f32 %v4594, %v3254
        %v4596 = vmul.f32 %v4594, %v3255
        %v4599 = vrot.slane %v4595, 1
        %v4600 = vrot.slane %v4596, 1
        %v4601 = vsel %vm1333, %v4599, %v4600
        %4602 = vrot.lane.b32.xlu0 %v4601, 126
        %v4603 = vpop.permute.xlu0 %4602
        %4604 = vrot.lane.b32.xlu0 %v4600, 126
        %v4605 = vpop.permute.xlu0 %4604
        %v4608 = vadd.f32 %v4540, %v4603
        %v4609 = vadd.f32 %v4541, %v4605
        %s4610 = sld [smem:[#allocation2 + $0xcc]]
        %v4611 = vstv %s4610
        %v4612 = vmul.f32 %v4611, %v3254
        %v4613 = vmul.f32 %v4611, %v3255
        %v4616 = vrot.slane %v4612, 2
        %v4617 = vrot.slane %v4613, 2
        %v4618 = vsel %vm1522, %v4616, %v4617
        %v4621 = vadd.f32 %v4557, %v4618
        %v4622 = vadd.f32 %v4558, %v4617
        %s4623 = sld [smem:[#allocation2 + $0xf0]]
        %v4624 = vstv %s4623
        %v4625 = vmul.f32 %v4624, %v3254
        %v4626 = vmul.f32 %v4624, %v3255
        %v4629 = vrot.slane %v4625, 2
        %v4630 = vrot.slane %v4626, 2
        %v4631 = vsel %vm1522, %v4629, %v4630
        %v4634 = vadd.f32 %v4574, %v4631
        %v4635 = vadd.f32 %v4575, %v4630
        %s4636 = sld [smem:[#allocation2 + $0x114]]
        %v4637 = vstv %s4636
        %v4638 = vmul.f32 %v4637, %v3254
        %v4639 = vmul.f32 %v4637, %v3255
        %v4642 = vrot.slane %v4638, 2
        %v4643 = vrot.slane %v4639, 2
        %v4644 = vsel %vm1522, %v4642, %v4643
        %v4647 = vadd.f32 %v4591, %v4644
        %v4648 = vadd.f32 %v4592, %v4643
        %s4649 = sld [smem:[#allocation2 + $0x138]]
        %v4650 = vstv %s4649
        %v4651 = vmul.f32 %v4650, %v3254
        %v4652 = vmul.f32 %v4650, %v3255
        %v4655 = vrot.slane %v4651, 2
        %v4656 = vrot.slane %v4652, 2
        %v4657 = vsel %vm1522, %v4655, %v4656
        %v4660 = vadd.f32 %v4608, %v4657
        %v4661 = vadd.f32 %v4609, %v4656
        %s4662 = sld [smem:[#allocation2 + $0xcd]]
        %v4663 = vstv %s4662
        %v4664 = vmul.f32 %v4663, %v3254
        %v4665 = vmul.f32 %v4663, %v3255
        %v4668 = vrot.slane %v4664, 2
        %v4669 = vrot.slane %v4665, 2
        %v4670 = vsel %vm1522, %v4668, %v4669
        %4671 = vrot.lane.b32.xlu0 %v4670, 127
        %v4672 = vpop.permute.xlu0 %4671
        %4673 = vrot.lane.b32.xlu0 %v4669, 127
        %v4674 = vpop.permute.xlu0 %4673
        %v4677 = vadd.f32 %v4621, %v4672
        %v4678 = vadd.f32 %v4622, %v4674
        %s4679 = sld [smem:[#allocation2 + $0xf1]]
        %v4680 = vstv %s4679
        %v4681 = vmul.f32 %v4680, %v3254
        %v4682 = vmul.f32 %v4680, %v3255
        %v4685 = vrot.slane %v4681, 2
        %v4686 = vrot.slane %v4682, 2
        %v4687 = vsel %vm1522, %v4685, %v4686
        %4688 = vrot.lane.b32.xlu0 %v4687, 127
        %v4689 = vpop.permute.xlu0 %4688
        %4690 = vrot.lane.b32.xlu0 %v4686, 127
        %v4691 = vpop.permute.xlu0 %4690
        %v4694 = vadd.f32 %v4634, %v4689
        %v4695 = vadd.f32 %v4635, %v4691
        %s4696 = sld [smem:[#allocation2 + $0x115]]
        %v4697 = vstv %s4696
        %v4698 = vmul.f32 %v4697, %v3254
        %v4699 = vmul.f32 %v4697, %v3255
        %v4702 = vrot.slane %v4698, 2
        %v4703 = vrot.slane %v4699, 2
        %v4704 = vsel %vm1522, %v4702, %v4703
        %4705 = vrot.lane.b32.xlu0 %v4704, 127
        %v4706 = vpop.permute.xlu0 %4705
        %4707 = vrot.lane.b32.xlu0 %v4703, 127
        %v4708 = vpop.permute.xlu0 %4707
        %v4711 = vadd.f32 %v4647, %v4706
        %v4712 = vadd.f32 %v4648, %v4708
        %s4713 = sld [smem:[#allocation2 + $0x139]]
        %v4714 = vstv %s4713
        %v4715 = vmul.f32 %v4714, %v3254
        %v4716 = vmul.f32 %v4714, %v3255
        %v4719 = vrot.slane %v4715, 2
        %v4720 = vrot.slane %v4716, 2
        %v4721 = vsel %vm1522, %v4719, %v4720
        %4722 = vrot.lane.b32.xlu0 %v4721, 127
        %v4723 = vpop.permute.xlu0 %4722
        %4724 = vrot.lane.b32.xlu0 %v4720, 127
        %v4725 = vpop.permute.xlu0 %4724
        %v4728 = vadd.f32 %v4660, %v4723
        %v4729 = vadd.f32 %v4661, %v4725
        %s4730 = sld [smem:[#allocation2 + $0xce]]
        %v4731 = vstv %s4730
        %v4732 = vmul.f32 %v4731, %v3254
        %v4733 = vmul.f32 %v4731, %v3255
        %v4736 = vrot.slane %v4732, 2
        %v4737 = vrot.slane %v4733, 2
        %v4738 = vsel %vm1522, %v4736, %v4737
        %4739 = vrot.lane.b32.xlu0 %v4738, 126
        %v4740 = vpop.permute.xlu0 %4739
        %4741 = vrot.lane.b32.xlu0 %v4737, 126
        %v4742 = vpop.permute.xlu0 %4741
        %v4745 = vadd.f32 %v4677, %v4740
        %v4746 = vadd.f32 %v4678, %v4742
        %s4747 = sld [smem:[#allocation2 + $0xf2]]
        %v4748 = vstv %s4747
        %v4749 = vmul.f32 %v4748, %v3254
        %v4750 = vmul.f32 %v4748, %v3255
        %v4753 = vrot.slane %v4749, 2
        %v4754 = vrot.slane %v4750, 2
        %v4755 = vsel %vm1522, %v4753, %v4754
        %4756 = vrot.lane.b32.xlu0 %v4755, 126
        %v4757 = vpop.permute.xlu0 %4756
        %4758 = vrot.lane.b32.xlu0 %v4754, 126
        %v4759 = vpop.permute.xlu0 %4758
        %v4762 = vadd.f32 %v4694, %v4757
        %v4763 = vadd.f32 %v4695, %v4759
        %s4764 = sld [smem:[#allocation2 + $0x116]]
        %v4765 = vstv %s4764
        %v4766 = vmul.f32 %v4765, %v3254
        %v4767 = vmul.f32 %v4765, %v3255
        %v4770 = vrot.slane %v4766, 2
        %v4771 = vrot.slane %v4767, 2
        %v4772 = vsel %vm1522, %v4770, %v4771
        %4773 = vrot.lane.b32.xlu0 %v4772, 126
        %v4774 = vpop.permute.xlu0 %4773
        %4775 = vrot.lane.b32.xlu0 %v4771, 126
        %v4776 = vpop.permute.xlu0 %4775
        %v4779 = vadd.f32 %v4711, %v4774
        %v4780 = vadd.f32 %v4712, %v4776
        %s4781 = sld [smem:[#allocation2 + $0x13a]]
        %v4782 = vstv %s4781
        %v4783 = vmul.f32 %v4782, %v3254
        %v4784 = vmul.f32 %v4782, %v3255
        %v4787 = vrot.slane %v4783, 2
        %v4788 = vrot.slane %v4784, 2
        %v4789 = vsel %vm1522, %v4787, %v4788
        %4790 = vrot.lane.b32.xlu0 %v4789, 126
        %v4791 = vpop.permute.xlu0 %4790
        %4792 = vrot.lane.b32.xlu0 %v4788, 126
        %v4793 = vpop.permute.xlu0 %4792
        %v4796 = vadd.f32 %v4728, %v4791
        %v4797 = vadd.f32 %v4729, %v4793
        %s4798 = sld [smem:[#allocation2 + $0xcf]]
        %v4799 = vstv %s4798
        %v4800 = vmul.f32 %v4799, %v3260
        %v4801 = vmul.f32 %v4799, %v3261
        %v4802 = vadd.f32 %v4745, %v4800
        %v4803 = vadd.f32 %v4746, %v4801
        %s4804 = sld [smem:[#allocation2 + $0xf3]]
        %v4805 = vstv %s4804
        %v4806 = vmul.f32 %v4805, %v3260
        %v4807 = vmul.f32 %v4805, %v3261
        %v4808 = vadd.f32 %v4762, %v4806
        %v4809 = vadd.f32 %v4763, %v4807
        %s4810 = sld [smem:[#allocation2 + $0x117]]
        %v4811 = vstv %s4810
        %v4812 = vmul.f32 %v4811, %v3260
        %v4813 = vmul.f32 %v4811, %v3261
        %v4814 = vadd.f32 %v4779, %v4812
        %v4815 = vadd.f32 %v4780, %v4813
        %s4816 = sld [smem:[#allocation2 + $0x13b]]
        %v4817 = vstv %s4816
        %v4818 = vmul.f32 %v4817, %v3260
        %v4819 = vmul.f32 %v4817, %v3261
        %v4820 = vadd.f32 %v4796, %v4818
        %v4821 = vadd.f32 %v4797, %v4819
        %s4822 = sld [smem:[#allocation2 + $0xd0]]
        %v4823 = vstv %s4822
        %v4824 = vmul.f32 %v4823, %v3260
        %v4825 = vmul.f32 %v4823, %v3261
        %4828 = vrot.lane.b32.xlu0 %v4824, 127
        %v4829 = vpop.permute.xlu0 %4828
        %4830 = vrot.lane.b32.xlu0 %v4825, 127
        %v4831 = vpop.permute.xlu0 %4830
        %v4834 = vadd.f32 %v4802, %v4829
        %v4835 = vadd.f32 %v4803, %v4831
        %s4836 = sld [smem:[#allocation2 + $0xf4]]
        %v4837 = vstv %s4836
        %v4838 = vmul.f32 %v4837, %v3260
        %v4839 = vmul.f32 %v4837, %v3261
        %4842 = vrot.lane.b32.xlu0 %v4838, 127
        %v4843 = vpop.permute.xlu0 %4842
        %4844 = vrot.lane.b32.xlu0 %v4839, 127
        %v4845 = vpop.permute.xlu0 %4844
        %v4848 = vadd.f32 %v4808, %v4843
        %v4849 = vadd.f32 %v4809, %v4845
        %s4850 = sld [smem:[#allocation2 + $0x118]]
        %v4851 = vstv %s4850
        %v4852 = vmul.f32 %v4851, %v3260
        %v4853 = vmul.f32 %v4851, %v3261
        %4856 = vrot.lane.b32.xlu0 %v4852, 127
        %v4857 = vpop.permute.xlu0 %4856
        %4858 = vrot.lane.b32.xlu0 %v4853, 127
        %v4859 = vpop.permute.xlu0 %4858
        %v4862 = vadd.f32 %v4814, %v4857
        %v4863 = vadd.f32 %v4815, %v4859
        %s4864 = sld [smem:[#allocation2 + $0x13c]]
        %v4865 = vstv %s4864
        %v4866 = vmul.f32 %v4865, %v3260
        %v4867 = vmul.f32 %v4865, %v3261
        %4870 = vrot.lane.b32.xlu0 %v4866, 127
        %v4871 = vpop.permute.xlu0 %4870
        %4872 = vrot.lane.b32.xlu0 %v4867, 127
        %v4873 = vpop.permute.xlu0 %4872
        %v4876 = vadd.f32 %v4820, %v4871
        %v4877 = vadd.f32 %v4821, %v4873
        %s4878 = sld [smem:[#allocation2 + $0xd1]]
        %v4879 = vstv %s4878
        %v4880 = vmul.f32 %v4879, %v3260
        %v4881 = vmul.f32 %v4879, %v3261
        %4884 = vrot.lane.b32.xlu0 %v4880, 126
        %v4885 = vpop.permute.xlu0 %4884
        %4886 = vrot.lane.b32.xlu0 %v4881, 126
        %v4887 = vpop.permute.xlu0 %4886
        %v4890 = vadd.f32 %v4834, %v4885
        %v4891 = vadd.f32 %v4835, %v4887
        %s4892 = sld [smem:[#allocation2 + $0xf5]]
        %v4893 = vstv %s4892
        %v4894 = vmul.f32 %v4893, %v3260
        %v4895 = vmul.f32 %v4893, %v3261
        %4898 = vrot.lane.b32.xlu0 %v4894, 126
        %v4899 = vpop.permute.xlu0 %4898
        %4900 = vrot.lane.b32.xlu0 %v4895, 126
        %v4901 = vpop.permute.xlu0 %4900
        %v4904 = vadd.f32 %v4848, %v4899
        %v4905 = vadd.f32 %v4849, %v4901
        %s4906 = sld [smem:[#allocation2 + $0x119]]
        %v4907 = vstv %s4906
        %v4908 = vmul.f32 %v4907, %v3260
        %v4909 = vmul.f32 %v4907, %v3261
        %4912 = vrot.lane.b32.xlu0 %v4908, 126
        %v4913 = vpop.permute.xlu0 %4912
        %4914 = vrot.lane.b32.xlu0 %v4909, 126
        %v4915 = vpop.permute.xlu0 %4914
        %v4918 = vadd.f32 %v4862, %v4913
        %v4919 = vadd.f32 %v4863, %v4915
        %s4920 = sld [smem:[#allocation2 + $0x13d]]
        %v4921 = vstv %s4920
        %v4922 = vmul.f32 %v4921, %v3260
        %v4923 = vmul.f32 %v4921, %v3261
        %4926 = vrot.lane.b32.xlu0 %v4922, 126
        %v4927 = vpop.permute.xlu0 %4926
        %4928 = vrot.lane.b32.xlu0 %v4923, 126
        %v4929 = vpop.permute.xlu0 %4928
        %v4932 = vadd.f32 %v4876, %v4927
        %v4933 = vadd.f32 %v4877, %v4929
        %s4934 = sld [smem:[#allocation2 + $0xd2]]
        %v4935 = vstv %s4934
        %v4936 = vmul.f32 %v4935, %v3260
        %v4937 = vmul.f32 %v4935, %v3261
        %v4940 = vrot.slane %v4936, 1
        %v4941 = vrot.slane %v4937, 1
        %v4942 = vsel %vm1333, %v4940, %v4941
        %v4945 = vadd.f32 %v4890, %v4942
        %v4946 = vadd.f32 %v4891, %v4941
        %s4947 = sld [smem:[#allocation2 + $0xf6]]
        %v4948 = vstv %s4947
        %v4949 = vmul.f32 %v4948, %v3260
        %v4950 = vmul.f32 %v4948, %v3261
        %v4953 = vrot.slane %v4949, 1
        %v4954 = vrot.slane %v4950, 1
        %v4955 = vsel %vm1333, %v4953, %v4954
        %v4958 = vadd.f32 %v4904, %v4955
        %v4959 = vadd.f32 %v4905, %v4954
        %s4960 = sld [smem:[#allocation2 + $0x11a]]
        %v4961 = vstv %s4960
        %v4962 = vmul.f32 %v4961, %v3260
        %v4963 = vmul.f32 %v4961, %v3261
        %v4966 = vrot.slane %v4962, 1
        %v4967 = vrot.slane %v4963, 1
        %v4968 = vsel %vm1333, %v4966, %v4967
        %v4971 = vadd.f32 %v4918, %v4968
        %v4972 = vadd.f32 %v4919, %v4967
        %s4973 = sld [smem:[#allocation2 + $0x13e]]
        %v4974 = vstv %s4973
        %v4975 = vmul.f32 %v4974, %v3260
        %v4976 = vmul.f32 %v4974, %v3261
        %v4979 = vrot.slane %v4975, 1
        %v4980 = vrot.slane %v4976, 1
        %v4981 = vsel %vm1333, %v4979, %v4980
        %v4984 = vadd.f32 %v4932, %v4981
        %v4985 = vadd.f32 %v4933, %v4980
        %s4986 = sld [smem:[#allocation2 + $0xd3]]
        %v4987 = vstv %s4986
        %v4988 = vmul.f32 %v4987, %v3260
        %v4989 = vmul.f32 %v4987, %v3261
        %v4992 = vrot.slane %v4988, 1
        %v4993 = vrot.slane %v4989, 1
        %v4994 = vsel %vm1333, %v4992, %v4993
        %4995 = vrot.lane.b32.xlu0 %v4994, 127
        %v4996 = vpop.permute.xlu0 %4995
        %4997 = vrot.lane.b32.xlu0 %v4993, 127
        %v4998 = vpop.permute.xlu0 %4997
        %v5001 = vadd.f32 %v4945, %v4996
        %v5002 = vadd.f32 %v4946, %v4998
        %s5003 = sld [smem:[#allocation2 + $0xf7]]
        %v5004 = vstv %s5003
        %v5005 = vmul.f32 %v5004, %v3260
        %v5006 = vmul.f32 %v5004, %v3261
        %v5009 = vrot.slane %v5005, 1
        %v5010 = vrot.slane %v5006, 1
        %v5011 = vsel %vm1333, %v5009, %v5010
        %5012 = vrot.lane.b32.xlu0 %v5011, 127
        %v5013 = vpop.permute.xlu0 %5012
        %5014 = vrot.lane.b32.xlu0 %v5010, 127
        %v5015 = vpop.permute.xlu0 %5014
        %v5018 = vadd.f32 %v4958, %v5013
        %v5019 = vadd.f32 %v4959, %v5015
        %s5020 = sld [smem:[#allocation2 + $0x11b]]
        %v5021 = vstv %s5020
        %v5022 = vmul.f32 %v5021, %v3260
        %v5023 = vmul.f32 %v5021, %v3261
        %v5026 = vrot.slane %v5022, 1
        %v5027 = vrot.slane %v5023, 1
        %v5028 = vsel %vm1333, %v5026, %v5027
        %5029 = vrot.lane.b32.xlu0 %v5028, 127
        %v5030 = vpop.permute.xlu0 %5029
        %5031 = vrot.lane.b32.xlu0 %v5027, 127
        %v5032 = vpop.permute.xlu0 %5031
        %v5035 = vadd.f32 %v4971, %v5030
        %v5036 = vadd.f32 %v4972, %v5032
        %s5037 = sld [smem:[#allocation2 + $0x13f]]
        %v5038 = vstv %s5037
        %v5039 = vmul.f32 %v5038, %v3260
        %v5040 = vmul.f32 %v5038, %v3261
        %v5043 = vrot.slane %v5039, 1
        %v5044 = vrot.slane %v5040, 1
        %v5045 = vsel %vm1333, %v5043, %v5044
        %5046 = vrot.lane.b32.xlu0 %v5045, 127
        %v5047 = vpop.permute.xlu0 %5046
        %5048 = vrot.lane.b32.xlu0 %v5044, 127
        %v5049 = vpop.permute.xlu0 %5048
        %v5052 = vadd.f32 %v4984, %v5047
        %v5053 = vadd.f32 %v4985, %v5049
        %s5054 = sld [smem:[#allocation2 + $0xd4]]
        %v5055 = vstv %s5054
        %v5056 = vmul.f32 %v5055, %v3260
        %v5057 = vmul.f32 %v5055, %v3261
        %v5060 = vrot.slane %v5056, 1
        %v5061 = vrot.slane %v5057, 1
        %v5062 = vsel %vm1333, %v5060, %v5061
        %5063 = vrot.lane.b32.xlu0 %v5062, 126
        %v5064 = vpop.permute.xlu0 %5063
        %5065 = vrot.lane.b32.xlu0 %v5061, 126
        %v5066 = vpop.permute.xlu0 %5065
        %v5069 = vadd.f32 %v5001, %v5064
        %v5070 = vadd.f32 %v5002, %v5066
        %s5071 = sld [smem:[#allocation2 + $0xf8]]
        %v5072 = vstv %s5071
        %v5073 = vmul.f32 %v5072, %v3260
        %v5074 = vmul.f32 %v5072, %v3261
        %v5077 = vrot.slane %v5073, 1
        %v5078 = vrot.slane %v5074, 1
        %v5079 = vsel %vm1333, %v5077, %v5078
        %5080 = vrot.lane.b32.xlu0 %v5079, 126
        %v5081 = vpop.permute.xlu0 %5080
        %5082 = vrot.lane.b32.xlu0 %v5078, 126
        %v5083 = vpop.permute.xlu0 %5082
        %v5086 = vadd.f32 %v5018, %v5081
        %v5087 = vadd.f32 %v5019, %v5083
        %s5088 = sld [smem:[#allocation2 + $0x11c]]
        %v5089 = vstv %s5088
        %v5090 = vmul.f32 %v5089, %v3260
        %v5091 = vmul.f32 %v5089, %v3261
        %v5094 = vrot.slane %v5090, 1
        %v5095 = vrot.slane %v5091, 1
        %v5096 = vsel %vm1333, %v5094, %v5095
        %5097 = vrot.lane.b32.xlu0 %v5096, 126
        %v5098 = vpop.permute.xlu0 %5097
        %5099 = vrot.lane.b32.xlu0 %v5095, 126
        %v5100 = vpop.permute.xlu0 %5099
        %v5103 = vadd.f32 %v5035, %v5098
        %v5104 = vadd.f32 %v5036, %v5100
        %s5105 = sld [smem:[#allocation2 + $0x140]]
        %v5106 = vstv %s5105
        %v5107 = vmul.f32 %v5106, %v3260
        %v5108 = vmul.f32 %v5106, %v3261
        %v5111 = vrot.slane %v5107, 1
        %v5112 = vrot.slane %v5108, 1
        %v5113 = vsel %vm1333, %v5111, %v5112
        %5114 = vrot.lane.b32.xlu0 %v5113, 126
        %v5115 = vpop.permute.xlu0 %5114
        %5116 = vrot.lane.b32.xlu0 %v5112, 126
        %v5117 = vpop.permute.xlu0 %5116
        %v5120 = vadd.f32 %v5052, %v5115
        %v5121 = vadd.f32 %v5053, %v5117
        %s5122 = sld [smem:[#allocation2 + $0xd5]]
        %v5123 = vstv %s5122
        %v5124 = vmul.f32 %v5123, %v3260
        %v5125 = vmul.f32 %v5123, %v3261
        %v5128 = vrot.slane %v5124, 2
        %v5129 = vrot.slane %v5125, 2
        %v5130 = vsel %vm1522, %v5128, %v5129
        %v5133 = vadd.f32 %v5069, %v5130
        %v5134 = vadd.f32 %v5070, %v5129
        %s5135 = sld [smem:[#allocation2 + $0xf9]]
        %v5136 = vstv %s5135
        %v5137 = vmul.f32 %v5136, %v3260
        %v5138 = vmul.f32 %v5136, %v3261
        %v5141 = vrot.slane %v5137, 2
        %v5142 = vrot.slane %v5138, 2
        %v5143 = vsel %vm1522, %v5141, %v5142
        %v5146 = vadd.f32 %v5086, %v5143
        %v5147 = vadd.f32 %v5087, %v5142
        %s5148 = sld [smem:[#allocation2 + $0x11d]]
        %v5149 = vstv %s5148
        %v5150 = vmul.f32 %v5149, %v3260
        %v5151 = vmul.f32 %v5149, %v3261
        %v5154 = vrot.slane %v5150, 2
        %v5155 = vrot.slane %v5151, 2
        %v5156 = vsel %vm1522, %v5154, %v5155
        %v5159 = vadd.f32 %v5103, %v5156
        %v5160 = vadd.f32 %v5104, %v5155
        %s5161 = sld [smem:[#allocation2 + $0x141]]
        %v5162 = vstv %s5161
        %v5163 = vmul.f32 %v5162, %v3260
        %v5164 = vmul.f32 %v5162, %v3261
        %v5167 = vrot.slane %v5163, 2
        %v5168 = vrot.slane %v5164, 2
        %v5169 = vsel %vm1522, %v5167, %v5168
        %v5172 = vadd.f32 %v5120, %v5169
        %v5173 = vadd.f32 %v5121, %v5168
        %s5174 = sld [smem:[#allocation2 + $0xd6]]
        %v5175 = vstv %s5174
        %v5176 = vmul.f32 %v5175, %v3260
        %v5177 = vmul.f32 %v5175, %v3261
        %v5180 = vrot.slane %v5176, 2
        %v5181 = vrot.slane %v5177, 2
        %v5182 = vsel %vm1522, %v5180, %v5181
        %5183 = vrot.lane.b32.xlu0 %v5182, 127
        %v5184 = vpop.permute.xlu0 %5183
        %5185 = vrot.lane.b32.xlu0 %v5181, 127
        %v5186 = vpop.permute.xlu0 %5185
        %v5189 = vadd.f32 %v5133, %v5184
        %v5190 = vadd.f32 %v5134, %v5186
        %s5191 = sld [smem:[#allocation2 + $0xfa]]
        %v5192 = vstv %s5191
        %v5193 = vmul.f32 %v5192, %v3260
        %v5194 = vmul.f32 %v5192, %v3261
        %v5197 = vrot.slane %v5193, 2
        %v5198 = vrot.slane %v5194, 2
        %v5199 = vsel %vm1522, %v5197, %v5198
        %5200 = vrot.lane.b32.xlu0 %v5199, 127
        %v5201 = vpop.permute.xlu0 %5200
        %5202 = vrot.lane.b32.xlu0 %v5198, 127
        %v5203 = vpop.permute.xlu0 %5202
        %v5206 = vadd.f32 %v5146, %v5201
        %v5207 = vadd.f32 %v5147, %v5203
        %s5208 = sld [smem:[#allocation2 + $0x11e]]
        %v5209 = vstv %s5208
        %v5210 = vmul.f32 %v5209, %v3260
        %v5211 = vmul.f32 %v5209, %v3261
        %v5214 = vrot.slane %v5210, 2
        %v5215 = vrot.slane %v5211, 2
        %v5216 = vsel %vm1522, %v5214, %v5215
        %5217 = vrot.lane.b32.xlu0 %v5216, 127
        %v5218 = vpop.permute.xlu0 %5217
        %5219 = vrot.lane.b32.xlu0 %v5215, 127
        %v5220 = vpop.permute.xlu0 %5219
        %v5223 = vadd.f32 %v5159, %v5218
        %v5224 = vadd.f32 %v5160, %v5220
        %s5225 = sld [smem:[#allocation2 + $0x142]]
        %v5226 = vstv %s5225
        %v5227 = vmul.f32 %v5226, %v3260
        %v5228 = vmul.f32 %v5226, %v3261
        %v5231 = vrot.slane %v5227, 2
        %v5232 = vrot.slane %v5228, 2
        %v5233 = vsel %vm1522, %v5231, %v5232
        %5234 = vrot.lane.b32.xlu0 %v5233, 127
        %v5235 = vpop.permute.xlu0 %5234
        %5236 = vrot.lane.b32.xlu0 %v5232, 127
        %v5237 = vpop.permute.xlu0 %5236
        %v5240 = vadd.f32 %v5172, %v5235
        %v5241 = vadd.f32 %v5173, %v5237
        %s5242 = sld [smem:[#allocation2 + $0xd7]]
        %v5243 = vstv %s5242
        %v5244 = vmul.f32 %v5243, %v3260
        %v5245 = vmul.f32 %v5243, %v3261
        %v5248 = vrot.slane %v5244, 2
        %v5249 = vrot.slane %v5245, 2
        %v5250 = vsel %vm1522, %v5248, %v5249
        %5251 = vrot.lane.b32.xlu0 %v5250, 126
        %v5252 = vpop.permute.xlu0 %5251
        %5253 = vrot.lane.b32.xlu0 %v5249, 126
        %v5254 = vpop.permute.xlu0 %5253
        %v5257 = vadd.f32 %v5189, %v5252
        %v5258 = vadd.f32 %v5190, %v5254
        %s5259 = sld [smem:[#allocation2 + $0xfb]]
        %v5260 = vstv %s5259
        %v5261 = vmul.f32 %v5260, %v3260
        %v5262 = vmul.f32 %v5260, %v3261
        %v5265 = vrot.slane %v5261, 2
        %v5266 = vrot.slane %v5262, 2
        %v5267 = vsel %vm1522, %v5265, %v5266
        %5268 = vrot.lane.b32.xlu0 %v5267, 126
        %v5269 = vpop.permute.xlu0 %5268
        %5270 = vrot.lane.b32.xlu0 %v5266, 126
        %v5271 = vpop.permute.xlu0 %5270
        %v5274 = vadd.f32 %v5206, %v5269
        %v5275 = vadd.f32 %v5207, %v5271
        %s5276 = sld [smem:[#allocation2 + $0x11f]]
        %v5277 = vstv %s5276
        %v5278 = vmul.f32 %v5277, %v3260
        %v5279 = vmul.f32 %v5277, %v3261
        %v5282 = vrot.slane %v5278, 2
        %v5283 = vrot.slane %v5279, 2
        %v5284 = vsel %vm1522, %v5282, %v5283
        %5285 = vrot.lane.b32.xlu0 %v5284, 126
        %v5286 = vpop.permute.xlu0 %5285
        %5287 = vrot.lane.b32.xlu0 %v5283, 126
        %v5288 = vpop.permute.xlu0 %5287
        %v5291 = vadd.f32 %v5223, %v5286
        %v5292 = vadd.f32 %v5224, %v5288
        %s5293 = sld [smem:[#allocation2 + $0x143]]
        %v5294 = vstv %s5293
        %v5295 = vmul.f32 %v5294, %v3260
        %v5296 = vmul.f32 %v5294, %v3261
        %v5299 = vrot.slane %v5295, 2
        %v5300 = vrot.slane %v5296, 2
        %v5301 = vsel %vm1522, %v5299, %v5300
        %5302 = vrot.lane.b32.xlu0 %v5301, 126
        %v5303 = vpop.permute.xlu0 %5302
        %5304 = vrot.lane.b32.xlu0 %v5300, 126
        %v5305 = vpop.permute.xlu0 %5304
        %v5308 = vadd.f32 %v5240, %v5303
        %v5309 = vadd.f32 %v5241, %v5305
        %s5310 = sld [smem:[#allocation2 + $0x144]]
        %v5311 = vstv %s5310
        %v5312 = vadd.f32 %v5257, %v5311
        %v5313 = vadd.f32 %v5258, %v5311
        %v5314 = vmax.f32 %v5312, 0.0
        %v5315 = vmax.f32 %v5313, 0.0
        %s5316 = sld [smem:[#allocation2 + $0x145]]
        %v5317 = vstv %s5316
        %v5318 = vadd.f32 %v5274, %v5317
        %v5319 = vadd.f32 %v5275, %v5317
        %v5320 = vmax.f32 %v5318, 0.0
        %v5321 = vmax.f32 %v5319, 0.0
        %s5322 = sld [smem:[#allocation2 + $0x146]]
        %v5323 = vstv %s5322
        %v5324 = vadd.f32 %v5291, %v5323
        %v5325 = vadd.f32 %v5292, %v5323
        %v5326 = vmax.f32 %v5324, 0.0
        %v5327 = vmax.f32 %v5325, 0.0
        %s5328 = sld [smem:[#allocation2 + $0x147]]
        %v5329 = vstv %s5328
        %v5330 = vadd.f32 %v5308, %v5329
        %v5331 = vadd.f32 %v5309, %v5329
        %v5332 = vmax.f32 %v5330, 0.0
        %v5333 = vmax.f32 %v5331, 0.0
        %vm5334 = vcmask 97280
        %5335 = vst.msk [vmem:[%s258] sm:$0xff] %vm5334, %v5314
        %vm5336 = vcmask 93184
        %5337 = vst.msk [vmem:[%s258 + $0x8] sm:$0xf] %vm5336, %v5315
        %s5338 = scalar_lea.vmem %s258, 16
        %5339 = vst.msk [vmem:[%s5338] sm:$0xff] %vm5334, %v5320
        %5340 = vst.msk [vmem:[%s5338 + $0x8] sm:$0xf] %vm5336, %v5321
        %s5341 = scalar_lea.vmem %s258, 32
        %5342 = vst.msk [vmem:[%s5341] sm:$0xff] %vm5334, %v5326
        %5343 = vst.msk [vmem:[%s5341 + $0x8] sm:$0xf] %vm5336, %v5327
        %s5344 = scalar_lea.vmem %s258, 48
        %5345 = vst.msk [vmem:[%s5344] sm:$0xff] %vm5334, %v5332
        %5346 = vst.msk [vmem:[%s5344 + $0x8] sm:$0xf] %vm5336, %v5333
        %p5347 = scmp.lt.s32.totalorder %s17, 1
        %s5348 = scalar_select %p5347, %s17, 1
        %s5349 = smul.addr %s5348, 8
        %s5350 = smul.addr %s5349, 8
        %s5351 = scalar_lea.vmem %s5, %s5350
        // Predicated region
        $region45: #{tpu_custom_call.1} parent=39 // pred_check
          %p5352 = pneg %p150
        $region46: #{tpu_custom_call.1} parent=39 // pred_check_branch
          %5354 = sbr.rel (%p5352) target = $region48
        $region47: #{tpu_custom_call.1} parent=39 // pred_region
          _
        $region48: #{tpu_custom_call.1} parent=39 // pred_fallthru
          _
      $region40: #{tpu_custom_call.1} parent=5 // pred_fallthru
        _
      %p5355 = scmp.le.s32.totalorder 2, %s12
      // Predicated region
      $region49: #{tpu_custom_call.1} parent=5 // pred_check
        %p5356 = pneg %p5355
      $region50: #{tpu_custom_call.1} parent=5 // pred_check_branch
        %5358 = sbr.rel (%p5356) target = $region52
      $region51: #{tpu_custom_call.1} parent=5 // pred_region
        %s5359 = ssub.s32 %s12, 2
        // Predicated region
        $region53: #{tpu_custom_call.1} parent=51 // pred_check
          %p5360 = pneg %p156
        $region54: #{tpu_custom_call.1} parent=51 // pred_check_branch
          %5362 = sbr.rel (%p5360) target = $region56
        $region55: #{tpu_custom_call.1} parent=51 // pred_region
          %p5363 = scmp.lt.s32.totalorder %s18, 1
          %s5364 = scalar_select %p5363, %s18, 1
          %s5365 = smul.addr %s5364, 8
          %s5366 = smul.addr %s5365, 8
          %s5367 = scalar_lea.vmem %s5, %s5366
        $region56: #{tpu_custom_call.1} parent=51 // pred_fallthru
          _
      $region52: #{tpu_custom_call.1} parent=5 // pred_fallthru
        _
    $region6: #{tpu_custom_call.1} parent=1 // loop_footer
      %s16 = sadd.s32 1, %s12
    $region7: #{tpu_custom_call.1} parent=1 // loop_footer_branch
      %11 = sbr.rel target = $region3
    $region8: #{tpu_custom_call.1} parent=1 // loop_exit
      _
    %5368 = vsyncpa [#allocation3], 1
    %s5369 = scalar_lea.sflag [#allocation3], 1
    %5370 = vsyncpa %s5369, 1

</llo_original>
